<compile_context>
chip_gen: v5e
topology: v5e:2x2
jax: 0.10.0
libtpu: 0.0.40
codegen_flags: <defaults>
</compile_context>

<pallas_src>
import functools

import jax
import jax.numpy as jnp
from jax.experimental import pallas as pl
from jax.experimental.pallas import tpu as pltpu


def _round_up(x, m):
    return (x + m - 1) // m * m


# Layer dims (PyTorch spec) and 128-padded dims.
_DIMS = [784, 1000, 500, 250, 30, 250, 500, 1000, 784]
_DIMS_PAD = [_round_up(d, 128) for d in _DIMS]          # [896,1024,512,256,128,256,512,1024,896]
_SIGMOID = [True, True, True, False, True, True, True, True]
_MAX_PAD = max(_DIMS_PAD)                                # 1024
_NUM_LAYERS = 8


# ----------------------------------------------------------------------------
# Fused Pallas kernel: the entire 8-layer forward for one batch tile.
# ----------------------------------------------------------------------------
def _ae_fused_kernel(x_ref, w1_ref, w2_ref, w3_ref, w4_ref,
                     w5_ref, w6_ref, w7_ref, w8_ref, b_ref, o_ref):
    w_refs = (w1_ref, w2_ref, w3_ref, w4_ref, w5_ref, w6_ref, w7_ref, w8_ref)
    h = x_ref[...]                                   # (block_m, 896) f32
    for li, w_ref in enumerate(w_refs):
        n_pad = w_ref.shape[1]                       # static, multiple of 128
        # MXU matmul in bf16 with f32 accumulation.
        y = jnp.dot(h.astype(jnp.bfloat16), w_ref[...],
                    preferred_element_type=jnp.float32)
        # Bias add + activation in f32 (v5e has no bf16 VPU/EUP).
        y = y + b_ref[li:li + 1, :n_pad]             # (1, n_pad) broadcast
        if _SIGMOID[li]:
            y = jax.nn.sigmoid(y)
        h = y
    o_ref[...] = h.astype(o_ref.dtype)               # (block_m, 896) lane-dense store


# ----------------------------------------------------------------------------
# Parameter construction (deterministic, PyTorch nn.Linear-style init)
# ----------------------------------------------------------------------------
def init_params(key):
    """Unpadded f32 params: list of (W (in, out), b (out,)).

    Stored as (F_in, F_out); PyTorch stores (F_out, F_in) and computes x @ W.T,
    which is equivalent.
    """
    params = []
    for li in range(_NUM_LAYERS):
        fan_in, fan_out = _DIMS[li], _DIMS[li + 1]
        key, kw, kb = jax.random.split(key, 3)
        bound = 1.0 / jnp.sqrt(fan_in)
        w = jax.random.uniform(kw, (fan_in, fan_out), jnp.float32, -bound, bound)
        b = jax.random.uniform(kb, (fan_out,), jnp.float32, -bound, bound)
        params.append((w, b))
    return params


def pad_params(params):
    """Zero-pad every dim to a multiple of 128; weights -> bf16, biases -> one
    (8, 1024) f32 slab (row i = layer i's bias)."""
    ws_pad = []
    b_slab = jnp.zeros((_NUM_LAYERS, _MAX_PAD), jnp.float32)
    for li, (w, b) in enumerate(params):
        ip, op = _DIMS_PAD[li], _DIMS_PAD[li + 1]
        wp = jnp.zeros((ip, op), jnp.float32).at[:w.shape[0], :w.shape[1]].set(w)
        ws_pad.append(wp.astype(jnp.bfloat16))
        b_slab = b_slab.at[li, :b.shape[0]].set(b)
    return ws_pad, b_slab


# ----------------------------------------------------------------------------
# Full forward pass (matches AE.forward)
# ----------------------------------------------------------------------------
@jax.jit
def ae_forward(ws_pad, b_slab, x):
    # x.view(-1, 784)
    xf = jnp.reshape(x, (-1, 784)).astype(jnp.float32)
    batch = xf.shape[0]

    # Batch tiling: one tile for small batches, 256-row tiles for large ones.
    block_m = min(256, _round_up(max(batch, 1), 8))
    m_pad = _round_up(batch, block_m)
    x_pad = jnp.zeros((m_pad, _DIMS_PAD[0]), jnp.float32).at[:batch, :784].set(xf)

    grid = (m_pad // block_m,)

    in_specs = [pl.BlockSpec((block_m, _DIMS_PAD[0]), lambda i: (i, 0))]
    for li in range(_NUM_LAYERS):
        ip, op = _DIMS_PAD[li], _DIMS_PAD[li + 1]
        # Constant block index -> weights stay resident across batch tiles.
        in_specs.append(pl.BlockSpec((ip, op), lambda i: (0, 0)))
    in_specs.append(pl.BlockSpec((_NUM_LAYERS, _MAX_PAD), lambda i: (0, 0)))

    out = pl.pallas_call(
        _ae_fused_kernel,
        out_shape=jax.ShapeDtypeStruct((m_pad, _DIMS_PAD[-1]), jnp.float32),
        grid=grid,
        in_specs=in_specs,
        out_specs=pl.BlockSpec((block_m, _DIMS_PAD[-1]), lambda i: (i, 0)),
        compiler_params=pltpu.CompilerParams(
            dimension_semantics=("parallel",),     # megacore / v7x 2-TC split
            vmem_limit_bytes=32 << 20,             # plenty; safe on v7x's 64 MiB
        ),
    )(x_pad, *ws_pad, b_slab)

    return out[:batch, :784]


# ----------------------------------------------------------------------------
# References (plain JAX) for sanity checks
# ----------------------------------------------------------------------------
def ae_forward_ref_bf16(params, x):
    """Mirrors the kernel math (bf16 matmul inputs, f32 accumulate/elementwise)."""
    h = jnp.reshape(x, (-1, 784)).astype(jnp.float32)
    for (w, b), sig in zip(params, _SIGMOID):
        h = jnp.dot(h.astype(jnp.bfloat16), w.astype(jnp.bfloat16),
                    preferred_element_type=jnp.float32) + b
        if sig:
            h = jax.nn.sigmoid(h)
    return h


def ae_forward_ref_f32(params, x):
    h = jnp.reshape(x, (-1, 784)).astype(jnp.float32)
    for (w, b), sig in zip(params, _SIGMOID):
        h = h @ w + b
        if sig:
            h = jax.nn.sigmoid(h)
    return h


if __name__ == "__main__":
    key = jax.random.PRNGKey(0)
    kp, kx = jax.random.split(key)
    params = init_params(kp)
    ws_pad, b_slab = pad_params(params)

    # Small MNIST-like input: (batch=2, channels=1, 28, 28) -> flattened to (2, 784)
    x = jax.random.uniform(kx, (2, 1, 28, 28), jnp.float32)

    out = jax.block_until_ready(ae_forward(ws_pad, b_slab, x))
    ref_bf16 = jax.block_until_ready(ae_forward_ref_bf16(params, x))
    ref_f32 = jax.block_until_ready(ae_forward_ref_f32(params, x))

    assert out.shape == (2, 784), out.shape
    # Tight check against a reference using the same bf16-matmul / f32-accumulate math.
    assert jnp.allclose(out, ref_bf16, atol=1e-3, rtol=1e-3), "mismatch vs bf16 reference"
    # Loose check against the pure-f32 PyTorch-equivalent math (bf16 weight cast error).
    assert jnp.allclose(out, ref_f32, atol=5e-2, rtol=0.0), "mismatch vs f32 reference"
    print("KERNEL_OK")
</pallas_src>

<mosaic_0001>
module attributes {stable_mosaic.version = 11 : i64} {
  func.func @_ae_fused_kernel(%arg0: i32, %arg1: memref<8x896xf32, #tpu.memory_space<vmem>>, %arg2: memref<896x1024xbf16, #tpu.memory_space<vmem>>, %arg3: memref<1024x512xbf16, #tpu.memory_space<vmem>>, %arg4: memref<512x256xbf16, #tpu.memory_space<vmem>>, %arg5: memref<256x128xbf16, #tpu.memory_space<vmem>>, %arg6: memref<128x256xbf16, #tpu.memory_space<vmem>>, %arg7: memref<256x512xbf16, #tpu.memory_space<vmem>>, %arg8: memref<512x1024xbf16, #tpu.memory_space<vmem>>, %arg9: memref<1024x896xbf16, #tpu.memory_space<vmem>>, %arg10: memref<8x1024xf32, #tpu.memory_space<vmem>>, %arg11: memref<8x896xf32, #tpu.memory_space<vmem>>) attributes {dimension_semantics = [#tpu.dimension_semantics<parallel>], iteration_bounds = array<i64: 1>, scalar_prefetch = 0 : i64, scratch_operands = 0 : i64, tpu.core_type = #tpu.core_type<tc>, window_params = [{transform_indices = @transform_0, window_bounds = array<i64: 8, 896>}, {pipeline_mode = #tpu.pipeline_mode<synchronous>, transform_indices = @transform_1, window_bounds = array<i64: 896, 1024>}, {pipeline_mode = #tpu.pipeline_mode<synchronous>, transform_indices = @transform_2, window_bounds = array<i64: 1024, 512>}, {pipeline_mode = #tpu.pipeline_mode<synchronous>, transform_indices = @transform_3, window_bounds = array<i64: 512, 256>}, {pipeline_mode = #tpu.pipeline_mode<synchronous>, transform_indices = @transform_4, window_bounds = array<i64: 256, 128>}, {pipeline_mode = #tpu.pipeline_mode<synchronous>, transform_indices = @transform_5, window_bounds = array<i64: 128, 256>}, {pipeline_mode = #tpu.pipeline_mode<synchronous>, transform_indices = @transform_6, window_bounds = array<i64: 256, 512>}, {pipeline_mode = #tpu.pipeline_mode<synchronous>, transform_indices = @transform_7, window_bounds = array<i64: 512, 1024>}, {pipeline_mode = #tpu.pipeline_mode<synchronous>, transform_indices = @transform_8, window_bounds = array<i64: 1024, 896>}, {pipeline_mode = #tpu.pipeline_mode<synchronous>, transform_indices = @transform_9, window_bounds = array<i64: 8, 1024>}, {transform_indices = @transform_10, window_bounds = array<i64: 8, 896>}]} {
    %c0 = arith.constant 0 : index
    %c0_0 = arith.constant 0 : index
    %0 = vector.load %arg1[%c0, %c0_0] : memref<8x896xf32, #tpu.memory_space<vmem>>, vector<8x896xf32>
    %1 = arith.truncf %0 : vector<8x896xf32> to vector<8x896xbf16>
    %c0_1 = arith.constant 0 : index
    %c0_2 = arith.constant 0 : index
    %2 = vector.load %arg2[%c0_1, %c0_2] : memref<896x1024xbf16, #tpu.memory_space<vmem>>, vector<896x1024xbf16>
    %cst = arith.constant dense<0.000000e+00> : vector<8x1024xf32>
    %3 = tpu.matmul %1, %2, %cst {dimension_numbers = #tpu.dot_dimension_numbers<[1], [0], [0], [1], [0, 0, 1, 1], [], []>} : vector<8x896xbf16>, vector<896x1024xbf16>, vector<8x1024xf32> -> vector<8x1024xf32>
    %c0_3 = arith.constant 0 : index
    %c0_4 = arith.constant 0 : index
    %4 = vector.load %arg10[%c0_3, %c0_4] : memref<8x1024xf32, #tpu.memory_space<vmem>>, vector<1x1024xf32>
    %5 = vector.broadcast %4 : vector<1x1024xf32> to vector<8x1024xf32>
    %6 = arith.addf %3, %5 : vector<8x1024xf32>
    %7 = arith.negf %6 : vector<8x1024xf32>
    %8 = math.exp %7 : vector<8x1024xf32>
    %cst_5 = arith.constant 1.000000e+00 : f32
    %9 = vector.broadcast %cst_5 : f32 to vector<8x1024xf32>
    %10 = arith.addf %9, %8 : vector<8x1024xf32>
    %11 = arith.divf %9, %10 : vector<8x1024xf32>
    %12 = arith.truncf %11 : vector<8x1024xf32> to vector<8x1024xbf16>
    %c0_6 = arith.constant 0 : index
    %c0_7 = arith.constant 0 : index
    %13 = vector.load %arg3[%c0_6, %c0_7] : memref<1024x512xbf16, #tpu.memory_space<vmem>>, vector<1024x512xbf16>
    %cst_8 = arith.constant dense<0.000000e+00> : vector<8x512xf32>
    %14 = tpu.matmul %12, %13, %cst_8 {dimension_numbers = #tpu.dot_dimension_numbers<[1], [0], [0], [1], [0, 0, 1, 1], [], []>} : vector<8x1024xbf16>, vector<1024x512xbf16>, vector<8x512xf32> -> vector<8x512xf32>
    %c1 = arith.constant 1 : index
    %c0_9 = arith.constant 0 : index
    %15 = vector.load %arg10[%c1, %c0_9] : memref<8x1024xf32, #tpu.memory_space<vmem>>, vector<1x512xf32>
    %16 = vector.broadcast %15 : vector<1x512xf32> to vector<8x512xf32>
    %17 = arith.addf %14, %16 : vector<8x512xf32>
    %18 = arith.negf %17 : vector<8x512xf32>
    %19 = math.exp %18 : vector<8x512xf32>
    %cst_10 = arith.constant 1.000000e+00 : f32
    %20 = vector.broadcast %cst_10 : f32 to vector<8x512xf32>
    %21 = arith.addf %20, %19 : vector<8x512xf32>
    %22 = arith.divf %20, %21 : vector<8x512xf32>
    %23 = arith.truncf %22 : vector<8x512xf32> to vector<8x512xbf16>
    %c0_11 = arith.constant 0 : index
    %c0_12 = arith.constant 0 : index
    %24 = vector.load %arg4[%c0_11, %c0_12] : memref<512x256xbf16, #tpu.memory_space<vmem>>, vector<512x256xbf16>
    %cst_13 = arith.constant dense<0.000000e+00> : vector<8x256xf32>
    %25 = tpu.matmul %23, %24, %cst_13 {dimension_numbers = #tpu.dot_dimension_numbers<[1], [0], [0], [1], [0, 0, 1, 1], [], []>} : vector<8x512xbf16>, vector<512x256xbf16>, vector<8x256xf32> -> vector<8x256xf32>
    %c2 = arith.constant 2 : index
    %c0_14 = arith.constant 0 : index
    %26 = vector.load %arg10[%c2, %c0_14] : memref<8x1024xf32, #tpu.memory_space<vmem>>, vector<1x256xf32>
    %27 = vector.broadcast %26 : vector<1x256xf32> to vector<8x256xf32>
    %28 = arith.addf %25, %27 : vector<8x256xf32>
    %29 = arith.negf %28 : vector<8x256xf32>
    %30 = math.exp %29 : vector<8x256xf32>
    %cst_15 = arith.constant 1.000000e+00 : f32
    %31 = vector.broadcast %cst_15 : f32 to vector<8x256xf32>
    %32 = arith.addf %31, %30 : vector<8x256xf32>
    %33 = arith.divf %31, %32 : vector<8x256xf32>
    %34 = arith.truncf %33 : vector<8x256xf32> to vector<8x256xbf16>
    %c0_16 = arith.constant 0 : index
    %c0_17 = arith.constant 0 : index
    %35 = vector.load %arg5[%c0_16, %c0_17] : memref<256x128xbf16, #tpu.memory_space<vmem>>, vector<256x128xbf16>
    %cst_18 = arith.constant dense<0.000000e+00> : vector<8x128xf32>
    %36 = tpu.matmul %34, %35, %cst_18 {dimension_numbers = #tpu.dot_dimension_numbers<[1], [0], [0], [1], [0, 0, 1, 1], [], []>} : vector<8x256xbf16>, vector<256x128xbf16>, vector<8x128xf32> -> vector<8x128xf32>
    %c3 = arith.constant 3 : index
    %c0_19 = arith.constant 0 : index
    %37 = vector.load %arg10[%c3, %c0_19] : memref<8x1024xf32, #tpu.memory_space<vmem>>, vector<1x128xf32>
    %38 = vector.broadcast %37 : vector<1x128xf32> to vector<8x128xf32>
    %39 = arith.addf %36, %38 : vector<8x128xf32>
    %40 = arith.truncf %39 : vector<8x128xf32> to vector<8x128xbf16>
    %c0_20 = arith.constant 0 : index
    %c0_21 = arith.constant 0 : index
    %41 = vector.load %arg6[%c0_20, %c0_21] : memref<128x256xbf16, #tpu.memory_space<vmem>>, vector<128x256xbf16>
    %cst_22 = arith.constant dense<0.000000e+00> : vector<8x256xf32>
    %42 = tpu.matmul %40, %41, %cst_22 {dimension_numbers = #tpu.dot_dimension_numbers<[1], [0], [0], [1], [0, 0, 1, 1], [], []>} : vector<8x128xbf16>, vector<128x256xbf16>, vector<8x256xf32> -> vector<8x256xf32>
    %c4 = arith.constant 4 : index
    %c0_23 = arith.constant 0 : index
    %43 = vector.load %arg10[%c4, %c0_23] : memref<8x1024xf32, #tpu.memory_space<vmem>>, vector<1x256xf32>
    %44 = vector.broadcast %43 : vector<1x256xf32> to vector<8x256xf32>
    %45 = arith.addf %42, %44 : vector<8x256xf32>
    %46 = arith.negf %45 : vector<8x256xf32>
    %47 = math.exp %46 : vector<8x256xf32>
    %cst_24 = arith.constant 1.000000e+00 : f32
    %48 = vector.broadcast %cst_24 : f32 to vector<8x256xf32>
    %49 = arith.addf %48, %47 : vector<8x256xf32>
    %50 = arith.divf %48, %49 : vector<8x256xf32>
    %51 = arith.truncf %50 : vector<8x256xf32> to vector<8x256xbf16>
    %c0_25 = arith.constant 0 : index
    %c0_26 = arith.constant 0 : index
    %52 = vector.load %arg7[%c0_25, %c0_26] : memref<256x512xbf16, #tpu.memory_space<vmem>>, vector<256x512xbf16>
    %cst_27 = arith.constant dense<0.000000e+00> : vector<8x512xf32>
    %53 = tpu.matmul %51, %52, %cst_27 {dimension_numbers = #tpu.dot_dimension_numbers<[1], [0], [0], [1], [0, 0, 1, 1], [], []>} : vector<8x256xbf16>, vector<256x512xbf16>, vector<8x512xf32> -> vector<8x512xf32>
    %c5 = arith.constant 5 : index
    %c0_28 = arith.constant 0 : index
    %54 = vector.load %arg10[%c5, %c0_28] : memref<8x1024xf32, #tpu.memory_space<vmem>>, vector<1x512xf32>
    %55 = vector.broadcast %54 : vector<1x512xf32> to vector<8x512xf32>
    %56 = arith.addf %53, %55 : vector<8x512xf32>
    %57 = arith.negf %56 : vector<8x512xf32>
    %58 = math.exp %57 : vector<8x512xf32>
    %cst_29 = arith.constant 1.000000e+00 : f32
    %59 = vector.broadcast %cst_29 : f32 to vector<8x512xf32>
    %60 = arith.addf %59, %58 : vector<8x512xf32>
    %61 = arith.divf %59, %60 : vector<8x512xf32>
    %62 = arith.truncf %61 : vector<8x512xf32> to vector<8x512xbf16>
    %c0_30 = arith.constant 0 : index
    %c0_31 = arith.constant 0 : index
    %63 = vector.load %arg8[%c0_30, %c0_31] : memref<512x1024xbf16, #tpu.memory_space<vmem>>, vector<512x1024xbf16>
    %cst_32 = arith.constant dense<0.000000e+00> : vector<8x1024xf32>
    %64 = tpu.matmul %62, %63, %cst_32 {dimension_numbers = #tpu.dot_dimension_numbers<[1], [0], [0], [1], [0, 0, 1, 1], [], []>} : vector<8x512xbf16>, vector<512x1024xbf16>, vector<8x1024xf32> -> vector<8x1024xf32>
    %c6 = arith.constant 6 : index
    %c0_33 = arith.constant 0 : index
    %65 = vector.load %arg10[%c6, %c0_33] : memref<8x1024xf32, #tpu.memory_space<vmem>>, vector<1x1024xf32>
    %66 = vector.broadcast %65 : vector<1x1024xf32> to vector<8x1024xf32>
    %67 = arith.addf %64, %66 : vector<8x1024xf32>
    %68 = arith.negf %67 : vector<8x1024xf32>
    %69 = math.exp %68 : vector<8x1024xf32>
    %cst_34 = arith.constant 1.000000e+00 : f32
    %70 = vector.broadcast %cst_34 : f32 to vector<8x1024xf32>
    %71 = arith.addf %70, %69 : vector<8x1024xf32>
    %72 = arith.divf %70, %71 : vector<8x1024xf32>
    %73 = arith.truncf %72 : vector<8x1024xf32> to vector<8x1024xbf16>
    %c0_35 = arith.constant 0 : index
    %c0_36 = arith.constant 0 : index
    %74 = vector.load %arg9[%c0_35, %c0_36] : memref<1024x896xbf16, #tpu.memory_space<vmem>>, vector<1024x896xbf16>
    %cst_37 = arith.constant dense<0.000000e+00> : vector<8x896xf32>
    %75 = tpu.matmul %73, %74, %cst_37 {dimension_numbers = #tpu.dot_dimension_numbers<[1], [0], [0], [1], [0, 0, 1, 1], [], []>} : vector<8x1024xbf16>, vector<1024x896xbf16>, vector<8x896xf32> -> vector<8x896xf32>
    %c7 = arith.constant 7 : index
    %c0_38 = arith.constant 0 : index
    %76 = vector.load %arg10[%c7, %c0_38] : memref<8x1024xf32, #tpu.memory_space<vmem>>, vector<1x896xf32>
    %77 = vector.broadcast %76 : vector<1x896xf32> to vector<8x896xf32>
    %78 = arith.addf %75, %77 : vector<8x896xf32>
    %79 = arith.negf %78 : vector<8x896xf32>
    %80 = math.exp %79 : vector<8x896xf32>
    %cst_39 = arith.constant 1.000000e+00 : f32
    %81 = vector.broadcast %cst_39 : f32 to vector<8x896xf32>
    %82 = arith.addf %81, %80 : vector<8x896xf32>
    %83 = arith.divf %81, %82 : vector<8x896xf32>
    %c0_40 = arith.constant 0 : index
    %c0_41 = arith.constant 0 : index
    %84 = vector.load %arg11[%c0_40, %c0_41] : memref<8x896xf32, #tpu.memory_space<vmem>>, vector<8x896xf32>
    tpu.vector_store %arg11[%c0_40, %c0_41], %83 {strides = array<i32>} : memref<8x896xf32, #tpu.memory_space<vmem>>, vector<8x896xf32>,
    return
  }
  func.func @transform_0(%arg0: i32) -> (i32, i32) {
    %c0_i32 = arith.constant 0 : i32
    %c0_i32_0 = arith.constant 0 : i32
    return %arg0, %c0_i32 : i32, i32
  }
  func.func @transform_1(%arg0: i32) -> (i32, i32) {
    %c0_i32 = arith.constant 0 : i32
    %c0_i32_0 = arith.constant 0 : i32
    %c0_i32_1 = arith.constant 0 : i32
    return %c0_i32, %c0_i32_0 : i32, i32
  }
  func.func @transform_2(%arg0: i32) -> (i32, i32) {
    %c0_i32 = arith.constant 0 : i32
    %c0_i32_0 = arith.constant 0 : i32
    %c0_i32_1 = arith.constant 0 : i32
    return %c0_i32, %c0_i32_0 : i32, i32
  }
  func.func @transform_3(%arg0: i32) -> (i32, i32) {
    %c0_i32 = arith.constant 0 : i32
    %c0_i32_0 = arith.constant 0 : i32
    %c0_i32_1 = arith.constant 0 : i32
    return %c0_i32, %c0_i32_0 : i32, i32
  }
  func.func @transform_4(%arg0: i32) -> (i32, i32) {
    %c0_i32 = arith.constant 0 : i32
    %c0_i32_0 = arith.constant 0 : i32
    %c0_i32_1 = arith.constant 0 : i32
    return %c0_i32, %c0_i32_0 : i32, i32
  }
  func.func @transform_5(%arg0: i32) -> (i32, i32) {
    %c0_i32 = arith.constant 0 : i32
    %c0_i32_0 = arith.constant 0 : i32
    %c0_i32_1 = arith.constant 0 : i32
    return %c0_i32, %c0_i32_0 : i32, i32
  }
  func.func @transform_6(%arg0: i32) -> (i32, i32) {
    %c0_i32 = arith.constant 0 : i32
    %c0_i32_0 = arith.constant 0 : i32
    %c0_i32_1 = arith.constant 0 : i32
    return %c0_i32, %c0_i32_0 : i32, i32
  }
  func.func @transform_7(%arg0: i32) -> (i32, i32) {
    %c0_i32 = arith.constant 0 : i32
    %c0_i32_0 = arith.constant 0 : i32
    %c0_i32_1 = arith.constant 0 : i32
    return %c0_i32, %c0_i32_0 : i32, i32
  }
  func.func @transform_8(%arg0: i32) -> (i32, i32) {
    %c0_i32 = arith.constant 0 : i32
    %c0_i32_0 = arith.constant 0 : i32
    %c0_i32_1 = arith.constant 0 : i32
    return %c0_i32, %c0_i32_0 : i32, i32
  }
  func.func @transform_9(%arg0: i32) -> (i32, i32) {
    %c0_i32 = arith.constant 0 : i32
    %c0_i32_0 = arith.constant 0 : i32
    %c0_i32_1 = arith.constant 0 : i32
    return %c0_i32, %c0_i32_0 : i32, i32
  }
  func.func @transform_10(%arg0: i32) -> (i32, i32) {
    %c0_i32 = arith.constant 0 : i32
    %c0_i32_0 = arith.constant 0 : i32
    return %arg0, %c0_i32 : i32, i32
  }
}

</mosaic_0001>

<llo_original>
// kernel: ae_forward.1
$region0: #{ae_forward.1}
  #allocation0 [shape = 'u32[]', space=smem, size = 0x4, offset = 0x4, fixed_abs, tag = 'smem constant byte address 0x4 - core index']
  #allocation1 [shape = 'u32[72,128]{1,0:T(1,128)}', space=vmem, size = 0x9000, scoped, tag = 'internal scratch']
  %s0 = inlined_call_operand.vmem [shape: f32[8,896], index: 0, kind: input, shape index: {}]
  %s1 = inlined_call_operand.hbm [shape: bf16[896,1024], index: 1, kind: input, shape index: {}]
  %s2 = inlined_call_operand.hbm [shape: bf16[1024,512], index: 2, kind: input, shape index: {}]
  %s3 = inlined_call_operand.hbm [shape: bf16[512,256], index: 3, kind: input, shape index: {}]
  %s4 = inlined_call_operand.hbm [shape: bf16[256,128], index: 4, kind: input, shape index: {}]
  %s5 = inlined_call_operand.hbm [shape: bf16[128,256], index: 5, kind: input, shape index: {}]
  %s6 = inlined_call_operand.hbm [shape: bf16[256,512], index: 6, kind: input, shape index: {}]
  %s7 = inlined_call_operand.hbm [shape: bf16[512,1024], index: 7, kind: input, shape index: {}]
  %s8 = inlined_call_operand.hbm [shape: bf16[1024,896], index: 8, kind: input, shape index: {}]
  %s9 = inlined_call_operand.hbm [shape: f32[8,1024], index: 9, kind: input, shape index: {}]
  %s10 = inlined_call_operand.vmem [shape: f32[8,896], index: 10, kind: output, shape index: {}]
  %s11 = sld [smem:[#allocation0]]
  $region86: #{ae_forward.1} parent=0
    _
  %s13 = ssub.s32 1, %s11
  %s14 = scalar_select 0, %s13, %s11
  $region1: #{ae_forward.1} parent=0
    #allocation2 [shape = 'u8[1835008]{0}', space=vmem, size = 0x1c0000, scoped, tag = 'input window, operand 1, single buffered']
    #allocation3 [shape = 's32[1]{0}', space=sflag, size = 0x4, scoped, tag = 'scoped memory for ae_forward.1']
    #allocation4 [shape = 'u8[1048576]{0}', space=vmem, size = 0x100000, scoped, tag = 'input window, operand 2, single buffered']
    #allocation5 [shape = 's32[1]{0}', space=sflag, size = 0x4, scoped, tag = 'scoped memory for ae_forward.1']
    #allocation6 [shape = 'u8[262144]{0}', space=vmem, size = 0x40000, scoped, tag = 'input window, operand 3, single buffered']
    #allocation7 [shape = 'u8[65536]{0}', space=vmem, size = 0x10000, scoped, tag = 'input window, operand 4, single buffered']
    #allocation8 [shape = 's32[1]{0}', space=sflag, size = 0x4, scoped, tag = 'scoped memory for ae_forward.1']
    #allocation9 [shape = 'u8[65536]{0}', space=vmem, size = 0x10000, scoped, tag = 'input window, operand 5, single buffered']
    #allocation10 [shape = 'u8[262144]{0}', space=vmem, size = 0x40000, scoped, tag = 'input window, operand 6, single buffered']
    #allocation11 [shape = 's32[1]{0}', space=sflag, size = 0x4, scoped, tag = 'scoped memory for ae_forward.1']
    #allocation12 [shape = 'u8[1048576]{0}', space=vmem, size = 0x100000, scoped, tag = 'input window, operand 7, single buffered']
    #allocation13 [shape = 'u8[1835008]{0}', space=vmem, size = 0x1c0000, scoped, tag = 'input window, operand 8, single buffered']
    #allocation14 [shape = 's32[1]{0}', space=sflag, size = 0x4, scoped, tag = 'scoped memory for ae_forward.1']
    #allocation15 [shape = 'u8[32768]{0}', space=vmem, size = 0x8000, scoped, tag = 'input window, operand 9, single buffered']
    %15 = vsyncpa [#allocation3], 0
    %16 = vsyncpa [#allocation5], 0
    %17 = vsyncpa [#allocation8], 0
    %18 = vsyncpa [#allocation11], 0
    %19 = vsyncpa [#allocation14], 0
    // Predicated region
    $region2: #{ae_forward.1} parent=1 // pred_check
      _
    $region3: #{ae_forward.1} parent=1 // pred_check_branch
      %21 = sbr.rel (0) target = $region5
    $region4: #{ae_forward.1} parent=1 // pred_region
      _
    $region5: #{ae_forward.1} parent=1 // pred_fallthru
      _
    // Predicated region
    $region6: #{ae_forward.1} parent=1 // pred_check
      _
    $region7: #{ae_forward.1} parent=1 // pred_check_branch
      %23 = sbr.rel (0) target = $region9
    $region8: #{ae_forward.1} parent=1 // pred_region
      %25 = vsyncadd [#allocation3], 0
      %s26 = sshll.u32 %s1, 4
      %s27 = int_to_ptr.hbm [resolvable:$true] %s26
      %s28 = sshll.u32 [#allocation2], 4
      %s29 = int_to_ptr.vmem [resolvable:$true] %s28
      %34 = dma.hbm_to_vmem [thread:$0]  %s27, 57344, %s29, [#allocation3], 512, 512, 32
    $region9: #{ae_forward.1} parent=1 // pred_fallthru
      _
    // Predicated region
    $region10: #{ae_forward.1} parent=1 // pred_check
      _
    $region11: #{ae_forward.1} parent=1 // pred_check_branch
      %36 = sbr.rel (0) target = $region13
    $region12: #{ae_forward.1} parent=1 // pred_region
      %38 = vsyncadd [#allocation5], 0
      %s39 = sshll.u32 %s2, 4
      %s40 = int_to_ptr.hbm [resolvable:$true] %s39
      %s41 = sshll.u32 [#allocation4], 4
      %s42 = int_to_ptr.vmem [resolvable:$true] %s41
      %47 = dma.hbm_to_vmem [thread:$0]  %s40, 32768, %s42, [#allocation5], 256, 256, 16
    $region13: #{ae_forward.1} parent=1 // pred_fallthru
      _
    // Predicated region
    $region14: #{ae_forward.1} parent=1 // pred_check
      _
    $region15: #{ae_forward.1} parent=1 // pred_check_branch
      %49 = sbr.rel (0) target = $region17
    $region16: #{ae_forward.1} parent=1 // pred_region
      %51 = vsyncadd [#allocation5], 0
      %s52 = sshll.u32 %s3, 4
      %s53 = int_to_ptr.hbm [resolvable:$true] %s52
      %s54 = sshll.u32 [#allocation6], 4
      %s55 = int_to_ptr.vmem [resolvable:$true] %s54
      %60 = dma.hbm_to_vmem [thread:$0]  %s53, 8192, %s55, [#allocation5], 128, 128, 8
    $region17: #{ae_forward.1} parent=1 // pred_fallthru
      _
    // Predicated region
    $region18: #{ae_forward.1} parent=1 // pred_check
      _
    $region19: #{ae_forward.1} parent=1 // pred_check_branch
      %62 = sbr.rel (0) target = $region21
    $region20: #{ae_forward.1} parent=1 // pred_region
      %64 = vsyncadd [#allocation8], 0
      %s65 = sshll.u32 %s4, 4
      %s66 = int_to_ptr.hbm [resolvable:$true] %s65
      %s67 = sshll.u32 [#allocation7], 4
      %s68 = int_to_ptr.vmem [resolvable:$true] %s67
      %73 = dma.hbm_to_vmem [thread:$0]  %s66, 2048, %s68, [#allocation8], 64, 64, 4
    $region21: #{ae_forward.1} parent=1 // pred_fallthru
      _
    // Predicated region
    $region22: #{ae_forward.1} parent=1 // pred_check
      _
    $region23: #{ae_forward.1} parent=1 // pred_check_branch
      %75 = sbr.rel (0) target = $region25
    $region24: #{ae_forward.1} parent=1 // pred_region
      %77 = vsyncadd [#allocation8], 0
      %s78 = sshll.u32 %s5, 4
      %s79 = int_to_ptr.hbm [resolvable:$true] %s78
      %s80 = sshll.u32 [#allocation9], 4
      %s81 = int_to_ptr.vmem [resolvable:$true] %s80
      %86 = dma.hbm_to_vmem [thread:$0]  %s79, 2048, %s81, [#allocation8], 128, 128, 8
    $region25: #{ae_forward.1} parent=1 // pred_fallthru
      _
    // Predicated region
    $region26: #{ae_forward.1} parent=1 // pred_check
      _
    $region27: #{ae_forward.1} parent=1 // pred_check_branch
      %88 = sbr.rel (0) target = $region29
    $region28: #{ae_forward.1} parent=1 // pred_region
      %90 = vsyncadd [#allocation11], 0
      %s91 = sshll.u32 %s6, 4
      %s92 = int_to_ptr.hbm [resolvable:$true] %s91
      %s93 = sshll.u32 [#allocation10], 4
      %s94 = int_to_ptr.vmem [resolvable:$true] %s93
      %99 = dma.hbm_to_vmem [thread:$0]  %s92, 8192, %s94, [#allocation11], 256, 256, 16
    $region29: #{ae_forward.1} parent=1 // pred_fallthru
      _
    // Predicated region
    $region30: #{ae_forward.1} parent=1 // pred_check
      _
    $region31: #{ae_forward.1} parent=1 // pred_check_branch
      %101 = sbr.rel (0) target = $region33
    $region32: #{ae_forward.1} parent=1 // pred_region
      %103 = vsyncadd [#allocation11], 0
      %s104 = sshll.u32 %s7, 4
      %s105 = int_to_ptr.hbm [resolvable:$true] %s104
      %s106 = sshll.u32 [#allocation12], 4
      %s107 = int_to_ptr.vmem [resolvable:$true] %s106
      %112 = dma.hbm_to_vmem [thread:$0]  %s105, 32768, %s107, [#allocation11], 512, 512, 32
    $region33: #{ae_forward.1} parent=1 // pred_fallthru
      _
    // Predicated region
    $region34: #{ae_forward.1} parent=1 // pred_check
      _
    $region35: #{ae_forward.1} parent=1 // pred_check_branch
      %114 = sbr.rel (0) target = $region37
    $region36: #{ae_forward.1} parent=1 // pred_region
      %116 = vsyncadd [#allocation14], 0
      %s117 = sshll.u32 %s8, 4
      %s118 = int_to_ptr.hbm [resolvable:$true] %s117
      %s119 = sshll.u32 [#allocation13], 4
      %s120 = int_to_ptr.vmem [resolvable:$true] %s119
      %125 = dma.hbm_to_vmem [thread:$0]  %s118, 57344, %s120, [#allocation14], 448, 448, 28
    $region37: #{ae_forward.1} parent=1 // pred_fallthru
      _
    // Predicated region
    $region38: #{ae_forward.1} parent=1 // pred_check
      _
    $region39: #{ae_forward.1} parent=1 // pred_check_branch
      %127 = sbr.rel (0) target = $region41
    $region40: #{ae_forward.1} parent=1 // pred_region
      %129 = vsyncadd [#allocation14], 0
      %s131 = sshll.u32 %s9, 4
      %s132 = int_to_ptr.hbm [resolvable:$true] %s131
      %s133 = sshll.u32 [#allocation15], 4
      %s134 = int_to_ptr.vmem [resolvable:$true] %s133
      %136 = dma.hbm_to_vmem [thread:$0]  %s132, 1024, %s134, [#allocation14]
    $region41: #{ae_forward.1} parent=1 // pred_fallthru
      _
    // Predicated region
    $region42: #{ae_forward.1} parent=1 // pred_check
      _
    $region43: #{ae_forward.1} parent=1 // pred_check_branch
      %138 = sbr.rel (0) target = $region45
    $region44: #{ae_forward.1} parent=1 // pred_region
      %140 = dma.done [#allocation3], 57344
    $region45: #{ae_forward.1} parent=1 // pred_fallthru
      _
    // Predicated region
    $region46: #{ae_forward.1} parent=1 // pred_check
      _
    $region47: #{ae_forward.1} parent=1 // pred_check_branch
      %142 = sbr.rel (0) target = $region49
    $region48: #{ae_forward.1} parent=1 // pred_region
      %144 = dma.done [#allocation5], 32768
    $region49: #{ae_forward.1} parent=1 // pred_fallthru
      _
    // Predicated region
    $region50: #{ae_forward.1} parent=1 // pred_check
      _
    $region51: #{ae_forward.1} parent=1 // pred_check_branch
      %146 = sbr.rel (0) target = $region53
    $region52: #{ae_forward.1} parent=1 // pred_region
      %148 = dma.done [#allocation5], 8192
    $region53: #{ae_forward.1} parent=1 // pred_fallthru
      _
    // Predicated region
    $region54: #{ae_forward.1} parent=1 // pred_check
      _
    $region55: #{ae_forward.1} parent=1 // pred_check_branch
      %150 = sbr.rel (0) target = $region57
    $region56: #{ae_forward.1} parent=1 // pred_region
      %152 = dma.done [#allocation8], 2048
    $region57: #{ae_forward.1} parent=1 // pred_fallthru
      _
    // Predicated region
    $region58: #{ae_forward.1} parent=1 // pred_check
      _
    $region59: #{ae_forward.1} parent=1 // pred_check_branch
      %154 = sbr.rel (0) target = $region61
    $region60: #{ae_forward.1} parent=1 // pred_region
      %156 = dma.done [#allocation8], 2048
    $region61: #{ae_forward.1} parent=1 // pred_fallthru
      _
    // Predicated region
    $region62: #{ae_forward.1} parent=1 // pred_check
      _
    $region63: #{ae_forward.1} parent=1 // pred_check_branch
      %158 = sbr.rel (0) target = $region65
    $region64: #{ae_forward.1} parent=1 // pred_region
      %160 = dma.done [#allocation11], 8192
    $region65: #{ae_forward.1} parent=1 // pred_fallthru
      _
    // Predicated region
    $region66: #{ae_forward.1} parent=1 // pred_check
      _
    $region67: #{ae_forward.1} parent=1 // pred_check_branch
      %162 = sbr.rel (0) target = $region69
    $region68: #{ae_forward.1} parent=1 // pred_region
      %164 = dma.done [#allocation11], 32768
    $region69: #{ae_forward.1} parent=1 // pred_fallthru
      _
    // Predicated region
    $region70: #{ae_forward.1} parent=1 // pred_check
      _
    $region71: #{ae_forward.1} parent=1 // pred_check_branch
      %166 = sbr.rel (0) target = $region73
    $region72: #{ae_forward.1} parent=1 // pred_region
      %168 = dma.done [#allocation14], 57344
    $region73: #{ae_forward.1} parent=1 // pred_fallthru
      _
    // Predicated region
    $region74: #{ae_forward.1} parent=1 // pred_check
      _
    $region75: #{ae_forward.1} parent=1 // pred_check_branch
      %170 = sbr.rel (0) target = $region77
    $region76: #{ae_forward.1} parent=1 // pred_region
      %172 = dma.done [#allocation14], 1024
    $region77: #{ae_forward.1} parent=1 // pred_fallthru
      _
    %v173 = vld [vmem:[%s0] sm:$0xff]
    %v174 = vld [vmem:[%s0 + $0x8] sm:$0xff]
    %v175 = vld [vmem:[%s0 + $0x10] sm:$0xff]
    %v176 = vld [vmem:[%s0 + $0x18] sm:$0xff]
    %v177 = vld [vmem:[%s0 + $0x20] sm:$0xff]
    %v178 = vld [vmem:[%s0 + $0x28] sm:$0xff]
    %v179 = vld [vmem:[%s0 + $0x30] sm:$0xff]
    %v180 = vpack.c.bf16 %v173, %v173
    %v181 = vpack.c.bf16 %v174, %v174
    %v182 = vpack.c.bf16 %v175, %v175
    %v183 = vpack.c.bf16 %v176, %v176
    %v184 = vpack.c.bf16 %v177, %v177
    %v185 = vpack.c.bf16 %v178, %v178
    %v186 = vpack.c.bf16 %v179, %v179
    %v187 = vld [vmem:[#allocation2] sm:$0xff]
    %v188 = vld [vmem:[#allocation2 + $0x8] sm:$0xff]
    %v189 = vld [vmem:[#allocation2 + $0x10] sm:$0xff]
    %v190 = vld [vmem:[#allocation2 + $0x18] sm:$0xff]
    %v191 = vld [vmem:[#allocation2 + $0x20] sm:$0xff]
    %v192 = vld [vmem:[#allocation2 + $0x28] sm:$0xff]
    %v193 = vld [vmem:[#allocation2 + $0x30] sm:$0xff]
    %v194 = vld [vmem:[#allocation2 + $0x38] sm:$0xff]
    %v195 = vld [vmem:[#allocation2 + $0x40] sm:$0xff]
    %v196 = vld [vmem:[#allocation2 + $0x48] sm:$0xff]
    %v197 = vld [vmem:[#allocation2 + $0x50] sm:$0xff]
    %v198 = vld [vmem:[#allocation2 + $0x58] sm:$0xff]
    %v199 = vld [vmem:[#allocation2 + $0x60] sm:$0xff]
    %v200 = vld [vmem:[#allocation2 + $0x68] sm:$0xff]
    %v201 = vld [vmem:[#allocation2 + $0x70] sm:$0xff]
    %v202 = vld [vmem:[#allocation2 + $0x78] sm:$0xff]
    %v203 = vld [vmem:[#allocation2 + $0x80] sm:$0xff]
    %v204 = vld [vmem:[#allocation2 + $0x88] sm:$0xff]
    %v205 = vld [vmem:[#allocation2 + $0x90] sm:$0xff]
    %v206 = vld [vmem:[#allocation2 + $0x98] sm:$0xff]
    %v207 = vld [vmem:[#allocation2 + $0xa0] sm:$0xff]
    %v208 = vld [vmem:[#allocation2 + $0xa8] sm:$0xff]
    %v209 = vld [vmem:[#allocation2 + $0xb0] sm:$0xff]
    %v210 = vld [vmem:[#allocation2 + $0xb8] sm:$0xff]
    %v211 = vld [vmem:[#allocation2 + $0xc0] sm:$0xff]
    %v212 = vld [vmem:[#allocation2 + $0xc8] sm:$0xff]
    %v213 = vld [vmem:[#allocation2 + $0xd0] sm:$0xff]
    %v214 = vld [vmem:[#allocation2 + $0xd8] sm:$0xff]
    %v215 = vld [vmem:[#allocation2 + $0xe0] sm:$0xff]
    %v216 = vld [vmem:[#allocation2 + $0xe8] sm:$0xff]
    %v217 = vld [vmem:[#allocation2 + $0xf0] sm:$0xff]
    %v218 = vld [vmem:[#allocation2 + $0xf8] sm:$0xff]
    %v219 = vld [vmem:[#allocation2 + $0x100] sm:$0xff]
    %v220 = vld [vmem:[#allocation2 + $0x108] sm:$0xff]
    %v221 = vld [vmem:[#allocation2 + $0x110] sm:$0xff]
    %v222 = vld [vmem:[#allocation2 + $0x118] sm:$0xff]
    %v223 = vld [vmem:[#allocation2 + $0x120] sm:$0xff]
    %v224 = vld [vmem:[#allocation2 + $0x128] sm:$0xff]
    %v225 = vld [vmem:[#allocation2 + $0x130] sm:$0xff]
    %v226 = vld [vmem:[#allocation2 + $0x138] sm:$0xff]
    %v227 = vld [vmem:[#allocation2 + $0x140] sm:$0xff]
    %v228 = vld [vmem:[#allocation2 + $0x148] sm:$0xff]
    %v229 = vld [vmem:[#allocation2 + $0x150] sm:$0xff]
    %v230 = vld [vmem:[#allocation2 + $0x158] sm:$0xff]
    %v231 = vld [vmem:[#allocation2 + $0x160] sm:$0xff]
    %v232 = vld [vmem:[#allocation2 + $0x168] sm:$0xff]
    %v233 = vld [vmem:[#allocation2 + $0x170] sm:$0xff]
    %v234 = vld [vmem:[#allocation2 + $0x178] sm:$0xff]
    %v235 = vld [vmem:[#allocation2 + $0x180] sm:$0xff]
    %v236 = vld [vmem:[#allocation2 + $0x188] sm:$0xff]
    %v237 = vld [vmem:[#allocation2 + $0x190] sm:$0xff]
    %v238 = vld [vmem:[#allocation2 + $0x198] sm:$0xff]
    %v239 = vld [vmem:[#allocation2 + $0x1a0] sm:$0xff]
    %v240 = vld [vmem:[#allocation2 + $0x1a8] sm:$0xff]
    %v241 = vld [vmem:[#allocation2 + $0x1b0] sm:$0xff]
    %v242 = vld [vmem:[#allocation2 + $0x1b8] sm:$0xff]
    %v243 = vld [vmem:[#allocation2 + $0x1c0] sm:$0xff]
    %v244 = vld [vmem:[#allocation2 + $0x1c8] sm:$0xff]
    %v245 = vld [vmem:[#allocation2 + $0x1d0] sm:$0xff]
    %v246 = vld [vmem:[#allocation2 + $0x1d8] sm:$0xff]
    %v247 = vld [vmem:[#allocation2 + $0x1e0] sm:$0xff]
    %v248 = vld [vmem:[#allocation2 + $0x1e8] sm:$0xff]
    %v249 = vld [vmem:[#allocation2 + $0x1f0] sm:$0xff]
    %v250 = vld [vmem:[#allocation2 + $0x1f8] sm:$0xff]
    %v251 = vld [vmem:[#allocation2 + $0x200] sm:$0xff]
    %v252 = vld [vmem:[#allocation2 + $0x208] sm:$0xff]
    %v253 = vld [vmem:[#allocation2 + $0x210] sm:$0xff]
    %v254 = vld [vmem:[#allocation2 + $0x218] sm:$0xff]
    %v255 = vld [vmem:[#allocation2 + $0x220] sm:$0xff]
    %v256 = vld [vmem:[#allocation2 + $0x228] sm:$0xff]
    %v257 = vld [vmem:[#allocation2 + $0x230] sm:$0xff]
    %v258 = vld [vmem:[#allocation2 + $0x238] sm:$0xff]
    %v259 = vld [vmem:[#allocation2 + $0x240] sm:$0xff]
    %v260 = vld [vmem:[#allocation2 + $0x248] sm:$0xff]
    %v261 = vld [vmem:[#allocation2 + $0x250] sm:$0xff]
    %v262 = vld [vmem:[#allocation2 + $0x258] sm:$0xff]
    %v263 = vld [vmem:[#allocation2 + $0x260] sm:$0xff]
    %v264 = vld [vmem:[#allocation2 + $0x268] sm:$0xff]
    %v265 = vld [vmem:[#allocation2 + $0x270] sm:$0xff]
    %v266 = vld [vmem:[#allocation2 + $0x278] sm:$0xff]
    %v267 = vld [vmem:[#allocation2 + $0x280] sm:$0xff]
    %v268 = vld [vmem:[#allocation2 + $0x288] sm:$0xff]
    %v269 = vld [vmem:[#allocation2 + $0x290] sm:$0xff]
    %v270 = vld [vmem:[#allocation2 + $0x298] sm:$0xff]
    %v271 = vld [vmem:[#allocation2 + $0x2a0] sm:$0xff]
    %v272 = vld [vmem:[#allocation2 + $0x2a8] sm:$0xff]
    %v273 = vld [vmem:[#allocation2 + $0x2b0] sm:$0xff]
    %v274 = vld [vmem:[#allocation2 + $0x2b8] sm:$0xff]
    %v275 = vld [vmem:[#allocation2 + $0x2c0] sm:$0xff]
    %v276 = vld [vmem:[#allocation2 + $0x2c8] sm:$0xff]
    %v277 = vld [vmem:[#allocation2 + $0x2d0] sm:$0xff]
    %v278 = vld [vmem:[#allocation2 + $0x2d8] sm:$0xff]
    %v279 = vld [vmem:[#allocation2 + $0x2e0] sm:$0xff]
    %v280 = vld [vmem:[#allocation2 + $0x2e8] sm:$0xff]
    %v281 = vld [vmem:[#allocation2 + $0x2f0] sm:$0xff]
    %v282 = vld [vmem:[#allocation2 + $0x2f8] sm:$0xff]
    %v283 = vld [vmem:[#allocation2 + $0x300] sm:$0xff]
    %v284 = vld [vmem:[#allocation2 + $0x308] sm:$0xff]
    %v285 = vld [vmem:[#allocation2 + $0x310] sm:$0xff]
    %v286 = vld [vmem:[#allocation2 + $0x318] sm:$0xff]
    %v287 = vld [vmem:[#allocation2 + $0x320] sm:$0xff]
    %v288 = vld [vmem:[#allocation2 + $0x328] sm:$0xff]
    %v289 = vld [vmem:[#allocation2 + $0x330] sm:$0xff]
    %v290 = vld [vmem:[#allocation2 + $0x338] sm:$0xff]
    %v291 = vld [vmem:[#allocation2 + $0x340] sm:$0xff]
    %v292 = vld [vmem:[#allocation2 + $0x348] sm:$0xff]
    %v293 = vld [vmem:[#allocation2 + $0x350] sm:$0xff]
    %v294 = vld [vmem:[#allocation2 + $0x358] sm:$0xff]
    %v295 = vld [vmem:[#allocation2 + $0x360] sm:$0xff]
    %v296 = vld [vmem:[#allocation2 + $0x368] sm:$0xff]
    %v297 = vld [vmem:[#allocation2 + $0x370] sm:$0xff]
    %v298 = vld [vmem:[#allocation2 + $0x378] sm:$0xff]
    %v299 = vld [vmem:[#allocation2 + $0x380] sm:$0xff]
    %v300 = vld [vmem:[#allocation2 + $0x388] sm:$0xff]
    %v301 = vld [vmem:[#allocation2 + $0x390] sm:$0xff]
    %v302 = vld [vmem:[#allocation2 + $0x398] sm:$0xff]
    %v303 = vld [vmem:[#allocation2 + $0x3a0] sm:$0xff]
    %v304 = vld [vmem:[#allocation2 + $0x3a8] sm:$0xff]
    %v305 = vld [vmem:[#allocation2 + $0x3b0] sm:$0xff]
    %v306 = vld [vmem:[#allocation2 + $0x3b8] sm:$0xff]
    %v307 = vld [vmem:[#allocation2 + $0x3c0] sm:$0xff]
    %v308 = vld [vmem:[#allocation2 + $0x3c8] sm:$0xff]
    %v309 = vld [vmem:[#allocation2 + $0x3d0] sm:$0xff]
    %v310 = vld [vmem:[#allocation2 + $0x3d8] sm:$0xff]
    %v311 = vld [vmem:[#allocation2 + $0x3e0] sm:$0xff]
    %v312 = vld [vmem:[#allocation2 + $0x3e8] sm:$0xff]
    %v313 = vld [vmem:[#allocation2 + $0x3f0] sm:$0xff]
    %v314 = vld [vmem:[#allocation2 + $0x3f8] sm:$0xff]
    %v315 = vld [vmem:[#allocation2 + $0x400] sm:$0xff]
    %v316 = vld [vmem:[#allocation2 + $0x408] sm:$0xff]
    %v317 = vld [vmem:[#allocation2 + $0x410] sm:$0xff]
    %v318 = vld [vmem:[#allocation2 + $0x418] sm:$0xff]
    %v319 = vld [vmem:[#allocation2 + $0x420] sm:$0xff]
    %v320 = vld [vmem:[#allocation2 + $0x428] sm:$0xff]
    %v321 = vld [vmem:[#allocation2 + $0x430] sm:$0xff]
    %v322 = vld [vmem:[#allocation2 + $0x438] sm:$0xff]
    %v323 = vld [vmem:[#allocation2 + $0x440] sm:$0xff]
    %v324 = vld [vmem:[#allocation2 + $0x448] sm:$0xff]
    %v325 = vld [vmem:[#allocation2 + $0x450] sm:$0xff]
    %v326 = vld [vmem:[#allocation2 + $0x458] sm:$0xff]
    %v327 = vld [vmem:[#allocation2 + $0x460] sm:$0xff]
    %v328 = vld [vmem:[#allocation2 + $0x468] sm:$0xff]
    %v329 = vld [vmem:[#allocation2 + $0x470] sm:$0xff]
    %v330 = vld [vmem:[#allocation2 + $0x478] sm:$0xff]
    %v331 = vld [vmem:[#allocation2 + $0x480] sm:$0xff]
    %v332 = vld [vmem:[#allocation2 + $0x488] sm:$0xff]
    %v333 = vld [vmem:[#allocation2 + $0x490] sm:$0xff]
    %v334 = vld [vmem:[#allocation2 + $0x498] sm:$0xff]
    %v335 = vld [vmem:[#allocation2 + $0x4a0] sm:$0xff]
    %v336 = vld [vmem:[#allocation2 + $0x4a8] sm:$0xff]
    %v337 = vld [vmem:[#allocation2 + $0x4b0] sm:$0xff]
    %v338 = vld [vmem:[#allocation2 + $0x4b8] sm:$0xff]
    %v339 = vld [vmem:[#allocation2 + $0x4c0] sm:$0xff]
    %v340 = vld [vmem:[#allocation2 + $0x4c8] sm:$0xff]
    %v341 = vld [vmem:[#allocation2 + $0x4d0] sm:$0xff]
    %v342 = vld [vmem:[#allocation2 + $0x4d8] sm:$0xff]
    %v343 = vld [vmem:[#allocation2 + $0x4e0] sm:$0xff]
    %v344 = vld [vmem:[#allocation2 + $0x4e8] sm:$0xff]
    %v345 = vld [vmem:[#allocation2 + $0x4f0] sm:$0xff]
    %v346 = vld [vmem:[#allocation2 + $0x4f8] sm:$0xff]
    %v347 = vld [vmem:[#allocation2 + $0x500] sm:$0xff]
    %v348 = vld [vmem:[#allocation2 + $0x508] sm:$0xff]
    %v349 = vld [vmem:[#allocation2 + $0x510] sm:$0xff]
    %v350 = vld [vmem:[#allocation2 + $0x518] sm:$0xff]
    %v351 = vld [vmem:[#allocation2 + $0x520] sm:$0xff]
    %v352 = vld [vmem:[#allocation2 + $0x528] sm:$0xff]
    %v353 = vld [vmem:[#allocation2 + $0x530] sm:$0xff]
    %v354 = vld [vmem:[#allocation2 + $0x538] sm:$0xff]
    %v355 = vld [vmem:[#allocation2 + $0x540] sm:$0xff]
    %v356 = vld [vmem:[#allocation2 + $0x548] sm:$0xff]
    %v357 = vld [vmem:[#allocation2 + $0x550] sm:$0xff]
    %v358 = vld [vmem:[#allocation2 + $0x558] sm:$0xff]
    %v359 = vld [vmem:[#allocation2 + $0x560] sm:$0xff]
    %v360 = vld [vmem:[#allocation2 + $0x568] sm:$0xff]
    %v361 = vld [vmem:[#allocation2 + $0x570] sm:$0xff]
    %v362 = vld [vmem:[#allocation2 + $0x578] sm:$0xff]
    %v363 = vld [vmem:[#allocation2 + $0x580] sm:$0xff]
    %v364 = vld [vmem:[#allocation2 + $0x588] sm:$0xff]
    %v365 = vld [vmem:[#allocation2 + $0x590] sm:$0xff]
    %v366 = vld [vmem:[#allocation2 + $0x598] sm:$0xff]
    %v367 = vld [vmem:[#allocation2 + $0x5a0] sm:$0xff]
    %v368 = vld [vmem:[#allocation2 + $0x5a8] sm:$0xff]
    %v369 = vld [vmem:[#allocation2 + $0x5b0] sm:$0xff]
    %v370 = vld [vmem:[#allocation2 + $0x5b8] sm:$0xff]
    %v371 = vld [vmem:[#allocation2 + $0x5c0] sm:$0xff]
    %v372 = vld [vmem:[#allocation2 + $0x5c8] sm:$0xff]
    %v373 = vld [vmem:[#allocation2 + $0x5d0] sm:$0xff]
    %v374 = vld [vmem:[#allocation2 + $0x5d8] sm:$0xff]
    %v375 = vld [vmem:[#allocation2 + $0x5e0] sm:$0xff]
    %v376 = vld [vmem:[#allocation2 + $0x5e8] sm:$0xff]
    %v377 = vld [vmem:[#allocation2 + $0x5f0] sm:$0xff]
    %v378 = vld [vmem:[#allocation2 + $0x5f8] sm:$0xff]
    %v379 = vld [vmem:[#allocation2 + $0x600] sm:$0xff]
    %v380 = vld [vmem:[#allocation2 + $0x608] sm:$0xff]
    %v381 = vld [vmem:[#allocation2 + $0x610] sm:$0xff]
    %v382 = vld [vmem:[#allocation2 + $0x618] sm:$0xff]
    %v383 = vld [vmem:[#allocation2 + $0x620] sm:$0xff]
    %v384 = vld [vmem:[#allocation2 + $0x628] sm:$0xff]
    %v385 = vld [vmem:[#allocation2 + $0x630] sm:$0xff]
    %v386 = vld [vmem:[#allocation2 + $0x638] sm:$0xff]
    %v387 = vld [vmem:[#allocation2 + $0x640] sm:$0xff]
    %v388 = vld [vmem:[#allocation2 + $0x648] sm:$0xff]
    %v389 = vld [vmem:[#allocation2 + $0x650] sm:$0xff]
    %v390 = vld [vmem:[#allocation2 + $0x658] sm:$0xff]
    %v391 = vld [vmem:[#allocation2 + $0x660] sm:$0xff]
    %v392 = vld [vmem:[#allocation2 + $0x668] sm:$0xff]
    %v393 = vld [vmem:[#allocation2 + $0x670] sm:$0xff]
    %v394 = vld [vmem:[#allocation2 + $0x678] sm:$0xff]
    %v395 = vld [vmem:[#allocation2 + $0x680] sm:$0xff]
    %v396 = vld [vmem:[#allocation2 + $0x688] sm:$0xff]
    %v397 = vld [vmem:[#allocation2 + $0x690] sm:$0xff]
    %v398 = vld [vmem:[#allocation2 + $0x698] sm:$0xff]
    %v399 = vld [vmem:[#allocation2 + $0x6a0] sm:$0xff]
    %v400 = vld [vmem:[#allocation2 + $0x6a8] sm:$0xff]
    %v401 = vld [vmem:[#allocation2 + $0x6b0] sm:$0xff]
    %v402 = vld [vmem:[#allocation2 + $0x6b8] sm:$0xff]
    %v403 = vld [vmem:[#allocation2 + $0x6c0] sm:$0xff]
    %v404 = vld [vmem:[#allocation2 + $0x6c8] sm:$0xff]
    %v405 = vld [vmem:[#allocation2 + $0x6d0] sm:$0xff]
    %v406 = vld [vmem:[#allocation2 + $0x6d8] sm:$0xff]
    %v407 = vld [vmem:[#allocation2 + $0x6e0] sm:$0xff]
    %v408 = vld [vmem:[#allocation2 + $0x6e8] sm:$0xff]
    %v409 = vld [vmem:[#allocation2 + $0x6f0] sm:$0xff]
    %v410 = vld [vmem:[#allocation2 + $0x6f8] sm:$0xff]
    %v411 = vld [vmem:[#allocation2 + $0x700] sm:$0xff]
    %v412 = vld [vmem:[#allocation2 + $0x708] sm:$0xff]
    %v413 = vld [vmem:[#allocation2 + $0x710] sm:$0xff]
    %v414 = vld [vmem:[#allocation2 + $0x718] sm:$0xff]
    %v415 = vld [vmem:[#allocation2 + $0x720] sm:$0xff]
    %v416 = vld [vmem:[#allocation2 + $0x728] sm:$0xff]
    %v417 = vld [vmem:[#allocation2 + $0x730] sm:$0xff]
    %v418 = vld [vmem:[#allocation2 + $0x738] sm:$0xff]
    %v419 = vld [vmem:[#allocation2 + $0x740] sm:$0xff]
    %v420 = vld [vmem:[#allocation2 + $0x748] sm:$0xff]
    %v421 = vld [vmem:[#allocation2 + $0x750] sm:$0xff]
    %v422 = vld [vmem:[#allocation2 + $0x758] sm:$0xff]
    %v423 = vld [vmem:[#allocation2 + $0x760] sm:$0xff]
    %v424 = vld [vmem:[#allocation2 + $0x768] sm:$0xff]
    %v425 = vld [vmem:[#allocation2 + $0x770] sm:$0xff]
    %v426 = vld [vmem:[#allocation2 + $0x778] sm:$0xff]
    %v427 = vld [vmem:[#allocation2 + $0x780] sm:$0xff]
    %v428 = vld [vmem:[#allocation2 + $0x788] sm:$0xff]
    %v429 = vld [vmem:[#allocation2 + $0x790] sm:$0xff]
    %v430 = vld [vmem:[#allocation2 + $0x798] sm:$0xff]
    %v431 = vld [vmem:[#allocation2 + $0x7a0] sm:$0xff]
    %v432 = vld [vmem:[#allocation2 + $0x7a8] sm:$0xff]
    %v433 = vld [vmem:[#allocation2 + $0x7b0] sm:$0xff]
    %v434 = vld [vmem:[#allocation2 + $0x7b8] sm:$0xff]
    %v435 = vld [vmem:[#allocation2 + $0x7c0] sm:$0xff]
    %v436 = vld [vmem:[#allocation2 + $0x7c8] sm:$0xff]
    %v437 = vld [vmem:[#allocation2 + $0x7d0] sm:$0xff]
    %v438 = vld [vmem:[#allocation2 + $0x7d8] sm:$0xff]
    %v439 = vld [vmem:[#allocation2 + $0x7e0] sm:$0xff]
    %v440 = vld [vmem:[#allocation2 + $0x7e8] sm:$0xff]
    %v441 = vld [vmem:[#allocation2 + $0x7f0] sm:$0xff]
    %v442 = vld [vmem:[#allocation2 + $0x7f8] sm:$0xff]
    %v443 = vld [vmem:[#allocation2 + $0x800] sm:$0xff]
    %v444 = vld [vmem:[#allocation2 + $0x808] sm:$0xff]
    %v445 = vld [vmem:[#allocation2 + $0x810] sm:$0xff]
    %v446 = vld [vmem:[#allocation2 + $0x818] sm:$0xff]
    %v447 = vld [vmem:[#allocation2 + $0x820] sm:$0xff]
    %v448 = vld [vmem:[#allocation2 + $0x828] sm:$0xff]
    %v449 = vld [vmem:[#allocation2 + $0x830] sm:$0xff]
    %v450 = vld [vmem:[#allocation2 + $0x838] sm:$0xff]
    %v451 = vld [vmem:[#allocation2 + $0x840] sm:$0xff]
    %v452 = vld [vmem:[#allocation2 + $0x848] sm:$0xff]
    %v453 = vld [vmem:[#allocation2 + $0x850] sm:$0xff]
    %v454 = vld [vmem:[#allocation2 + $0x858] sm:$0xff]
    %v455 = vld [vmem:[#allocation2 + $0x860] sm:$0xff]
    %v456 = vld [vmem:[#allocation2 + $0x868] sm:$0xff]
    %v457 = vld [vmem:[#allocation2 + $0x870] sm:$0xff]
    %v458 = vld [vmem:[#allocation2 + $0x878] sm:$0xff]
    %v459 = vld [vmem:[#allocation2 + $0x880] sm:$0xff]
    %v460 = vld [vmem:[#allocation2 + $0x888] sm:$0xff]
    %v461 = vld [vmem:[#allocation2 + $0x890] sm:$0xff]
    %v462 = vld [vmem:[#allocation2 + $0x898] sm:$0xff]
    %v463 = vld [vmem:[#allocation2 + $0x8a0] sm:$0xff]
    %v464 = vld [vmem:[#allocation2 + $0x8a8] sm:$0xff]
    %v465 = vld [vmem:[#allocation2 + $0x8b0] sm:$0xff]
    %v466 = vld [vmem:[#allocation2 + $0x8b8] sm:$0xff]
    %v467 = vld [vmem:[#allocation2 + $0x8c0] sm:$0xff]
    %v468 = vld [vmem:[#allocation2 + $0x8c8] sm:$0xff]
    %v469 = vld [vmem:[#allocation2 + $0x8d0] sm:$0xff]
    %v470 = vld [vmem:[#allocation2 + $0x8d8] sm:$0xff]
    %v471 = vld [vmem:[#allocation2 + $0x8e0] sm:$0xff]
    %v472 = vld [vmem:[#allocation2 + $0x8e8] sm:$0xff]
    %v473 = vld [vmem:[#allocation2 + $0x8f0] sm:$0xff]
    %v474 = vld [vmem:[#allocation2 + $0x8f8] sm:$0xff]
    %v475 = vld [vmem:[#allocation2 + $0x900] sm:$0xff]
    %v476 = vld [vmem:[#allocation2 + $0x908] sm:$0xff]
    %v477 = vld [vmem:[#allocation2 + $0x910] sm:$0xff]
    %v478 = vld [vmem:[#allocation2 + $0x918] sm:$0xff]
    %v479 = vld [vmem:[#allocation2 + $0x920] sm:$0xff]
    %v480 = vld [vmem:[#allocation2 + $0x928] sm:$0xff]
    %v481 = vld [vmem:[#allocation2 + $0x930] sm:$0xff]
    %v482 = vld [vmem:[#allocation2 + $0x938] sm:$0xff]
    %v483 = vld [vmem:[#allocation2 + $0x940] sm:$0xff]
    %v484 = vld [vmem:[#allocation2 + $0x948] sm:$0xff]
    %v485 = vld [vmem:[#allocation2 + $0x950] sm:$0xff]
    %v486 = vld [vmem:[#allocation2 + $0x958] sm:$0xff]
    %v487 = vld [vmem:[#allocation2 + $0x960] sm:$0xff]
    %v488 = vld [vmem:[#allocation2 + $0x968] sm:$0xff]
    %v489 = vld [vmem:[#allocation2 + $0x970] sm:$0xff]
    %v490 = vld [vmem:[#allocation2 + $0x978] sm:$0xff]
    %v491 = vld [vmem:[#allocation2 + $0x980] sm:$0xff]
    %v492 = vld [vmem:[#allocation2 + $0x988] sm:$0xff]
    %v493 = vld [vmem:[#allocation2 + $0x990] sm:$0xff]
    %v494 = vld [vmem:[#allocation2 + $0x998] sm:$0xff]
    %v495 = vld [vmem:[#allocation2 + $0x9a0] sm:$0xff]
    %v496 = vld [vmem:[#allocation2 + $0x9a8] sm:$0xff]
    %v497 = vld [vmem:[#allocation2 + $0x9b0] sm:$0xff]
    %v498 = vld [vmem:[#allocation2 + $0x9b8] sm:$0xff]
    %v499 = vld [vmem:[#allocation2 + $0x9c0] sm:$0xff]
    %v500 = vld [vmem:[#allocation2 + $0x9c8] sm:$0xff]
    %v501 = vld [vmem:[#allocation2 + $0x9d0] sm:$0xff]
    %v502 = vld [vmem:[#allocation2 + $0x9d8] sm:$0xff]
    %v503 = vld [vmem:[#allocation2 + $0x9e0] sm:$0xff]
    %v504 = vld [vmem:[#allocation2 + $0x9e8] sm:$0xff]
    %v505 = vld [vmem:[#allocation2 + $0x9f0] sm:$0xff]
    %v506 = vld [vmem:[#allocation2 + $0x9f8] sm:$0xff]
    %v507 = vld [vmem:[#allocation2 + $0xa00] sm:$0xff]
    %v508 = vld [vmem:[#allocation2 + $0xa08] sm:$0xff]
    %v509 = vld [vmem:[#allocation2 + $0xa10] sm:$0xff]
    %v510 = vld [vmem:[#allocation2 + $0xa18] sm:$0xff]
    %v511 = vld [vmem:[#allocation2 + $0xa20] sm:$0xff]
    %v512 = vld [vmem:[#allocation2 + $0xa28] sm:$0xff]
    %v513 = vld [vmem:[#allocation2 + $0xa30] sm:$0xff]
    %v514 = vld [vmem:[#allocation2 + $0xa38] sm:$0xff]
    %v515 = vld [vmem:[#allocation2 + $0xa40] sm:$0xff]
    %v516 = vld [vmem:[#allocation2 + $0xa48] sm:$0xff]
    %v517 = vld [vmem:[#allocation2 + $0xa50] sm:$0xff]
    %v518 = vld [vmem:[#allocation2 + $0xa58] sm:$0xff]
    %v519 = vld [vmem:[#allocation2 + $0xa60] sm:$0xff]
    %v520 = vld [vmem:[#allocation2 + $0xa68] sm:$0xff]
    %v521 = vld [vmem:[#allocation2 + $0xa70] sm:$0xff]
    %v522 = vld [vmem:[#allocation2 + $0xa78] sm:$0xff]
    %v523 = vld [vmem:[#allocation2 + $0xa80] sm:$0xff]
    %v524 = vld [vmem:[#allocation2 + $0xa88] sm:$0xff]
    %v525 = vld [vmem:[#allocation2 + $0xa90] sm:$0xff]
    %v526 = vld [vmem:[#allocation2 + $0xa98] sm:$0xff]
    %v527 = vld [vmem:[#allocation2 + $0xaa0] sm:$0xff]
    %v528 = vld [vmem:[#allocation2 + $0xaa8] sm:$0xff]
    %v529 = vld [vmem:[#allocation2 + $0xab0] sm:$0xff]
    %v530 = vld [vmem:[#allocation2 + $0xab8] sm:$0xff]
    %v531 = vld [vmem:[#allocation2 + $0xac0] sm:$0xff]
    %v532 = vld [vmem:[#allocation2 + $0xac8] sm:$0xff]
    %v533 = vld [vmem:[#allocation2 + $0xad0] sm:$0xff]
    %v534 = vld [vmem:[#allocation2 + $0xad8] sm:$0xff]
    %v535 = vld [vmem:[#allocation2 + $0xae0] sm:$0xff]
    %v536 = vld [vmem:[#allocation2 + $0xae8] sm:$0xff]
    %v537 = vld [vmem:[#allocation2 + $0xaf0] sm:$0xff]
    %v538 = vld [vmem:[#allocation2 + $0xaf8] sm:$0xff]
    %v539 = vld [vmem:[#allocation2 + $0xb00] sm:$0xff]
    %v540 = vld [vmem:[#allocation2 + $0xb08] sm:$0xff]
    %v541 = vld [vmem:[#allocation2 + $0xb10] sm:$0xff]
    %v542 = vld [vmem:[#allocation2 + $0xb18] sm:$0xff]
    %v543 = vld [vmem:[#allocation2 + $0xb20] sm:$0xff]
    %v544 = vld [vmem:[#allocation2 + $0xb28] sm:$0xff]
    %v545 = vld [vmem:[#allocation2 + $0xb30] sm:$0xff]
    %v546 = vld [vmem:[#allocation2 + $0xb38] sm:$0xff]
    %v547 = vld [vmem:[#allocation2 + $0xb40] sm:$0xff]
    %v548 = vld [vmem:[#allocation2 + $0xb48] sm:$0xff]
    %v549 = vld [vmem:[#allocation2 + $0xb50] sm:$0xff]
    %v550 = vld [vmem:[#allocation2 + $0xb58] sm:$0xff]
    %v551 = vld [vmem:[#allocation2 + $0xb60] sm:$0xff]
    %v552 = vld [vmem:[#allocation2 + $0xb68] sm:$0xff]
    %v553 = vld [vmem:[#allocation2 + $0xb70] sm:$0xff]
    %v554 = vld [vmem:[#allocation2 + $0xb78] sm:$0xff]
    %v555 = vld [vmem:[#allocation2 + $0xb80] sm:$0xff]
    %v556 = vld [vmem:[#allocation2 + $0xb88] sm:$0xff]
    %v557 = vld [vmem:[#allocation2 + $0xb90] sm:$0xff]
    %v558 = vld [vmem:[#allocation2 + $0xb98] sm:$0xff]
    %v559 = vld [vmem:[#allocation2 + $0xba0] sm:$0xff]
    %v560 = vld [vmem:[#allocation2 + $0xba8] sm:$0xff]
    %v561 = vld [vmem:[#allocation2 + $0xbb0] sm:$0xff]
    %v562 = vld [vmem:[#allocation2 + $0xbb8] sm:$0xff]
    %v563 = vld [vmem:[#allocation2 + $0xbc0] sm:$0xff]
    %v564 = vld [vmem:[#allocation2 + $0xbc8] sm:$0xff]
    %v565 = vld [vmem:[#allocation2 + $0xbd0] sm:$0xff]
    %v566 = vld [vmem:[#allocation2 + $0xbd8] sm:$0xff]
    %v567 = vld [vmem:[#allocation2 + $0xbe0] sm:$0xff]
    %v568 = vld [vmem:[#allocation2 + $0xbe8] sm:$0xff]
    %v569 = vld [vmem:[#allocation2 + $0xbf0] sm:$0xff]
    %v570 = vld [vmem:[#allocation2 + $0xbf8] sm:$0xff]
    %v571 = vld [vmem:[#allocation2 + $0xc00] sm:$0xff]
    %v572 = vld [vmem:[#allocation2 + $0xc08] sm:$0xff]
    %v573 = vld [vmem:[#allocation2 + $0xc10] sm:$0xff]
    %v574 = vld [vmem:[#allocation2 + $0xc18] sm:$0xff]
    %v575 = vld [vmem:[#allocation2 + $0xc20] sm:$0xff]
    %v576 = vld [vmem:[#allocation2 + $0xc28] sm:$0xff]
    %v577 = vld [vmem:[#allocation2 + $0xc30] sm:$0xff]
    %v578 = vld [vmem:[#allocation2 + $0xc38] sm:$0xff]
    %v579 = vld [vmem:[#allocation2 + $0xc40] sm:$0xff]
    %v580 = vld [vmem:[#allocation2 + $0xc48] sm:$0xff]
    %v581 = vld [vmem:[#allocation2 + $0xc50] sm:$0xff]
    %v582 = vld [vmem:[#allocation2 + $0xc58] sm:$0xff]
    %v583 = vld [vmem:[#allocation2 + $0xc60] sm:$0xff]
    %v584 = vld [vmem:[#allocation2 + $0xc68] sm:$0xff]
    %v585 = vld [vmem:[#allocation2 + $0xc70] sm:$0xff]
    %v586 = vld [vmem:[#allocation2 + $0xc78] sm:$0xff]
    %v587 = vld [vmem:[#allocation2 + $0xc80] sm:$0xff]
    %v588 = vld [vmem:[#allocation2 + $0xc88] sm:$0xff]
    %v589 = vld [vmem:[#allocation2 + $0xc90] sm:$0xff]
    %v590 = vld [vmem:[#allocation2 + $0xc98] sm:$0xff]
    %v591 = vld [vmem:[#allocation2 + $0xca0] sm:$0xff]
    %v592 = vld [vmem:[#allocation2 + $0xca8] sm:$0xff]
    %v593 = vld [vmem:[#allocation2 + $0xcb0] sm:$0xff]
    %v594 = vld [vmem:[#allocation2 + $0xcb8] sm:$0xff]
    %v595 = vld [vmem:[#allocation2 + $0xcc0] sm:$0xff]
    %v596 = vld [vmem:[#allocation2 + $0xcc8] sm:$0xff]
    %v597 = vld [vmem:[#allocation2 + $0xcd0] sm:$0xff]
    %v598 = vld [vmem:[#allocation2 + $0xcd8] sm:$0xff]
    %v599 = vld [vmem:[#allocation2 + $0xce0] sm:$0xff]
    %v600 = vld [vmem:[#allocation2 + $0xce8] sm:$0xff]
    %v601 = vld [vmem:[#allocation2 + $0xcf0] sm:$0xff]
    %v602 = vld [vmem:[#allocation2 + $0xcf8] sm:$0xff]
    %v603 = vld [vmem:[#allocation2 + $0xd00] sm:$0xff]
    %v604 = vld [vmem:[#allocation2 + $0xd08] sm:$0xff]
    %v605 = vld [vmem:[#allocation2 + $0xd10] sm:$0xff]
    %v606 = vld [vmem:[#allocation2 + $0xd18] sm:$0xff]
    %v607 = vld [vmem:[#allocation2 + $0xd20] sm:$0xff]
    %v608 = vld [vmem:[#allocation2 + $0xd28] sm:$0xff]
    %v609 = vld [vmem:[#allocation2 + $0xd30] sm:$0xff]
    %v610 = vld [vmem:[#allocation2 + $0xd38] sm:$0xff]
    %v611 = vld [vmem:[#allocation2 + $0xd40] sm:$0xff]
    %v612 = vld [vmem:[#allocation2 + $0xd48] sm:$0xff]
    %v613 = vld [vmem:[#allocation2 + $0xd50] sm:$0xff]
    %v614 = vld [vmem:[#allocation2 + $0xd58] sm:$0xff]
    %v615 = vld [vmem:[#allocation2 + $0xd60] sm:$0xff]
    %v616 = vld [vmem:[#allocation2 + $0xd68] sm:$0xff]
    %v617 = vld [vmem:[#allocation2 + $0xd70] sm:$0xff]
    %v618 = vld [vmem:[#allocation2 + $0xd78] sm:$0xff]
    %v619 = vld [vmem:[#allocation2 + $0xd80] sm:$0xff]
    %v620 = vld [vmem:[#allocation2 + $0xd88] sm:$0xff]
    %v621 = vld [vmem:[#allocation2 + $0xd90] sm:$0xff]
    %v622 = vld [vmem:[#allocation2 + $0xd98] sm:$0xff]
    %v623 = vld [vmem:[#allocation2 + $0xda0] sm:$0xff]
    %v624 = vld [vmem:[#allocation2 + $0xda8] sm:$0xff]
    %v625 = vld [vmem:[#allocation2 + $0xdb0] sm:$0xff]
    %v626 = vld [vmem:[#allocation2 + $0xdb8] sm:$0xff]
    %v627 = vld [vmem:[#allocation2 + $0xdc0] sm:$0xff]
    %v628 = vld [vmem:[#allocation2 + $0xdc8] sm:$0xff]
    %v629 = vld [vmem:[#allocation2 + $0xdd0] sm:$0xff]
    %v630 = vld [vmem:[#allocation2 + $0xdd8] sm:$0xff]
    %v631 = vld [vmem:[#allocation2 + $0xde0] sm:$0xff]
    %v632 = vld [vmem:[#allocation2 + $0xde8] sm:$0xff]
    %v633 = vld [vmem:[#allocation2 + $0xdf0] sm:$0xff]
    %v634 = vld [vmem:[#allocation2 + $0xdf8] sm:$0xff]
    %v635 = vld [vmem:[#allocation15] ss:$8 sm:$0xf]
    %v636 = vld [vmem:[#allocation15] ss:$8 sm:$0xf0]
    %v637 = vor.u32 %v635, %v636
    %v639 = vperm.slane %v637, 0
    %v640 = vperm.slane %v637, 1
    %v641 = vperm.slane %v637, 2
    %v642 = vperm.slane %v637, 3
    %v643 = vperm.slane %v637, 4
    %v644 = vperm.slane %v637, 5
    %v645 = vperm.slane %v637, 6
    %v646 = vperm.slane %v637, 7
    %v1103 = vunpack.c.l.b16 %v187
    %v1104 = vunpack.c.h.b16 %v187
    %v1105 = vunpack.c.l.b16 %v188
    %v1106 = vunpack.c.h.b16 %v188
    %v1107 = vunpack.c.l.b16 %v189
    %v1108 = vunpack.c.h.b16 %v189
    %v1109 = vunpack.c.l.b16 %v190
    %v1110 = vunpack.c.h.b16 %v190
    %v1111 = vunpack.c.l.b16 %v191
    %v1112 = vunpack.c.h.b16 %v191
    %v1113 = vunpack.c.l.b16 %v192
    %v1114 = vunpack.c.h.b16 %v192
    %v1115 = vunpack.c.l.b16 %v193
    %v1116 = vunpack.c.h.b16 %v193
    %v1117 = vunpack.c.l.b16 %v194
    %v1118 = vunpack.c.h.b16 %v194
    %v1119 = vunpack.c.l.b16 %v195
    %v1120 = vunpack.c.h.b16 %v195
    %v1121 = vunpack.c.l.b16 %v196
    %v1122 = vunpack.c.h.b16 %v196
    %v1123 = vunpack.c.l.b16 %v197
    %v1124 = vunpack.c.h.b16 %v197
    %v1125 = vunpack.c.l.b16 %v198
    %v1126 = vunpack.c.h.b16 %v198
    %v1127 = vunpack.c.l.b16 %v199
    %v1128 = vunpack.c.h.b16 %v199
    %v1129 = vunpack.c.l.b16 %v200
    %v1130 = vunpack.c.h.b16 %v200
    %v1131 = vunpack.c.l.b16 %v201
    %v1132 = vunpack.c.h.b16 %v201
    %v1133 = vunpack.c.l.b16 %v202
    %v1134 = vunpack.c.h.b16 %v202
    %v1135 = vunpack.c.l.b16 %v203
    %v1136 = vunpack.c.h.b16 %v203
    %v1137 = vunpack.c.l.b16 %v204
    %v1138 = vunpack.c.h.b16 %v204
    %v1139 = vunpack.c.l.b16 %v205
    %v1140 = vunpack.c.h.b16 %v205
    %v1141 = vunpack.c.l.b16 %v206
    %v1142 = vunpack.c.h.b16 %v206
    %v1143 = vunpack.c.l.b16 %v207
    %v1144 = vunpack.c.h.b16 %v207
    %v1145 = vunpack.c.l.b16 %v208
    %v1146 = vunpack.c.h.b16 %v208
    %v1147 = vunpack.c.l.b16 %v209
    %v1148 = vunpack.c.h.b16 %v209
    %v1149 = vunpack.c.l.b16 %v210
    %v1150 = vunpack.c.h.b16 %v210
    %v1151 = vunpack.c.l.b16 %v211
    %v1152 = vunpack.c.h.b16 %v211
    %v1153 = vunpack.c.l.b16 %v212
    %v1154 = vunpack.c.h.b16 %v212
    %v1155 = vunpack.c.l.b16 %v213
    %v1156 = vunpack.c.h.b16 %v213
    %v1157 = vunpack.c.l.b16 %v214
    %v1158 = vunpack.c.h.b16 %v214
    %v1159 = vunpack.c.l.b16 %v215
    %v1160 = vunpack.c.h.b16 %v215
    %v1161 = vunpack.c.l.b16 %v216
    %v1162 = vunpack.c.h.b16 %v216
    %v1163 = vunpack.c.l.b16 %v217
    %v1164 = vunpack.c.h.b16 %v217
    %v1165 = vunpack.c.l.b16 %v218
    %v1166 = vunpack.c.h.b16 %v218
    %v1167 = vunpack.c.l.b16 %v219
    %v1168 = vunpack.c.h.b16 %v219
    %v1169 = vunpack.c.l.b16 %v220
    %v1170 = vunpack.c.h.b16 %v220
    %v1171 = vunpack.c.l.b16 %v221
    %v1172 = vunpack.c.h.b16 %v221
    %v1173 = vunpack.c.l.b16 %v222
    %v1174 = vunpack.c.h.b16 %v222
    %v1175 = vunpack.c.l.b16 %v223
    %v1176 = vunpack.c.h.b16 %v223
    %v1177 = vunpack.c.l.b16 %v224
    %v1178 = vunpack.c.h.b16 %v224
    %v1179 = vunpack.c.l.b16 %v225
    %v1180 = vunpack.c.h.b16 %v225
    %v1181 = vunpack.c.l.b16 %v226
    %v1182 = vunpack.c.h.b16 %v226
    %v1183 = vunpack.c.l.b16 %v227
    %v1184 = vunpack.c.h.b16 %v227
    %v1185 = vunpack.c.l.b16 %v228
    %v1186 = vunpack.c.h.b16 %v228
    %v1187 = vunpack.c.l.b16 %v229
    %v1188 = vunpack.c.h.b16 %v229
    %v1189 = vunpack.c.l.b16 %v230
    %v1190 = vunpack.c.h.b16 %v230
    %v1191 = vunpack.c.l.b16 %v231
    %v1192 = vunpack.c.h.b16 %v231
    %v1193 = vunpack.c.l.b16 %v232
    %v1194 = vunpack.c.h.b16 %v232
    %v1195 = vunpack.c.l.b16 %v233
    %v1196 = vunpack.c.h.b16 %v233
    %v1197 = vunpack.c.l.b16 %v234
    %v1198 = vunpack.c.h.b16 %v234
    %v1199 = vunpack.c.l.b16 %v235
    %v1200 = vunpack.c.h.b16 %v235
    %v1201 = vunpack.c.l.b16 %v236
    %v1202 = vunpack.c.h.b16 %v236
    %v1203 = vunpack.c.l.b16 %v237
    %v1204 = vunpack.c.h.b16 %v237
    %v1205 = vunpack.c.l.b16 %v238
    %v1206 = vunpack.c.h.b16 %v238
    %v1207 = vunpack.c.l.b16 %v239
    %v1208 = vunpack.c.h.b16 %v239
    %v1209 = vunpack.c.l.b16 %v240
    %v1210 = vunpack.c.h.b16 %v240
    %v1211 = vunpack.c.l.b16 %v241
    %v1212 = vunpack.c.h.b16 %v241
    %v1213 = vunpack.c.l.b16 %v242
    %v1214 = vunpack.c.h.b16 %v242
    %v1215 = vunpack.c.l.b16 %v243
    %v1216 = vunpack.c.h.b16 %v243
    %v1217 = vunpack.c.l.b16 %v244
    %v1218 = vunpack.c.h.b16 %v244
    %v1219 = vunpack.c.l.b16 %v245
    %v1220 = vunpack.c.h.b16 %v245
    %v1221 = vunpack.c.l.b16 %v246
    %v1222 = vunpack.c.h.b16 %v246
    %v1223 = vunpack.c.l.b16 %v247
    %v1224 = vunpack.c.h.b16 %v247
    %v1225 = vunpack.c.l.b16 %v248
    %v1226 = vunpack.c.h.b16 %v248
    %v1227 = vunpack.c.l.b16 %v249
    %v1228 = vunpack.c.h.b16 %v249
    %v1229 = vunpack.c.l.b16 %v250
    %v1230 = vunpack.c.h.b16 %v250
    %v1231 = vunpack.c.l.b16 %v251
    %v1232 = vunpack.c.h.b16 %v251
    %v1233 = vunpack.c.l.b16 %v252
    %v1234 = vunpack.c.h.b16 %v252
    %v1235 = vunpack.c.l.b16 %v253
    %v1236 = vunpack.c.h.b16 %v253
    %v1237 = vunpack.c.l.b16 %v254
    %v1238 = vunpack.c.h.b16 %v254
    %v1239 = vunpack.c.l.b16 %v255
    %v1240 = vunpack.c.h.b16 %v255
    %v1241 = vunpack.c.l.b16 %v256
    %v1242 = vunpack.c.h.b16 %v256
    %v1243 = vunpack.c.l.b16 %v257
    %v1244 = vunpack.c.h.b16 %v257
    %v1245 = vunpack.c.l.b16 %v258
    %v1246 = vunpack.c.h.b16 %v258
    %v1247 = vunpack.c.l.b16 %v259
    %v1248 = vunpack.c.h.b16 %v259
    %v1249 = vunpack.c.l.b16 %v260
    %v1250 = vunpack.c.h.b16 %v260
    %v1251 = vunpack.c.l.b16 %v261
    %v1252 = vunpack.c.h.b16 %v261
    %v1253 = vunpack.c.l.b16 %v262
    %v1254 = vunpack.c.h.b16 %v262
    %v1255 = vunpack.c.l.b16 %v263
    %v1256 = vunpack.c.h.b16 %v263
    %v1257 = vunpack.c.l.b16 %v264
    %v1258 = vunpack.c.h.b16 %v264
    %v1259 = vunpack.c.l.b16 %v265
    %v1260 = vunpack.c.h.b16 %v265
    %v1261 = vunpack.c.l.b16 %v266
    %v1262 = vunpack.c.h.b16 %v266
    %v1263 = vunpack.c.l.b16 %v267
    %v1264 = vunpack.c.h.b16 %v267
    %v1265 = vunpack.c.l.b16 %v268
    %v1266 = vunpack.c.h.b16 %v268
    %v1267 = vunpack.c.l.b16 %v269
    %v1268 = vunpack.c.h.b16 %v269
    %v1269 = vunpack.c.l.b16 %v270
    %v1270 = vunpack.c.h.b16 %v270
    %v1271 = vunpack.c.l.b16 %v271
    %v1272 = vunpack.c.h.b16 %v271
    %v1273 = vunpack.c.l.b16 %v272
    %v1274 = vunpack.c.h.b16 %v272
    %v1275 = vunpack.c.l.b16 %v273
    %v1276 = vunpack.c.h.b16 %v273
    %v1277 = vunpack.c.l.b16 %v274
    %v1278 = vunpack.c.h.b16 %v274
    %v1279 = vunpack.c.l.b16 %v275
    %v1280 = vunpack.c.h.b16 %v275
    %v1281 = vunpack.c.l.b16 %v276
    %v1282 = vunpack.c.h.b16 %v276
    %v1283 = vunpack.c.l.b16 %v277
    %v1284 = vunpack.c.h.b16 %v277
    %v1285 = vunpack.c.l.b16 %v278
    %v1286 = vunpack.c.h.b16 %v278
    %v1287 = vunpack.c.l.b16 %v279
    %v1288 = vunpack.c.h.b16 %v279
    %v1289 = vunpack.c.l.b16 %v280
    %v1290 = vunpack.c.h.b16 %v280
    %v1291 = vunpack.c.l.b16 %v281
    %v1292 = vunpack.c.h.b16 %v281
    %v1293 = vunpack.c.l.b16 %v282
    %v1294 = vunpack.c.h.b16 %v282
    %v1295 = vunpack.c.l.b16 %v283
    %v1296 = vunpack.c.h.b16 %v283
    %v1297 = vunpack.c.l.b16 %v284
    %v1298 = vunpack.c.h.b16 %v284
    %v1299 = vunpack.c.l.b16 %v285
    %v1300 = vunpack.c.h.b16 %v285
    %v1301 = vunpack.c.l.b16 %v286
    %v1302 = vunpack.c.h.b16 %v286
    %v1303 = vunpack.c.l.b16 %v287
    %v1304 = vunpack.c.h.b16 %v287
    %v1305 = vunpack.c.l.b16 %v288
    %v1306 = vunpack.c.h.b16 %v288
    %v1307 = vunpack.c.l.b16 %v289
    %v1308 = vunpack.c.h.b16 %v289
    %v1309 = vunpack.c.l.b16 %v290
    %v1310 = vunpack.c.h.b16 %v290
    %v1311 = vunpack.c.l.b16 %v291
    %v1312 = vunpack.c.h.b16 %v291
    %v1313 = vunpack.c.l.b16 %v292
    %v1314 = vunpack.c.h.b16 %v292
    %v1315 = vunpack.c.l.b16 %v293
    %v1316 = vunpack.c.h.b16 %v293
    %v1317 = vunpack.c.l.b16 %v294
    %v1318 = vunpack.c.h.b16 %v294
    %v1319 = vunpack.c.l.b16 %v295
    %v1320 = vunpack.c.h.b16 %v295
    %v1321 = vunpack.c.l.b16 %v296
    %v1322 = vunpack.c.h.b16 %v296
    %v1323 = vunpack.c.l.b16 %v297
    %v1324 = vunpack.c.h.b16 %v297
    %v1325 = vunpack.c.l.b16 %v298
    %v1326 = vunpack.c.h.b16 %v298
    %v1327 = vunpack.c.l.b16 %v299
    %v1328 = vunpack.c.h.b16 %v299
    %v1329 = vunpack.c.l.b16 %v300
    %v1330 = vunpack.c.h.b16 %v300
    %v1331 = vunpack.c.l.b16 %v301
    %v1332 = vunpack.c.h.b16 %v301
    %v1333 = vunpack.c.l.b16 %v302
    %v1334 = vunpack.c.h.b16 %v302
    %v1335 = vunpack.c.l.b16 %v303
    %v1336 = vunpack.c.h.b16 %v303
    %v1337 = vunpack.c.l.b16 %v304
    %v1338 = vunpack.c.h.b16 %v304
    %v1339 = vunpack.c.l.b16 %v305
    %v1340 = vunpack.c.h.b16 %v305
    %v1341 = vunpack.c.l.b16 %v306
    %v1342 = vunpack.c.h.b16 %v306
    %v1343 = vunpack.c.l.b16 %v307
    %v1344 = vunpack.c.h.b16 %v307
    %v1345 = vunpack.c.l.b16 %v308
    %v1346 = vunpack.c.h.b16 %v308
    %v1347 = vunpack.c.l.b16 %v309
    %v1348 = vunpack.c.h.b16 %v309
    %v1349 = vunpack.c.l.b16 %v310
    %v1350 = vunpack.c.h.b16 %v310
    %v1351 = vunpack.c.l.b16 %v311
    %v1352 = vunpack.c.h.b16 %v311
    %v1353 = vunpack.c.l.b16 %v312
    %v1354 = vunpack.c.h.b16 %v312
    %v1355 = vunpack.c.l.b16 %v313
    %v1356 = vunpack.c.h.b16 %v313
    %v1357 = vunpack.c.l.b16 %v314
    %v1358 = vunpack.c.h.b16 %v314
    %v1359 = vunpack.c.l.b16 %v315
    %v1360 = vunpack.c.h.b16 %v315
    %v1361 = vunpack.c.l.b16 %v316
    %v1362 = vunpack.c.h.b16 %v316
    %v1363 = vunpack.c.l.b16 %v317
    %v1364 = vunpack.c.h.b16 %v317
    %v1365 = vunpack.c.l.b16 %v318
    %v1366 = vunpack.c.h.b16 %v318
    %v1367 = vunpack.c.l.b16 %v319
    %v1368 = vunpack.c.h.b16 %v319
    %v1369 = vunpack.c.l.b16 %v320
    %v1370 = vunpack.c.h.b16 %v320
    %v1371 = vunpack.c.l.b16 %v321
    %v1372 = vunpack.c.h.b16 %v321
    %v1373 = vunpack.c.l.b16 %v322
    %v1374 = vunpack.c.h.b16 %v322
    %v1375 = vunpack.c.l.b16 %v323
    %v1376 = vunpack.c.h.b16 %v323
    %v1377 = vunpack.c.l.b16 %v324
    %v1378 = vunpack.c.h.b16 %v324
    %v1379 = vunpack.c.l.b16 %v325
    %v1380 = vunpack.c.h.b16 %v325
    %v1381 = vunpack.c.l.b16 %v326
    %v1382 = vunpack.c.h.b16 %v326
    %v1383 = vunpack.c.l.b16 %v327
    %v1384 = vunpack.c.h.b16 %v327
    %v1385 = vunpack.c.l.b16 %v328
    %v1386 = vunpack.c.h.b16 %v328
    %v1387 = vunpack.c.l.b16 %v329
    %v1388 = vunpack.c.h.b16 %v329
    %v1389 = vunpack.c.l.b16 %v330
    %v1390 = vunpack.c.h.b16 %v330
    %v1391 = vunpack.c.l.b16 %v331
    %v1392 = vunpack.c.h.b16 %v331
    %v1393 = vunpack.c.l.b16 %v332
    %v1394 = vunpack.c.h.b16 %v332
    %v1395 = vunpack.c.l.b16 %v333
    %v1396 = vunpack.c.h.b16 %v333
    %v1397 = vunpack.c.l.b16 %v334
    %v1398 = vunpack.c.h.b16 %v334
    %v1399 = vunpack.c.l.b16 %v335
    %v1400 = vunpack.c.h.b16 %v335
    %v1401 = vunpack.c.l.b16 %v336
    %v1402 = vunpack.c.h.b16 %v336
    %v1403 = vunpack.c.l.b16 %v337
    %v1404 = vunpack.c.h.b16 %v337
    %v1405 = vunpack.c.l.b16 %v338
    %v1406 = vunpack.c.h.b16 %v338
    %v1407 = vunpack.c.l.b16 %v339
    %v1408 = vunpack.c.h.b16 %v339
    %v1409 = vunpack.c.l.b16 %v340
    %v1410 = vunpack.c.h.b16 %v340
    %v1411 = vunpack.c.l.b16 %v341
    %v1412 = vunpack.c.h.b16 %v341
    %v1413 = vunpack.c.l.b16 %v342
    %v1414 = vunpack.c.h.b16 %v342
    %v1415 = vunpack.c.l.b16 %v343
    %v1416 = vunpack.c.h.b16 %v343
    %v1417 = vunpack.c.l.b16 %v344
    %v1418 = vunpack.c.h.b16 %v344
    %v1419 = vunpack.c.l.b16 %v345
    %v1420 = vunpack.c.h.b16 %v345
    %v1421 = vunpack.c.l.b16 %v346
    %v1422 = vunpack.c.h.b16 %v346
    %v1423 = vunpack.c.l.b16 %v347
    %v1424 = vunpack.c.h.b16 %v347
    %v1425 = vunpack.c.l.b16 %v348
    %v1426 = vunpack.c.h.b16 %v348
    %v1427 = vunpack.c.l.b16 %v349
    %v1428 = vunpack.c.h.b16 %v349
    %v1429 = vunpack.c.l.b16 %v350
    %v1430 = vunpack.c.h.b16 %v350
    %v1431 = vunpack.c.l.b16 %v351
    %v1432 = vunpack.c.h.b16 %v351
    %v1433 = vunpack.c.l.b16 %v352
    %v1434 = vunpack.c.h.b16 %v352
    %v1435 = vunpack.c.l.b16 %v353
    %v1436 = vunpack.c.h.b16 %v353
    %v1437 = vunpack.c.l.b16 %v354
    %v1438 = vunpack.c.h.b16 %v354
    %v1439 = vunpack.c.l.b16 %v355
    %v1440 = vunpack.c.h.b16 %v355
    %v1441 = vunpack.c.l.b16 %v356
    %v1442 = vunpack.c.h.b16 %v356
    %v1443 = vunpack.c.l.b16 %v357
    %v1444 = vunpack.c.h.b16 %v357
    %v1445 = vunpack.c.l.b16 %v358
    %v1446 = vunpack.c.h.b16 %v358
    %v1447 = vunpack.c.l.b16 %v359
    %v1448 = vunpack.c.h.b16 %v359
    %v1449 = vunpack.c.l.b16 %v360
    %v1450 = vunpack.c.h.b16 %v360
    %v1451 = vunpack.c.l.b16 %v361
    %v1452 = vunpack.c.h.b16 %v361
    %v1453 = vunpack.c.l.b16 %v362
    %v1454 = vunpack.c.h.b16 %v362
    %v1455 = vunpack.c.l.b16 %v363
    %v1456 = vunpack.c.h.b16 %v363
    %v1457 = vunpack.c.l.b16 %v364
    %v1458 = vunpack.c.h.b16 %v364
    %v1459 = vunpack.c.l.b16 %v365
    %v1460 = vunpack.c.h.b16 %v365
    %v1461 = vunpack.c.l.b16 %v366
    %v1462 = vunpack.c.h.b16 %v366
    %v1463 = vunpack.c.l.b16 %v367
    %v1464 = vunpack.c.h.b16 %v367
    %v1465 = vunpack.c.l.b16 %v368
    %v1466 = vunpack.c.h.b16 %v368
    %v1467 = vunpack.c.l.b16 %v369
    %v1468 = vunpack.c.h.b16 %v369
    %v1469 = vunpack.c.l.b16 %v370
    %v1470 = vunpack.c.h.b16 %v370
    %v1471 = vunpack.c.l.b16 %v371
    %v1472 = vunpack.c.h.b16 %v371
    %v1473 = vunpack.c.l.b16 %v372
    %v1474 = vunpack.c.h.b16 %v372
    %v1475 = vunpack.c.l.b16 %v373
    %v1476 = vunpack.c.h.b16 %v373
    %v1477 = vunpack.c.l.b16 %v374
    %v1478 = vunpack.c.h.b16 %v374
    %v1479 = vunpack.c.l.b16 %v375
    %v1480 = vunpack.c.h.b16 %v375
    %v1481 = vunpack.c.l.b16 %v376
    %v1482 = vunpack.c.h.b16 %v376
    %v1483 = vunpack.c.l.b16 %v377
    %v1484 = vunpack.c.h.b16 %v377
    %v1485 = vunpack.c.l.b16 %v378
    %v1486 = vunpack.c.h.b16 %v378
    %v1487 = vunpack.c.l.b16 %v379
    %v1488 = vunpack.c.h.b16 %v379
    %v1489 = vunpack.c.l.b16 %v380
    %v1490 = vunpack.c.h.b16 %v380
    %v1491 = vunpack.c.l.b16 %v381
    %v1492 = vunpack.c.h.b16 %v381
    %v1493 = vunpack.c.l.b16 %v382
    %v1494 = vunpack.c.h.b16 %v382
    %v1495 = vunpack.c.l.b16 %v383
    %v1496 = vunpack.c.h.b16 %v383
    %v1497 = vunpack.c.l.b16 %v384
    %v1498 = vunpack.c.h.b16 %v384
    %v1499 = vunpack.c.l.b16 %v385
    %v1500 = vunpack.c.h.b16 %v385
    %v1501 = vunpack.c.l.b16 %v386
    %v1502 = vunpack.c.h.b16 %v386
    %v1503 = vunpack.c.l.b16 %v387
    %v1504 = vunpack.c.h.b16 %v387
    %v1505 = vunpack.c.l.b16 %v388
    %v1506 = vunpack.c.h.b16 %v388
    %v1507 = vunpack.c.l.b16 %v389
    %v1508 = vunpack.c.h.b16 %v389
    %v1509 = vunpack.c.l.b16 %v390
    %v1510 = vunpack.c.h.b16 %v390
    %v1511 = vunpack.c.l.b16 %v391
    %v1512 = vunpack.c.h.b16 %v391
    %v1513 = vunpack.c.l.b16 %v392
    %v1514 = vunpack.c.h.b16 %v392
    %v1515 = vunpack.c.l.b16 %v393
    %v1516 = vunpack.c.h.b16 %v393
    %v1517 = vunpack.c.l.b16 %v394
    %v1518 = vunpack.c.h.b16 %v394
    %v1519 = vunpack.c.l.b16 %v395
    %v1520 = vunpack.c.h.b16 %v395
    %v1521 = vunpack.c.l.b16 %v396
    %v1522 = vunpack.c.h.b16 %v396
    %v1523 = vunpack.c.l.b16 %v397
    %v1524 = vunpack.c.h.b16 %v397
    %v1525 = vunpack.c.l.b16 %v398
    %v1526 = vunpack.c.h.b16 %v398
    %v1527 = vunpack.c.l.b16 %v399
    %v1528 = vunpack.c.h.b16 %v399
    %v1529 = vunpack.c.l.b16 %v400
    %v1530 = vunpack.c.h.b16 %v400
    %v1531 = vunpack.c.l.b16 %v401
    %v1532 = vunpack.c.h.b16 %v401
    %v1533 = vunpack.c.l.b16 %v402
    %v1534 = vunpack.c.h.b16 %v402
    %v1535 = vunpack.c.l.b16 %v403
    %v1536 = vunpack.c.h.b16 %v403
    %v1537 = vunpack.c.l.b16 %v404
    %v1538 = vunpack.c.h.b16 %v404
    %v1539 = vunpack.c.l.b16 %v405
    %v1540 = vunpack.c.h.b16 %v405
    %v1541 = vunpack.c.l.b16 %v406
    %v1542 = vunpack.c.h.b16 %v406
    %v1543 = vunpack.c.l.b16 %v407
    %v1544 = vunpack.c.h.b16 %v407
    %v1545 = vunpack.c.l.b16 %v408
    %v1546 = vunpack.c.h.b16 %v408
    %v1547 = vunpack.c.l.b16 %v409
    %v1548 = vunpack.c.h.b16 %v409
    %v1549 = vunpack.c.l.b16 %v410
    %v1550 = vunpack.c.h.b16 %v410
    %v1551 = vunpack.c.l.b16 %v411
    %v1552 = vunpack.c.h.b16 %v411
    %v1553 = vunpack.c.l.b16 %v412
    %v1554 = vunpack.c.h.b16 %v412
    %v1555 = vunpack.c.l.b16 %v413
    %v1556 = vunpack.c.h.b16 %v413
    %v1557 = vunpack.c.l.b16 %v414
    %v1558 = vunpack.c.h.b16 %v414
    %v1559 = vunpack.c.l.b16 %v415
    %v1560 = vunpack.c.h.b16 %v415
    %v1561 = vunpack.c.l.b16 %v416
    %v1562 = vunpack.c.h.b16 %v416
    %v1563 = vunpack.c.l.b16 %v417
    %v1564 = vunpack.c.h.b16 %v417
    %v1565 = vunpack.c.l.b16 %v418
    %v1566 = vunpack.c.h.b16 %v418
    %v1567 = vunpack.c.l.b16 %v419
    %v1568 = vunpack.c.h.b16 %v419
    %v1569 = vunpack.c.l.b16 %v420
    %v1570 = vunpack.c.h.b16 %v420
    %v1571 = vunpack.c.l.b16 %v421
    %v1572 = vunpack.c.h.b16 %v421
    %v1573 = vunpack.c.l.b16 %v422
    %v1574 = vunpack.c.h.b16 %v422
    %v1575 = vunpack.c.l.b16 %v423
    %v1576 = vunpack.c.h.b16 %v423
    %v1577 = vunpack.c.l.b16 %v424
    %v1578 = vunpack.c.h.b16 %v424
    %v1579 = vunpack.c.l.b16 %v425
    %v1580 = vunpack.c.h.b16 %v425
    %v1581 = vunpack.c.l.b16 %v426
    %v1582 = vunpack.c.h.b16 %v426
    %v1583 = vunpack.c.l.b16 %v427
    %v1584 = vunpack.c.h.b16 %v427
    %v1585 = vunpack.c.l.b16 %v428
    %v1586 = vunpack.c.h.b16 %v428
    %v1587 = vunpack.c.l.b16 %v429
    %v1588 = vunpack.c.h.b16 %v429
    %v1589 = vunpack.c.l.b16 %v430
    %v1590 = vunpack.c.h.b16 %v430
    %v1591 = vunpack.c.l.b16 %v431
    %v1592 = vunpack.c.h.b16 %v431
    %v1593 = vunpack.c.l.b16 %v432
    %v1594 = vunpack.c.h.b16 %v432
    %v1595 = vunpack.c.l.b16 %v433
    %v1596 = vunpack.c.h.b16 %v433
    %v1597 = vunpack.c.l.b16 %v434
    %v1598 = vunpack.c.h.b16 %v434
    %v1599 = vunpack.c.l.b16 %v435
    %v1600 = vunpack.c.h.b16 %v435
    %v1601 = vunpack.c.l.b16 %v436
    %v1602 = vunpack.c.h.b16 %v436
    %v1603 = vunpack.c.l.b16 %v437
    %v1604 = vunpack.c.h.b16 %v437
    %v1605 = vunpack.c.l.b16 %v438
    %v1606 = vunpack.c.h.b16 %v438
    %v1607 = vunpack.c.l.b16 %v439
    %v1608 = vunpack.c.h.b16 %v439
    %v1609 = vunpack.c.l.b16 %v440
    %v1610 = vunpack.c.h.b16 %v440
    %v1611 = vunpack.c.l.b16 %v441
    %v1612 = vunpack.c.h.b16 %v441
    %v1613 = vunpack.c.l.b16 %v442
    %v1614 = vunpack.c.h.b16 %v442
    %v1615 = vunpack.c.l.b16 %v443
    %v1616 = vunpack.c.h.b16 %v443
    %v1617 = vunpack.c.l.b16 %v444
    %v1618 = vunpack.c.h.b16 %v444
    %v1619 = vunpack.c.l.b16 %v445
    %v1620 = vunpack.c.h.b16 %v445
    %v1621 = vunpack.c.l.b16 %v446
    %v1622 = vunpack.c.h.b16 %v446
    %v1623 = vunpack.c.l.b16 %v447
    %v1624 = vunpack.c.h.b16 %v447
    %v1625 = vunpack.c.l.b16 %v448
    %v1626 = vunpack.c.h.b16 %v448
    %v1627 = vunpack.c.l.b16 %v449
    %v1628 = vunpack.c.h.b16 %v449
    %v1629 = vunpack.c.l.b16 %v450
    %v1630 = vunpack.c.h.b16 %v450
    %v1631 = vunpack.c.l.b16 %v451
    %v1632 = vunpack.c.h.b16 %v451
    %v1633 = vunpack.c.l.b16 %v452
    %v1634 = vunpack.c.h.b16 %v452
    %v1635 = vunpack.c.l.b16 %v453
    %v1636 = vunpack.c.h.b16 %v453
    %v1637 = vunpack.c.l.b16 %v454
    %v1638 = vunpack.c.h.b16 %v454
    %v1639 = vunpack.c.l.b16 %v455
    %v1640 = vunpack.c.h.b16 %v455
    %v1641 = vunpack.c.l.b16 %v456
    %v1642 = vunpack.c.h.b16 %v456
    %v1643 = vunpack.c.l.b16 %v457
    %v1644 = vunpack.c.h.b16 %v457
    %v1645 = vunpack.c.l.b16 %v458
    %v1646 = vunpack.c.h.b16 %v458
    %v1647 = vunpack.c.l.b16 %v459
    %v1648 = vunpack.c.h.b16 %v459
    %v1649 = vunpack.c.l.b16 %v460
    %v1650 = vunpack.c.h.b16 %v460
    %v1651 = vunpack.c.l.b16 %v461
    %v1652 = vunpack.c.h.b16 %v461
    %v1653 = vunpack.c.l.b16 %v462
    %v1654 = vunpack.c.h.b16 %v462
    %v1655 = vunpack.c.l.b16 %v463
    %v1656 = vunpack.c.h.b16 %v463
    %v1657 = vunpack.c.l.b16 %v464
    %v1658 = vunpack.c.h.b16 %v464
    %v1659 = vunpack.c.l.b16 %v465
    %v1660 = vunpack.c.h.b16 %v465
    %v1661 = vunpack.c.l.b16 %v466
    %v1662 = vunpack.c.h.b16 %v466
    %v1663 = vunpack.c.l.b16 %v467
    %v1664 = vunpack.c.h.b16 %v467
    %v1665 = vunpack.c.l.b16 %v468
    %v1666 = vunpack.c.h.b16 %v468
    %v1667 = vunpack.c.l.b16 %v469
    %v1668 = vunpack.c.h.b16 %v469
    %v1669 = vunpack.c.l.b16 %v470
    %v1670 = vunpack.c.h.b16 %v470
    %v1671 = vunpack.c.l.b16 %v471
    %v1672 = vunpack.c.h.b16 %v471
    %v1673 = vunpack.c.l.b16 %v472
    %v1674 = vunpack.c.h.b16 %v472
    %v1675 = vunpack.c.l.b16 %v473
    %v1676 = vunpack.c.h.b16 %v473
    %v1677 = vunpack.c.l.b16 %v474
    %v1678 = vunpack.c.h.b16 %v474
    %v1679 = vunpack.c.l.b16 %v475
    %v1680 = vunpack.c.h.b16 %v475
    %v1681 = vunpack.c.l.b16 %v476
    %v1682 = vunpack.c.h.b16 %v476
    %v1683 = vunpack.c.l.b16 %v477
    %v1684 = vunpack.c.h.b16 %v477
    %v1685 = vunpack.c.l.b16 %v478
    %v1686 = vunpack.c.h.b16 %v478
    %v1687 = vunpack.c.l.b16 %v479
    %v1688 = vunpack.c.h.b16 %v479
    %v1689 = vunpack.c.l.b16 %v480
    %v1690 = vunpack.c.h.b16 %v480
    %v1691 = vunpack.c.l.b16 %v481
    %v1692 = vunpack.c.h.b16 %v481
    %v1693 = vunpack.c.l.b16 %v482
    %v1694 = vunpack.c.h.b16 %v482
    %v1695 = vunpack.c.l.b16 %v483
    %v1696 = vunpack.c.h.b16 %v483
    %v1697 = vunpack.c.l.b16 %v484
    %v1698 = vunpack.c.h.b16 %v484
    %v1699 = vunpack.c.l.b16 %v485
    %v1700 = vunpack.c.h.b16 %v485
    %v1701 = vunpack.c.l.b16 %v486
    %v1702 = vunpack.c.h.b16 %v486
    %v1703 = vunpack.c.l.b16 %v487
    %v1704 = vunpack.c.h.b16 %v487
    %v1705 = vunpack.c.l.b16 %v488
    %v1706 = vunpack.c.h.b16 %v488
    %v1707 = vunpack.c.l.b16 %v489
    %v1708 = vunpack.c.h.b16 %v489
    %v1709 = vunpack.c.l.b16 %v490
    %v1710 = vunpack.c.h.b16 %v490
    %v1711 = vunpack.c.l.b16 %v491
    %v1712 = vunpack.c.h.b16 %v491
    %v1713 = vunpack.c.l.b16 %v492
    %v1714 = vunpack.c.h.b16 %v492
    %v1715 = vunpack.c.l.b16 %v493
    %v1716 = vunpack.c.h.b16 %v493
    %v1717 = vunpack.c.l.b16 %v494
    %v1718 = vunpack.c.h.b16 %v494
    %v1719 = vunpack.c.l.b16 %v495
    %v1720 = vunpack.c.h.b16 %v495
    %v1721 = vunpack.c.l.b16 %v496
    %v1722 = vunpack.c.h.b16 %v496
    %v1723 = vunpack.c.l.b16 %v497
    %v1724 = vunpack.c.h.b16 %v497
    %v1725 = vunpack.c.l.b16 %v498
    %v1726 = vunpack.c.h.b16 %v498
    %v1727 = vunpack.c.l.b16 %v499
    %v1728 = vunpack.c.h.b16 %v499
    %v1729 = vunpack.c.l.b16 %v500
    %v1730 = vunpack.c.h.b16 %v500
    %v1731 = vunpack.c.l.b16 %v501
    %v1732 = vunpack.c.h.b16 %v501
    %v1733 = vunpack.c.l.b16 %v502
    %v1734 = vunpack.c.h.b16 %v502
    %v1735 = vunpack.c.l.b16 %v503
    %v1736 = vunpack.c.h.b16 %v503
    %v1737 = vunpack.c.l.b16 %v504
    %v1738 = vunpack.c.h.b16 %v504
    %v1739 = vunpack.c.l.b16 %v505
    %v1740 = vunpack.c.h.b16 %v505
    %v1741 = vunpack.c.l.b16 %v506
    %v1742 = vunpack.c.h.b16 %v506
    %v1743 = vunpack.c.l.b16 %v507
    %v1744 = vunpack.c.h.b16 %v507
    %v1745 = vunpack.c.l.b16 %v508
    %v1746 = vunpack.c.h.b16 %v508
    %v1747 = vunpack.c.l.b16 %v509
    %v1748 = vunpack.c.h.b16 %v509
    %v1749 = vunpack.c.l.b16 %v510
    %v1750 = vunpack.c.h.b16 %v510
    %v1751 = vunpack.c.l.b16 %v511
    %v1752 = vunpack.c.h.b16 %v511
    %v1753 = vunpack.c.l.b16 %v512
    %v1754 = vunpack.c.h.b16 %v512
    %v1755 = vunpack.c.l.b16 %v513
    %v1756 = vunpack.c.h.b16 %v513
    %v1757 = vunpack.c.l.b16 %v514
    %v1758 = vunpack.c.h.b16 %v514
    %v1759 = vunpack.c.l.b16 %v515
    %v1760 = vunpack.c.h.b16 %v515
    %v1761 = vunpack.c.l.b16 %v516
    %v1762 = vunpack.c.h.b16 %v516
    %v1763 = vunpack.c.l.b16 %v517
    %v1764 = vunpack.c.h.b16 %v517
    %v1765 = vunpack.c.l.b16 %v518
    %v1766 = vunpack.c.h.b16 %v518
    %v1767 = vunpack.c.l.b16 %v519
    %v1768 = vunpack.c.h.b16 %v519
    %v1769 = vunpack.c.l.b16 %v520
    %v1770 = vunpack.c.h.b16 %v520
    %v1771 = vunpack.c.l.b16 %v521
    %v1772 = vunpack.c.h.b16 %v521
    %v1773 = vunpack.c.l.b16 %v522
    %v1774 = vunpack.c.h.b16 %v522
    %v1775 = vunpack.c.l.b16 %v523
    %v1776 = vunpack.c.h.b16 %v523
    %v1777 = vunpack.c.l.b16 %v524
    %v1778 = vunpack.c.h.b16 %v524
    %v1779 = vunpack.c.l.b16 %v525
    %v1780 = vunpack.c.h.b16 %v525
    %v1781 = vunpack.c.l.b16 %v526
    %v1782 = vunpack.c.h.b16 %v526
    %v1783 = vunpack.c.l.b16 %v527
    %v1784 = vunpack.c.h.b16 %v527
    %v1785 = vunpack.c.l.b16 %v528
    %v1786 = vunpack.c.h.b16 %v528
    %v1787 = vunpack.c.l.b16 %v529
    %v1788 = vunpack.c.h.b16 %v529
    %v1789 = vunpack.c.l.b16 %v530
    %v1790 = vunpack.c.h.b16 %v530
    %v1791 = vunpack.c.l.b16 %v531
    %v1792 = vunpack.c.h.b16 %v531
    %v1793 = vunpack.c.l.b16 %v532
    %v1794 = vunpack.c.h.b16 %v532
    %v1795 = vunpack.c.l.b16 %v533
    %v1796 = vunpack.c.h.b16 %v533
    %v1797 = vunpack.c.l.b16 %v534
    %v1798 = vunpack.c.h.b16 %v534
    %v1799 = vunpack.c.l.b16 %v535
    %v1800 = vunpack.c.h.b16 %v535
    %v1801 = vunpack.c.l.b16 %v536
    %v1802 = vunpack.c.h.b16 %v536
    %v1803 = vunpack.c.l.b16 %v537
    %v1804 = vunpack.c.h.b16 %v537
    %v1805 = vunpack.c.l.b16 %v538
    %v1806 = vunpack.c.h.b16 %v538
    %v1807 = vunpack.c.l.b16 %v539
    %v1808 = vunpack.c.h.b16 %v539
    %v1809 = vunpack.c.l.b16 %v540
    %v1810 = vunpack.c.h.b16 %v540
    %v1811 = vunpack.c.l.b16 %v541
    %v1812 = vunpack.c.h.b16 %v541
    %v1813 = vunpack.c.l.b16 %v542
    %v1814 = vunpack.c.h.b16 %v542
    %v1815 = vunpack.c.l.b16 %v543
    %v1816 = vunpack.c.h.b16 %v543
    %v1817 = vunpack.c.l.b16 %v544
    %v1818 = vunpack.c.h.b16 %v544
    %v1819 = vunpack.c.l.b16 %v545
    %v1820 = vunpack.c.h.b16 %v545
    %v1821 = vunpack.c.l.b16 %v546
    %v1822 = vunpack.c.h.b16 %v546
    %v1823 = vunpack.c.l.b16 %v547
    %v1824 = vunpack.c.h.b16 %v547
    %v1825 = vunpack.c.l.b16 %v548
    %v1826 = vunpack.c.h.b16 %v548
    %v1827 = vunpack.c.l.b16 %v549
    %v1828 = vunpack.c.h.b16 %v549
    %v1829 = vunpack.c.l.b16 %v550
    %v1830 = vunpack.c.h.b16 %v550
    %v1831 = vunpack.c.l.b16 %v551
    %v1832 = vunpack.c.h.b16 %v551
    %v1833 = vunpack.c.l.b16 %v552
    %v1834 = vunpack.c.h.b16 %v552
    %v1835 = vunpack.c.l.b16 %v553
    %v1836 = vunpack.c.h.b16 %v553
    %v1837 = vunpack.c.l.b16 %v554
    %v1838 = vunpack.c.h.b16 %v554
    %v1839 = vunpack.c.l.b16 %v555
    %v1840 = vunpack.c.h.b16 %v555
    %v1841 = vunpack.c.l.b16 %v556
    %v1842 = vunpack.c.h.b16 %v556
    %v1843 = vunpack.c.l.b16 %v557
    %v1844 = vunpack.c.h.b16 %v557
    %v1845 = vunpack.c.l.b16 %v558
    %v1846 = vunpack.c.h.b16 %v558
    %v1847 = vunpack.c.l.b16 %v559
    %v1848 = vunpack.c.h.b16 %v559
    %v1849 = vunpack.c.l.b16 %v560
    %v1850 = vunpack.c.h.b16 %v560
    %v1851 = vunpack.c.l.b16 %v561
    %v1852 = vunpack.c.h.b16 %v561
    %v1853 = vunpack.c.l.b16 %v562
    %v1854 = vunpack.c.h.b16 %v562
    %v1855 = vunpack.c.l.b16 %v563
    %v1856 = vunpack.c.h.b16 %v563
    %v1857 = vunpack.c.l.b16 %v564
    %v1858 = vunpack.c.h.b16 %v564
    %v1859 = vunpack.c.l.b16 %v565
    %v1860 = vunpack.c.h.b16 %v565
    %v1861 = vunpack.c.l.b16 %v566
    %v1862 = vunpack.c.h.b16 %v566
    %v1863 = vunpack.c.l.b16 %v567
    %v1864 = vunpack.c.h.b16 %v567
    %v1865 = vunpack.c.l.b16 %v568
    %v1866 = vunpack.c.h.b16 %v568
    %v1867 = vunpack.c.l.b16 %v569
    %v1868 = vunpack.c.h.b16 %v569
    %v1869 = vunpack.c.l.b16 %v570
    %v1870 = vunpack.c.h.b16 %v570
    %v1871 = vunpack.c.l.b16 %v571
    %v1872 = vunpack.c.h.b16 %v571
    %v1873 = vunpack.c.l.b16 %v572
    %v1874 = vunpack.c.h.b16 %v572
    %v1875 = vunpack.c.l.b16 %v573
    %v1876 = vunpack.c.h.b16 %v573
    %v1877 = vunpack.c.l.b16 %v574
    %v1878 = vunpack.c.h.b16 %v574
    %v1879 = vunpack.c.l.b16 %v575
    %v1880 = vunpack.c.h.b16 %v575
    %v1881 = vunpack.c.l.b16 %v576
    %v1882 = vunpack.c.h.b16 %v576
    %v1883 = vunpack.c.l.b16 %v577
    %v1884 = vunpack.c.h.b16 %v577
    %v1885 = vunpack.c.l.b16 %v578
    %v1886 = vunpack.c.h.b16 %v578
    %v1887 = vunpack.c.l.b16 %v579
    %v1888 = vunpack.c.h.b16 %v579
    %v1889 = vunpack.c.l.b16 %v580
    %v1890 = vunpack.c.h.b16 %v580
    %v1891 = vunpack.c.l.b16 %v581
    %v1892 = vunpack.c.h.b16 %v581
    %v1893 = vunpack.c.l.b16 %v582
    %v1894 = vunpack.c.h.b16 %v582
    %v1895 = vunpack.c.l.b16 %v583
    %v1896 = vunpack.c.h.b16 %v583
    %v1897 = vunpack.c.l.b16 %v584
    %v1898 = vunpack.c.h.b16 %v584
    %v1899 = vunpack.c.l.b16 %v585
    %v1900 = vunpack.c.h.b16 %v585
    %v1901 = vunpack.c.l.b16 %v586
    %v1902 = vunpack.c.h.b16 %v586
    %v1903 = vunpack.c.l.b16 %v587
    %v1904 = vunpack.c.h.b16 %v587
    %v1905 = vunpack.c.l.b16 %v588
    %v1906 = vunpack.c.h.b16 %v588
    %v1907 = vunpack.c.l.b16 %v589
    %v1908 = vunpack.c.h.b16 %v589
    %v1909 = vunpack.c.l.b16 %v590
    %v1910 = vunpack.c.h.b16 %v590
    %v1911 = vunpack.c.l.b16 %v591
    %v1912 = vunpack.c.h.b16 %v591
    %v1913 = vunpack.c.l.b16 %v592
    %v1914 = vunpack.c.h.b16 %v592
    %v1915 = vunpack.c.l.b16 %v593
    %v1916 = vunpack.c.h.b16 %v593
    %v1917 = vunpack.c.l.b16 %v594
    %v1918 = vunpack.c.h.b16 %v594
    %v1919 = vunpack.c.l.b16 %v595
    %v1920 = vunpack.c.h.b16 %v595
    %v1921 = vunpack.c.l.b16 %v596
    %v1922 = vunpack.c.h.b16 %v596
    %v1923 = vunpack.c.l.b16 %v597
    %v1924 = vunpack.c.h.b16 %v597
    %v1925 = vunpack.c.l.b16 %v598
    %v1926 = vunpack.c.h.b16 %v598
    %v1927 = vunpack.c.l.b16 %v599
    %v1928 = vunpack.c.h.b16 %v599
    %v1929 = vunpack.c.l.b16 %v600
    %v1930 = vunpack.c.h.b16 %v600
    %v1931 = vunpack.c.l.b16 %v601
    %v1932 = vunpack.c.h.b16 %v601
    %v1933 = vunpack.c.l.b16 %v602
    %v1934 = vunpack.c.h.b16 %v602
    %v1935 = vunpack.c.l.b16 %v603
    %v1936 = vunpack.c.h.b16 %v603
    %v1937 = vunpack.c.l.b16 %v604
    %v1938 = vunpack.c.h.b16 %v604
    %v1939 = vunpack.c.l.b16 %v605
    %v1940 = vunpack.c.h.b16 %v605
    %v1941 = vunpack.c.l.b16 %v606
    %v1942 = vunpack.c.h.b16 %v606
    %v1943 = vunpack.c.l.b16 %v607
    %v1944 = vunpack.c.h.b16 %v607
    %v1945 = vunpack.c.l.b16 %v608
    %v1946 = vunpack.c.h.b16 %v608
    %v1947 = vunpack.c.l.b16 %v609
    %v1948 = vunpack.c.h.b16 %v609
    %v1949 = vunpack.c.l.b16 %v610
    %v1950 = vunpack.c.h.b16 %v610
    %v1951 = vunpack.c.l.b16 %v611
    %v1952 = vunpack.c.h.b16 %v611
    %v1953 = vunpack.c.l.b16 %v612
    %v1954 = vunpack.c.h.b16 %v612
    %v1955 = vunpack.c.l.b16 %v613
    %v1956 = vunpack.c.h.b16 %v613
    %v1957 = vunpack.c.l.b16 %v614
    %v1958 = vunpack.c.h.b16 %v614
    %v1959 = vunpack.c.l.b16 %v615
    %v1960 = vunpack.c.h.b16 %v615
    %v1961 = vunpack.c.l.b16 %v616
    %v1962 = vunpack.c.h.b16 %v616
    %v1963 = vunpack.c.l.b16 %v617
    %v1964 = vunpack.c.h.b16 %v617
    %v1965 = vunpack.c.l.b16 %v618
    %v1966 = vunpack.c.h.b16 %v618
    %v1967 = vunpack.c.l.b16 %v619
    %v1968 = vunpack.c.h.b16 %v619
    %v1969 = vunpack.c.l.b16 %v620
    %v1970 = vunpack.c.h.b16 %v620
    %v1971 = vunpack.c.l.b16 %v621
    %v1972 = vunpack.c.h.b16 %v621
    %v1973 = vunpack.c.l.b16 %v622
    %v1974 = vunpack.c.h.b16 %v622
    %v1975 = vunpack.c.l.b16 %v623
    %v1976 = vunpack.c.h.b16 %v623
    %v1977 = vunpack.c.l.b16 %v624
    %v1978 = vunpack.c.h.b16 %v624
    %v1979 = vunpack.c.l.b16 %v625
    %v1980 = vunpack.c.h.b16 %v625
    %v1981 = vunpack.c.l.b16 %v626
    %v1982 = vunpack.c.h.b16 %v626
    %v1983 = vunpack.c.l.b16 %v627
    %v1984 = vunpack.c.h.b16 %v627
    %v1985 = vunpack.c.l.b16 %v628
    %v1986 = vunpack.c.h.b16 %v628
    %v1987 = vunpack.c.l.b16 %v629
    %v1988 = vunpack.c.h.b16 %v629
    %v1989 = vunpack.c.l.b16 %v630
    %v1990 = vunpack.c.h.b16 %v630
    %v1991 = vunpack.c.l.b16 %v631
    %v1992 = vunpack.c.h.b16 %v631
    %v1993 = vunpack.c.l.b16 %v632
    %v1994 = vunpack.c.h.b16 %v632
    %v1995 = vunpack.c.l.b16 %v633
    %v1996 = vunpack.c.h.b16 %v633
    %v1997 = vunpack.c.l.b16 %v634
    %v1998 = vunpack.c.h.b16 %v634
    %v1999 = vpack.c.b16 %v1111, %v1103
    %v2000 = vpack.c.b16 %v1112, %v1104
    %v2001 = vpack.c.b16 %v1113, %v1105
    %v2002 = vpack.c.b16 %v1114, %v1106
    %v2003 = vpack.c.b16 %v1115, %v1107
    %v2004 = vpack.c.b16 %v1116, %v1108
    %v2005 = vpack.c.b16 %v1117, %v1109
    %v2006 = vpack.c.b16 %v1118, %v1110
    %v2007 = vpack.c.b16 %v1127, %v1119
    %v2008 = vpack.c.b16 %v1128, %v1120
    %v2009 = vpack.c.b16 %v1129, %v1121
    %v2010 = vpack.c.b16 %v1130, %v1122
    %v2011 = vpack.c.b16 %v1131, %v1123
    %v2012 = vpack.c.b16 %v1132, %v1124
    %v2013 = vpack.c.b16 %v1133, %v1125
    %v2014 = vpack.c.b16 %v1134, %v1126
    %v2015 = vpack.c.b16 %v1143, %v1135
    %v2016 = vpack.c.b16 %v1144, %v1136
    %v2017 = vpack.c.b16 %v1145, %v1137
    %v2018 = vpack.c.b16 %v1146, %v1138
    %v2019 = vpack.c.b16 %v1147, %v1139
    %v2020 = vpack.c.b16 %v1148, %v1140
    %v2021 = vpack.c.b16 %v1149, %v1141
    %v2022 = vpack.c.b16 %v1150, %v1142
    %v2023 = vpack.c.b16 %v1159, %v1151
    %v2024 = vpack.c.b16 %v1160, %v1152
    %v2025 = vpack.c.b16 %v1161, %v1153
    %v2026 = vpack.c.b16 %v1162, %v1154
    %v2027 = vpack.c.b16 %v1163, %v1155
    %v2028 = vpack.c.b16 %v1164, %v1156
    %v2029 = vpack.c.b16 %v1165, %v1157
    %v2030 = vpack.c.b16 %v1166, %v1158
    %v2031 = vpack.c.b16 %v1175, %v1167
    %v2032 = vpack.c.b16 %v1176, %v1168
    %v2033 = vpack.c.b16 %v1177, %v1169
    %v2034 = vpack.c.b16 %v1178, %v1170
    %v2035 = vpack.c.b16 %v1179, %v1171
    %v2036 = vpack.c.b16 %v1180, %v1172
    %v2037 = vpack.c.b16 %v1181, %v1173
    %v2038 = vpack.c.b16 %v1182, %v1174
    %v2039 = vpack.c.b16 %v1191, %v1183
    %v2040 = vpack.c.b16 %v1192, %v1184
    %v2041 = vpack.c.b16 %v1193, %v1185
    %v2042 = vpack.c.b16 %v1194, %v1186
    %v2043 = vpack.c.b16 %v1195, %v1187
    %v2044 = vpack.c.b16 %v1196, %v1188
    %v2045 = vpack.c.b16 %v1197, %v1189
    %v2046 = vpack.c.b16 %v1198, %v1190
    %v2047 = vpack.c.b16 %v1207, %v1199
    %v2048 = vpack.c.b16 %v1208, %v1200
    %v2049 = vpack.c.b16 %v1209, %v1201
    %v2050 = vpack.c.b16 %v1210, %v1202
    %v2051 = vpack.c.b16 %v1211, %v1203
    %v2052 = vpack.c.b16 %v1212, %v1204
    %v2053 = vpack.c.b16 %v1213, %v1205
    %v2054 = vpack.c.b16 %v1214, %v1206
    %v2055 = vpack.c.b16 %v1223, %v1215
    %v2056 = vpack.c.b16 %v1224, %v1216
    %v2057 = vpack.c.b16 %v1225, %v1217
    %v2058 = vpack.c.b16 %v1226, %v1218
    %v2059 = vpack.c.b16 %v1227, %v1219
    %v2060 = vpack.c.b16 %v1228, %v1220
    %v2061 = vpack.c.b16 %v1229, %v1221
    %v2062 = vpack.c.b16 %v1230, %v1222
    %v2063 = vpack.c.b16 %v1239, %v1231
    %v2064 = vpack.c.b16 %v1240, %v1232
    %v2065 = vpack.c.b16 %v1241, %v1233
    %v2066 = vpack.c.b16 %v1242, %v1234
    %v2067 = vpack.c.b16 %v1243, %v1235
    %v2068 = vpack.c.b16 %v1244, %v1236
    %v2069 = vpack.c.b16 %v1245, %v1237
    %v2070 = vpack.c.b16 %v1246, %v1238
    %v2071 = vpack.c.b16 %v1255, %v1247
    %v2072 = vpack.c.b16 %v1256, %v1248
    %v2073 = vpack.c.b16 %v1257, %v1249
    %v2074 = vpack.c.b16 %v1258, %v1250
    %v2075 = vpack.c.b16 %v1259, %v1251
    %v2076 = vpack.c.b16 %v1260, %v1252
    %v2077 = vpack.c.b16 %v1261, %v1253
    %v2078 = vpack.c.b16 %v1262, %v1254
    %v2079 = vpack.c.b16 %v1271, %v1263
    %v2080 = vpack.c.b16 %v1272, %v1264
    %v2081 = vpack.c.b16 %v1273, %v1265
    %v2082 = vpack.c.b16 %v1274, %v1266
    %v2083 = vpack.c.b16 %v1275, %v1267
    %v2084 = vpack.c.b16 %v1276, %v1268
    %v2085 = vpack.c.b16 %v1277, %v1269
    %v2086 = vpack.c.b16 %v1278, %v1270
    %v2087 = vpack.c.b16 %v1287, %v1279
    %v2088 = vpack.c.b16 %v1288, %v1280
    %v2089 = vpack.c.b16 %v1289, %v1281
    %v2090 = vpack.c.b16 %v1290, %v1282
    %v2091 = vpack.c.b16 %v1291, %v1283
    %v2092 = vpack.c.b16 %v1292, %v1284
    %v2093 = vpack.c.b16 %v1293, %v1285
    %v2094 = vpack.c.b16 %v1294, %v1286
    %v2095 = vpack.c.b16 %v1303, %v1295
    %v2096 = vpack.c.b16 %v1304, %v1296
    %v2097 = vpack.c.b16 %v1305, %v1297
    %v2098 = vpack.c.b16 %v1306, %v1298
    %v2099 = vpack.c.b16 %v1307, %v1299
    %v2100 = vpack.c.b16 %v1308, %v1300
    %v2101 = vpack.c.b16 %v1309, %v1301
    %v2102 = vpack.c.b16 %v1310, %v1302
    %v2103 = vpack.c.b16 %v1319, %v1311
    %v2104 = vpack.c.b16 %v1320, %v1312
    %v2105 = vpack.c.b16 %v1321, %v1313
    %v2106 = vpack.c.b16 %v1322, %v1314
    %v2107 = vpack.c.b16 %v1323, %v1315
    %v2108 = vpack.c.b16 %v1324, %v1316
    %v2109 = vpack.c.b16 %v1325, %v1317
    %v2110 = vpack.c.b16 %v1326, %v1318
    %v2111 = vpack.c.b16 %v1335, %v1327
    %v2112 = vpack.c.b16 %v1336, %v1328
    %v2113 = vpack.c.b16 %v1337, %v1329
    %v2114 = vpack.c.b16 %v1338, %v1330
    %v2115 = vpack.c.b16 %v1339, %v1331
    %v2116 = vpack.c.b16 %v1340, %v1332
    %v2117 = vpack.c.b16 %v1341, %v1333
    %v2118 = vpack.c.b16 %v1342, %v1334
    %v2119 = vpack.c.b16 %v1351, %v1343
    %v2120 = vpack.c.b16 %v1352, %v1344
    %v2121 = vpack.c.b16 %v1353, %v1345
    %v2122 = vpack.c.b16 %v1354, %v1346
    %v2123 = vpack.c.b16 %v1355, %v1347
    %v2124 = vpack.c.b16 %v1356, %v1348
    %v2125 = vpack.c.b16 %v1357, %v1349
    %v2126 = vpack.c.b16 %v1358, %v1350
    %v2127 = vpack.c.b16 %v1367, %v1359
    %v2128 = vpack.c.b16 %v1368, %v1360
    %v2129 = vpack.c.b16 %v1369, %v1361
    %v2130 = vpack.c.b16 %v1370, %v1362
    %v2131 = vpack.c.b16 %v1371, %v1363
    %v2132 = vpack.c.b16 %v1372, %v1364
    %v2133 = vpack.c.b16 %v1373, %v1365
    %v2134 = vpack.c.b16 %v1374, %v1366
    %v2135 = vpack.c.b16 %v1383, %v1375
    %v2136 = vpack.c.b16 %v1384, %v1376
    %v2137 = vpack.c.b16 %v1385, %v1377
    %v2138 = vpack.c.b16 %v1386, %v1378
    %v2139 = vpack.c.b16 %v1387, %v1379
    %v2140 = vpack.c.b16 %v1388, %v1380
    %v2141 = vpack.c.b16 %v1389, %v1381
    %v2142 = vpack.c.b16 %v1390, %v1382
    %v2143 = vpack.c.b16 %v1399, %v1391
    %v2144 = vpack.c.b16 %v1400, %v1392
    %v2145 = vpack.c.b16 %v1401, %v1393
    %v2146 = vpack.c.b16 %v1402, %v1394
    %v2147 = vpack.c.b16 %v1403, %v1395
    %v2148 = vpack.c.b16 %v1404, %v1396
    %v2149 = vpack.c.b16 %v1405, %v1397
    %v2150 = vpack.c.b16 %v1406, %v1398
    %v2151 = vpack.c.b16 %v1415, %v1407
    %v2152 = vpack.c.b16 %v1416, %v1408
    %v2153 = vpack.c.b16 %v1417, %v1409
    %v2154 = vpack.c.b16 %v1418, %v1410
    %v2155 = vpack.c.b16 %v1419, %v1411
    %v2156 = vpack.c.b16 %v1420, %v1412
    %v2157 = vpack.c.b16 %v1421, %v1413
    %v2158 = vpack.c.b16 %v1422, %v1414
    %v2159 = vpack.c.b16 %v1431, %v1423
    %v2160 = vpack.c.b16 %v1432, %v1424
    %v2161 = vpack.c.b16 %v1433, %v1425
    %v2162 = vpack.c.b16 %v1434, %v1426
    %v2163 = vpack.c.b16 %v1435, %v1427
    %v2164 = vpack.c.b16 %v1436, %v1428
    %v2165 = vpack.c.b16 %v1437, %v1429
    %v2166 = vpack.c.b16 %v1438, %v1430
    %v2167 = vpack.c.b16 %v1447, %v1439
    %v2168 = vpack.c.b16 %v1448, %v1440
    %v2169 = vpack.c.b16 %v1449, %v1441
    %v2170 = vpack.c.b16 %v1450, %v1442
    %v2171 = vpack.c.b16 %v1451, %v1443
    %v2172 = vpack.c.b16 %v1452, %v1444
    %v2173 = vpack.c.b16 %v1453, %v1445
    %v2174 = vpack.c.b16 %v1454, %v1446
    %v2175 = vpack.c.b16 %v1463, %v1455
    %v2176 = vpack.c.b16 %v1464, %v1456
    %v2177 = vpack.c.b16 %v1465, %v1457
    %v2178 = vpack.c.b16 %v1466, %v1458
    %v2179 = vpack.c.b16 %v1467, %v1459
    %v2180 = vpack.c.b16 %v1468, %v1460
    %v2181 = vpack.c.b16 %v1469, %v1461
    %v2182 = vpack.c.b16 %v1470, %v1462
    %v2183 = vpack.c.b16 %v1479, %v1471
    %v2184 = vpack.c.b16 %v1480, %v1472
    %v2185 = vpack.c.b16 %v1481, %v1473
    %v2186 = vpack.c.b16 %v1482, %v1474
    %v2187 = vpack.c.b16 %v1483, %v1475
    %v2188 = vpack.c.b16 %v1484, %v1476
    %v2189 = vpack.c.b16 %v1485, %v1477
    %v2190 = vpack.c.b16 %v1486, %v1478
    %v2191 = vpack.c.b16 %v1495, %v1487
    %v2192 = vpack.c.b16 %v1496, %v1488
    %v2193 = vpack.c.b16 %v1497, %v1489
    %v2194 = vpack.c.b16 %v1498, %v1490
    %v2195 = vpack.c.b16 %v1499, %v1491
    %v2196 = vpack.c.b16 %v1500, %v1492
    %v2197 = vpack.c.b16 %v1501, %v1493
    %v2198 = vpack.c.b16 %v1502, %v1494
    %v2199 = vpack.c.b16 %v1511, %v1503
    %v2200 = vpack.c.b16 %v1512, %v1504
    %v2201 = vpack.c.b16 %v1513, %v1505
    %v2202 = vpack.c.b16 %v1514, %v1506
    %v2203 = vpack.c.b16 %v1515, %v1507
    %v2204 = vpack.c.b16 %v1516, %v1508
    %v2205 = vpack.c.b16 %v1517, %v1509
    %v2206 = vpack.c.b16 %v1518, %v1510
    %v2207 = vpack.c.b16 %v1527, %v1519
    %v2208 = vpack.c.b16 %v1528, %v1520
    %v2209 = vpack.c.b16 %v1529, %v1521
    %v2210 = vpack.c.b16 %v1530, %v1522
    %v2211 = vpack.c.b16 %v1531, %v1523
    %v2212 = vpack.c.b16 %v1532, %v1524
    %v2213 = vpack.c.b16 %v1533, %v1525
    %v2214 = vpack.c.b16 %v1534, %v1526
    %v2215 = vpack.c.b16 %v1543, %v1535
    %v2216 = vpack.c.b16 %v1544, %v1536
    %v2217 = vpack.c.b16 %v1545, %v1537
    %v2218 = vpack.c.b16 %v1546, %v1538
    %v2219 = vpack.c.b16 %v1547, %v1539
    %v2220 = vpack.c.b16 %v1548, %v1540
    %v2221 = vpack.c.b16 %v1549, %v1541
    %v2222 = vpack.c.b16 %v1550, %v1542
    %v2223 = vpack.c.b16 %v1559, %v1551
    %v2224 = vpack.c.b16 %v1560, %v1552
    %v2225 = vpack.c.b16 %v1561, %v1553
    %v2226 = vpack.c.b16 %v1562, %v1554
    %v2227 = vpack.c.b16 %v1563, %v1555
    %v2228 = vpack.c.b16 %v1564, %v1556
    %v2229 = vpack.c.b16 %v1565, %v1557
    %v2230 = vpack.c.b16 %v1566, %v1558
    %v2231 = vpack.c.b16 %v1575, %v1567
    %v2232 = vpack.c.b16 %v1576, %v1568
    %v2233 = vpack.c.b16 %v1577, %v1569
    %v2234 = vpack.c.b16 %v1578, %v1570
    %v2235 = vpack.c.b16 %v1579, %v1571
    %v2236 = vpack.c.b16 %v1580, %v1572
    %v2237 = vpack.c.b16 %v1581, %v1573
    %v2238 = vpack.c.b16 %v1582, %v1574
    %v2239 = vpack.c.b16 %v1591, %v1583
    %v2240 = vpack.c.b16 %v1592, %v1584
    %v2241 = vpack.c.b16 %v1593, %v1585
    %v2242 = vpack.c.b16 %v1594, %v1586
    %v2243 = vpack.c.b16 %v1595, %v1587
    %v2244 = vpack.c.b16 %v1596, %v1588
    %v2245 = vpack.c.b16 %v1597, %v1589
    %v2246 = vpack.c.b16 %v1598, %v1590
    %v2247 = vpack.c.b16 %v1607, %v1599
    %v2248 = vpack.c.b16 %v1608, %v1600
    %v2249 = vpack.c.b16 %v1609, %v1601
    %v2250 = vpack.c.b16 %v1610, %v1602
    %v2251 = vpack.c.b16 %v1611, %v1603
    %v2252 = vpack.c.b16 %v1612, %v1604
    %v2253 = vpack.c.b16 %v1613, %v1605
    %v2254 = vpack.c.b16 %v1614, %v1606
    %v2255 = vpack.c.b16 %v1623, %v1615
    %v2256 = vpack.c.b16 %v1624, %v1616
    %v2257 = vpack.c.b16 %v1625, %v1617
    %v2258 = vpack.c.b16 %v1626, %v1618
    %v2259 = vpack.c.b16 %v1627, %v1619
    %v2260 = vpack.c.b16 %v1628, %v1620
    %v2261 = vpack.c.b16 %v1629, %v1621
    %v2262 = vpack.c.b16 %v1630, %v1622
    %v2263 = vpack.c.b16 %v1639, %v1631
    %v2264 = vpack.c.b16 %v1640, %v1632
    %v2265 = vpack.c.b16 %v1641, %v1633
    %v2266 = vpack.c.b16 %v1642, %v1634
    %v2267 = vpack.c.b16 %v1643, %v1635
    %v2268 = vpack.c.b16 %v1644, %v1636
    %v2269 = vpack.c.b16 %v1645, %v1637
    %v2270 = vpack.c.b16 %v1646, %v1638
    %v2271 = vpack.c.b16 %v1655, %v1647
    %v2272 = vpack.c.b16 %v1656, %v1648
    %v2273 = vpack.c.b16 %v1657, %v1649
    %v2274 = vpack.c.b16 %v1658, %v1650
    %v2275 = vpack.c.b16 %v1659, %v1651
    %v2276 = vpack.c.b16 %v1660, %v1652
    %v2277 = vpack.c.b16 %v1661, %v1653
    %v2278 = vpack.c.b16 %v1662, %v1654
    %v2279 = vpack.c.b16 %v1671, %v1663
    %v2280 = vpack.c.b16 %v1672, %v1664
    %v2281 = vpack.c.b16 %v1673, %v1665
    %v2282 = vpack.c.b16 %v1674, %v1666
    %v2283 = vpack.c.b16 %v1675, %v1667
    %v2284 = vpack.c.b16 %v1676, %v1668
    %v2285 = vpack.c.b16 %v1677, %v1669
    %v2286 = vpack.c.b16 %v1678, %v1670
    %v2287 = vpack.c.b16 %v1687, %v1679
    %v2288 = vpack.c.b16 %v1688, %v1680
    %v2289 = vpack.c.b16 %v1689, %v1681
    %v2290 = vpack.c.b16 %v1690, %v1682
    %v2291 = vpack.c.b16 %v1691, %v1683
    %v2292 = vpack.c.b16 %v1692, %v1684
    %v2293 = vpack.c.b16 %v1693, %v1685
    %v2294 = vpack.c.b16 %v1694, %v1686
    %v2295 = vpack.c.b16 %v1703, %v1695
    %v2296 = vpack.c.b16 %v1704, %v1696
    %v2297 = vpack.c.b16 %v1705, %v1697
    %v2298 = vpack.c.b16 %v1706, %v1698
    %v2299 = vpack.c.b16 %v1707, %v1699
    %v2300 = vpack.c.b16 %v1708, %v1700
    %v2301 = vpack.c.b16 %v1709, %v1701
    %v2302 = vpack.c.b16 %v1710, %v1702
    %v2303 = vpack.c.b16 %v1719, %v1711
    %v2304 = vpack.c.b16 %v1720, %v1712
    %v2305 = vpack.c.b16 %v1721, %v1713
    %v2306 = vpack.c.b16 %v1722, %v1714
    %v2307 = vpack.c.b16 %v1723, %v1715
    %v2308 = vpack.c.b16 %v1724, %v1716
    %v2309 = vpack.c.b16 %v1725, %v1717
    %v2310 = vpack.c.b16 %v1726, %v1718
    %v2311 = vpack.c.b16 %v1735, %v1727
    %v2312 = vpack.c.b16 %v1736, %v1728
    %v2313 = vpack.c.b16 %v1737, %v1729
    %v2314 = vpack.c.b16 %v1738, %v1730
    %v2315 = vpack.c.b16 %v1739, %v1731
    %v2316 = vpack.c.b16 %v1740, %v1732
    %v2317 = vpack.c.b16 %v1741, %v1733
    %v2318 = vpack.c.b16 %v1742, %v1734
    %v2319 = vpack.c.b16 %v1751, %v1743
    %v2320 = vpack.c.b16 %v1752, %v1744
    %v2321 = vpack.c.b16 %v1753, %v1745
    %v2322 = vpack.c.b16 %v1754, %v1746
    %v2323 = vpack.c.b16 %v1755, %v1747
    %v2324 = vpack.c.b16 %v1756, %v1748
    %v2325 = vpack.c.b16 %v1757, %v1749
    %v2326 = vpack.c.b16 %v1758, %v1750
    %v2327 = vpack.c.b16 %v1767, %v1759
    %v2328 = vpack.c.b16 %v1768, %v1760
    %v2329 = vpack.c.b16 %v1769, %v1761
    %v2330 = vpack.c.b16 %v1770, %v1762
    %v2331 = vpack.c.b16 %v1771, %v1763
    %v2332 = vpack.c.b16 %v1772, %v1764
    %v2333 = vpack.c.b16 %v1773, %v1765
    %v2334 = vpack.c.b16 %v1774, %v1766
    %v2335 = vpack.c.b16 %v1783, %v1775
    %v2336 = vpack.c.b16 %v1784, %v1776
    %v2337 = vpack.c.b16 %v1785, %v1777
    %v2338 = vpack.c.b16 %v1786, %v1778
    %v2339 = vpack.c.b16 %v1787, %v1779
    %v2340 = vpack.c.b16 %v1788, %v1780
    %v2341 = vpack.c.b16 %v1789, %v1781
    %v2342 = vpack.c.b16 %v1790, %v1782
    %v2343 = vpack.c.b16 %v1799, %v1791
    %v2344 = vpack.c.b16 %v1800, %v1792
    %v2345 = vpack.c.b16 %v1801, %v1793
    %v2346 = vpack.c.b16 %v1802, %v1794
    %v2347 = vpack.c.b16 %v1803, %v1795
    %v2348 = vpack.c.b16 %v1804, %v1796
    %v2349 = vpack.c.b16 %v1805, %v1797
    %v2350 = vpack.c.b16 %v1806, %v1798
    %v2351 = vpack.c.b16 %v1815, %v1807
    %v2352 = vpack.c.b16 %v1816, %v1808
    %v2353 = vpack.c.b16 %v1817, %v1809
    %v2354 = vpack.c.b16 %v1818, %v1810
    %v2355 = vpack.c.b16 %v1819, %v1811
    %v2356 = vpack.c.b16 %v1820, %v1812
    %v2357 = vpack.c.b16 %v1821, %v1813
    %v2358 = vpack.c.b16 %v1822, %v1814
    %v2359 = vpack.c.b16 %v1831, %v1823
    %v2360 = vpack.c.b16 %v1832, %v1824
    %v2361 = vpack.c.b16 %v1833, %v1825
    %v2362 = vpack.c.b16 %v1834, %v1826
    %v2363 = vpack.c.b16 %v1835, %v1827
    %v2364 = vpack.c.b16 %v1836, %v1828
    %v2365 = vpack.c.b16 %v1837, %v1829
    %v2366 = vpack.c.b16 %v1838, %v1830
    %v2367 = vpack.c.b16 %v1847, %v1839
    %v2368 = vpack.c.b16 %v1848, %v1840
    %v2369 = vpack.c.b16 %v1849, %v1841
    %v2370 = vpack.c.b16 %v1850, %v1842
    %v2371 = vpack.c.b16 %v1851, %v1843
    %v2372 = vpack.c.b16 %v1852, %v1844
    %v2373 = vpack.c.b16 %v1853, %v1845
    %v2374 = vpack.c.b16 %v1854, %v1846
    %v2375 = vpack.c.b16 %v1863, %v1855
    %v2376 = vpack.c.b16 %v1864, %v1856
    %v2377 = vpack.c.b16 %v1865, %v1857
    %v2378 = vpack.c.b16 %v1866, %v1858
    %v2379 = vpack.c.b16 %v1867, %v1859
    %v2380 = vpack.c.b16 %v1868, %v1860
    %v2381 = vpack.c.b16 %v1869, %v1861
    %v2382 = vpack.c.b16 %v1870, %v1862
    %v2383 = vpack.c.b16 %v1879, %v1871
    %v2384 = vpack.c.b16 %v1880, %v1872
    %v2385 = vpack.c.b16 %v1881, %v1873
    %v2386 = vpack.c.b16 %v1882, %v1874
    %v2387 = vpack.c.b16 %v1883, %v1875
    %v2388 = vpack.c.b16 %v1884, %v1876
    %v2389 = vpack.c.b16 %v1885, %v1877
    %v2390 = vpack.c.b16 %v1886, %v1878
    %v2391 = vpack.c.b16 %v1895, %v1887
    %v2392 = vpack.c.b16 %v1896, %v1888
    %v2393 = vpack.c.b16 %v1897, %v1889
    %v2394 = vpack.c.b16 %v1898, %v1890
    %v2395 = vpack.c.b16 %v1899, %v1891
    %v2396 = vpack.c.b16 %v1900, %v1892
    %v2397 = vpack.c.b16 %v1901, %v1893
    %v2398 = vpack.c.b16 %v1902, %v1894
    %v2399 = vpack.c.b16 %v1911, %v1903
    %v2400 = vpack.c.b16 %v1912, %v1904
    %v2401 = vpack.c.b16 %v1913, %v1905
    %v2402 = vpack.c.b16 %v1914, %v1906
    %v2403 = vpack.c.b16 %v1915, %v1907
    %v2404 = vpack.c.b16 %v1916, %v1908
    %v2405 = vpack.c.b16 %v1917, %v1909
    %v2406 = vpack.c.b16 %v1918, %v1910
    %v2407 = vpack.c.b16 %v1927, %v1919
    %v2408 = vpack.c.b16 %v1928, %v1920
    %v2409 = vpack.c.b16 %v1929, %v1921
    %v2410 = vpack.c.b16 %v1930, %v1922
    %v2411 = vpack.c.b16 %v1931, %v1923
    %v2412 = vpack.c.b16 %v1932, %v1924
    %v2413 = vpack.c.b16 %v1933, %v1925
    %v2414 = vpack.c.b16 %v1934, %v1926
    %v2415 = vpack.c.b16 %v1943, %v1935
    %v2416 = vpack.c.b16 %v1944, %v1936
    %v2417 = vpack.c.b16 %v1945, %v1937
    %v2418 = vpack.c.b16 %v1946, %v1938
    %v2419 = vpack.c.b16 %v1947, %v1939
    %v2420 = vpack.c.b16 %v1948, %v1940
    %v2421 = vpack.c.b16 %v1949, %v1941
    %v2422 = vpack.c.b16 %v1950, %v1942
    %v2423 = vpack.c.b16 %v1959, %v1951
    %v2424 = vpack.c.b16 %v1960, %v1952
    %v2425 = vpack.c.b16 %v1961, %v1953
    %v2426 = vpack.c.b16 %v1962, %v1954
    %v2427 = vpack.c.b16 %v1963, %v1955
    %v2428 = vpack.c.b16 %v1964, %v1956
    %v2429 = vpack.c.b16 %v1965, %v1957
    %v2430 = vpack.c.b16 %v1966, %v1958
    %v2431 = vpack.c.b16 %v1975, %v1967
    %v2432 = vpack.c.b16 %v1976, %v1968
    %v2433 = vpack.c.b16 %v1977, %v1969
    %v2434 = vpack.c.b16 %v1978, %v1970
    %v2435 = vpack.c.b16 %v1979, %v1971
    %v2436 = vpack.c.b16 %v1980, %v1972
    %v2437 = vpack.c.b16 %v1981, %v1973
    %v2438 = vpack.c.b16 %v1982, %v1974
    %v2439 = vpack.c.b16 %v1991, %v1983
    %v2440 = vpack.c.b16 %v1992, %v1984
    %v2441 = vpack.c.b16 %v1993, %v1985
    %v2442 = vpack.c.b16 %v1994, %v1986
    %v2443 = vpack.c.b16 %v1995, %v1987
    %v2444 = vpack.c.b16 %v1996, %v1988
    %v2445 = vpack.c.b16 %v1997, %v1989
    %v2446 = vpack.c.b16 %v1998, %v1990
    %2895 = vmatpush.bf16.msra.mxu0 %v2055
    %2896 = vmatpush.bf16.msra.mxu0 %v2047
    %2897 = vmatpush.bf16.msra.mxu0 %v2039
    %2898 = vmatpush.bf16.msra.mxu0 %v2031
    %2899 = vmatpush.bf16.msra.mxu0 %v2023
    %2900 = vmatpush.bf16.msra.mxu0 %v2015
    %2901 = vmatpush.bf16.msra.mxu0 %v2007
    %2902 = vmatpush.bf16.msra.mxu0 %v1999
    %2903 = vmatmul.bf16.gmra.mxu0 %v180
    %v2904 = vpop.f32.mrf.mxu0
    %v2905 = vadd.f32 %v639, %v2904
    %v2906 = vpop.f32.mrf.mxu0
    %2907 = vdwg.mxu0
    %2908 = vmatpush.bf16.msra.mxu0 %v2119
    %2909 = vmatpush.bf16.msra.mxu0 %v2111
    %2910 = vmatpush.bf16.msra.mxu0 %v2103
    %2911 = vmatpush.bf16.msra.mxu0 %v2095
    %2912 = vmatpush.bf16.msra.mxu0 %v2087
    %2913 = vmatpush.bf16.msra.mxu0 %v2079
    %2914 = vmatpush.bf16.msra.mxu0 %v2071
    %2915 = vmatpush.bf16.msra.mxu0 %v2063
    %2916 = vmatmul.bf16.gmra.mxu0 %v181
    %v2917 = vpop.f32.mrf.mxu0
    %v2918 = vadd.f32 %v2905, %v2917
    %v2919 = vpop.f32.mrf.mxu0
    %2920 = vdwg.mxu0
    %2921 = vmatpush.bf16.msra.mxu0 %v2183
    %2922 = vmatpush.bf16.msra.mxu0 %v2175
    %2923 = vmatpush.bf16.msra.mxu0 %v2167
    %2924 = vmatpush.bf16.msra.mxu0 %v2159
    %2925 = vmatpush.bf16.msra.mxu0 %v2151
    %2926 = vmatpush.bf16.msra.mxu0 %v2143
    %2927 = vmatpush.bf16.msra.mxu0 %v2135
    %2928 = vmatpush.bf16.msra.mxu0 %v2127
    %2929 = vmatmul.bf16.gmra.mxu0 %v182
    %v2930 = vpop.f32.mrf.mxu0
    %v2931 = vadd.f32 %v2918, %v2930
    %v2932 = vpop.f32.mrf.mxu0
    %2933 = vdwg.mxu0
    %2934 = vmatpush.bf16.msra.mxu0 %v2247
    %2935 = vmatpush.bf16.msra.mxu0 %v2239
    %2936 = vmatpush.bf16.msra.mxu0 %v2231
    %2937 = vmatpush.bf16.msra.mxu0 %v2223
    %2938 = vmatpush.bf16.msra.mxu0 %v2215
    %2939 = vmatpush.bf16.msra.mxu0 %v2207
    %2940 = vmatpush.bf16.msra.mxu0 %v2199
    %2941 = vmatpush.bf16.msra.mxu0 %v2191
    %2942 = vmatmul.bf16.gmra.mxu0 %v183
    %v2943 = vpop.f32.mrf.mxu0
    %v2944 = vadd.f32 %v2931, %v2943
    %v2945 = vpop.f32.mrf.mxu0
    %2946 = vdwg.mxu0
    %2947 = vmatpush.bf16.msra.mxu0 %v2311
    %2948 = vmatpush.bf16.msra.mxu0 %v2303
    %2949 = vmatpush.bf16.msra.mxu0 %v2295
    %2950 = vmatpush.bf16.msra.mxu0 %v2287
    %2951 = vmatpush.bf16.msra.mxu0 %v2279
    %2952 = vmatpush.bf16.msra.mxu0 %v2271
    %2953 = vmatpush.bf16.msra.mxu0 %v2263
    %2954 = vmatpush.bf16.msra.mxu0 %v2255
    %2955 = vmatmul.bf16.gmra.mxu0 %v184
    %v2956 = vpop.f32.mrf.mxu0
    %v2957 = vadd.f32 %v2944, %v2956
    %v2958 = vpop.f32.mrf.mxu0
    %2959 = vdwg.mxu0
    %2960 = vmatpush.bf16.msra.mxu0 %v2375
    %2961 = vmatpush.bf16.msra.mxu0 %v2367
    %2962 = vmatpush.bf16.msra.mxu0 %v2359
    %2963 = vmatpush.bf16.msra.mxu0 %v2351
    %2964 = vmatpush.bf16.msra.mxu0 %v2343
    %2965 = vmatpush.bf16.msra.mxu0 %v2335
    %2966 = vmatpush.bf16.msra.mxu0 %v2327
    %2967 = vmatpush.bf16.msra.mxu0 %v2319
    %2968 = vmatmul.bf16.gmra.mxu0 %v185
    %v2969 = vpop.f32.mrf.mxu0
    %v2970 = vadd.f32 %v2957, %v2969
    %v2971 = vpop.f32.mrf.mxu0
    %2972 = vdwg.mxu0
    %2973 = vmatpush.bf16.msra.mxu0 %v2439
    %2974 = vmatpush.bf16.msra.mxu0 %v2431
    %2975 = vmatpush.bf16.msra.mxu0 %v2423
    %2976 = vmatpush.bf16.msra.mxu0 %v2415
    %2977 = vmatpush.bf16.msra.mxu0 %v2407
    %2978 = vmatpush.bf16.msra.mxu0 %v2399
    %2979 = vmatpush.bf16.msra.mxu0 %v2391
    %2980 = vmatpush.bf16.msra.mxu0 %v2383
    %2981 = vmatmul.bf16.gmra.mxu0 %v186
    %v2982 = vpop.f32.mrf.mxu0
    %v2983 = vadd.f32 %v2970, %v2982
    %v2984 = vpop.f32.mrf.mxu0
    %2985 = vdwg.mxu0
    %2986 = vmatpush.bf16.msra.mxu0 %v2056
    %2987 = vmatpush.bf16.msra.mxu0 %v2048
    %2988 = vmatpush.bf16.msra.mxu0 %v2040
    %2989 = vmatpush.bf16.msra.mxu0 %v2032
    %2990 = vmatpush.bf16.msra.mxu0 %v2024
    %2991 = vmatpush.bf16.msra.mxu0 %v2016
    %2992 = vmatpush.bf16.msra.mxu0 %v2008
    %2993 = vmatpush.bf16.msra.mxu0 %v2000
    %2994 = vmatmul.bf16.gmra.mxu0 %v180
    %v2995 = vpop.f32.mrf.mxu0
    %v2996 = vadd.f32 %v640, %v2995
    %v2997 = vpop.f32.mrf.mxu0
    %2998 = vdwg.mxu0
    %2999 = vmatpush.bf16.msra.mxu0 %v2120
    %3000 = vmatpush.bf16.msra.mxu0 %v2112
    %3001 = vmatpush.bf16.msra.mxu0 %v2104
    %3002 = vmatpush.bf16.msra.mxu0 %v2096
    %3003 = vmatpush.bf16.msra.mxu0 %v2088
    %3004 = vmatpush.bf16.msra.mxu0 %v2080
    %3005 = vmatpush.bf16.msra.mxu0 %v2072
    %3006 = vmatpush.bf16.msra.mxu0 %v2064
    %3007 = vmatmul.bf16.gmra.mxu0 %v181
    %v3008 = vpop.f32.mrf.mxu0
    %v3009 = vadd.f32 %v2996, %v3008
    %v3010 = vpop.f32.mrf.mxu0
    %3011 = vdwg.mxu0
    %3012 = vmatpush.bf16.msra.mxu0 %v2184
    %3013 = vmatpush.bf16.msra.mxu0 %v2176
    %3014 = vmatpush.bf16.msra.mxu0 %v2168
    %3015 = vmatpush.bf16.msra.mxu0 %v2160
    %3016 = vmatpush.bf16.msra.mxu0 %v2152
    %3017 = vmatpush.bf16.msra.mxu0 %v2144
    %3018 = vmatpush.bf16.msra.mxu0 %v2136
    %3019 = vmatpush.bf16.msra.mxu0 %v2128
    %3020 = vmatmul.bf16.gmra.mxu0 %v182
    %v3021 = vpop.f32.mrf.mxu0
    %v3022 = vadd.f32 %v3009, %v3021
    %v3023 = vpop.f32.mrf.mxu0
    %3024 = vdwg.mxu0
    %3025 = vmatpush.bf16.msra.mxu0 %v2248
    %3026 = vmatpush.bf16.msra.mxu0 %v2240
    %3027 = vmatpush.bf16.msra.mxu0 %v2232
    %3028 = vmatpush.bf16.msra.mxu0 %v2224
    %3029 = vmatpush.bf16.msra.mxu0 %v2216
    %3030 = vmatpush.bf16.msra.mxu0 %v2208
    %3031 = vmatpush.bf16.msra.mxu0 %v2200
    %3032 = vmatpush.bf16.msra.mxu0 %v2192
    %3033 = vmatmul.bf16.gmra.mxu0 %v183
    %v3034 = vpop.f32.mrf.mxu0
    %v3035 = vadd.f32 %v3022, %v3034
    %v3036 = vpop.f32.mrf.mxu0
    %3037 = vdwg.mxu0
    %3038 = vmatpush.bf16.msra.mxu0 %v2312
    %3039 = vmatpush.bf16.msra.mxu0 %v2304
    %3040 = vmatpush.bf16.msra.mxu0 %v2296
    %3041 = vmatpush.bf16.msra.mxu0 %v2288
    %3042 = vmatpush.bf16.msra.mxu0 %v2280
    %3043 = vmatpush.bf16.msra.mxu0 %v2272
    %3044 = vmatpush.bf16.msra.mxu0 %v2264
    %3045 = vmatpush.bf16.msra.mxu0 %v2256
    %3046 = vmatmul.bf16.gmra.mxu0 %v184
    %v3047 = vpop.f32.mrf.mxu0
    %v3048 = vadd.f32 %v3035, %v3047
    %v3049 = vpop.f32.mrf.mxu0
    %3050 = vdwg.mxu0
    %3051 = vmatpush.bf16.msra.mxu0 %v2376
    %3052 = vmatpush.bf16.msra.mxu0 %v2368
    %3053 = vmatpush.bf16.msra.mxu0 %v2360
    %3054 = vmatpush.bf16.msra.mxu0 %v2352
    %3055 = vmatpush.bf16.msra.mxu0 %v2344
    %3056 = vmatpush.bf16.msra.mxu0 %v2336
    %3057 = vmatpush.bf16.msra.mxu0 %v2328
    %3058 = vmatpush.bf16.msra.mxu0 %v2320
    %3059 = vmatmul.bf16.gmra.mxu0 %v185
    %v3060 = vpop.f32.mrf.mxu0
    %v3061 = vadd.f32 %v3048, %v3060
    %v3062 = vpop.f32.mrf.mxu0
    %3063 = vdwg.mxu0
    %3064 = vmatpush.bf16.msra.mxu0 %v2440
    %3065 = vmatpush.bf16.msra.mxu0 %v2432
    %3066 = vmatpush.bf16.msra.mxu0 %v2424
    %3067 = vmatpush.bf16.msra.mxu0 %v2416
    %3068 = vmatpush.bf16.msra.mxu0 %v2408
    %3069 = vmatpush.bf16.msra.mxu0 %v2400
    %3070 = vmatpush.bf16.msra.mxu0 %v2392
    %3071 = vmatpush.bf16.msra.mxu0 %v2384
    %3072 = vmatmul.bf16.gmra.mxu0 %v186
    %v3073 = vpop.f32.mrf.mxu0
    %v3074 = vadd.f32 %v3061, %v3073
    %v3075 = vpop.f32.mrf.mxu0
    %3076 = vdwg.mxu0
    %3077 = vmatpush.bf16.msra.mxu0 %v2057
    %3078 = vmatpush.bf16.msra.mxu0 %v2049
    %3079 = vmatpush.bf16.msra.mxu0 %v2041
    %3080 = vmatpush.bf16.msra.mxu0 %v2033
    %3081 = vmatpush.bf16.msra.mxu0 %v2025
    %3082 = vmatpush.bf16.msra.mxu0 %v2017
    %3083 = vmatpush.bf16.msra.mxu0 %v2009
    %3084 = vmatpush.bf16.msra.mxu0 %v2001
    %3085 = vmatmul.bf16.gmra.mxu0 %v180
    %v3086 = vpop.f32.mrf.mxu0
    %v3087 = vadd.f32 %v641, %v3086
    %v3088 = vpop.f32.mrf.mxu0
    %3089 = vdwg.mxu0
    %3090 = vmatpush.bf16.msra.mxu0 %v2121
    %3091 = vmatpush.bf16.msra.mxu0 %v2113
    %3092 = vmatpush.bf16.msra.mxu0 %v2105
    %3093 = vmatpush.bf16.msra.mxu0 %v2097
    %3094 = vmatpush.bf16.msra.mxu0 %v2089
    %3095 = vmatpush.bf16.msra.mxu0 %v2081
    %3096 = vmatpush.bf16.msra.mxu0 %v2073
    %3097 = vmatpush.bf16.msra.mxu0 %v2065
    %3098 = vmatmul.bf16.gmra.mxu0 %v181
    %v3099 = vpop.f32.mrf.mxu0
    %v3100 = vadd.f32 %v3087, %v3099
    %v3101 = vpop.f32.mrf.mxu0
    %3102 = vdwg.mxu0
    %3103 = vmatpush.bf16.msra.mxu0 %v2185
    %3104 = vmatpush.bf16.msra.mxu0 %v2177
    %3105 = vmatpush.bf16.msra.mxu0 %v2169
    %3106 = vmatpush.bf16.msra.mxu0 %v2161
    %3107 = vmatpush.bf16.msra.mxu0 %v2153
    %3108 = vmatpush.bf16.msra.mxu0 %v2145
    %3109 = vmatpush.bf16.msra.mxu0 %v2137
    %3110 = vmatpush.bf16.msra.mxu0 %v2129
    %3111 = vmatmul.bf16.gmra.mxu0 %v182
    %v3112 = vpop.f32.mrf.mxu0
    %v3113 = vadd.f32 %v3100, %v3112
    %v3114 = vpop.f32.mrf.mxu0
    %3115 = vdwg.mxu0
    %3116 = vmatpush.bf16.msra.mxu0 %v2249
    %3117 = vmatpush.bf16.msra.mxu0 %v2241
    %3118 = vmatpush.bf16.msra.mxu0 %v2233
    %3119 = vmatpush.bf16.msra.mxu0 %v2225
    %3120 = vmatpush.bf16.msra.mxu0 %v2217
    %3121 = vmatpush.bf16.msra.mxu0 %v2209
    %3122 = vmatpush.bf16.msra.mxu0 %v2201
    %3123 = vmatpush.bf16.msra.mxu0 %v2193
    %3124 = vmatmul.bf16.gmra.mxu0 %v183
    %v3125 = vpop.f32.mrf.mxu0
    %v3126 = vadd.f32 %v3113, %v3125
    %v3127 = vpop.f32.mrf.mxu0
    %3128 = vdwg.mxu0
    %3129 = vmatpush.bf16.msra.mxu0 %v2313
    %3130 = vmatpush.bf16.msra.mxu0 %v2305
    %3131 = vmatpush.bf16.msra.mxu0 %v2297
    %3132 = vmatpush.bf16.msra.mxu0 %v2289
    %3133 = vmatpush.bf16.msra.mxu0 %v2281
    %3134 = vmatpush.bf16.msra.mxu0 %v2273
    %3135 = vmatpush.bf16.msra.mxu0 %v2265
    %3136 = vmatpush.bf16.msra.mxu0 %v2257
    %3137 = vmatmul.bf16.gmra.mxu0 %v184
    %v3138 = vpop.f32.mrf.mxu0
    %v3139 = vadd.f32 %v3126, %v3138
    %v3140 = vpop.f32.mrf.mxu0
    %3141 = vdwg.mxu0
    %3142 = vmatpush.bf16.msra.mxu0 %v2377
    %3143 = vmatpush.bf16.msra.mxu0 %v2369
    %3144 = vmatpush.bf16.msra.mxu0 %v2361
    %3145 = vmatpush.bf16.msra.mxu0 %v2353
    %3146 = vmatpush.bf16.msra.mxu0 %v2345
    %3147 = vmatpush.bf16.msra.mxu0 %v2337
    %3148 = vmatpush.bf16.msra.mxu0 %v2329
    %3149 = vmatpush.bf16.msra.mxu0 %v2321
    %3150 = vmatmul.bf16.gmra.mxu0 %v185
    %v3151 = vpop.f32.mrf.mxu0
    %v3152 = vadd.f32 %v3139, %v3151
    %v3153 = vpop.f32.mrf.mxu0
    %3154 = vdwg.mxu0
    %3155 = vmatpush.bf16.msra.mxu0 %v2441
    %3156 = vmatpush.bf16.msra.mxu0 %v2433
    %3157 = vmatpush.bf16.msra.mxu0 %v2425
    %3158 = vmatpush.bf16.msra.mxu0 %v2417
    %3159 = vmatpush.bf16.msra.mxu0 %v2409
    %3160 = vmatpush.bf16.msra.mxu0 %v2401
    %3161 = vmatpush.bf16.msra.mxu0 %v2393
    %3162 = vmatpush.bf16.msra.mxu0 %v2385
    %3163 = vmatmul.bf16.gmra.mxu0 %v186
    %v3164 = vpop.f32.mrf.mxu0
    %v3165 = vadd.f32 %v3152, %v3164
    %v3166 = vpop.f32.mrf.mxu0
    %3167 = vdwg.mxu0
    %3168 = vmatpush.bf16.msra.mxu0 %v2058
    %3169 = vmatpush.bf16.msra.mxu0 %v2050
    %3170 = vmatpush.bf16.msra.mxu0 %v2042
    %3171 = vmatpush.bf16.msra.mxu0 %v2034
    %3172 = vmatpush.bf16.msra.mxu0 %v2026
    %3173 = vmatpush.bf16.msra.mxu0 %v2018
    %3174 = vmatpush.bf16.msra.mxu0 %v2010
    %3175 = vmatpush.bf16.msra.mxu0 %v2002
    %3176 = vmatmul.bf16.gmra.mxu0 %v180
    %v3177 = vpop.f32.mrf.mxu0
    %v3178 = vadd.f32 %v642, %v3177
    %v3179 = vpop.f32.mrf.mxu0
    %3180 = vdwg.mxu0
    %3181 = vmatpush.bf16.msra.mxu0 %v2122
    %3182 = vmatpush.bf16.msra.mxu0 %v2114
    %3183 = vmatpush.bf16.msra.mxu0 %v2106
    %3184 = vmatpush.bf16.msra.mxu0 %v2098
    %3185 = vmatpush.bf16.msra.mxu0 %v2090
    %3186 = vmatpush.bf16.msra.mxu0 %v2082
    %3187 = vmatpush.bf16.msra.mxu0 %v2074
    %3188 = vmatpush.bf16.msra.mxu0 %v2066
    %3189 = vmatmul.bf16.gmra.mxu0 %v181
    %v3190 = vpop.f32.mrf.mxu0
    %v3191 = vadd.f32 %v3178, %v3190
    %v3192 = vpop.f32.mrf.mxu0
    %3193 = vdwg.mxu0
    %3194 = vmatpush.bf16.msra.mxu0 %v2186
    %3195 = vmatpush.bf16.msra.mxu0 %v2178
    %3196 = vmatpush.bf16.msra.mxu0 %v2170
    %3197 = vmatpush.bf16.msra.mxu0 %v2162
    %3198 = vmatpush.bf16.msra.mxu0 %v2154
    %3199 = vmatpush.bf16.msra.mxu0 %v2146
    %3200 = vmatpush.bf16.msra.mxu0 %v2138
    %3201 = vmatpush.bf16.msra.mxu0 %v2130
    %3202 = vmatmul.bf16.gmra.mxu0 %v182
    %v3203 = vpop.f32.mrf.mxu0
    %v3204 = vadd.f32 %v3191, %v3203
    %v3205 = vpop.f32.mrf.mxu0
    %3206 = vdwg.mxu0
    %3207 = vmatpush.bf16.msra.mxu0 %v2250
    %3208 = vmatpush.bf16.msra.mxu0 %v2242
    %3209 = vmatpush.bf16.msra.mxu0 %v2234
    %3210 = vmatpush.bf16.msra.mxu0 %v2226
    %3211 = vmatpush.bf16.msra.mxu0 %v2218
    %3212 = vmatpush.bf16.msra.mxu0 %v2210
    %3213 = vmatpush.bf16.msra.mxu0 %v2202
    %3214 = vmatpush.bf16.msra.mxu0 %v2194
    %3215 = vmatmul.bf16.gmra.mxu0 %v183
    %v3216 = vpop.f32.mrf.mxu0
    %v3217 = vadd.f32 %v3204, %v3216
    %v3218 = vpop.f32.mrf.mxu0
    %3219 = vdwg.mxu0
    %3220 = vmatpush.bf16.msra.mxu0 %v2314
    %3221 = vmatpush.bf16.msra.mxu0 %v2306
    %3222 = vmatpush.bf16.msra.mxu0 %v2298
    %3223 = vmatpush.bf16.msra.mxu0 %v2290
    %3224 = vmatpush.bf16.msra.mxu0 %v2282
    %3225 = vmatpush.bf16.msra.mxu0 %v2274
    %3226 = vmatpush.bf16.msra.mxu0 %v2266
    %3227 = vmatpush.bf16.msra.mxu0 %v2258
    %3228 = vmatmul.bf16.gmra.mxu0 %v184
    %v3229 = vpop.f32.mrf.mxu0
    %v3230 = vadd.f32 %v3217, %v3229
    %v3231 = vpop.f32.mrf.mxu0
    %3232 = vdwg.mxu0
    %3233 = vmatpush.bf16.msra.mxu0 %v2378
    %3234 = vmatpush.bf16.msra.mxu0 %v2370
    %3235 = vmatpush.bf16.msra.mxu0 %v2362
    %3236 = vmatpush.bf16.msra.mxu0 %v2354
    %3237 = vmatpush.bf16.msra.mxu0 %v2346
    %3238 = vmatpush.bf16.msra.mxu0 %v2338
    %3239 = vmatpush.bf16.msra.mxu0 %v2330
    %3240 = vmatpush.bf16.msra.mxu0 %v2322
    %3241 = vmatmul.bf16.gmra.mxu0 %v185
    %v3242 = vpop.f32.mrf.mxu0
    %v3243 = vadd.f32 %v3230, %v3242
    %v3244 = vpop.f32.mrf.mxu0
    %3245 = vdwg.mxu0
    %3246 = vmatpush.bf16.msra.mxu0 %v2442
    %3247 = vmatpush.bf16.msra.mxu0 %v2434
    %3248 = vmatpush.bf16.msra.mxu0 %v2426
    %3249 = vmatpush.bf16.msra.mxu0 %v2418
    %3250 = vmatpush.bf16.msra.mxu0 %v2410
    %3251 = vmatpush.bf16.msra.mxu0 %v2402
    %3252 = vmatpush.bf16.msra.mxu0 %v2394
    %3253 = vmatpush.bf16.msra.mxu0 %v2386
    %3254 = vmatmul.bf16.gmra.mxu0 %v186
    %v3255 = vpop.f32.mrf.mxu0
    %v3256 = vadd.f32 %v3243, %v3255
    %v3257 = vpop.f32.mrf.mxu0
    %3258 = vdwg.mxu0
    %3259 = vmatpush.bf16.msra.mxu0 %v2059
    %3260 = vmatpush.bf16.msra.mxu0 %v2051
    %3261 = vmatpush.bf16.msra.mxu0 %v2043
    %3262 = vmatpush.bf16.msra.mxu0 %v2035
    %3263 = vmatpush.bf16.msra.mxu0 %v2027
    %3264 = vmatpush.bf16.msra.mxu0 %v2019
    %3265 = vmatpush.bf16.msra.mxu0 %v2011
    %3266 = vmatpush.bf16.msra.mxu0 %v2003
    %3267 = vmatmul.bf16.gmra.mxu0 %v180
    %v3268 = vpop.f32.mrf.mxu0
    %v3269 = vadd.f32 %v643, %v3268
    %v3270 = vpop.f32.mrf.mxu0
    %3271 = vdwg.mxu0
    %3272 = vmatpush.bf16.msra.mxu0 %v2123
    %3273 = vmatpush.bf16.msra.mxu0 %v2115
    %3274 = vmatpush.bf16.msra.mxu0 %v2107
    %3275 = vmatpush.bf16.msra.mxu0 %v2099
    %3276 = vmatpush.bf16.msra.mxu0 %v2091
    %3277 = vmatpush.bf16.msra.mxu0 %v2083
    %3278 = vmatpush.bf16.msra.mxu0 %v2075
    %3279 = vmatpush.bf16.msra.mxu0 %v2067
    %3280 = vmatmul.bf16.gmra.mxu0 %v181
    %v3281 = vpop.f32.mrf.mxu0
    %v3282 = vadd.f32 %v3269, %v3281
    %v3283 = vpop.f32.mrf.mxu0
    %3284 = vdwg.mxu0
    %3285 = vmatpush.bf16.msra.mxu0 %v2187
    %3286 = vmatpush.bf16.msra.mxu0 %v2179
    %3287 = vmatpush.bf16.msra.mxu0 %v2171
    %3288 = vmatpush.bf16.msra.mxu0 %v2163
    %3289 = vmatpush.bf16.msra.mxu0 %v2155
    %3290 = vmatpush.bf16.msra.mxu0 %v2147
    %3291 = vmatpush.bf16.msra.mxu0 %v2139
    %3292 = vmatpush.bf16.msra.mxu0 %v2131
    %3293 = vmatmul.bf16.gmra.mxu0 %v182
    %v3294 = vpop.f32.mrf.mxu0
    %v3295 = vadd.f32 %v3282, %v3294
    %v3296 = vpop.f32.mrf.mxu0
    %3297 = vdwg.mxu0
    %3298 = vmatpush.bf16.msra.mxu0 %v2251
    %3299 = vmatpush.bf16.msra.mxu0 %v2243
    %3300 = vmatpush.bf16.msra.mxu0 %v2235
    %3301 = vmatpush.bf16.msra.mxu0 %v2227
    %3302 = vmatpush.bf16.msra.mxu0 %v2219
    %3303 = vmatpush.bf16.msra.mxu0 %v2211
    %3304 = vmatpush.bf16.msra.mxu0 %v2203
    %3305 = vmatpush.bf16.msra.mxu0 %v2195
    %3306 = vmatmul.bf16.gmra.mxu0 %v183
    %v3307 = vpop.f32.mrf.mxu0
    %v3308 = vadd.f32 %v3295, %v3307
    %v3309 = vpop.f32.mrf.mxu0
    %3310 = vdwg.mxu0
    %3311 = vmatpush.bf16.msra.mxu0 %v2315
    %3312 = vmatpush.bf16.msra.mxu0 %v2307
    %3313 = vmatpush.bf16.msra.mxu0 %v2299
    %3314 = vmatpush.bf16.msra.mxu0 %v2291
    %3315 = vmatpush.bf16.msra.mxu0 %v2283
    %3316 = vmatpush.bf16.msra.mxu0 %v2275
    %3317 = vmatpush.bf16.msra.mxu0 %v2267
    %3318 = vmatpush.bf16.msra.mxu0 %v2259
    %3319 = vmatmul.bf16.gmra.mxu0 %v184
    %v3320 = vpop.f32.mrf.mxu0
    %v3321 = vadd.f32 %v3308, %v3320
    %v3322 = vpop.f32.mrf.mxu0
    %3323 = vdwg.mxu0
    %3324 = vmatpush.bf16.msra.mxu0 %v2379
    %3325 = vmatpush.bf16.msra.mxu0 %v2371
    %3326 = vmatpush.bf16.msra.mxu0 %v2363
    %3327 = vmatpush.bf16.msra.mxu0 %v2355
    %3328 = vmatpush.bf16.msra.mxu0 %v2347
    %3329 = vmatpush.bf16.msra.mxu0 %v2339
    %3330 = vmatpush.bf16.msra.mxu0 %v2331
    %3331 = vmatpush.bf16.msra.mxu0 %v2323
    %3332 = vmatmul.bf16.gmra.mxu0 %v185
    %v3333 = vpop.f32.mrf.mxu0
    %v3334 = vadd.f32 %v3321, %v3333
    %v3335 = vpop.f32.mrf.mxu0
    %3336 = vdwg.mxu0
    %3337 = vmatpush.bf16.msra.mxu0 %v2443
    %3338 = vmatpush.bf16.msra.mxu0 %v2435
    %3339 = vmatpush.bf16.msra.mxu0 %v2427
    %3340 = vmatpush.bf16.msra.mxu0 %v2419
    %3341 = vmatpush.bf16.msra.mxu0 %v2411
    %3342 = vmatpush.bf16.msra.mxu0 %v2403
    %3343 = vmatpush.bf16.msra.mxu0 %v2395
    %3344 = vmatpush.bf16.msra.mxu0 %v2387
    %3345 = vmatmul.bf16.gmra.mxu0 %v186
    %v3346 = vpop.f32.mrf.mxu0
    %v3347 = vadd.f32 %v3334, %v3346
    %v3348 = vpop.f32.mrf.mxu0
    %3349 = vdwg.mxu0
    %3350 = vmatpush.bf16.msra.mxu0 %v2060
    %3351 = vmatpush.bf16.msra.mxu0 %v2052
    %3352 = vmatpush.bf16.msra.mxu0 %v2044
    %3353 = vmatpush.bf16.msra.mxu0 %v2036
    %3354 = vmatpush.bf16.msra.mxu0 %v2028
    %3355 = vmatpush.bf16.msra.mxu0 %v2020
    %3356 = vmatpush.bf16.msra.mxu0 %v2012
    %3357 = vmatpush.bf16.msra.mxu0 %v2004
    %3358 = vmatmul.bf16.gmra.mxu0 %v180
    %v3359 = vpop.f32.mrf.mxu0
    %v3360 = vadd.f32 %v644, %v3359
    %v3361 = vpop.f32.mrf.mxu0
    %3362 = vdwg.mxu0
    %3363 = vmatpush.bf16.msra.mxu0 %v2124
    %3364 = vmatpush.bf16.msra.mxu0 %v2116
    %3365 = vmatpush.bf16.msra.mxu0 %v2108
    %3366 = vmatpush.bf16.msra.mxu0 %v2100
    %3367 = vmatpush.bf16.msra.mxu0 %v2092
    %3368 = vmatpush.bf16.msra.mxu0 %v2084
    %3369 = vmatpush.bf16.msra.mxu0 %v2076
    %3370 = vmatpush.bf16.msra.mxu0 %v2068
    %3371 = vmatmul.bf16.gmra.mxu0 %v181
    %v3372 = vpop.f32.mrf.mxu0
    %v3373 = vadd.f32 %v3360, %v3372
    %v3374 = vpop.f32.mrf.mxu0
    %3375 = vdwg.mxu0
    %3376 = vmatpush.bf16.msra.mxu0 %v2188
    %3377 = vmatpush.bf16.msra.mxu0 %v2180
    %3378 = vmatpush.bf16.msra.mxu0 %v2172
    %3379 = vmatpush.bf16.msra.mxu0 %v2164
    %3380 = vmatpush.bf16.msra.mxu0 %v2156
    %3381 = vmatpush.bf16.msra.mxu0 %v2148
    %3382 = vmatpush.bf16.msra.mxu0 %v2140
    %3383 = vmatpush.bf16.msra.mxu0 %v2132
    %3384 = vmatmul.bf16.gmra.mxu0 %v182
    %v3385 = vpop.f32.mrf.mxu0
    %v3386 = vadd.f32 %v3373, %v3385
    %v3387 = vpop.f32.mrf.mxu0
    %3388 = vdwg.mxu0
    %3389 = vmatpush.bf16.msra.mxu0 %v2252
    %3390 = vmatpush.bf16.msra.mxu0 %v2244
    %3391 = vmatpush.bf16.msra.mxu0 %v2236
    %3392 = vmatpush.bf16.msra.mxu0 %v2228
    %3393 = vmatpush.bf16.msra.mxu0 %v2220
    %3394 = vmatpush.bf16.msra.mxu0 %v2212
    %3395 = vmatpush.bf16.msra.mxu0 %v2204
    %3396 = vmatpush.bf16.msra.mxu0 %v2196
    %3397 = vmatmul.bf16.gmra.mxu0 %v183
    %v3398 = vpop.f32.mrf.mxu0
    %v3399 = vadd.f32 %v3386, %v3398
    %v3400 = vpop.f32.mrf.mxu0
    %3401 = vdwg.mxu0
    %3402 = vmatpush.bf16.msra.mxu0 %v2316
    %3403 = vmatpush.bf16.msra.mxu0 %v2308
    %3404 = vmatpush.bf16.msra.mxu0 %v2300
    %3405 = vmatpush.bf16.msra.mxu0 %v2292
    %3406 = vmatpush.bf16.msra.mxu0 %v2284
    %3407 = vmatpush.bf16.msra.mxu0 %v2276
    %3408 = vmatpush.bf16.msra.mxu0 %v2268
    %3409 = vmatpush.bf16.msra.mxu0 %v2260
    %3410 = vmatmul.bf16.gmra.mxu0 %v184
    %v3411 = vpop.f32.mrf.mxu0
    %v3412 = vadd.f32 %v3399, %v3411
    %v3413 = vpop.f32.mrf.mxu0
    %3414 = vdwg.mxu0
    %3415 = vmatpush.bf16.msra.mxu0 %v2380
    %3416 = vmatpush.bf16.msra.mxu0 %v2372
    %3417 = vmatpush.bf16.msra.mxu0 %v2364
    %3418 = vmatpush.bf16.msra.mxu0 %v2356
    %3419 = vmatpush.bf16.msra.mxu0 %v2348
    %3420 = vmatpush.bf16.msra.mxu0 %v2340
    %3421 = vmatpush.bf16.msra.mxu0 %v2332
    %3422 = vmatpush.bf16.msra.mxu0 %v2324
    %3423 = vmatmul.bf16.gmra.mxu0 %v185
    %v3424 = vpop.f32.mrf.mxu0
    %v3425 = vadd.f32 %v3412, %v3424
    %v3426 = vpop.f32.mrf.mxu0
    %3427 = vdwg.mxu0
    %3428 = vmatpush.bf16.msra.mxu0 %v2444
    %3429 = vmatpush.bf16.msra.mxu0 %v2436
    %3430 = vmatpush.bf16.msra.mxu0 %v2428
    %3431 = vmatpush.bf16.msra.mxu0 %v2420
    %3432 = vmatpush.bf16.msra.mxu0 %v2412
    %3433 = vmatpush.bf16.msra.mxu0 %v2404
    %3434 = vmatpush.bf16.msra.mxu0 %v2396
    %3435 = vmatpush.bf16.msra.mxu0 %v2388
    %3436 = vmatmul.bf16.gmra.mxu0 %v186
    %v3437 = vpop.f32.mrf.mxu0
    %v3438 = vadd.f32 %v3425, %v3437
    %v3439 = vpop.f32.mrf.mxu0
    %3440 = vdwg.mxu0
    %3441 = vmatpush.bf16.msra.mxu0 %v2061
    %3442 = vmatpush.bf16.msra.mxu0 %v2053
    %3443 = vmatpush.bf16.msra.mxu0 %v2045
    %3444 = vmatpush.bf16.msra.mxu0 %v2037
    %3445 = vmatpush.bf16.msra.mxu0 %v2029
    %3446 = vmatpush.bf16.msra.mxu0 %v2021
    %3447 = vmatpush.bf16.msra.mxu0 %v2013
    %3448 = vmatpush.bf16.msra.mxu0 %v2005
    %3449 = vmatmul.bf16.gmra.mxu0 %v180
    %v3450 = vpop.f32.mrf.mxu0
    %v3451 = vadd.f32 %v645, %v3450
    %v3452 = vpop.f32.mrf.mxu0
    %3453 = vdwg.mxu0
    %3454 = vmatpush.bf16.msra.mxu0 %v2125
    %3455 = vmatpush.bf16.msra.mxu0 %v2117
    %3456 = vmatpush.bf16.msra.mxu0 %v2109
    %3457 = vmatpush.bf16.msra.mxu0 %v2101
    %3458 = vmatpush.bf16.msra.mxu0 %v2093
    %3459 = vmatpush.bf16.msra.mxu0 %v2085
    %3460 = vmatpush.bf16.msra.mxu0 %v2077
    %3461 = vmatpush.bf16.msra.mxu0 %v2069
    %3462 = vmatmul.bf16.gmra.mxu0 %v181
    %v3463 = vpop.f32.mrf.mxu0
    %v3464 = vadd.f32 %v3451, %v3463
    %v3465 = vpop.f32.mrf.mxu0
    %3466 = vdwg.mxu0
    %3467 = vmatpush.bf16.msra.mxu0 %v2189
    %3468 = vmatpush.bf16.msra.mxu0 %v2181
    %3469 = vmatpush.bf16.msra.mxu0 %v2173
    %3470 = vmatpush.bf16.msra.mxu0 %v2165
    %3471 = vmatpush.bf16.msra.mxu0 %v2157
    %3472 = vmatpush.bf16.msra.mxu0 %v2149
    %3473 = vmatpush.bf16.msra.mxu0 %v2141
    %3474 = vmatpush.bf16.msra.mxu0 %v2133
    %3475 = vmatmul.bf16.gmra.mxu0 %v182
    %v3476 = vpop.f32.mrf.mxu0
    %v3477 = vadd.f32 %v3464, %v3476
    %v3478 = vpop.f32.mrf.mxu0
    %3479 = vdwg.mxu0
    %3480 = vmatpush.bf16.msra.mxu0 %v2253
    %3481 = vmatpush.bf16.msra.mxu0 %v2245
    %3482 = vmatpush.bf16.msra.mxu0 %v2237
    %3483 = vmatpush.bf16.msra.mxu0 %v2229
    %3484 = vmatpush.bf16.msra.mxu0 %v2221
    %3485 = vmatpush.bf16.msra.mxu0 %v2213
    %3486 = vmatpush.bf16.msra.mxu0 %v2205
    %3487 = vmatpush.bf16.msra.mxu0 %v2197
    %3488 = vmatmul.bf16.gmra.mxu0 %v183
    %v3489 = vpop.f32.mrf.mxu0
    %v3490 = vadd.f32 %v3477, %v3489
    %v3491 = vpop.f32.mrf.mxu0
    %3492 = vdwg.mxu0
    %3493 = vmatpush.bf16.msra.mxu0 %v2317
    %3494 = vmatpush.bf16.msra.mxu0 %v2309
    %3495 = vmatpush.bf16.msra.mxu0 %v2301
    %3496 = vmatpush.bf16.msra.mxu0 %v2293
    %3497 = vmatpush.bf16.msra.mxu0 %v2285
    %3498 = vmatpush.bf16.msra.mxu0 %v2277
    %3499 = vmatpush.bf16.msra.mxu0 %v2269
    %3500 = vmatpush.bf16.msra.mxu0 %v2261
    %3501 = vmatmul.bf16.gmra.mxu0 %v184
    %v3502 = vpop.f32.mrf.mxu0
    %v3503 = vadd.f32 %v3490, %v3502
    %v3504 = vpop.f32.mrf.mxu0
    %3505 = vdwg.mxu0
    %3506 = vmatpush.bf16.msra.mxu0 %v2381
    %3507 = vmatpush.bf16.msra.mxu0 %v2373
    %3508 = vmatpush.bf16.msra.mxu0 %v2365
    %3509 = vmatpush.bf16.msra.mxu0 %v2357
    %3510 = vmatpush.bf16.msra.mxu0 %v2349
    %3511 = vmatpush.bf16.msra.mxu0 %v2341
    %3512 = vmatpush.bf16.msra.mxu0 %v2333
    %3513 = vmatpush.bf16.msra.mxu0 %v2325
    %3514 = vmatmul.bf16.gmra.mxu0 %v185
    %v3515 = vpop.f32.mrf.mxu0
    %v3516 = vadd.f32 %v3503, %v3515
    %v3517 = vpop.f32.mrf.mxu0
    %3518 = vdwg.mxu0
    %3519 = vmatpush.bf16.msra.mxu0 %v2445
    %3520 = vmatpush.bf16.msra.mxu0 %v2437
    %3521 = vmatpush.bf16.msra.mxu0 %v2429
    %3522 = vmatpush.bf16.msra.mxu0 %v2421
    %3523 = vmatpush.bf16.msra.mxu0 %v2413
    %3524 = vmatpush.bf16.msra.mxu0 %v2405
    %3525 = vmatpush.bf16.msra.mxu0 %v2397
    %3526 = vmatpush.bf16.msra.mxu0 %v2389
    %3527 = vmatmul.bf16.gmra.mxu0 %v186
    %v3528 = vpop.f32.mrf.mxu0
    %v3529 = vadd.f32 %v3516, %v3528
    %v3530 = vpop.f32.mrf.mxu0
    %3531 = vdwg.mxu0
    %3532 = vmatpush.bf16.msra.mxu0 %v2062
    %3533 = vmatpush.bf16.msra.mxu0 %v2054
    %3534 = vmatpush.bf16.msra.mxu0 %v2046
    %3535 = vmatpush.bf16.msra.mxu0 %v2038
    %3536 = vmatpush.bf16.msra.mxu0 %v2030
    %3537 = vmatpush.bf16.msra.mxu0 %v2022
    %3538 = vmatpush.bf16.msra.mxu0 %v2014
    %3539 = vmatpush.bf16.msra.mxu0 %v2006
    %3540 = vmatmul.bf16.gmra.mxu0 %v180
    %v3541 = vpop.f32.mrf.mxu0
    %v3542 = vadd.f32 %v646, %v3541
    %v3543 = vpop.f32.mrf.mxu0
    %3544 = vdwg.mxu0
    %3545 = vmatpush.bf16.msra.mxu0 %v2126
    %3546 = vmatpush.bf16.msra.mxu0 %v2118
    %3547 = vmatpush.bf16.msra.mxu0 %v2110
    %3548 = vmatpush.bf16.msra.mxu0 %v2102
    %3549 = vmatpush.bf16.msra.mxu0 %v2094
    %3550 = vmatpush.bf16.msra.mxu0 %v2086
    %3551 = vmatpush.bf16.msra.mxu0 %v2078
    %3552 = vmatpush.bf16.msra.mxu0 %v2070
    %3553 = vmatmul.bf16.gmra.mxu0 %v181
    %v3554 = vpop.f32.mrf.mxu0
    %v3555 = vadd.f32 %v3542, %v3554
    %v3556 = vpop.f32.mrf.mxu0
    %3557 = vdwg.mxu0
    %3558 = vmatpush.bf16.msra.mxu0 %v2190
    %3559 = vmatpush.bf16.msra.mxu0 %v2182
    %3560 = vmatpush.bf16.msra.mxu0 %v2174
    %3561 = vmatpush.bf16.msra.mxu0 %v2166
    %3562 = vmatpush.bf16.msra.mxu0 %v2158
    %3563 = vmatpush.bf16.msra.mxu0 %v2150
    %3564 = vmatpush.bf16.msra.mxu0 %v2142
    %3565 = vmatpush.bf16.msra.mxu0 %v2134
    %3566 = vmatmul.bf16.gmra.mxu0 %v182
    %v3567 = vpop.f32.mrf.mxu0
    %v3568 = vadd.f32 %v3555, %v3567
    %v3569 = vpop.f32.mrf.mxu0
    %3570 = vdwg.mxu0
    %3571 = vmatpush.bf16.msra.mxu0 %v2254
    %3572 = vmatpush.bf16.msra.mxu0 %v2246
    %3573 = vmatpush.bf16.msra.mxu0 %v2238
    %3574 = vmatpush.bf16.msra.mxu0 %v2230
    %3575 = vmatpush.bf16.msra.mxu0 %v2222
    %3576 = vmatpush.bf16.msra.mxu0 %v2214
    %3577 = vmatpush.bf16.msra.mxu0 %v2206
    %3578 = vmatpush.bf16.msra.mxu0 %v2198
    %3579 = vmatmul.bf16.gmra.mxu0 %v183
    %v3580 = vpop.f32.mrf.mxu0
    %v3581 = vadd.f32 %v3568, %v3580
    %v3582 = vpop.f32.mrf.mxu0
    %3583 = vdwg.mxu0
    %3584 = vmatpush.bf16.msra.mxu0 %v2318
    %3585 = vmatpush.bf16.msra.mxu0 %v2310
    %3586 = vmatpush.bf16.msra.mxu0 %v2302
    %3587 = vmatpush.bf16.msra.mxu0 %v2294
    %3588 = vmatpush.bf16.msra.mxu0 %v2286
    %3589 = vmatpush.bf16.msra.mxu0 %v2278
    %3590 = vmatpush.bf16.msra.mxu0 %v2270
    %3591 = vmatpush.bf16.msra.mxu0 %v2262
    %3592 = vmatmul.bf16.gmra.mxu0 %v184
    %v3593 = vpop.f32.mrf.mxu0
    %v3594 = vadd.f32 %v3581, %v3593
    %v3595 = vpop.f32.mrf.mxu0
    %3596 = vdwg.mxu0
    %3597 = vmatpush.bf16.msra.mxu0 %v2382
    %3598 = vmatpush.bf16.msra.mxu0 %v2374
    %3599 = vmatpush.bf16.msra.mxu0 %v2366
    %3600 = vmatpush.bf16.msra.mxu0 %v2358
    %3601 = vmatpush.bf16.msra.mxu0 %v2350
    %3602 = vmatpush.bf16.msra.mxu0 %v2342
    %3603 = vmatpush.bf16.msra.mxu0 %v2334
    %3604 = vmatpush.bf16.msra.mxu0 %v2326
    %3605 = vmatmul.bf16.gmra.mxu0 %v185
    %v3606 = vpop.f32.mrf.mxu0
    %v3607 = vadd.f32 %v3594, %v3606
    %v3608 = vpop.f32.mrf.mxu0
    %3609 = vdwg.mxu0
    %3610 = vmatpush.bf16.msra.mxu0 %v2446
    %3611 = vmatpush.bf16.msra.mxu0 %v2438
    %3612 = vmatpush.bf16.msra.mxu0 %v2430
    %3613 = vmatpush.bf16.msra.mxu0 %v2422
    %3614 = vmatpush.bf16.msra.mxu0 %v2414
    %3615 = vmatpush.bf16.msra.mxu0 %v2406
    %3616 = vmatpush.bf16.msra.mxu0 %v2398
    %3617 = vmatpush.bf16.msra.mxu0 %v2390
    %3618 = vmatmul.bf16.gmra.mxu0 %v186
    %v3619 = vpop.f32.mrf.mxu0
    %v3620 = vadd.f32 %v3607, %v3619
    %v3621 = vpop.f32.mrf.mxu0
    %3622 = vdwg.mxu0
    %v3623 = vxor.u32 %v2983, 2147483648
    %v3624 = vxor.u32 %v3074, 2147483648
    %v3625 = vxor.u32 %v3165, 2147483648
    %v3626 = vxor.u32 %v3256, 2147483648
    %v3627 = vxor.u32 %v3347, 2147483648
    %v3628 = vxor.u32 %v3438, 2147483648
    %v3629 = vxor.u32 %v3529, 2147483648
    %v3630 = vxor.u32 %v3620, 2147483648
    %v3631 = vmul.f32 %v3623, 1.442695
    %v3632 = vpow.pop %v3631
    %v3633 = vmul.f32 %v3624, 1.442695
    %v3634 = vpow.pop %v3633
    %v3635 = vmul.f32 %v3625, 1.442695
    %v3636 = vpow.pop %v3635
    %v3637 = vmul.f32 %v3626, 1.442695
    %v3638 = vpow.pop %v3637
    %v3639 = vmul.f32 %v3627, 1.442695
    %v3640 = vpow.pop %v3639
    %v3641 = vmul.f32 %v3628, 1.442695
    %v3642 = vpow.pop %v3641
    %v3643 = vmul.f32 %v3629, 1.442695
    %v3644 = vpow.pop %v3643
    %v3645 = vmul.f32 %v3630, 1.442695
    %v3646 = vpow.pop %v3645
    %v3647 = vadd.f32 %v3632, 1.0
    %v3648 = vadd.f32 %v3634, 1.0
    %v3649 = vadd.f32 %v3636, 1.0
    %v3650 = vadd.f32 %v3638, 1.0
    %v3651 = vadd.f32 %v3640, 1.0
    %v3652 = vadd.f32 %v3642, 1.0
    %v3653 = vadd.f32 %v3644, 1.0
    %v3654 = vadd.f32 %v3646, 1.0
    %v3655 = vrcp.pop %v3647
    %v3656 = vmul.f32 %v3647, %v3655
    %v3657 = vsub.f32 1.0, %v3656
    %v3658 = vmul.f32 %v3655, %v3657
    %v3659 = vadd.f32 %v3655, %v3658
    %vm3660 = vweird.f32 %v3647
    %vm3661 = vweird.f32 %v3655
    %vm3662 = vmor %vm3660, %vm3661
    %v3663 = vsel %vm3662, %v3655, %v3659
    %v3664 = vand.u32 2147483647, %v3647
    %vm3665 = vcmp.eq.f32.partialorder %v3664, 8.507059e+37
    %v3666 = vand.u32 %v3647, 2147483648
    %v3667 = vor.u32 1.1754944e-38, %v3666
    %v3668 = vsel %vm3665, %v3667, %v3663
    %v3669 = vmul.f32 1.0, %v3668
    %v3670 = vrcp.pop %v3648
    %v3671 = vmul.f32 %v3648, %v3670
    %v3672 = vsub.f32 1.0, %v3671
    %v3673 = vmul.f32 %v3670, %v3672
    %v3674 = vadd.f32 %v3670, %v3673
    %vm3675 = vweird.f32 %v3648
    %vm3676 = vweird.f32 %v3670
    %vm3677 = vmor %vm3675, %vm3676
    %v3678 = vsel %vm3677, %v3670, %v3674
    %v3679 = vand.u32 2147483647, %v3648
    %vm3680 = vcmp.eq.f32.partialorder %v3679, 8.507059e+37
    %v3681 = vand.u32 %v3648, 2147483648
    %v3682 = vor.u32 1.1754944e-38, %v3681
    %v3683 = vsel %vm3680, %v3682, %v3678
    %v3684 = vmul.f32 1.0, %v3683
    %v3685 = vrcp.pop %v3649
    %v3686 = vmul.f32 %v3649, %v3685
    %v3687 = vsub.f32 1.0, %v3686
    %v3688 = vmul.f32 %v3685, %v3687
    %v3689 = vadd.f32 %v3685, %v3688
    %vm3690 = vweird.f32 %v3649
    %vm3691 = vweird.f32 %v3685
    %vm3692 = vmor %vm3690, %vm3691
    %v3693 = vsel %vm3692, %v3685, %v3689
    %v3694 = vand.u32 2147483647, %v3649
    %vm3695 = vcmp.eq.f32.partialorder %v3694, 8.507059e+37
    %v3696 = vand.u32 %v3649, 2147483648
    %v3697 = vor.u32 1.1754944e-38, %v3696
    %v3698 = vsel %vm3695, %v3697, %v3693
    %v3699 = vmul.f32 1.0, %v3698
    %v3700 = vrcp.pop %v3650
    %v3701 = vmul.f32 %v3650, %v3700
    %v3702 = vsub.f32 1.0, %v3701
    %v3703 = vmul.f32 %v3700, %v3702
    %v3704 = vadd.f32 %v3700, %v3703
    %vm3705 = vweird.f32 %v3650
    %vm3706 = vweird.f32 %v3700
    %vm3707 = vmor %vm3705, %vm3706
    %v3708 = vsel %vm3707, %v3700, %v3704
    %v3709 = vand.u32 2147483647, %v3650
    %vm3710 = vcmp.eq.f32.partialorder %v3709, 8.507059e+37
    %v3711 = vand.u32 %v3650, 2147483648
    %v3712 = vor.u32 1.1754944e-38, %v3711
    %v3713 = vsel %vm3710, %v3712, %v3708
    %v3714 = vmul.f32 1.0, %v3713
    %v3715 = vrcp.pop %v3651
    %v3716 = vmul.f32 %v3651, %v3715
    %v3717 = vsub.f32 1.0, %v3716
    %v3718 = vmul.f32 %v3715, %v3717
    %v3719 = vadd.f32 %v3715, %v3718
    %vm3720 = vweird.f32 %v3651
    %vm3721 = vweird.f32 %v3715
    %vm3722 = vmor %vm3720, %vm3721
    %v3723 = vsel %vm3722, %v3715, %v3719
    %v3724 = vand.u32 2147483647, %v3651
    %vm3725 = vcmp.eq.f32.partialorder %v3724, 8.507059e+37
    %v3726 = vand.u32 %v3651, 2147483648
    %v3727 = vor.u32 1.1754944e-38, %v3726
    %v3728 = vsel %vm3725, %v3727, %v3723
    %v3729 = vmul.f32 1.0, %v3728
    %v3730 = vrcp.pop %v3652
    %v3731 = vmul.f32 %v3652, %v3730
    %v3732 = vsub.f32 1.0, %v3731
    %v3733 = vmul.f32 %v3730, %v3732
    %v3734 = vadd.f32 %v3730, %v3733
    %vm3735 = vweird.f32 %v3652
    %vm3736 = vweird.f32 %v3730
    %vm3737 = vmor %vm3735, %vm3736
    %v3738 = vsel %vm3737, %v3730, %v3734
    %v3739 = vand.u32 2147483647, %v3652
    %vm3740 = vcmp.eq.f32.partialorder %v3739, 8.507059e+37
    %v3741 = vand.u32 %v3652, 2147483648
    %v3742 = vor.u32 1.1754944e-38, %v3741
    %v3743 = vsel %vm3740, %v3742, %v3738
    %v3744 = vmul.f32 1.0, %v3743
    %v3745 = vrcp.pop %v3653
    %v3746 = vmul.f32 %v3653, %v3745
    %v3747 = vsub.f32 1.0, %v3746
    %v3748 = vmul.f32 %v3745, %v3747
    %v3749 = vadd.f32 %v3745, %v3748
    %vm3750 = vweird.f32 %v3653
    %vm3751 = vweird.f32 %v3745
    %vm3752 = vmor %vm3750, %vm3751
    %v3753 = vsel %vm3752, %v3745, %v3749
    %v3754 = vand.u32 2147483647, %v3653
    %vm3755 = vcmp.eq.f32.partialorder %v3754, 8.507059e+37
    %v3756 = vand.u32 %v3653, 2147483648
    %v3757 = vor.u32 1.1754944e-38, %v3756
    %v3758 = vsel %vm3755, %v3757, %v3753
    %v3759 = vmul.f32 1.0, %v3758
    %v3760 = vrcp.pop %v3654
    %v3761 = vmul.f32 %v3654, %v3760
    %v3762 = vsub.f32 1.0, %v3761
    %v3763 = vmul.f32 %v3760, %v3762
    %v3764 = vadd.f32 %v3760, %v3763
    %vm3765 = vweird.f32 %v3654
    %vm3766 = vweird.f32 %v3760
    %vm3767 = vmor %vm3765, %vm3766
    %v3768 = vsel %vm3767, %v3760, %v3764
    %v3769 = vand.u32 2147483647, %v3654
    %vm3770 = vcmp.eq.f32.partialorder %v3769, 8.507059e+37
    %v3771 = vand.u32 %v3654, 2147483648
    %v3772 = vor.u32 1.1754944e-38, %v3771
    %v3773 = vsel %vm3770, %v3772, %v3768
    %v3774 = vmul.f32 1.0, %v3773
    %v3775 = vpack.c.bf16 %v3669, %v3669
    %v3776 = vpack.c.bf16 %v3684, %v3684
    %v3777 = vpack.c.bf16 %v3699, %v3699
    %v3778 = vpack.c.bf16 %v3714, %v3714
    %v3779 = vpack.c.bf16 %v3729, %v3729
    %v3780 = vpack.c.bf16 %v3744, %v3744
    %v3781 = vpack.c.bf16 %v3759, %v3759
    %v3782 = vpack.c.bf16 %v3774, %v3774
    %v3783 = vld [vmem:[#allocation4] sm:$0xff]
    %v3784 = vld [vmem:[#allocation4 + $0x8] sm:$0xff]
    %v3785 = vld [vmem:[#allocation4 + $0x10] sm:$0xff]
    %v3786 = vld [vmem:[#allocation4 + $0x18] sm:$0xff]
    %v3787 = vld [vmem:[#allocation4 + $0x20] sm:$0xff]
    %v3788 = vld [vmem:[#allocation4 + $0x28] sm:$0xff]
    %v3789 = vld [vmem:[#allocation4 + $0x30] sm:$0xff]
    %v3790 = vld [vmem:[#allocation4 + $0x38] sm:$0xff]
    %v3791 = vld [vmem:[#allocation4 + $0x40] sm:$0xff]
    %v3792 = vld [vmem:[#allocation4 + $0x48] sm:$0xff]
    %v3793 = vld [vmem:[#allocation4 + $0x50] sm:$0xff]
    %v3794 = vld [vmem:[#allocation4 + $0x58] sm:$0xff]
    %v3795 = vld [vmem:[#allocation4 + $0x60] sm:$0xff]
    %v3796 = vld [vmem:[#allocation4 + $0x68] sm:$0xff]
    %v3797 = vld [vmem:[#allocation4 + $0x70] sm:$0xff]
    %v3798 = vld [vmem:[#allocation4 + $0x78] sm:$0xff]
    %v3799 = vld [vmem:[#allocation4 + $0x80] sm:$0xff]
    %v3800 = vld [vmem:[#allocation4 + $0x88] sm:$0xff]
    %v3801 = vld [vmem:[#allocation4 + $0x90] sm:$0xff]
    %v3802 = vld [vmem:[#allocation4 + $0x98] sm:$0xff]
    %v3803 = vld [vmem:[#allocation4 + $0xa0] sm:$0xff]
    %v3804 = vld [vmem:[#allocation4 + $0xa8] sm:$0xff]
    %v3805 = vld [vmem:[#allocation4 + $0xb0] sm:$0xff]
    %v3806 = vld [vmem:[#allocation4 + $0xb8] sm:$0xff]
    %v3807 = vld [vmem:[#allocation4 + $0xc0] sm:$0xff]
    %v3808 = vld [vmem:[#allocation4 + $0xc8] sm:$0xff]
    %v3809 = vld [vmem:[#allocation4 + $0xd0] sm:$0xff]
    %v3810 = vld [vmem:[#allocation4 + $0xd8] sm:$0xff]
    %v3811 = vld [vmem:[#allocation4 + $0xe0] sm:$0xff]
    %v3812 = vld [vmem:[#allocation4 + $0xe8] sm:$0xff]
    %v3813 = vld [vmem:[#allocation4 + $0xf0] sm:$0xff]
    %v3814 = vld [vmem:[#allocation4 + $0xf8] sm:$0xff]
    %v3815 = vld [vmem:[#allocation4 + $0x100] sm:$0xff]
    %v3816 = vld [vmem:[#allocation4 + $0x108] sm:$0xff]
    %v3817 = vld [vmem:[#allocation4 + $0x110] sm:$0xff]
    %v3818 = vld [vmem:[#allocation4 + $0x118] sm:$0xff]
    %v3819 = vld [vmem:[#allocation4 + $0x120] sm:$0xff]
    %v3820 = vld [vmem:[#allocation4 + $0x128] sm:$0xff]
    %v3821 = vld [vmem:[#allocation4 + $0x130] sm:$0xff]
    %v3822 = vld [vmem:[#allocation4 + $0x138] sm:$0xff]
    %v3823 = vld [vmem:[#allocation4 + $0x140] sm:$0xff]
    %v3824 = vld [vmem:[#allocation4 + $0x148] sm:$0xff]
    %v3825 = vld [vmem:[#allocation4 + $0x150] sm:$0xff]
    %v3826 = vld [vmem:[#allocation4 + $0x158] sm:$0xff]
    %v3827 = vld [vmem:[#allocation4 + $0x160] sm:$0xff]
    %v3828 = vld [vmem:[#allocation4 + $0x168] sm:$0xff]
    %v3829 = vld [vmem:[#allocation4 + $0x170] sm:$0xff]
    %v3830 = vld [vmem:[#allocation4 + $0x178] sm:$0xff]
    %v3831 = vld [vmem:[#allocation4 + $0x180] sm:$0xff]
    %v3832 = vld [vmem:[#allocation4 + $0x188] sm:$0xff]
    %v3833 = vld [vmem:[#allocation4 + $0x190] sm:$0xff]
    %v3834 = vld [vmem:[#allocation4 + $0x198] sm:$0xff]
    %v3835 = vld [vmem:[#allocation4 + $0x1a0] sm:$0xff]
    %v3836 = vld [vmem:[#allocation4 + $0x1a8] sm:$0xff]
    %v3837 = vld [vmem:[#allocation4 + $0x1b0] sm:$0xff]
    %v3838 = vld [vmem:[#allocation4 + $0x1b8] sm:$0xff]
    %v3839 = vld [vmem:[#allocation4 + $0x1c0] sm:$0xff]
    %v3840 = vld [vmem:[#allocation4 + $0x1c8] sm:$0xff]
    %v3841 = vld [vmem:[#allocation4 + $0x1d0] sm:$0xff]
    %v3842 = vld [vmem:[#allocation4 + $0x1d8] sm:$0xff]
    %v3843 = vld [vmem:[#allocation4 + $0x1e0] sm:$0xff]
    %v3844 = vld [vmem:[#allocation4 + $0x1e8] sm:$0xff]
    %v3845 = vld [vmem:[#allocation4 + $0x1f0] sm:$0xff]
    %v3846 = vld [vmem:[#allocation4 + $0x1f8] sm:$0xff]
    %v3847 = vld [vmem:[#allocation4 + $0x200] sm:$0xff]
    %v3848 = vld [vmem:[#allocation4 + $0x208] sm:$0xff]
    %v3849 = vld [vmem:[#allocation4 + $0x210] sm:$0xff]
    %v3850 = vld [vmem:[#allocation4 + $0x218] sm:$0xff]
    %v3851 = vld [vmem:[#allocation4 + $0x220] sm:$0xff]
    %v3852 = vld [vmem:[#allocation4 + $0x228] sm:$0xff]
    %v3853 = vld [vmem:[#allocation4 + $0x230] sm:$0xff]
    %v3854 = vld [vmem:[#allocation4 + $0x238] sm:$0xff]
    %v3855 = vld [vmem:[#allocation4 + $0x240] sm:$0xff]
    %v3856 = vld [vmem:[#allocation4 + $0x248] sm:$0xff]
    %v3857 = vld [vmem:[#allocation4 + $0x250] sm:$0xff]
    %v3858 = vld [vmem:[#allocation4 + $0x258] sm:$0xff]
    %v3859 = vld [vmem:[#allocation4 + $0x260] sm:$0xff]
    %v3860 = vld [vmem:[#allocation4 + $0x268] sm:$0xff]
    %v3861 = vld [vmem:[#allocation4 + $0x270] sm:$0xff]
    %v3862 = vld [vmem:[#allocation4 + $0x278] sm:$0xff]
    %v3863 = vld [vmem:[#allocation4 + $0x280] sm:$0xff]
    %v3864 = vld [vmem:[#allocation4 + $0x288] sm:$0xff]
    %v3865 = vld [vmem:[#allocation4 + $0x290] sm:$0xff]
    %v3866 = vld [vmem:[#allocation4 + $0x298] sm:$0xff]
    %v3867 = vld [vmem:[#allocation4 + $0x2a0] sm:$0xff]
    %v3868 = vld [vmem:[#allocation4 + $0x2a8] sm:$0xff]
    %v3869 = vld [vmem:[#allocation4 + $0x2b0] sm:$0xff]
    %v3870 = vld [vmem:[#allocation4 + $0x2b8] sm:$0xff]
    %v3871 = vld [vmem:[#allocation4 + $0x2c0] sm:$0xff]
    %v3872 = vld [vmem:[#allocation4 + $0x2c8] sm:$0xff]
    %v3873 = vld [vmem:[#allocation4 + $0x2d0] sm:$0xff]
    %v3874 = vld [vmem:[#allocation4 + $0x2d8] sm:$0xff]
    %v3875 = vld [vmem:[#allocation4 + $0x2e0] sm:$0xff]
    %v3876 = vld [vmem:[#allocation4 + $0x2e8] sm:$0xff]
    %v3877 = vld [vmem:[#allocation4 + $0x2f0] sm:$0xff]
    %v3878 = vld [vmem:[#allocation4 + $0x2f8] sm:$0xff]
    %v3879 = vld [vmem:[#allocation4 + $0x300] sm:$0xff]
    %v3880 = vld [vmem:[#allocation4 + $0x308] sm:$0xff]
    %v3881 = vld [vmem:[#allocation4 + $0x310] sm:$0xff]
    %v3882 = vld [vmem:[#allocation4 + $0x318] sm:$0xff]
    %v3883 = vld [vmem:[#allocation4 + $0x320] sm:$0xff]
    %v3884 = vld [vmem:[#allocation4 + $0x328] sm:$0xff]
    %v3885 = vld [vmem:[#allocation4 + $0x330] sm:$0xff]
    %v3886 = vld [vmem:[#allocation4 + $0x338] sm:$0xff]
    %v3887 = vld [vmem:[#allocation4 + $0x340] sm:$0xff]
    %v3888 = vld [vmem:[#allocation4 + $0x348] sm:$0xff]
    %v3889 = vld [vmem:[#allocation4 + $0x350] sm:$0xff]
    %v3890 = vld [vmem:[#allocation4 + $0x358] sm:$0xff]
    %v3891 = vld [vmem:[#allocation4 + $0x360] sm:$0xff]
    %v3892 = vld [vmem:[#allocation4 + $0x368] sm:$0xff]
    %v3893 = vld [vmem:[#allocation4 + $0x370] sm:$0xff]
    %v3894 = vld [vmem:[#allocation4 + $0x378] sm:$0xff]
    %v3895 = vld [vmem:[#allocation4 + $0x380] sm:$0xff]
    %v3896 = vld [vmem:[#allocation4 + $0x388] sm:$0xff]
    %v3897 = vld [vmem:[#allocation4 + $0x390] sm:$0xff]
    %v3898 = vld [vmem:[#allocation4 + $0x398] sm:$0xff]
    %v3899 = vld [vmem:[#allocation4 + $0x3a0] sm:$0xff]
    %v3900 = vld [vmem:[#allocation4 + $0x3a8] sm:$0xff]
    %v3901 = vld [vmem:[#allocation4 + $0x3b0] sm:$0xff]
    %v3902 = vld [vmem:[#allocation4 + $0x3b8] sm:$0xff]
    %v3903 = vld [vmem:[#allocation4 + $0x3c0] sm:$0xff]
    %v3904 = vld [vmem:[#allocation4 + $0x3c8] sm:$0xff]
    %v3905 = vld [vmem:[#allocation4 + $0x3d0] sm:$0xff]
    %v3906 = vld [vmem:[#allocation4 + $0x3d8] sm:$0xff]
    %v3907 = vld [vmem:[#allocation4 + $0x3e0] sm:$0xff]
    %v3908 = vld [vmem:[#allocation4 + $0x3e8] sm:$0xff]
    %v3909 = vld [vmem:[#allocation4 + $0x3f0] sm:$0xff]
    %v3910 = vld [vmem:[#allocation4 + $0x3f8] sm:$0xff]
    %v3911 = vld [vmem:[#allocation4 + $0x400] sm:$0xff]
    %v3912 = vld [vmem:[#allocation4 + $0x408] sm:$0xff]
    %v3913 = vld [vmem:[#allocation4 + $0x410] sm:$0xff]
    %v3914 = vld [vmem:[#allocation4 + $0x418] sm:$0xff]
    %v3915 = vld [vmem:[#allocation4 + $0x420] sm:$0xff]
    %v3916 = vld [vmem:[#allocation4 + $0x428] sm:$0xff]
    %v3917 = vld [vmem:[#allocation4 + $0x430] sm:$0xff]
    %v3918 = vld [vmem:[#allocation4 + $0x438] sm:$0xff]
    %v3919 = vld [vmem:[#allocation4 + $0x440] sm:$0xff]
    %v3920 = vld [vmem:[#allocation4 + $0x448] sm:$0xff]
    %v3921 = vld [vmem:[#allocation4 + $0x450] sm:$0xff]
    %v3922 = vld [vmem:[#allocation4 + $0x458] sm:$0xff]
    %v3923 = vld [vmem:[#allocation4 + $0x460] sm:$0xff]
    %v3924 = vld [vmem:[#allocation4 + $0x468] sm:$0xff]
    %v3925 = vld [vmem:[#allocation4 + $0x470] sm:$0xff]
    %v3926 = vld [vmem:[#allocation4 + $0x478] sm:$0xff]
    %v3927 = vld [vmem:[#allocation4 + $0x480] sm:$0xff]
    %v3928 = vld [vmem:[#allocation4 + $0x488] sm:$0xff]
    %v3929 = vld [vmem:[#allocation4 + $0x490] sm:$0xff]
    %v3930 = vld [vmem:[#allocation4 + $0x498] sm:$0xff]
    %v3931 = vld [vmem:[#allocation4 + $0x4a0] sm:$0xff]
    %v3932 = vld [vmem:[#allocation4 + $0x4a8] sm:$0xff]
    %v3933 = vld [vmem:[#allocation4 + $0x4b0] sm:$0xff]
    %v3934 = vld [vmem:[#allocation4 + $0x4b8] sm:$0xff]
    %v3935 = vld [vmem:[#allocation4 + $0x4c0] sm:$0xff]
    %v3936 = vld [vmem:[#allocation4 + $0x4c8] sm:$0xff]
    %v3937 = vld [vmem:[#allocation4 + $0x4d0] sm:$0xff]
    %v3938 = vld [vmem:[#allocation4 + $0x4d8] sm:$0xff]
    %v3939 = vld [vmem:[#allocation4 + $0x4e0] sm:$0xff]
    %v3940 = vld [vmem:[#allocation4 + $0x4e8] sm:$0xff]
    %v3941 = vld [vmem:[#allocation4 + $0x4f0] sm:$0xff]
    %v3942 = vld [vmem:[#allocation4 + $0x4f8] sm:$0xff]
    %v3943 = vld [vmem:[#allocation4 + $0x500] sm:$0xff]
    %v3944 = vld [vmem:[#allocation4 + $0x508] sm:$0xff]
    %v3945 = vld [vmem:[#allocation4 + $0x510] sm:$0xff]
    %v3946 = vld [vmem:[#allocation4 + $0x518] sm:$0xff]
    %v3947 = vld [vmem:[#allocation4 + $0x520] sm:$0xff]
    %v3948 = vld [vmem:[#allocation4 + $0x528] sm:$0xff]
    %v3949 = vld [vmem:[#allocation4 + $0x530] sm:$0xff]
    %v3950 = vld [vmem:[#allocation4 + $0x538] sm:$0xff]
    %v3951 = vld [vmem:[#allocation4 + $0x540] sm:$0xff]
    %v3952 = vld [vmem:[#allocation4 + $0x548] sm:$0xff]
    %v3953 = vld [vmem:[#allocation4 + $0x550] sm:$0xff]
    %v3954 = vld [vmem:[#allocation4 + $0x558] sm:$0xff]
    %v3955 = vld [vmem:[#allocation4 + $0x560] sm:$0xff]
    %v3956 = vld [vmem:[#allocation4 + $0x568] sm:$0xff]
    %v3957 = vld [vmem:[#allocation4 + $0x570] sm:$0xff]
    %v3958 = vld [vmem:[#allocation4 + $0x578] sm:$0xff]
    %v3959 = vld [vmem:[#allocation4 + $0x580] sm:$0xff]
    %v3960 = vld [vmem:[#allocation4 + $0x588] sm:$0xff]
    %v3961 = vld [vmem:[#allocation4 + $0x590] sm:$0xff]
    %v3962 = vld [vmem:[#allocation4 + $0x598] sm:$0xff]
    %v3963 = vld [vmem:[#allocation4 + $0x5a0] sm:$0xff]
    %v3964 = vld [vmem:[#allocation4 + $0x5a8] sm:$0xff]
    %v3965 = vld [vmem:[#allocation4 + $0x5b0] sm:$0xff]
    %v3966 = vld [vmem:[#allocation4 + $0x5b8] sm:$0xff]
    %v3967 = vld [vmem:[#allocation4 + $0x5c0] sm:$0xff]
    %v3968 = vld [vmem:[#allocation4 + $0x5c8] sm:$0xff]
    %v3969 = vld [vmem:[#allocation4 + $0x5d0] sm:$0xff]
    %v3970 = vld [vmem:[#allocation4 + $0x5d8] sm:$0xff]
    %v3971 = vld [vmem:[#allocation4 + $0x5e0] sm:$0xff]
    %v3972 = vld [vmem:[#allocation4 + $0x5e8] sm:$0xff]
    %v3973 = vld [vmem:[#allocation4 + $0x5f0] sm:$0xff]
    %v3974 = vld [vmem:[#allocation4 + $0x5f8] sm:$0xff]
    %v3975 = vld [vmem:[#allocation4 + $0x600] sm:$0xff]
    %v3976 = vld [vmem:[#allocation4 + $0x608] sm:$0xff]
    %v3977 = vld [vmem:[#allocation4 + $0x610] sm:$0xff]
    %v3978 = vld [vmem:[#allocation4 + $0x618] sm:$0xff]
    %v3979 = vld [vmem:[#allocation4 + $0x620] sm:$0xff]
    %v3980 = vld [vmem:[#allocation4 + $0x628] sm:$0xff]
    %v3981 = vld [vmem:[#allocation4 + $0x630] sm:$0xff]
    %v3982 = vld [vmem:[#allocation4 + $0x638] sm:$0xff]
    %v3983 = vld [vmem:[#allocation4 + $0x640] sm:$0xff]
    %v3984 = vld [vmem:[#allocation4 + $0x648] sm:$0xff]
    %v3985 = vld [vmem:[#allocation4 + $0x650] sm:$0xff]
    %v3986 = vld [vmem:[#allocation4 + $0x658] sm:$0xff]
    %v3987 = vld [vmem:[#allocation4 + $0x660] sm:$0xff]
    %v3988 = vld [vmem:[#allocation4 + $0x668] sm:$0xff]
    %v3989 = vld [vmem:[#allocation4 + $0x670] sm:$0xff]
    %v3990 = vld [vmem:[#allocation4 + $0x678] sm:$0xff]
    %v3991 = vld [vmem:[#allocation4 + $0x680] sm:$0xff]
    %v3992 = vld [vmem:[#allocation4 + $0x688] sm:$0xff]
    %v3993 = vld [vmem:[#allocation4 + $0x690] sm:$0xff]
    %v3994 = vld [vmem:[#allocation4 + $0x698] sm:$0xff]
    %v3995 = vld [vmem:[#allocation4 + $0x6a0] sm:$0xff]
    %v3996 = vld [vmem:[#allocation4 + $0x6a8] sm:$0xff]
    %v3997 = vld [vmem:[#allocation4 + $0x6b0] sm:$0xff]
    %v3998 = vld [vmem:[#allocation4 + $0x6b8] sm:$0xff]
    %v3999 = vld [vmem:[#allocation4 + $0x6c0] sm:$0xff]
    %v4000 = vld [vmem:[#allocation4 + $0x6c8] sm:$0xff]
    %v4001 = vld [vmem:[#allocation4 + $0x6d0] sm:$0xff]
    %v4002 = vld [vmem:[#allocation4 + $0x6d8] sm:$0xff]
    %v4003 = vld [vmem:[#allocation4 + $0x6e0] sm:$0xff]
    %v4004 = vld [vmem:[#allocation4 + $0x6e8] sm:$0xff]
    %v4005 = vld [vmem:[#allocation4 + $0x6f0] sm:$0xff]
    %v4006 = vld [vmem:[#allocation4 + $0x6f8] sm:$0xff]
    %v4007 = vld [vmem:[#allocation4 + $0x700] sm:$0xff]
    %v4008 = vld [vmem:[#allocation4 + $0x708] sm:$0xff]
    %v4009 = vld [vmem:[#allocation4 + $0x710] sm:$0xff]
    %v4010 = vld [vmem:[#allocation4 + $0x718] sm:$0xff]
    %v4011 = vld [vmem:[#allocation4 + $0x720] sm:$0xff]
    %v4012 = vld [vmem:[#allocation4 + $0x728] sm:$0xff]
    %v4013 = vld [vmem:[#allocation4 + $0x730] sm:$0xff]
    %v4014 = vld [vmem:[#allocation4 + $0x738] sm:$0xff]
    %v4015 = vld [vmem:[#allocation4 + $0x740] sm:$0xff]
    %v4016 = vld [vmem:[#allocation4 + $0x748] sm:$0xff]
    %v4017 = vld [vmem:[#allocation4 + $0x750] sm:$0xff]
    %v4018 = vld [vmem:[#allocation4 + $0x758] sm:$0xff]
    %v4019 = vld [vmem:[#allocation4 + $0x760] sm:$0xff]
    %v4020 = vld [vmem:[#allocation4 + $0x768] sm:$0xff]
    %v4021 = vld [vmem:[#allocation4 + $0x770] sm:$0xff]
    %v4022 = vld [vmem:[#allocation4 + $0x778] sm:$0xff]
    %v4023 = vld [vmem:[#allocation4 + $0x780] sm:$0xff]
    %v4024 = vld [vmem:[#allocation4 + $0x788] sm:$0xff]
    %v4025 = vld [vmem:[#allocation4 + $0x790] sm:$0xff]
    %v4026 = vld [vmem:[#allocation4 + $0x798] sm:$0xff]
    %v4027 = vld [vmem:[#allocation4 + $0x7a0] sm:$0xff]
    %v4028 = vld [vmem:[#allocation4 + $0x7a8] sm:$0xff]
    %v4029 = vld [vmem:[#allocation4 + $0x7b0] sm:$0xff]
    %v4030 = vld [vmem:[#allocation4 + $0x7b8] sm:$0xff]
    %v4031 = vld [vmem:[#allocation4 + $0x7c0] sm:$0xff]
    %v4032 = vld [vmem:[#allocation4 + $0x7c8] sm:$0xff]
    %v4033 = vld [vmem:[#allocation4 + $0x7d0] sm:$0xff]
    %v4034 = vld [vmem:[#allocation4 + $0x7d8] sm:$0xff]
    %v4035 = vld [vmem:[#allocation4 + $0x7e0] sm:$0xff]
    %v4036 = vld [vmem:[#allocation4 + $0x7e8] sm:$0xff]
    %v4037 = vld [vmem:[#allocation4 + $0x7f0] sm:$0xff]
    %v4038 = vld [vmem:[#allocation4 + $0x7f8] sm:$0xff]
    %s4039 = scalar_lea.vmem [#allocation15], 1
    %v4040 = vld [vmem:[%s4039] ss:$8 sm:$0xf]
    %v4042 = vperm.slane %v4040, 0
    %v4043 = vperm.slane %v4040, 1
    %v4044 = vperm.slane %v4040, 2
    %v4045 = vperm.slane %v4040, 3
    %v4306 = vunpack.c.l.b16 %v3783
    %v4307 = vunpack.c.h.b16 %v3783
    %v4308 = vunpack.c.l.b16 %v3784
    %v4309 = vunpack.c.h.b16 %v3784
    %v4310 = vunpack.c.l.b16 %v3785
    %v4311 = vunpack.c.h.b16 %v3785
    %v4312 = vunpack.c.l.b16 %v3786
    %v4313 = vunpack.c.h.b16 %v3786
    %v4314 = vunpack.c.l.b16 %v3787
    %v4315 = vunpack.c.h.b16 %v3787
    %v4316 = vunpack.c.l.b16 %v3788
    %v4317 = vunpack.c.h.b16 %v3788
    %v4318 = vunpack.c.l.b16 %v3789
    %v4319 = vunpack.c.h.b16 %v3789
    %v4320 = vunpack.c.l.b16 %v3790
    %v4321 = vunpack.c.h.b16 %v3790
    %v4322 = vunpack.c.l.b16 %v3791
    %v4323 = vunpack.c.h.b16 %v3791
    %v4324 = vunpack.c.l.b16 %v3792
    %v4325 = vunpack.c.h.b16 %v3792
    %v4326 = vunpack.c.l.b16 %v3793
    %v4327 = vunpack.c.h.b16 %v3793
    %v4328 = vunpack.c.l.b16 %v3794
    %v4329 = vunpack.c.h.b16 %v3794
    %v4330 = vunpack.c.l.b16 %v3795
    %v4331 = vunpack.c.h.b16 %v3795
    %v4332 = vunpack.c.l.b16 %v3796
    %v4333 = vunpack.c.h.b16 %v3796
    %v4334 = vunpack.c.l.b16 %v3797
    %v4335 = vunpack.c.h.b16 %v3797
    %v4336 = vunpack.c.l.b16 %v3798
    %v4337 = vunpack.c.h.b16 %v3798
    %v4338 = vunpack.c.l.b16 %v3799
    %v4339 = vunpack.c.h.b16 %v3799
    %v4340 = vunpack.c.l.b16 %v3800
    %v4341 = vunpack.c.h.b16 %v3800
    %v4342 = vunpack.c.l.b16 %v3801
    %v4343 = vunpack.c.h.b16 %v3801
    %v4344 = vunpack.c.l.b16 %v3802
    %v4345 = vunpack.c.h.b16 %v3802
    %v4346 = vunpack.c.l.b16 %v3803
    %v4347 = vunpack.c.h.b16 %v3803
    %v4348 = vunpack.c.l.b16 %v3804
    %v4349 = vunpack.c.h.b16 %v3804
    %v4350 = vunpack.c.l.b16 %v3805
    %v4351 = vunpack.c.h.b16 %v3805
    %v4352 = vunpack.c.l.b16 %v3806
    %v4353 = vunpack.c.h.b16 %v3806
    %v4354 = vunpack.c.l.b16 %v3807
    %v4355 = vunpack.c.h.b16 %v3807
    %v4356 = vunpack.c.l.b16 %v3808
    %v4357 = vunpack.c.h.b16 %v3808
    %v4358 = vunpack.c.l.b16 %v3809
    %v4359 = vunpack.c.h.b16 %v3809
    %v4360 = vunpack.c.l.b16 %v3810
    %v4361 = vunpack.c.h.b16 %v3810
    %v4362 = vunpack.c.l.b16 %v3811
    %v4363 = vunpack.c.h.b16 %v3811
    %v4364 = vunpack.c.l.b16 %v3812
    %v4365 = vunpack.c.h.b16 %v3812
    %v4366 = vunpack.c.l.b16 %v3813
    %v4367 = vunpack.c.h.b16 %v3813
    %v4368 = vunpack.c.l.b16 %v3814
    %v4369 = vunpack.c.h.b16 %v3814
    %v4370 = vunpack.c.l.b16 %v3815
    %v4371 = vunpack.c.h.b16 %v3815
    %v4372 = vunpack.c.l.b16 %v3816
    %v4373 = vunpack.c.h.b16 %v3816
    %v4374 = vunpack.c.l.b16 %v3817
    %v4375 = vunpack.c.h.b16 %v3817
    %v4376 = vunpack.c.l.b16 %v3818
    %v4377 = vunpack.c.h.b16 %v3818
    %v4378 = vunpack.c.l.b16 %v3819
    %v4379 = vunpack.c.h.b16 %v3819
    %v4380 = vunpack.c.l.b16 %v3820
    %v4381 = vunpack.c.h.b16 %v3820
    %v4382 = vunpack.c.l.b16 %v3821
    %v4383 = vunpack.c.h.b16 %v3821
    %v4384 = vunpack.c.l.b16 %v3822
    %v4385 = vunpack.c.h.b16 %v3822
    %v4386 = vunpack.c.l.b16 %v3823
    %v4387 = vunpack.c.h.b16 %v3823
    %v4388 = vunpack.c.l.b16 %v3824
    %v4389 = vunpack.c.h.b16 %v3824
    %v4390 = vunpack.c.l.b16 %v3825
    %v4391 = vunpack.c.h.b16 %v3825
    %v4392 = vunpack.c.l.b16 %v3826
    %v4393 = vunpack.c.h.b16 %v3826
    %v4394 = vunpack.c.l.b16 %v3827
    %v4395 = vunpack.c.h.b16 %v3827
    %v4396 = vunpack.c.l.b16 %v3828
    %v4397 = vunpack.c.h.b16 %v3828
    %v4398 = vunpack.c.l.b16 %v3829
    %v4399 = vunpack.c.h.b16 %v3829
    %v4400 = vunpack.c.l.b16 %v3830
    %v4401 = vunpack.c.h.b16 %v3830
    %v4402 = vunpack.c.l.b16 %v3831
    %v4403 = vunpack.c.h.b16 %v3831
    %v4404 = vunpack.c.l.b16 %v3832
    %v4405 = vunpack.c.h.b16 %v3832
    %v4406 = vunpack.c.l.b16 %v3833
    %v4407 = vunpack.c.h.b16 %v3833
    %v4408 = vunpack.c.l.b16 %v3834
    %v4409 = vunpack.c.h.b16 %v3834
    %v4410 = vunpack.c.l.b16 %v3835
    %v4411 = vunpack.c.h.b16 %v3835
    %v4412 = vunpack.c.l.b16 %v3836
    %v4413 = vunpack.c.h.b16 %v3836
    %v4414 = vunpack.c.l.b16 %v3837
    %v4415 = vunpack.c.h.b16 %v3837
    %v4416 = vunpack.c.l.b16 %v3838
    %v4417 = vunpack.c.h.b16 %v3838
    %v4418 = vunpack.c.l.b16 %v3839
    %v4419 = vunpack.c.h.b16 %v3839
    %v4420 = vunpack.c.l.b16 %v3840
    %v4421 = vunpack.c.h.b16 %v3840
    %v4422 = vunpack.c.l.b16 %v3841
    %v4423 = vunpack.c.h.b16 %v3841
    %v4424 = vunpack.c.l.b16 %v3842
    %v4425 = vunpack.c.h.b16 %v3842
    %v4426 = vunpack.c.l.b16 %v3843
    %v4427 = vunpack.c.h.b16 %v3843
    %v4428 = vunpack.c.l.b16 %v3844
    %v4429 = vunpack.c.h.b16 %v3844
    %v4430 = vunpack.c.l.b16 %v3845
    %v4431 = vunpack.c.h.b16 %v3845
    %v4432 = vunpack.c.l.b16 %v3846
    %v4433 = vunpack.c.h.b16 %v3846
    %v4434 = vunpack.c.l.b16 %v3847
    %v4435 = vunpack.c.h.b16 %v3847
    %v4436 = vunpack.c.l.b16 %v3848
    %v4437 = vunpack.c.h.b16 %v3848
    %v4438 = vunpack.c.l.b16 %v3849
    %v4439 = vunpack.c.h.b16 %v3849
    %v4440 = vunpack.c.l.b16 %v3850
    %v4441 = vunpack.c.h.b16 %v3850
    %v4442 = vunpack.c.l.b16 %v3851
    %v4443 = vunpack.c.h.b16 %v3851
    %v4444 = vunpack.c.l.b16 %v3852
    %v4445 = vunpack.c.h.b16 %v3852
    %v4446 = vunpack.c.l.b16 %v3853
    %v4447 = vunpack.c.h.b16 %v3853
    %v4448 = vunpack.c.l.b16 %v3854
    %v4449 = vunpack.c.h.b16 %v3854
    %v4450 = vunpack.c.l.b16 %v3855
    %v4451 = vunpack.c.h.b16 %v3855
    %v4452 = vunpack.c.l.b16 %v3856
    %v4453 = vunpack.c.h.b16 %v3856
    %v4454 = vunpack.c.l.b16 %v3857
    %v4455 = vunpack.c.h.b16 %v3857
    %v4456 = vunpack.c.l.b16 %v3858
    %v4457 = vunpack.c.h.b16 %v3858
    %v4458 = vunpack.c.l.b16 %v3859
    %v4459 = vunpack.c.h.b16 %v3859
    %v4460 = vunpack.c.l.b16 %v3860
    %v4461 = vunpack.c.h.b16 %v3860
    %v4462 = vunpack.c.l.b16 %v3861
    %v4463 = vunpack.c.h.b16 %v3861
    %v4464 = vunpack.c.l.b16 %v3862
    %v4465 = vunpack.c.h.b16 %v3862
    %v4466 = vunpack.c.l.b16 %v3863
    %v4467 = vunpack.c.h.b16 %v3863
    %v4468 = vunpack.c.l.b16 %v3864
    %v4469 = vunpack.c.h.b16 %v3864
    %v4470 = vunpack.c.l.b16 %v3865
    %v4471 = vunpack.c.h.b16 %v3865
    %v4472 = vunpack.c.l.b16 %v3866
    %v4473 = vunpack.c.h.b16 %v3866
    %v4474 = vunpack.c.l.b16 %v3867
    %v4475 = vunpack.c.h.b16 %v3867
    %v4476 = vunpack.c.l.b16 %v3868
    %v4477 = vunpack.c.h.b16 %v3868
    %v4478 = vunpack.c.l.b16 %v3869
    %v4479 = vunpack.c.h.b16 %v3869
    %v4480 = vunpack.c.l.b16 %v3870
    %v4481 = vunpack.c.h.b16 %v3870
    %v4482 = vunpack.c.l.b16 %v3871
    %v4483 = vunpack.c.h.b16 %v3871
    %v4484 = vunpack.c.l.b16 %v3872
    %v4485 = vunpack.c.h.b16 %v3872
    %v4486 = vunpack.c.l.b16 %v3873
    %v4487 = vunpack.c.h.b16 %v3873
    %v4488 = vunpack.c.l.b16 %v3874
    %v4489 = vunpack.c.h.b16 %v3874
    %v4490 = vunpack.c.l.b16 %v3875
    %v4491 = vunpack.c.h.b16 %v3875
    %v4492 = vunpack.c.l.b16 %v3876
    %v4493 = vunpack.c.h.b16 %v3876
    %v4494 = vunpack.c.l.b16 %v3877
    %v4495 = vunpack.c.h.b16 %v3877
    %v4496 = vunpack.c.l.b16 %v3878
    %v4497 = vunpack.c.h.b16 %v3878
    %v4498 = vunpack.c.l.b16 %v3879
    %v4499 = vunpack.c.h.b16 %v3879
    %v4500 = vunpack.c.l.b16 %v3880
    %v4501 = vunpack.c.h.b16 %v3880
    %v4502 = vunpack.c.l.b16 %v3881
    %v4503 = vunpack.c.h.b16 %v3881
    %v4504 = vunpack.c.l.b16 %v3882
    %v4505 = vunpack.c.h.b16 %v3882
    %v4506 = vunpack.c.l.b16 %v3883
    %v4507 = vunpack.c.h.b16 %v3883
    %v4508 = vunpack.c.l.b16 %v3884
    %v4509 = vunpack.c.h.b16 %v3884
    %v4510 = vunpack.c.l.b16 %v3885
    %v4511 = vunpack.c.h.b16 %v3885
    %v4512 = vunpack.c.l.b16 %v3886
    %v4513 = vunpack.c.h.b16 %v3886
    %v4514 = vunpack.c.l.b16 %v3887
    %v4515 = vunpack.c.h.b16 %v3887
    %v4516 = vunpack.c.l.b16 %v3888
    %v4517 = vunpack.c.h.b16 %v3888
    %v4518 = vunpack.c.l.b16 %v3889
    %v4519 = vunpack.c.h.b16 %v3889
    %v4520 = vunpack.c.l.b16 %v3890
    %v4521 = vunpack.c.h.b16 %v3890
    %v4522 = vunpack.c.l.b16 %v3891
    %v4523 = vunpack.c.h.b16 %v3891
    %v4524 = vunpack.c.l.b16 %v3892
    %v4525 = vunpack.c.h.b16 %v3892
    %v4526 = vunpack.c.l.b16 %v3893
    %v4527 = vunpack.c.h.b16 %v3893
    %v4528 = vunpack.c.l.b16 %v3894
    %v4529 = vunpack.c.h.b16 %v3894
    %v4530 = vunpack.c.l.b16 %v3895
    %v4531 = vunpack.c.h.b16 %v3895
    %v4532 = vunpack.c.l.b16 %v3896
    %v4533 = vunpack.c.h.b16 %v3896
    %v4534 = vunpack.c.l.b16 %v3897
    %v4535 = vunpack.c.h.b16 %v3897
    %v4536 = vunpack.c.l.b16 %v3898
    %v4537 = vunpack.c.h.b16 %v3898
    %v4538 = vunpack.c.l.b16 %v3899
    %v4539 = vunpack.c.h.b16 %v3899
    %v4540 = vunpack.c.l.b16 %v3900
    %v4541 = vunpack.c.h.b16 %v3900
    %v4542 = vunpack.c.l.b16 %v3901
    %v4543 = vunpack.c.h.b16 %v3901
    %v4544 = vunpack.c.l.b16 %v3902
    %v4545 = vunpack.c.h.b16 %v3902
    %v4546 = vunpack.c.l.b16 %v3903
    %v4547 = vunpack.c.h.b16 %v3903
    %v4548 = vunpack.c.l.b16 %v3904
    %v4549 = vunpack.c.h.b16 %v3904
    %v4550 = vunpack.c.l.b16 %v3905
    %v4551 = vunpack.c.h.b16 %v3905
    %v4552 = vunpack.c.l.b16 %v3906
    %v4553 = vunpack.c.h.b16 %v3906
    %v4554 = vunpack.c.l.b16 %v3907
    %v4555 = vunpack.c.h.b16 %v3907
    %v4556 = vunpack.c.l.b16 %v3908
    %v4557 = vunpack.c.h.b16 %v3908
    %v4558 = vunpack.c.l.b16 %v3909
    %v4559 = vunpack.c.h.b16 %v3909
    %v4560 = vunpack.c.l.b16 %v3910
    %v4561 = vunpack.c.h.b16 %v3910
    %v4562 = vunpack.c.l.b16 %v3911
    %v4563 = vunpack.c.h.b16 %v3911
    %v4564 = vunpack.c.l.b16 %v3912
    %v4565 = vunpack.c.h.b16 %v3912
    %v4566 = vunpack.c.l.b16 %v3913
    %v4567 = vunpack.c.h.b16 %v3913
    %v4568 = vunpack.c.l.b16 %v3914
    %v4569 = vunpack.c.h.b16 %v3914
    %v4570 = vunpack.c.l.b16 %v3915
    %v4571 = vunpack.c.h.b16 %v3915
    %v4572 = vunpack.c.l.b16 %v3916
    %v4573 = vunpack.c.h.b16 %v3916
    %v4574 = vunpack.c.l.b16 %v3917
    %v4575 = vunpack.c.h.b16 %v3917
    %v4576 = vunpack.c.l.b16 %v3918
    %v4577 = vunpack.c.h.b16 %v3918
    %v4578 = vunpack.c.l.b16 %v3919
    %v4579 = vunpack.c.h.b16 %v3919
    %v4580 = vunpack.c.l.b16 %v3920
    %v4581 = vunpack.c.h.b16 %v3920
    %v4582 = vunpack.c.l.b16 %v3921
    %v4583 = vunpack.c.h.b16 %v3921
    %v4584 = vunpack.c.l.b16 %v3922
    %v4585 = vunpack.c.h.b16 %v3922
    %v4586 = vunpack.c.l.b16 %v3923
    %v4587 = vunpack.c.h.b16 %v3923
    %v4588 = vunpack.c.l.b16 %v3924
    %v4589 = vunpack.c.h.b16 %v3924
    %v4590 = vunpack.c.l.b16 %v3925
    %v4591 = vunpack.c.h.b16 %v3925
    %v4592 = vunpack.c.l.b16 %v3926
    %v4593 = vunpack.c.h.b16 %v3926
    %v4594 = vunpack.c.l.b16 %v3927
    %v4595 = vunpack.c.h.b16 %v3927
    %v4596 = vunpack.c.l.b16 %v3928
    %v4597 = vunpack.c.h.b16 %v3928
    %v4598 = vunpack.c.l.b16 %v3929
    %v4599 = vunpack.c.h.b16 %v3929
    %v4600 = vunpack.c.l.b16 %v3930
    %v4601 = vunpack.c.h.b16 %v3930
    %v4602 = vunpack.c.l.b16 %v3931
    %v4603 = vunpack.c.h.b16 %v3931
    %v4604 = vunpack.c.l.b16 %v3932
    %v4605 = vunpack.c.h.b16 %v3932
    %v4606 = vunpack.c.l.b16 %v3933
    %v4607 = vunpack.c.h.b16 %v3933
    %v4608 = vunpack.c.l.b16 %v3934
    %v4609 = vunpack.c.h.b16 %v3934
    %v4610 = vunpack.c.l.b16 %v3935
    %v4611 = vunpack.c.h.b16 %v3935
    %v4612 = vunpack.c.l.b16 %v3936
    %v4613 = vunpack.c.h.b16 %v3936
    %v4614 = vunpack.c.l.b16 %v3937
    %v4615 = vunpack.c.h.b16 %v3937
    %v4616 = vunpack.c.l.b16 %v3938
    %v4617 = vunpack.c.h.b16 %v3938
    %v4618 = vunpack.c.l.b16 %v3939
    %v4619 = vunpack.c.h.b16 %v3939
    %v4620 = vunpack.c.l.b16 %v3940
    %v4621 = vunpack.c.h.b16 %v3940
    %v4622 = vunpack.c.l.b16 %v3941
    %v4623 = vunpack.c.h.b16 %v3941
    %v4624 = vunpack.c.l.b16 %v3942
    %v4625 = vunpack.c.h.b16 %v3942
    %v4626 = vunpack.c.l.b16 %v3943
    %v4627 = vunpack.c.h.b16 %v3943
    %v4628 = vunpack.c.l.b16 %v3944
    %v4629 = vunpack.c.h.b16 %v3944
    %v4630 = vunpack.c.l.b16 %v3945
    %v4631 = vunpack.c.h.b16 %v3945
    %v4632 = vunpack.c.l.b16 %v3946
    %v4633 = vunpack.c.h.b16 %v3946
    %v4634 = vunpack.c.l.b16 %v3947
    %v4635 = vunpack.c.h.b16 %v3947
    %v4636 = vunpack.c.l.b16 %v3948
    %v4637 = vunpack.c.h.b16 %v3948
    %v4638 = vunpack.c.l.b16 %v3949
    %v4639 = vunpack.c.h.b16 %v3949
    %v4640 = vunpack.c.l.b16 %v3950
    %v4641 = vunpack.c.h.b16 %v3950
    %v4642 = vunpack.c.l.b16 %v3951
    %v4643 = vunpack.c.h.b16 %v3951
    %v4644 = vunpack.c.l.b16 %v3952
    %v4645 = vunpack.c.h.b16 %v3952
    %v4646 = vunpack.c.l.b16 %v3953
    %v4647 = vunpack.c.h.b16 %v3953
    %v4648 = vunpack.c.l.b16 %v3954
    %v4649 = vunpack.c.h.b16 %v3954
    %v4650 = vunpack.c.l.b16 %v3955
    %v4651 = vunpack.c.h.b16 %v3955
    %v4652 = vunpack.c.l.b16 %v3956
    %v4653 = vunpack.c.h.b16 %v3956
    %v4654 = vunpack.c.l.b16 %v3957
    %v4655 = vunpack.c.h.b16 %v3957
    %v4656 = vunpack.c.l.b16 %v3958
    %v4657 = vunpack.c.h.b16 %v3958
    %v4658 = vunpack.c.l.b16 %v3959
    %v4659 = vunpack.c.h.b16 %v3959
    %v4660 = vunpack.c.l.b16 %v3960
    %v4661 = vunpack.c.h.b16 %v3960
    %v4662 = vunpack.c.l.b16 %v3961
    %v4663 = vunpack.c.h.b16 %v3961
    %v4664 = vunpack.c.l.b16 %v3962
    %v4665 = vunpack.c.h.b16 %v3962
    %v4666 = vunpack.c.l.b16 %v3963
    %v4667 = vunpack.c.h.b16 %v3963
    %v4668 = vunpack.c.l.b16 %v3964
    %v4669 = vunpack.c.h.b16 %v3964
    %v4670 = vunpack.c.l.b16 %v3965
    %v4671 = vunpack.c.h.b16 %v3965
    %v4672 = vunpack.c.l.b16 %v3966
    %v4673 = vunpack.c.h.b16 %v3966
    %v4674 = vunpack.c.l.b16 %v3967
    %v4675 = vunpack.c.h.b16 %v3967
    %v4676 = vunpack.c.l.b16 %v3968
    %v4677 = vunpack.c.h.b16 %v3968
    %v4678 = vunpack.c.l.b16 %v3969
    %v4679 = vunpack.c.h.b16 %v3969
    %v4680 = vunpack.c.l.b16 %v3970
    %v4681 = vunpack.c.h.b16 %v3970
    %v4682 = vunpack.c.l.b16 %v3971
    %v4683 = vunpack.c.h.b16 %v3971
    %v4684 = vunpack.c.l.b16 %v3972
    %v4685 = vunpack.c.h.b16 %v3972
    %v4686 = vunpack.c.l.b16 %v3973
    %v4687 = vunpack.c.h.b16 %v3973
    %v4688 = vunpack.c.l.b16 %v3974
    %v4689 = vunpack.c.h.b16 %v3974
    %v4690 = vunpack.c.l.b16 %v3975
    %v4691 = vunpack.c.h.b16 %v3975
    %v4692 = vunpack.c.l.b16 %v3976
    %v4693 = vunpack.c.h.b16 %v3976
    %v4694 = vunpack.c.l.b16 %v3977
    %v4695 = vunpack.c.h.b16 %v3977
    %v4696 = vunpack.c.l.b16 %v3978
    %v4697 = vunpack.c.h.b16 %v3978
    %v4698 = vunpack.c.l.b16 %v3979
    %v4699 = vunpack.c.h.b16 %v3979
    %v4700 = vunpack.c.l.b16 %v3980
    %v4701 = vunpack.c.h.b16 %v3980
    %v4702 = vunpack.c.l.b16 %v3981
    %v4703 = vunpack.c.h.b16 %v3981
    %v4704 = vunpack.c.l.b16 %v3982
    %v4705 = vunpack.c.h.b16 %v3982
    %v4706 = vunpack.c.l.b16 %v3983
    %v4707 = vunpack.c.h.b16 %v3983
    %v4708 = vunpack.c.l.b16 %v3984
    %v4709 = vunpack.c.h.b16 %v3984
    %v4710 = vunpack.c.l.b16 %v3985
    %v4711 = vunpack.c.h.b16 %v3985
    %v4712 = vunpack.c.l.b16 %v3986
    %v4713 = vunpack.c.h.b16 %v3986
    %v4714 = vunpack.c.l.b16 %v3987
    %v4715 = vunpack.c.h.b16 %v3987
    %v4716 = vunpack.c.l.b16 %v3988
    %v4717 = vunpack.c.h.b16 %v3988
    %v4718 = vunpack.c.l.b16 %v3989
    %v4719 = vunpack.c.h.b16 %v3989
    %v4720 = vunpack.c.l.b16 %v3990
    %v4721 = vunpack.c.h.b16 %v3990
    %v4722 = vunpack.c.l.b16 %v3991
    %v4723 = vunpack.c.h.b16 %v3991
    %v4724 = vunpack.c.l.b16 %v3992
    %v4725 = vunpack.c.h.b16 %v3992
    %v4726 = vunpack.c.l.b16 %v3993
    %v4727 = vunpack.c.h.b16 %v3993
    %v4728 = vunpack.c.l.b16 %v3994
    %v4729 = vunpack.c.h.b16 %v3994
    %v4730 = vunpack.c.l.b16 %v3995
    %v4731 = vunpack.c.h.b16 %v3995
    %v4732 = vunpack.c.l.b16 %v3996
    %v4733 = vunpack.c.h.b16 %v3996
    %v4734 = vunpack.c.l.b16 %v3997
    %v4735 = vunpack.c.h.b16 %v3997
    %v4736 = vunpack.c.l.b16 %v3998
    %v4737 = vunpack.c.h.b16 %v3998
    %v4738 = vunpack.c.l.b16 %v3999
    %v4739 = vunpack.c.h.b16 %v3999
    %v4740 = vunpack.c.l.b16 %v4000
    %v4741 = vunpack.c.h.b16 %v4000
    %v4742 = vunpack.c.l.b16 %v4001
    %v4743 = vunpack.c.h.b16 %v4001
    %v4744 = vunpack.c.l.b16 %v4002
    %v4745 = vunpack.c.h.b16 %v4002
    %v4746 = vunpack.c.l.b16 %v4003
    %v4747 = vunpack.c.h.b16 %v4003
    %v4748 = vunpack.c.l.b16 %v4004
    %v4749 = vunpack.c.h.b16 %v4004
    %v4750 = vunpack.c.l.b16 %v4005
    %v4751 = vunpack.c.h.b16 %v4005
    %v4752 = vunpack.c.l.b16 %v4006
    %v4753 = vunpack.c.h.b16 %v4006
    %v4754 = vunpack.c.l.b16 %v4007
    %v4755 = vunpack.c.h.b16 %v4007
    %v4756 = vunpack.c.l.b16 %v4008
    %v4757 = vunpack.c.h.b16 %v4008
    %v4758 = vunpack.c.l.b16 %v4009
    %v4759 = vunpack.c.h.b16 %v4009
    %v4760 = vunpack.c.l.b16 %v4010
    %v4761 = vunpack.c.h.b16 %v4010
    %v4762 = vunpack.c.l.b16 %v4011
    %v4763 = vunpack.c.h.b16 %v4011
    %v4764 = vunpack.c.l.b16 %v4012
    %v4765 = vunpack.c.h.b16 %v4012
    %v4766 = vunpack.c.l.b16 %v4013
    %v4767 = vunpack.c.h.b16 %v4013
    %v4768 = vunpack.c.l.b16 %v4014
    %v4769 = vunpack.c.h.b16 %v4014
    %v4770 = vunpack.c.l.b16 %v4015
    %v4771 = vunpack.c.h.b16 %v4015
    %v4772 = vunpack.c.l.b16 %v4016
    %v4773 = vunpack.c.h.b16 %v4016
    %v4774 = vunpack.c.l.b16 %v4017
    %v4775 = vunpack.c.h.b16 %v4017
    %v4776 = vunpack.c.l.b16 %v4018
    %v4777 = vunpack.c.h.b16 %v4018
    %v4778 = vunpack.c.l.b16 %v4019
    %v4779 = vunpack.c.h.b16 %v4019
    %v4780 = vunpack.c.l.b16 %v4020
    %v4781 = vunpack.c.h.b16 %v4020
    %v4782 = vunpack.c.l.b16 %v4021
    %v4783 = vunpack.c.h.b16 %v4021
    %v4784 = vunpack.c.l.b16 %v4022
    %v4785 = vunpack.c.h.b16 %v4022
    %v4786 = vunpack.c.l.b16 %v4023
    %v4787 = vunpack.c.h.b16 %v4023
    %v4788 = vunpack.c.l.b16 %v4024
    %v4789 = vunpack.c.h.b16 %v4024
    %v4790 = vunpack.c.l.b16 %v4025
    %v4791 = vunpack.c.h.b16 %v4025
    %v4792 = vunpack.c.l.b16 %v4026
    %v4793 = vunpack.c.h.b16 %v4026
    %v4794 = vunpack.c.l.b16 %v4027
    %v4795 = vunpack.c.h.b16 %v4027
    %v4796 = vunpack.c.l.b16 %v4028
    %v4797 = vunpack.c.h.b16 %v4028
    %v4798 = vunpack.c.l.b16 %v4029
    %v4799 = vunpack.c.h.b16 %v4029
    %v4800 = vunpack.c.l.b16 %v4030
    %v4801 = vunpack.c.h.b16 %v4030
    %v4802 = vunpack.c.l.b16 %v4031
    %v4803 = vunpack.c.h.b16 %v4031
    %v4804 = vunpack.c.l.b16 %v4032
    %v4805 = vunpack.c.h.b16 %v4032
    %v4806 = vunpack.c.l.b16 %v4033
    %v4807 = vunpack.c.h.b16 %v4033
    %v4808 = vunpack.c.l.b16 %v4034
    %v4809 = vunpack.c.h.b16 %v4034
    %v4810 = vunpack.c.l.b16 %v4035
    %v4811 = vunpack.c.h.b16 %v4035
    %v4812 = vunpack.c.l.b16 %v4036
    %v4813 = vunpack.c.h.b16 %v4036
    %v4814 = vunpack.c.l.b16 %v4037
    %v4815 = vunpack.c.h.b16 %v4037
    %v4816 = vunpack.c.l.b16 %v4038
    %v4817 = vunpack.c.h.b16 %v4038
    %v4818 = vpack.c.b16 %v4310, %v4306
    %v4819 = vpack.c.b16 %v4311, %v4307
    %v4820 = vpack.c.b16 %v4312, %v4308
    %v4821 = vpack.c.b16 %v4313, %v4309
    %v4822 = vpack.c.b16 %v4318, %v4314
    %v4823 = vpack.c.b16 %v4319, %v4315
    %v4824 = vpack.c.b16 %v4320, %v4316
    %v4825 = vpack.c.b16 %v4321, %v4317
    %v4826 = vpack.c.b16 %v4326, %v4322
    %v4827 = vpack.c.b16 %v4327, %v4323
    %v4828 = vpack.c.b16 %v4328, %v4324
    %v4829 = vpack.c.b16 %v4329, %v4325
    %v4830 = vpack.c.b16 %v4334, %v4330
    %v4831 = vpack.c.b16 %v4335, %v4331
    %v4832 = vpack.c.b16 %v4336, %v4332
    %v4833 = vpack.c.b16 %v4337, %v4333
    %v4834 = vpack.c.b16 %v4342, %v4338
    %v4835 = vpack.c.b16 %v4343, %v4339
    %v4836 = vpack.c.b16 %v4344, %v4340
    %v4837 = vpack.c.b16 %v4345, %v4341
    %v4838 = vpack.c.b16 %v4350, %v4346
    %v4839 = vpack.c.b16 %v4351, %v4347
    %v4840 = vpack.c.b16 %v4352, %v4348
    %v4841 = vpack.c.b16 %v4353, %v4349
    %v4842 = vpack.c.b16 %v4358, %v4354
    %v4843 = vpack.c.b16 %v4359, %v4355
    %v4844 = vpack.c.b16 %v4360, %v4356
    %v4845 = vpack.c.b16 %v4361, %v4357
    %v4846 = vpack.c.b16 %v4366, %v4362
    %v4847 = vpack.c.b16 %v4367, %v4363
    %v4848 = vpack.c.b16 %v4368, %v4364
    %v4849 = vpack.c.b16 %v4369, %v4365
    %v4850 = vpack.c.b16 %v4374, %v4370
    %v4851 = vpack.c.b16 %v4375, %v4371
    %v4852 = vpack.c.b16 %v4376, %v4372
    %v4853 = vpack.c.b16 %v4377, %v4373
    %v4854 = vpack.c.b16 %v4382, %v4378
    %v4855 = vpack.c.b16 %v4383, %v4379
    %v4856 = vpack.c.b16 %v4384, %v4380
    %v4857 = vpack.c.b16 %v4385, %v4381
    %v4858 = vpack.c.b16 %v4390, %v4386
    %v4859 = vpack.c.b16 %v4391, %v4387
    %v4860 = vpack.c.b16 %v4392, %v4388
    %v4861 = vpack.c.b16 %v4393, %v4389
    %v4862 = vpack.c.b16 %v4398, %v4394
    %v4863 = vpack.c.b16 %v4399, %v4395
    %v4864 = vpack.c.b16 %v4400, %v4396
    %v4865 = vpack.c.b16 %v4401, %v4397
    %v4866 = vpack.c.b16 %v4406, %v4402
    %v4867 = vpack.c.b16 %v4407, %v4403
    %v4868 = vpack.c.b16 %v4408, %v4404
    %v4869 = vpack.c.b16 %v4409, %v4405
    %v4870 = vpack.c.b16 %v4414, %v4410
    %v4871 = vpack.c.b16 %v4415, %v4411
    %v4872 = vpack.c.b16 %v4416, %v4412
    %v4873 = vpack.c.b16 %v4417, %v4413
    %v4874 = vpack.c.b16 %v4422, %v4418
    %v4875 = vpack.c.b16 %v4423, %v4419
    %v4876 = vpack.c.b16 %v4424, %v4420
    %v4877 = vpack.c.b16 %v4425, %v4421
    %v4878 = vpack.c.b16 %v4430, %v4426
    %v4879 = vpack.c.b16 %v4431, %v4427
    %v4880 = vpack.c.b16 %v4432, %v4428
    %v4881 = vpack.c.b16 %v4433, %v4429
    %v4882 = vpack.c.b16 %v4438, %v4434
    %v4883 = vpack.c.b16 %v4439, %v4435
    %v4884 = vpack.c.b16 %v4440, %v4436
    %v4885 = vpack.c.b16 %v4441, %v4437
    %v4886 = vpack.c.b16 %v4446, %v4442
    %v4887 = vpack.c.b16 %v4447, %v4443
    %v4888 = vpack.c.b16 %v4448, %v4444
    %v4889 = vpack.c.b16 %v4449, %v4445
    %v4890 = vpack.c.b16 %v4454, %v4450
    %v4891 = vpack.c.b16 %v4455, %v4451
    %v4892 = vpack.c.b16 %v4456, %v4452
    %v4893 = vpack.c.b16 %v4457, %v4453
    %v4894 = vpack.c.b16 %v4462, %v4458
    %v4895 = vpack.c.b16 %v4463, %v4459
    %v4896 = vpack.c.b16 %v4464, %v4460
    %v4897 = vpack.c.b16 %v4465, %v4461
    %v4898 = vpack.c.b16 %v4470, %v4466
    %v4899 = vpack.c.b16 %v4471, %v4467
    %v4900 = vpack.c.b16 %v4472, %v4468
    %v4901 = vpack.c.b16 %v4473, %v4469
    %v4902 = vpack.c.b16 %v4478, %v4474
    %v4903 = vpack.c.b16 %v4479, %v4475
    %v4904 = vpack.c.b16 %v4480, %v4476
    %v4905 = vpack.c.b16 %v4481, %v4477
    %v4906 = vpack.c.b16 %v4486, %v4482
    %v4907 = vpack.c.b16 %v4487, %v4483
    %v4908 = vpack.c.b16 %v4488, %v4484
    %v4909 = vpack.c.b16 %v4489, %v4485
    %v4910 = vpack.c.b16 %v4494, %v4490
    %v4911 = vpack.c.b16 %v4495, %v4491
    %v4912 = vpack.c.b16 %v4496, %v4492
    %v4913 = vpack.c.b16 %v4497, %v4493
    %v4914 = vpack.c.b16 %v4502, %v4498
    %v4915 = vpack.c.b16 %v4503, %v4499
    %v4916 = vpack.c.b16 %v4504, %v4500
    %v4917 = vpack.c.b16 %v4505, %v4501
    %v4918 = vpack.c.b16 %v4510, %v4506
    %v4919 = vpack.c.b16 %v4511, %v4507
    %v4920 = vpack.c.b16 %v4512, %v4508
    %v4921 = vpack.c.b16 %v4513, %v4509
    %v4922 = vpack.c.b16 %v4518, %v4514
    %v4923 = vpack.c.b16 %v4519, %v4515
    %v4924 = vpack.c.b16 %v4520, %v4516
    %v4925 = vpack.c.b16 %v4521, %v4517
    %v4926 = vpack.c.b16 %v4526, %v4522
    %v4927 = vpack.c.b16 %v4527, %v4523
    %v4928 = vpack.c.b16 %v4528, %v4524
    %v4929 = vpack.c.b16 %v4529, %v4525
    %v4930 = vpack.c.b16 %v4534, %v4530
    %v4931 = vpack.c.b16 %v4535, %v4531
    %v4932 = vpack.c.b16 %v4536, %v4532
    %v4933 = vpack.c.b16 %v4537, %v4533
    %v4934 = vpack.c.b16 %v4542, %v4538
    %v4935 = vpack.c.b16 %v4543, %v4539
    %v4936 = vpack.c.b16 %v4544, %v4540
    %v4937 = vpack.c.b16 %v4545, %v4541
    %v4938 = vpack.c.b16 %v4550, %v4546
    %v4939 = vpack.c.b16 %v4551, %v4547
    %v4940 = vpack.c.b16 %v4552, %v4548
    %v4941 = vpack.c.b16 %v4553, %v4549
    %v4942 = vpack.c.b16 %v4558, %v4554
    %v4943 = vpack.c.b16 %v4559, %v4555
    %v4944 = vpack.c.b16 %v4560, %v4556
    %v4945 = vpack.c.b16 %v4561, %v4557
    %v4946 = vpack.c.b16 %v4566, %v4562
    %v4947 = vpack.c.b16 %v4567, %v4563
    %v4948 = vpack.c.b16 %v4568, %v4564
    %v4949 = vpack.c.b16 %v4569, %v4565
    %v4950 = vpack.c.b16 %v4574, %v4570
    %v4951 = vpack.c.b16 %v4575, %v4571
    %v4952 = vpack.c.b16 %v4576, %v4572
    %v4953 = vpack.c.b16 %v4577, %v4573
    %v4954 = vpack.c.b16 %v4582, %v4578
    %v4955 = vpack.c.b16 %v4583, %v4579
    %v4956 = vpack.c.b16 %v4584, %v4580
    %v4957 = vpack.c.b16 %v4585, %v4581
    %v4958 = vpack.c.b16 %v4590, %v4586
    %v4959 = vpack.c.b16 %v4591, %v4587
    %v4960 = vpack.c.b16 %v4592, %v4588
    %v4961 = vpack.c.b16 %v4593, %v4589
    %v4962 = vpack.c.b16 %v4598, %v4594
    %v4963 = vpack.c.b16 %v4599, %v4595
    %v4964 = vpack.c.b16 %v4600, %v4596
    %v4965 = vpack.c.b16 %v4601, %v4597
    %v4966 = vpack.c.b16 %v4606, %v4602
    %v4967 = vpack.c.b16 %v4607, %v4603
    %v4968 = vpack.c.b16 %v4608, %v4604
    %v4969 = vpack.c.b16 %v4609, %v4605
    %v4970 = vpack.c.b16 %v4614, %v4610
    %v4971 = vpack.c.b16 %v4615, %v4611
    %v4972 = vpack.c.b16 %v4616, %v4612
    %v4973 = vpack.c.b16 %v4617, %v4613
    %v4974 = vpack.c.b16 %v4622, %v4618
    %v4975 = vpack.c.b16 %v4623, %v4619
    %v4976 = vpack.c.b16 %v4624, %v4620
    %v4977 = vpack.c.b16 %v4625, %v4621
    %v4978 = vpack.c.b16 %v4630, %v4626
    %v4979 = vpack.c.b16 %v4631, %v4627
    %v4980 = vpack.c.b16 %v4632, %v4628
    %v4981 = vpack.c.b16 %v4633, %v4629
    %v4982 = vpack.c.b16 %v4638, %v4634
    %v4983 = vpack.c.b16 %v4639, %v4635
    %v4984 = vpack.c.b16 %v4640, %v4636
    %v4985 = vpack.c.b16 %v4641, %v4637
    %v4986 = vpack.c.b16 %v4646, %v4642
    %v4987 = vpack.c.b16 %v4647, %v4643
    %v4988 = vpack.c.b16 %v4648, %v4644
    %v4989 = vpack.c.b16 %v4649, %v4645
    %v4990 = vpack.c.b16 %v4654, %v4650
    %v4991 = vpack.c.b16 %v4655, %v4651
    %v4992 = vpack.c.b16 %v4656, %v4652
    %v4993 = vpack.c.b16 %v4657, %v4653
    %v4994 = vpack.c.b16 %v4662, %v4658
    %v4995 = vpack.c.b16 %v4663, %v4659
    %v4996 = vpack.c.b16 %v4664, %v4660
    %v4997 = vpack.c.b16 %v4665, %v4661
    %v4998 = vpack.c.b16 %v4670, %v4666
    %v4999 = vpack.c.b16 %v4671, %v4667
    %v5000 = vpack.c.b16 %v4672, %v4668
    %v5001 = vpack.c.b16 %v4673, %v4669
    %v5002 = vpack.c.b16 %v4678, %v4674
    %v5003 = vpack.c.b16 %v4679, %v4675
    %v5004 = vpack.c.b16 %v4680, %v4676
    %v5005 = vpack.c.b16 %v4681, %v4677
    %v5006 = vpack.c.b16 %v4686, %v4682
    %v5007 = vpack.c.b16 %v4687, %v4683
    %v5008 = vpack.c.b16 %v4688, %v4684
    %v5009 = vpack.c.b16 %v4689, %v4685
    %v5010 = vpack.c.b16 %v4694, %v4690
    %v5011 = vpack.c.b16 %v4695, %v4691
    %v5012 = vpack.c.b16 %v4696, %v4692
    %v5013 = vpack.c.b16 %v4697, %v4693
    %v5014 = vpack.c.b16 %v4702, %v4698
    %v5015 = vpack.c.b16 %v4703, %v4699
    %v5016 = vpack.c.b16 %v4704, %v4700
    %v5017 = vpack.c.b16 %v4705, %v4701
    %v5018 = vpack.c.b16 %v4710, %v4706
    %v5019 = vpack.c.b16 %v4711, %v4707
    %v5020 = vpack.c.b16 %v4712, %v4708
    %v5021 = vpack.c.b16 %v4713, %v4709
    %v5022 = vpack.c.b16 %v4718, %v4714
    %v5023 = vpack.c.b16 %v4719, %v4715
    %v5024 = vpack.c.b16 %v4720, %v4716
    %v5025 = vpack.c.b16 %v4721, %v4717
    %v5026 = vpack.c.b16 %v4726, %v4722
    %v5027 = vpack.c.b16 %v4727, %v4723
    %v5028 = vpack.c.b16 %v4728, %v4724
    %v5029 = vpack.c.b16 %v4729, %v4725
    %v5030 = vpack.c.b16 %v4734, %v4730
    %v5031 = vpack.c.b16 %v4735, %v4731
    %v5032 = vpack.c.b16 %v4736, %v4732
    %v5033 = vpack.c.b16 %v4737, %v4733
    %v5034 = vpack.c.b16 %v4742, %v4738
    %v5035 = vpack.c.b16 %v4743, %v4739
    %v5036 = vpack.c.b16 %v4744, %v4740
    %v5037 = vpack.c.b16 %v4745, %v4741
    %v5038 = vpack.c.b16 %v4750, %v4746
    %v5039 = vpack.c.b16 %v4751, %v4747
    %v5040 = vpack.c.b16 %v4752, %v4748
    %v5041 = vpack.c.b16 %v4753, %v4749
    %v5042 = vpack.c.b16 %v4758, %v4754
    %v5043 = vpack.c.b16 %v4759, %v4755
    %v5044 = vpack.c.b16 %v4760, %v4756
    %v5045 = vpack.c.b16 %v4761, %v4757
    %v5046 = vpack.c.b16 %v4766, %v4762
    %v5047 = vpack.c.b16 %v4767, %v4763
    %v5048 = vpack.c.b16 %v4768, %v4764
    %v5049 = vpack.c.b16 %v4769, %v4765
    %v5050 = vpack.c.b16 %v4774, %v4770
    %v5051 = vpack.c.b16 %v4775, %v4771
    %v5052 = vpack.c.b16 %v4776, %v4772
    %v5053 = vpack.c.b16 %v4777, %v4773
    %v5054 = vpack.c.b16 %v4782, %v4778
    %v5055 = vpack.c.b16 %v4783, %v4779
    %v5056 = vpack.c.b16 %v4784, %v4780
    %v5057 = vpack.c.b16 %v4785, %v4781
    %v5058 = vpack.c.b16 %v4790, %v4786
    %v5059 = vpack.c.b16 %v4791, %v4787
    %v5060 = vpack.c.b16 %v4792, %v4788
    %v5061 = vpack.c.b16 %v4793, %v4789
    %v5062 = vpack.c.b16 %v4798, %v4794
    %v5063 = vpack.c.b16 %v4799, %v4795
    %v5064 = vpack.c.b16 %v4800, %v4796
    %v5065 = vpack.c.b16 %v4801, %v4797
    %v5066 = vpack.c.b16 %v4806, %v4802
    %v5067 = vpack.c.b16 %v4807, %v4803
    %v5068 = vpack.c.b16 %v4808, %v4804
    %v5069 = vpack.c.b16 %v4809, %v4805
    %v5070 = vpack.c.b16 %v4814, %v4810
    %v5071 = vpack.c.b16 %v4815, %v4811
    %v5072 = vpack.c.b16 %v4816, %v4812
    %v5073 = vpack.c.b16 %v4817, %v4813
    %5330 = vmatpush.bf16.msra.mxu0 %v4846
    %5331 = vmatpush.bf16.msra.mxu0 %v4842
    %5332 = vmatpush.bf16.msra.mxu0 %v4838
    %5333 = vmatpush.bf16.msra.mxu0 %v4834
    %5334 = vmatpush.bf16.msra.mxu0 %v4830
    %5335 = vmatpush.bf16.msra.mxu0 %v4826
    %5336 = vmatpush.bf16.msra.mxu0 %v4822
    %5337 = vmatpush.bf16.msra.mxu0 %v4818
    %5338 = vmatmul.bf16.gmra.mxu0 %v3775
    %v5339 = vpop.f32.mrf.mxu0
    %v5340 = vadd.f32 %v4042, %v5339
    %v5341 = vpop.f32.mrf.mxu0
    %5342 = vdwg.mxu0
    %5343 = vmatpush.bf16.msra.mxu0 %v4878
    %5344 = vmatpush.bf16.msra.mxu0 %v4874
    %5345 = vmatpush.bf16.msra.mxu0 %v4870
    %5346 = vmatpush.bf16.msra.mxu0 %v4866
    %5347 = vmatpush.bf16.msra.mxu0 %v4862
    %5348 = vmatpush.bf16.msra.mxu0 %v4858
    %5349 = vmatpush.bf16.msra.mxu0 %v4854
    %5350 = vmatpush.bf16.msra.mxu0 %v4850
    %5351 = vmatmul.bf16.gmra.mxu0 %v3776
    %v5352 = vpop.f32.mrf.mxu0
    %v5353 = vadd.f32 %v5340, %v5352
    %v5354 = vpop.f32.mrf.mxu0
    %5355 = vdwg.mxu0
    %5356 = vmatpush.bf16.msra.mxu0 %v4910
    %5357 = vmatpush.bf16.msra.mxu0 %v4906
    %5358 = vmatpush.bf16.msra.mxu0 %v4902
    %5359 = vmatpush.bf16.msra.mxu0 %v4898
    %5360 = vmatpush.bf16.msra.mxu0 %v4894
    %5361 = vmatpush.bf16.msra.mxu0 %v4890
    %5362 = vmatpush.bf16.msra.mxu0 %v4886
    %5363 = vmatpush.bf16.msra.mxu0 %v4882
    %5364 = vmatmul.bf16.gmra.mxu0 %v3777
    %v5365 = vpop.f32.mrf.mxu0
    %v5366 = vadd.f32 %v5353, %v5365
    %v5367 = vpop.f32.mrf.mxu0
    %5368 = vdwg.mxu0
    %5369 = vmatpush.bf16.msra.mxu0 %v4942
    %5370 = vmatpush.bf16.msra.mxu0 %v4938
    %5371 = vmatpush.bf16.msra.mxu0 %v4934
    %5372 = vmatpush.bf16.msra.mxu0 %v4930
    %5373 = vmatpush.bf16.msra.mxu0 %v4926
    %5374 = vmatpush.bf16.msra.mxu0 %v4922
    %5375 = vmatpush.bf16.msra.mxu0 %v4918
    %5376 = vmatpush.bf16.msra.mxu0 %v4914
    %5377 = vmatmul.bf16.gmra.mxu0 %v3778
    %v5378 = vpop.f32.mrf.mxu0
    %v5379 = vadd.f32 %v5366, %v5378
    %v5380 = vpop.f32.mrf.mxu0
    %5381 = vdwg.mxu0
    %5382 = vmatpush.bf16.msra.mxu0 %v4974
    %5383 = vmatpush.bf16.msra.mxu0 %v4970
    %5384 = vmatpush.bf16.msra.mxu0 %v4966
    %5385 = vmatpush.bf16.msra.mxu0 %v4962
    %5386 = vmatpush.bf16.msra.mxu0 %v4958
    %5387 = vmatpush.bf16.msra.mxu0 %v4954
    %5388 = vmatpush.bf16.msra.mxu0 %v4950
    %5389 = vmatpush.bf16.msra.mxu0 %v4946
    %5390 = vmatmul.bf16.gmra.mxu0 %v3779
    %v5391 = vpop.f32.mrf.mxu0
    %v5392 = vadd.f32 %v5379, %v5391
    %v5393 = vpop.f32.mrf.mxu0
    %5394 = vdwg.mxu0
    %5395 = vmatpush.bf16.msra.mxu0 %v5006
    %5396 = vmatpush.bf16.msra.mxu0 %v5002
    %5397 = vmatpush.bf16.msra.mxu0 %v4998
    %5398 = vmatpush.bf16.msra.mxu0 %v4994
    %5399 = vmatpush.bf16.msra.mxu0 %v4990
    %5400 = vmatpush.bf16.msra.mxu0 %v4986
    %5401 = vmatpush.bf16.msra.mxu0 %v4982
    %5402 = vmatpush.bf16.msra.mxu0 %v4978
    %5403 = vmatmul.bf16.gmra.mxu0 %v3780
    %v5404 = vpop.f32.mrf.mxu0
    %v5405 = vadd.f32 %v5392, %v5404
    %v5406 = vpop.f32.mrf.mxu0
    %5407 = vdwg.mxu0
    %5408 = vmatpush.bf16.msra.mxu0 %v5038
    %5409 = vmatpush.bf16.msra.mxu0 %v5034
    %5410 = vmatpush.bf16.msra.mxu0 %v5030
    %5411 = vmatpush.bf16.msra.mxu0 %v5026
    %5412 = vmatpush.bf16.msra.mxu0 %v5022
    %5413 = vmatpush.bf16.msra.mxu0 %v5018
    %5414 = vmatpush.bf16.msra.mxu0 %v5014
    %5415 = vmatpush.bf16.msra.mxu0 %v5010
    %5416 = vmatmul.bf16.gmra.mxu0 %v3781
    %v5417 = vpop.f32.mrf.mxu0
    %v5418 = vadd.f32 %v5405, %v5417
    %v5419 = vpop.f32.mrf.mxu0
    %5420 = vdwg.mxu0
    %5421 = vmatpush.bf16.msra.mxu0 %v5070
    %5422 = vmatpush.bf16.msra.mxu0 %v5066
    %5423 = vmatpush.bf16.msra.mxu0 %v5062
    %5424 = vmatpush.bf16.msra.mxu0 %v5058
    %5425 = vmatpush.bf16.msra.mxu0 %v5054
    %5426 = vmatpush.bf16.msra.mxu0 %v5050
    %5427 = vmatpush.bf16.msra.mxu0 %v5046
    %5428 = vmatpush.bf16.msra.mxu0 %v5042
    %5429 = vmatmul.bf16.gmra.mxu0 %v3782
    %v5430 = vpop.f32.mrf.mxu0
    %v5431 = vadd.f32 %v5418, %v5430
    %v5432 = vpop.f32.mrf.mxu0
    %5433 = vdwg.mxu0
    %5434 = vmatpush.bf16.msra.mxu0 %v4847
    %5435 = vmatpush.bf16.msra.mxu0 %v4843
    %5436 = vmatpush.bf16.msra.mxu0 %v4839
    %5437 = vmatpush.bf16.msra.mxu0 %v4835
    %5438 = vmatpush.bf16.msra.mxu0 %v4831
    %5439 = vmatpush.bf16.msra.mxu0 %v4827
    %5440 = vmatpush.bf16.msra.mxu0 %v4823
    %5441 = vmatpush.bf16.msra.mxu0 %v4819
    %5442 = vmatmul.bf16.gmra.mxu0 %v3775
    %v5443 = vpop.f32.mrf.mxu0
    %v5444 = vadd.f32 %v4043, %v5443
    %v5445 = vpop.f32.mrf.mxu0
    %5446 = vdwg.mxu0
    %5447 = vmatpush.bf16.msra.mxu0 %v4879
    %5448 = vmatpush.bf16.msra.mxu0 %v4875
    %5449 = vmatpush.bf16.msra.mxu0 %v4871
    %5450 = vmatpush.bf16.msra.mxu0 %v4867
    %5451 = vmatpush.bf16.msra.mxu0 %v4863
    %5452 = vmatpush.bf16.msra.mxu0 %v4859
    %5453 = vmatpush.bf16.msra.mxu0 %v4855
    %5454 = vmatpush.bf16.msra.mxu0 %v4851
    %5455 = vmatmul.bf16.gmra.mxu0 %v3776
    %v5456 = vpop.f32.mrf.mxu0
    %v5457 = vadd.f32 %v5444, %v5456
    %v5458 = vpop.f32.mrf.mxu0
    %5459 = vdwg.mxu0
    %5460 = vmatpush.bf16.msra.mxu0 %v4911
    %5461 = vmatpush.bf16.msra.mxu0 %v4907
    %5462 = vmatpush.bf16.msra.mxu0 %v4903
    %5463 = vmatpush.bf16.msra.mxu0 %v4899
    %5464 = vmatpush.bf16.msra.mxu0 %v4895
    %5465 = vmatpush.bf16.msra.mxu0 %v4891
    %5466 = vmatpush.bf16.msra.mxu0 %v4887
    %5467 = vmatpush.bf16.msra.mxu0 %v4883
    %5468 = vmatmul.bf16.gmra.mxu0 %v3777
    %v5469 = vpop.f32.mrf.mxu0
    %v5470 = vadd.f32 %v5457, %v5469
    %v5471 = vpop.f32.mrf.mxu0
    %5472 = vdwg.mxu0
    %5473 = vmatpush.bf16.msra.mxu0 %v4943
    %5474 = vmatpush.bf16.msra.mxu0 %v4939
    %5475 = vmatpush.bf16.msra.mxu0 %v4935
    %5476 = vmatpush.bf16.msra.mxu0 %v4931
    %5477 = vmatpush.bf16.msra.mxu0 %v4927
    %5478 = vmatpush.bf16.msra.mxu0 %v4923
    %5479 = vmatpush.bf16.msra.mxu0 %v4919
    %5480 = vmatpush.bf16.msra.mxu0 %v4915
    %5481 = vmatmul.bf16.gmra.mxu0 %v3778
    %v5482 = vpop.f32.mrf.mxu0
    %v5483 = vadd.f32 %v5470, %v5482
    %v5484 = vpop.f32.mrf.mxu0
    %5485 = vdwg.mxu0
    %5486 = vmatpush.bf16.msra.mxu0 %v4975
    %5487 = vmatpush.bf16.msra.mxu0 %v4971
    %5488 = vmatpush.bf16.msra.mxu0 %v4967
    %5489 = vmatpush.bf16.msra.mxu0 %v4963
    %5490 = vmatpush.bf16.msra.mxu0 %v4959
    %5491 = vmatpush.bf16.msra.mxu0 %v4955
    %5492 = vmatpush.bf16.msra.mxu0 %v4951
    %5493 = vmatpush.bf16.msra.mxu0 %v4947
    %5494 = vmatmul.bf16.gmra.mxu0 %v3779
    %v5495 = vpop.f32.mrf.mxu0
    %v5496 = vadd.f32 %v5483, %v5495
    %v5497 = vpop.f32.mrf.mxu0
    %5498 = vdwg.mxu0
    %5499 = vmatpush.bf16.msra.mxu0 %v5007
    %5500 = vmatpush.bf16.msra.mxu0 %v5003
    %5501 = vmatpush.bf16.msra.mxu0 %v4999
    %5502 = vmatpush.bf16.msra.mxu0 %v4995
    %5503 = vmatpush.bf16.msra.mxu0 %v4991
    %5504 = vmatpush.bf16.msra.mxu0 %v4987
    %5505 = vmatpush.bf16.msra.mxu0 %v4983
    %5506 = vmatpush.bf16.msra.mxu0 %v4979
    %5507 = vmatmul.bf16.gmra.mxu0 %v3780
    %v5508 = vpop.f32.mrf.mxu0
    %v5509 = vadd.f32 %v5496, %v5508
    %v5510 = vpop.f32.mrf.mxu0
    %5511 = vdwg.mxu0
    %5512 = vmatpush.bf16.msra.mxu0 %v5039
    %5513 = vmatpush.bf16.msra.mxu0 %v5035
    %5514 = vmatpush.bf16.msra.mxu0 %v5031
    %5515 = vmatpush.bf16.msra.mxu0 %v5027
    %5516 = vmatpush.bf16.msra.mxu0 %v5023
    %5517 = vmatpush.bf16.msra.mxu0 %v5019
    %5518 = vmatpush.bf16.msra.mxu0 %v5015
    %5519 = vmatpush.bf16.msra.mxu0 %v5011
    %5520 = vmatmul.bf16.gmra.mxu0 %v3781
    %v5521 = vpop.f32.mrf.mxu0
    %v5522 = vadd.f32 %v5509, %v5521
    %v5523 = vpop.f32.mrf.mxu0
    %5524 = vdwg.mxu0
    %5525 = vmatpush.bf16.msra.mxu0 %v5071
    %5526 = vmatpush.bf16.msra.mxu0 %v5067
    %5527 = vmatpush.bf16.msra.mxu0 %v5063
    %5528 = vmatpush.bf16.msra.mxu0 %v5059
    %5529 = vmatpush.bf16.msra.mxu0 %v5055
    %5530 = vmatpush.bf16.msra.mxu0 %v5051
    %5531 = vmatpush.bf16.msra.mxu0 %v5047
    %5532 = vmatpush.bf16.msra.mxu0 %v5043
    %5533 = vmatmul.bf16.gmra.mxu0 %v3782
    %v5534 = vpop.f32.mrf.mxu0
    %v5535 = vadd.f32 %v5522, %v5534
    %v5536 = vpop.f32.mrf.mxu0
    %5537 = vdwg.mxu0
    %5538 = vmatpush.bf16.msra.mxu0 %v4848
    %5539 = vmatpush.bf16.msra.mxu0 %v4844
    %5540 = vmatpush.bf16.msra.mxu0 %v4840
    %5541 = vmatpush.bf16.msra.mxu0 %v4836
    %5542 = vmatpush.bf16.msra.mxu0 %v4832
    %5543 = vmatpush.bf16.msra.mxu0 %v4828
    %5544 = vmatpush.bf16.msra.mxu0 %v4824
    %5545 = vmatpush.bf16.msra.mxu0 %v4820
    %5546 = vmatmul.bf16.gmra.mxu0 %v3775
    %v5547 = vpop.f32.mrf.mxu0
    %v5548 = vadd.f32 %v4044, %v5547
    %v5549 = vpop.f32.mrf.mxu0
    %5550 = vdwg.mxu0
    %5551 = vmatpush.bf16.msra.mxu0 %v4880
    %5552 = vmatpush.bf16.msra.mxu0 %v4876
    %5553 = vmatpush.bf16.msra.mxu0 %v4872
    %5554 = vmatpush.bf16.msra.mxu0 %v4868
    %5555 = vmatpush.bf16.msra.mxu0 %v4864
    %5556 = vmatpush.bf16.msra.mxu0 %v4860
    %5557 = vmatpush.bf16.msra.mxu0 %v4856
    %5558 = vmatpush.bf16.msra.mxu0 %v4852
    %5559 = vmatmul.bf16.gmra.mxu0 %v3776
    %v5560 = vpop.f32.mrf.mxu0
    %v5561 = vadd.f32 %v5548, %v5560
    %v5562 = vpop.f32.mrf.mxu0
    %5563 = vdwg.mxu0
    %5564 = vmatpush.bf16.msra.mxu0 %v4912
    %5565 = vmatpush.bf16.msra.mxu0 %v4908
    %5566 = vmatpush.bf16.msra.mxu0 %v4904
    %5567 = vmatpush.bf16.msra.mxu0 %v4900
    %5568 = vmatpush.bf16.msra.mxu0 %v4896
    %5569 = vmatpush.bf16.msra.mxu0 %v4892
    %5570 = vmatpush.bf16.msra.mxu0 %v4888
    %5571 = vmatpush.bf16.msra.mxu0 %v4884
    %5572 = vmatmul.bf16.gmra.mxu0 %v3777
    %v5573 = vpop.f32.mrf.mxu0
    %v5574 = vadd.f32 %v5561, %v5573
    %v5575 = vpop.f32.mrf.mxu0
    %5576 = vdwg.mxu0
    %5577 = vmatpush.bf16.msra.mxu0 %v4944
    %5578 = vmatpush.bf16.msra.mxu0 %v4940
    %5579 = vmatpush.bf16.msra.mxu0 %v4936
    %5580 = vmatpush.bf16.msra.mxu0 %v4932
    %5581 = vmatpush.bf16.msra.mxu0 %v4928
    %5582 = vmatpush.bf16.msra.mxu0 %v4924
    %5583 = vmatpush.bf16.msra.mxu0 %v4920
    %5584 = vmatpush.bf16.msra.mxu0 %v4916
    %5585 = vmatmul.bf16.gmra.mxu0 %v3778
    %v5586 = vpop.f32.mrf.mxu0
    %v5587 = vadd.f32 %v5574, %v5586
    %v5588 = vpop.f32.mrf.mxu0
    %5589 = vdwg.mxu0
    %5590 = vmatpush.bf16.msra.mxu0 %v4976
    %5591 = vmatpush.bf16.msra.mxu0 %v4972
    %5592 = vmatpush.bf16.msra.mxu0 %v4968
    %5593 = vmatpush.bf16.msra.mxu0 %v4964
    %5594 = vmatpush.bf16.msra.mxu0 %v4960
    %5595 = vmatpush.bf16.msra.mxu0 %v4956
    %5596 = vmatpush.bf16.msra.mxu0 %v4952
    %5597 = vmatpush.bf16.msra.mxu0 %v4948
    %5598 = vmatmul.bf16.gmra.mxu0 %v3779
    %v5599 = vpop.f32.mrf.mxu0
    %v5600 = vadd.f32 %v5587, %v5599
    %v5601 = vpop.f32.mrf.mxu0
    %5602 = vdwg.mxu0
    %5603 = vmatpush.bf16.msra.mxu0 %v5008
    %5604 = vmatpush.bf16.msra.mxu0 %v5004
    %5605 = vmatpush.bf16.msra.mxu0 %v5000
    %5606 = vmatpush.bf16.msra.mxu0 %v4996
    %5607 = vmatpush.bf16.msra.mxu0 %v4992
    %5608 = vmatpush.bf16.msra.mxu0 %v4988
    %5609 = vmatpush.bf16.msra.mxu0 %v4984
    %5610 = vmatpush.bf16.msra.mxu0 %v4980
    %5611 = vmatmul.bf16.gmra.mxu0 %v3780
    %v5612 = vpop.f32.mrf.mxu0
    %v5613 = vadd.f32 %v5600, %v5612
    %v5614 = vpop.f32.mrf.mxu0
    %5615 = vdwg.mxu0
    %5616 = vmatpush.bf16.msra.mxu0 %v5040
    %5617 = vmatpush.bf16.msra.mxu0 %v5036
    %5618 = vmatpush.bf16.msra.mxu0 %v5032
    %5619 = vmatpush.bf16.msra.mxu0 %v5028
    %5620 = vmatpush.bf16.msra.mxu0 %v5024
    %5621 = vmatpush.bf16.msra.mxu0 %v5020
    %5622 = vmatpush.bf16.msra.mxu0 %v5016
    %5623 = vmatpush.bf16.msra.mxu0 %v5012
    %5624 = vmatmul.bf16.gmra.mxu0 %v3781
    %v5625 = vpop.f32.mrf.mxu0
    %v5626 = vadd.f32 %v5613, %v5625
    %v5627 = vpop.f32.mrf.mxu0
    %5628 = vdwg.mxu0
    %5629 = vmatpush.bf16.msra.mxu0 %v5072
    %5630 = vmatpush.bf16.msra.mxu0 %v5068
    %5631 = vmatpush.bf16.msra.mxu0 %v5064
    %5632 = vmatpush.bf16.msra.mxu0 %v5060
    %5633 = vmatpush.bf16.msra.mxu0 %v5056
    %5634 = vmatpush.bf16.msra.mxu0 %v5052
    %5635 = vmatpush.bf16.msra.mxu0 %v5048
    %5636 = vmatpush.bf16.msra.mxu0 %v5044
    %5637 = vmatmul.bf16.gmra.mxu0 %v3782
    %v5638 = vpop.f32.mrf.mxu0
    %v5639 = vadd.f32 %v5626, %v5638
    %v5640 = vpop.f32.mrf.mxu0
    %5641 = vdwg.mxu0
    %5642 = vmatpush.bf16.msra.mxu0 %v4849
    %5643 = vmatpush.bf16.msra.mxu0 %v4845
    %5644 = vmatpush.bf16.msra.mxu0 %v4841
    %5645 = vmatpush.bf16.msra.mxu0 %v4837
    %5646 = vmatpush.bf16.msra.mxu0 %v4833
    %5647 = vmatpush.bf16.msra.mxu0 %v4829
    %5648 = vmatpush.bf16.msra.mxu0 %v4825
    %5649 = vmatpush.bf16.msra.mxu0 %v4821
    %5650 = vmatmul.bf16.gmra.mxu0 %v3775
    %v5651 = vpop.f32.mrf.mxu0
    %v5652 = vadd.f32 %v4045, %v5651
    %v5653 = vpop.f32.mrf.mxu0
    %5654 = vdwg.mxu0
    %5655 = vmatpush.bf16.msra.mxu0 %v4881
    %5656 = vmatpush.bf16.msra.mxu0 %v4877
    %5657 = vmatpush.bf16.msra.mxu0 %v4873
    %5658 = vmatpush.bf16.msra.mxu0 %v4869
    %5659 = vmatpush.bf16.msra.mxu0 %v4865
    %5660 = vmatpush.bf16.msra.mxu0 %v4861
    %5661 = vmatpush.bf16.msra.mxu0 %v4857
    %5662 = vmatpush.bf16.msra.mxu0 %v4853
    %5663 = vmatmul.bf16.gmra.mxu0 %v3776
    %v5664 = vpop.f32.mrf.mxu0
    %v5665 = vadd.f32 %v5652, %v5664
    %v5666 = vpop.f32.mrf.mxu0
    %5667 = vdwg.mxu0
    %5668 = vmatpush.bf16.msra.mxu0 %v4913
    %5669 = vmatpush.bf16.msra.mxu0 %v4909
    %5670 = vmatpush.bf16.msra.mxu0 %v4905
    %5671 = vmatpush.bf16.msra.mxu0 %v4901
    %5672 = vmatpush.bf16.msra.mxu0 %v4897
    %5673 = vmatpush.bf16.msra.mxu0 %v4893
    %5674 = vmatpush.bf16.msra.mxu0 %v4889
    %5675 = vmatpush.bf16.msra.mxu0 %v4885
    %5676 = vmatmul.bf16.gmra.mxu0 %v3777
    %v5677 = vpop.f32.mrf.mxu0
    %v5678 = vadd.f32 %v5665, %v5677
    %v5679 = vpop.f32.mrf.mxu0
    %5680 = vdwg.mxu0
    %5681 = vmatpush.bf16.msra.mxu0 %v4945
    %5682 = vmatpush.bf16.msra.mxu0 %v4941
    %5683 = vmatpush.bf16.msra.mxu0 %v4937
    %5684 = vmatpush.bf16.msra.mxu0 %v4933
    %5685 = vmatpush.bf16.msra.mxu0 %v4929
    %5686 = vmatpush.bf16.msra.mxu0 %v4925
    %5687 = vmatpush.bf16.msra.mxu0 %v4921
    %5688 = vmatpush.bf16.msra.mxu0 %v4917
    %5689 = vmatmul.bf16.gmra.mxu0 %v3778
    %v5690 = vpop.f32.mrf.mxu0
    %v5691 = vadd.f32 %v5678, %v5690
    %v5692 = vpop.f32.mrf.mxu0
    %5693 = vdwg.mxu0
    %5694 = vmatpush.bf16.msra.mxu0 %v4977
    %5695 = vmatpush.bf16.msra.mxu0 %v4973
    %5696 = vmatpush.bf16.msra.mxu0 %v4969
    %5697 = vmatpush.bf16.msra.mxu0 %v4965
    %5698 = vmatpush.bf16.msra.mxu0 %v4961
    %5699 = vmatpush.bf16.msra.mxu0 %v4957
    %5700 = vmatpush.bf16.msra.mxu0 %v4953
    %5701 = vmatpush.bf16.msra.mxu0 %v4949
    %5702 = vmatmul.bf16.gmra.mxu0 %v3779
    %v5703 = vpop.f32.mrf.mxu0
    %v5704 = vadd.f32 %v5691, %v5703
    %v5705 = vpop.f32.mrf.mxu0
    %5706 = vdwg.mxu0
    %5707 = vmatpush.bf16.msra.mxu0 %v5009
    %5708 = vmatpush.bf16.msra.mxu0 %v5005
    %5709 = vmatpush.bf16.msra.mxu0 %v5001
    %5710 = vmatpush.bf16.msra.mxu0 %v4997
    %5711 = vmatpush.bf16.msra.mxu0 %v4993
    %5712 = vmatpush.bf16.msra.mxu0 %v4989
    %5713 = vmatpush.bf16.msra.mxu0 %v4985
    %5714 = vmatpush.bf16.msra.mxu0 %v4981
    %5715 = vmatmul.bf16.gmra.mxu0 %v3780
    %v5716 = vpop.f32.mrf.mxu0
    %v5717 = vadd.f32 %v5704, %v5716
    %v5718 = vpop.f32.mrf.mxu0
    %5719 = vdwg.mxu0
    %5720 = vmatpush.bf16.msra.mxu0 %v5041
    %5721 = vmatpush.bf16.msra.mxu0 %v5037
    %5722 = vmatpush.bf16.msra.mxu0 %v5033
    %5723 = vmatpush.bf16.msra.mxu0 %v5029
    %5724 = vmatpush.bf16.msra.mxu0 %v5025
    %5725 = vmatpush.bf16.msra.mxu0 %v5021
    %5726 = vmatpush.bf16.msra.mxu0 %v5017
    %5727 = vmatpush.bf16.msra.mxu0 %v5013
    %5728 = vmatmul.bf16.gmra.mxu0 %v3781
    %v5729 = vpop.f32.mrf.mxu0
    %v5730 = vadd.f32 %v5717, %v5729
    %v5731 = vpop.f32.mrf.mxu0
    %5732 = vdwg.mxu0
    %5733 = vmatpush.bf16.msra.mxu0 %v5073
    %5734 = vmatpush.bf16.msra.mxu0 %v5069
    %5735 = vmatpush.bf16.msra.mxu0 %v5065
    %5736 = vmatpush.bf16.msra.mxu0 %v5061
    %5737 = vmatpush.bf16.msra.mxu0 %v5057
    %5738 = vmatpush.bf16.msra.mxu0 %v5053
    %5739 = vmatpush.bf16.msra.mxu0 %v5049
    %5740 = vmatpush.bf16.msra.mxu0 %v5045
    %5741 = vmatmul.bf16.gmra.mxu0 %v3782
    %v5742 = vpop.f32.mrf.mxu0
    %v5743 = vadd.f32 %v5730, %v5742
    %v5744 = vpop.f32.mrf.mxu0
    %5745 = vdwg.mxu0
    %v5746 = vxor.u32 %v5431, 2147483648
    %v5747 = vxor.u32 %v5535, 2147483648
    %v5748 = vxor.u32 %v5639, 2147483648
    %v5749 = vxor.u32 %v5743, 2147483648
    %v5750 = vmul.f32 %v5746, 1.442695
    %v5751 = vpow.pop %v5750
    %v5752 = vmul.f32 %v5747, 1.442695
    %v5753 = vpow.pop %v5752
    %v5754 = vmul.f32 %v5748, 1.442695
    %v5755 = vpow.pop %v5754
    %v5756 = vmul.f32 %v5749, 1.442695
    %v5757 = vpow.pop %v5756
    %v5758 = vadd.f32 %v5751, 1.0
    %v5759 = vadd.f32 %v5753, 1.0
    %v5760 = vadd.f32 %v5755, 1.0
    %v5761 = vadd.f32 %v5757, 1.0
    %v5762 = vrcp.pop %v5758
    %v5763 = vmul.f32 %v5758, %v5762
    %v5764 = vsub.f32 1.0, %v5763
    %v5765 = vmul.f32 %v5762, %v5764
    %v5766 = vadd.f32 %v5762, %v5765
    %vm5767 = vweird.f32 %v5758
    %vm5768 = vweird.f32 %v5762
    %vm5769 = vmor %vm5767, %vm5768
    %v5770 = vsel %vm5769, %v5762, %v5766
    %v5771 = vand.u32 2147483647, %v5758
    %vm5772 = vcmp.eq.f32.partialorder %v5771, 8.507059e+37
    %v5773 = vand.u32 %v5758, 2147483648
    %v5774 = vor.u32 1.1754944e-38, %v5773
    %v5775 = vsel %vm5772, %v5774, %v5770
    %v5776 = vmul.f32 1.0, %v5775
    %v5777 = vrcp.pop %v5759
    %v5778 = vmul.f32 %v5759, %v5777
    %v5779 = vsub.f32 1.0, %v5778
    %v5780 = vmul.f32 %v5777, %v5779
    %v5781 = vadd.f32 %v5777, %v5780
    %vm5782 = vweird.f32 %v5759
    %vm5783 = vweird.f32 %v5777
    %vm5784 = vmor %vm5782, %vm5783
    %v5785 = vsel %vm5784, %v5777, %v5781
    %v5786 = vand.u32 2147483647, %v5759
    %vm5787 = vcmp.eq.f32.partialorder %v5786, 8.507059e+37
    %v5788 = vand.u32 %v5759, 2147483648
    %v5789 = vor.u32 1.1754944e-38, %v5788
    %v5790 = vsel %vm5787, %v5789, %v5785
    %v5791 = vmul.f32 1.0, %v5790
    %v5792 = vrcp.pop %v5760
    %v5793 = vmul.f32 %v5760, %v5792
    %v5794 = vsub.f32 1.0, %v5793
    %v5795 = vmul.f32 %v5792, %v5794
    %v5796 = vadd.f32 %v5792, %v5795
    %vm5797 = vweird.f32 %v5760
    %vm5798 = vweird.f32 %v5792
    %vm5799 = vmor %vm5797, %vm5798
    %v5800 = vsel %vm5799, %v5792, %v5796
    %v5801 = vand.u32 2147483647, %v5760
    %vm5802 = vcmp.eq.f32.partialorder %v5801, 8.507059e+37
    %v5803 = vand.u32 %v5760, 2147483648
    %v5804 = vor.u32 1.1754944e-38, %v5803
    %v5805 = vsel %vm5802, %v5804, %v5800
    %v5806 = vmul.f32 1.0, %v5805
    %v5807 = vrcp.pop %v5761
    %v5808 = vmul.f32 %v5761, %v5807
    %v5809 = vsub.f32 1.0, %v5808
    %v5810 = vmul.f32 %v5807, %v5809
    %v5811 = vadd.f32 %v5807, %v5810
    %vm5812 = vweird.f32 %v5761
    %vm5813 = vweird.f32 %v5807
    %vm5814 = vmor %vm5812, %vm5813
    %v5815 = vsel %vm5814, %v5807, %v5811
    %v5816 = vand.u32 2147483647, %v5761
    %vm5817 = vcmp.eq.f32.partialorder %v5816, 8.507059e+37
    %v5818 = vand.u32 %v5761, 2147483648
    %v5819 = vor.u32 1.1754944e-38, %v5818
    %v5820 = vsel %vm5817, %v5819, %v5815
    %v5821 = vmul.f32 1.0, %v5820
    %v5822 = vpack.c.bf16 %v5776, %v5776
    %v5823 = vpack.c.bf16 %v5791, %v5791
    %v5824 = vpack.c.bf16 %v5806, %v5806
    %v5825 = vpack.c.bf16 %v5821, %v5821
    %v5826 = vld [vmem:[#allocation6] sm:$0xff]
    %v5827 = vld [vmem:[#allocation6 + $0x8] sm:$0xff]
    %v5828 = vld [vmem:[#allocation6 + $0x10] sm:$0xff]
    %v5829 = vld [vmem:[#allocation6 + $0x18] sm:$0xff]
    %v5830 = vld [vmem:[#allocation6 + $0x20] sm:$0xff]
    %v5831 = vld [vmem:[#allocation6 + $0x28] sm:$0xff]
    %v5832 = vld [vmem:[#allocation6 + $0x30] sm:$0xff]
    %v5833 = vld [vmem:[#allocation6 + $0x38] sm:$0xff]
    %v5834 = vld [vmem:[#allocation6 + $0x40] sm:$0xff]
    %v5835 = vld [vmem:[#allocation6 + $0x48] sm:$0xff]
    %v5836 = vld [vmem:[#allocation6 + $0x50] sm:$0xff]
    %v5837 = vld [vmem:[#allocation6 + $0x58] sm:$0xff]
    %v5838 = vld [vmem:[#allocation6 + $0x60] sm:$0xff]
    %v5839 = vld [vmem:[#allocation6 + $0x68] sm:$0xff]
    %v5840 = vld [vmem:[#allocation6 + $0x70] sm:$0xff]
    %v5841 = vld [vmem:[#allocation6 + $0x78] sm:$0xff]
    %v5842 = vld [vmem:[#allocation6 + $0x80] sm:$0xff]
    %v5843 = vld [vmem:[#allocation6 + $0x88] sm:$0xff]
    %v5844 = vld [vmem:[#allocation6 + $0x90] sm:$0xff]
    %v5845 = vld [vmem:[#allocation6 + $0x98] sm:$0xff]
    %v5846 = vld [vmem:[#allocation6 + $0xa0] sm:$0xff]
    %v5847 = vld [vmem:[#allocation6 + $0xa8] sm:$0xff]
    %v5848 = vld [vmem:[#allocation6 + $0xb0] sm:$0xff]
    %v5849 = vld [vmem:[#allocation6 + $0xb8] sm:$0xff]
    %v5850 = vld [vmem:[#allocation6 + $0xc0] sm:$0xff]
    %v5851 = vld [vmem:[#allocation6 + $0xc8] sm:$0xff]
    %v5852 = vld [vmem:[#allocation6 + $0xd0] sm:$0xff]
    %v5853 = vld [vmem:[#allocation6 + $0xd8] sm:$0xff]
    %v5854 = vld [vmem:[#allocation6 + $0xe0] sm:$0xff]
    %v5855 = vld [vmem:[#allocation6 + $0xe8] sm:$0xff]
    %v5856 = vld [vmem:[#allocation6 + $0xf0] sm:$0xff]
    %v5857 = vld [vmem:[#allocation6 + $0xf8] sm:$0xff]
    %v5858 = vld [vmem:[#allocation6 + $0x100] sm:$0xff]
    %v5859 = vld [vmem:[#allocation6 + $0x108] sm:$0xff]
    %v5860 = vld [vmem:[#allocation6 + $0x110] sm:$0xff]
    %v5861 = vld [vmem:[#allocation6 + $0x118] sm:$0xff]
    %v5862 = vld [vmem:[#allocation6 + $0x120] sm:$0xff]
    %v5863 = vld [vmem:[#allocation6 + $0x128] sm:$0xff]
    %v5864 = vld [vmem:[#allocation6 + $0x130] sm:$0xff]
    %v5865 = vld [vmem:[#allocation6 + $0x138] sm:$0xff]
    %v5866 = vld [vmem:[#allocation6 + $0x140] sm:$0xff]
    %v5867 = vld [vmem:[#allocation6 + $0x148] sm:$0xff]
    %v5868 = vld [vmem:[#allocation6 + $0x150] sm:$0xff]
    %v5869 = vld [vmem:[#allocation6 + $0x158] sm:$0xff]
    %v5870 = vld [vmem:[#allocation6 + $0x160] sm:$0xff]
    %v5871 = vld [vmem:[#allocation6 + $0x168] sm:$0xff]
    %v5872 = vld [vmem:[#allocation6 + $0x170] sm:$0xff]
    %v5873 = vld [vmem:[#allocation6 + $0x178] sm:$0xff]
    %v5874 = vld [vmem:[#allocation6 + $0x180] sm:$0xff]
    %v5875 = vld [vmem:[#allocation6 + $0x188] sm:$0xff]
    %v5876 = vld [vmem:[#allocation6 + $0x190] sm:$0xff]
    %v5877 = vld [vmem:[#allocation6 + $0x198] sm:$0xff]
    %v5878 = vld [vmem:[#allocation6 + $0x1a0] sm:$0xff]
    %v5879 = vld [vmem:[#allocation6 + $0x1a8] sm:$0xff]
    %v5880 = vld [vmem:[#allocation6 + $0x1b0] sm:$0xff]
    %v5881 = vld [vmem:[#allocation6 + $0x1b8] sm:$0xff]
    %v5882 = vld [vmem:[#allocation6 + $0x1c0] sm:$0xff]
    %v5883 = vld [vmem:[#allocation6 + $0x1c8] sm:$0xff]
    %v5884 = vld [vmem:[#allocation6 + $0x1d0] sm:$0xff]
    %v5885 = vld [vmem:[#allocation6 + $0x1d8] sm:$0xff]
    %v5886 = vld [vmem:[#allocation6 + $0x1e0] sm:$0xff]
    %v5887 = vld [vmem:[#allocation6 + $0x1e8] sm:$0xff]
    %v5888 = vld [vmem:[#allocation6 + $0x1f0] sm:$0xff]
    %v5889 = vld [vmem:[#allocation6 + $0x1f8] sm:$0xff]
    %s5890 = scalar_lea.vmem [#allocation15], 2
    %v5891 = vld [vmem:[%s5890] ss:$8 sm:$0x3]
    %v5893 = vperm.slane %v5891, 0
    %v5894 = vperm.slane %v5891, 1
    %v5961 = vunpack.c.l.b16 %v5826
    %v5962 = vunpack.c.h.b16 %v5826
    %v5963 = vunpack.c.l.b16 %v5827
    %v5964 = vunpack.c.h.b16 %v5827
    %v5965 = vunpack.c.l.b16 %v5828
    %v5966 = vunpack.c.h.b16 %v5828
    %v5967 = vunpack.c.l.b16 %v5829
    %v5968 = vunpack.c.h.b16 %v5829
    %v5969 = vunpack.c.l.b16 %v5830
    %v5970 = vunpack.c.h.b16 %v5830
    %v5971 = vunpack.c.l.b16 %v5831
    %v5972 = vunpack.c.h.b16 %v5831
    %v5973 = vunpack.c.l.b16 %v5832
    %v5974 = vunpack.c.h.b16 %v5832
    %v5975 = vunpack.c.l.b16 %v5833
    %v5976 = vunpack.c.h.b16 %v5833
    %v5977 = vunpack.c.l.b16 %v5834
    %v5978 = vunpack.c.h.b16 %v5834
    %v5979 = vunpack.c.l.b16 %v5835
    %v5980 = vunpack.c.h.b16 %v5835
    %v5981 = vunpack.c.l.b16 %v5836
    %v5982 = vunpack.c.h.b16 %v5836
    %v5983 = vunpack.c.l.b16 %v5837
    %v5984 = vunpack.c.h.b16 %v5837
    %v5985 = vunpack.c.l.b16 %v5838
    %v5986 = vunpack.c.h.b16 %v5838
    %v5987 = vunpack.c.l.b16 %v5839
    %v5988 = vunpack.c.h.b16 %v5839
    %v5989 = vunpack.c.l.b16 %v5840
    %v5990 = vunpack.c.h.b16 %v5840
    %v5991 = vunpack.c.l.b16 %v5841
    %v5992 = vunpack.c.h.b16 %v5841
    %v5993 = vunpack.c.l.b16 %v5842
    %v5994 = vunpack.c.h.b16 %v5842
    %v5995 = vunpack.c.l.b16 %v5843
    %v5996 = vunpack.c.h.b16 %v5843
    %v5997 = vunpack.c.l.b16 %v5844
    %v5998 = vunpack.c.h.b16 %v5844
    %v5999 = vunpack.c.l.b16 %v5845
    %v6000 = vunpack.c.h.b16 %v5845
    %v6001 = vunpack.c.l.b16 %v5846
    %v6002 = vunpack.c.h.b16 %v5846
    %v6003 = vunpack.c.l.b16 %v5847
    %v6004 = vunpack.c.h.b16 %v5847
    %v6005 = vunpack.c.l.b16 %v5848
    %v6006 = vunpack.c.h.b16 %v5848
    %v6007 = vunpack.c.l.b16 %v5849
    %v6008 = vunpack.c.h.b16 %v5849
    %v6009 = vunpack.c.l.b16 %v5850
    %v6010 = vunpack.c.h.b16 %v5850
    %v6011 = vunpack.c.l.b16 %v5851
    %v6012 = vunpack.c.h.b16 %v5851
    %v6013 = vunpack.c.l.b16 %v5852
    %v6014 = vunpack.c.h.b16 %v5852
    %v6015 = vunpack.c.l.b16 %v5853
    %v6016 = vunpack.c.h.b16 %v5853
    %v6017 = vunpack.c.l.b16 %v5854
    %v6018 = vunpack.c.h.b16 %v5854
    %v6019 = vunpack.c.l.b16 %v5855
    %v6020 = vunpack.c.h.b16 %v5855
    %v6021 = vunpack.c.l.b16 %v5856
    %v6022 = vunpack.c.h.b16 %v5856
    %v6023 = vunpack.c.l.b16 %v5857
    %v6024 = vunpack.c.h.b16 %v5857
    %v6025 = vunpack.c.l.b16 %v5858
    %v6026 = vunpack.c.h.b16 %v5858
    %v6027 = vunpack.c.l.b16 %v5859
    %v6028 = vunpack.c.h.b16 %v5859
    %v6029 = vunpack.c.l.b16 %v5860
    %v6030 = vunpack.c.h.b16 %v5860
    %v6031 = vunpack.c.l.b16 %v5861
    %v6032 = vunpack.c.h.b16 %v5861
    %v6033 = vunpack.c.l.b16 %v5862
    %v6034 = vunpack.c.h.b16 %v5862
    %v6035 = vunpack.c.l.b16 %v5863
    %v6036 = vunpack.c.h.b16 %v5863
    %v6037 = vunpack.c.l.b16 %v5864
    %v6038 = vunpack.c.h.b16 %v5864
    %v6039 = vunpack.c.l.b16 %v5865
    %v6040 = vunpack.c.h.b16 %v5865
    %v6041 = vunpack.c.l.b16 %v5866
    %v6042 = vunpack.c.h.b16 %v5866
    %v6043 = vunpack.c.l.b16 %v5867
    %v6044 = vunpack.c.h.b16 %v5867
    %v6045 = vunpack.c.l.b16 %v5868
    %v6046 = vunpack.c.h.b16 %v5868
    %v6047 = vunpack.c.l.b16 %v5869
    %v6048 = vunpack.c.h.b16 %v5869
    %v6049 = vunpack.c.l.b16 %v5870
    %v6050 = vunpack.c.h.b16 %v5870
    %v6051 = vunpack.c.l.b16 %v5871
    %v6052 = vunpack.c.h.b16 %v5871
    %v6053 = vunpack.c.l.b16 %v5872
    %v6054 = vunpack.c.h.b16 %v5872
    %v6055 = vunpack.c.l.b16 %v5873
    %v6056 = vunpack.c.h.b16 %v5873
    %v6057 = vunpack.c.l.b16 %v5874
    %v6058 = vunpack.c.h.b16 %v5874
    %v6059 = vunpack.c.l.b16 %v5875
    %v6060 = vunpack.c.h.b16 %v5875
    %v6061 = vunpack.c.l.b16 %v5876
    %v6062 = vunpack.c.h.b16 %v5876
    %v6063 = vunpack.c.l.b16 %v5877
    %v6064 = vunpack.c.h.b16 %v5877
    %v6065 = vunpack.c.l.b16 %v5878
    %v6066 = vunpack.c.h.b16 %v5878
    %v6067 = vunpack.c.l.b16 %v5879
    %v6068 = vunpack.c.h.b16 %v5879
    %v6069 = vunpack.c.l.b16 %v5880
    %v6070 = vunpack.c.h.b16 %v5880
    %v6071 = vunpack.c.l.b16 %v5881
    %v6072 = vunpack.c.h.b16 %v5881
    %v6073 = vunpack.c.l.b16 %v5882
    %v6074 = vunpack.c.h.b16 %v5882
    %v6075 = vunpack.c.l.b16 %v5883
    %v6076 = vunpack.c.h.b16 %v5883
    %v6077 = vunpack.c.l.b16 %v5884
    %v6078 = vunpack.c.h.b16 %v5884
    %v6079 = vunpack.c.l.b16 %v5885
    %v6080 = vunpack.c.h.b16 %v5885
    %v6081 = vunpack.c.l.b16 %v5886
    %v6082 = vunpack.c.h.b16 %v5886
    %v6083 = vunpack.c.l.b16 %v5887
    %v6084 = vunpack.c.h.b16 %v5887
    %v6085 = vunpack.c.l.b16 %v5888
    %v6086 = vunpack.c.h.b16 %v5888
    %v6087 = vunpack.c.l.b16 %v5889
    %v6088 = vunpack.c.h.b16 %v5889
    %v6089 = vpack.c.b16 %v5963, %v5961
    %v6090 = vpack.c.b16 %v5964, %v5962
    %v6091 = vpack.c.b16 %v5967, %v5965
    %v6092 = vpack.c.b16 %v5968, %v5966
    %v6093 = vpack.c.b16 %v5971, %v5969
    %v6094 = vpack.c.b16 %v5972, %v5970
    %v6095 = vpack.c.b16 %v5975, %v5973
    %v6096 = vpack.c.b16 %v5976, %v5974
    %v6097 = vpack.c.b16 %v5979, %v5977
    %v6098 = vpack.c.b16 %v5980, %v5978
    %v6099 = vpack.c.b16 %v5983, %v5981
    %v6100 = vpack.c.b16 %v5984, %v5982
    %v6101 = vpack.c.b16 %v5987, %v5985
    %v6102 = vpack.c.b16 %v5988, %v5986
    %v6103 = vpack.c.b16 %v5991, %v5989
    %v6104 = vpack.c.b16 %v5992, %v5990
    %v6105 = vpack.c.b16 %v5995, %v5993
    %v6106 = vpack.c.b16 %v5996, %v5994
    %v6107 = vpack.c.b16 %v5999, %v5997
    %v6108 = vpack.c.b16 %v6000, %v5998
    %v6109 = vpack.c.b16 %v6003, %v6001
    %v6110 = vpack.c.b16 %v6004, %v6002
    %v6111 = vpack.c.b16 %v6007, %v6005
    %v6112 = vpack.c.b16 %v6008, %v6006
    %v6113 = vpack.c.b16 %v6011, %v6009
    %v6114 = vpack.c.b16 %v6012, %v6010
    %v6115 = vpack.c.b16 %v6015, %v6013
    %v6116 = vpack.c.b16 %v6016, %v6014
    %v6117 = vpack.c.b16 %v6019, %v6017
    %v6118 = vpack.c.b16 %v6020, %v6018
    %v6119 = vpack.c.b16 %v6023, %v6021
    %v6120 = vpack.c.b16 %v6024, %v6022
    %v6121 = vpack.c.b16 %v6027, %v6025
    %v6122 = vpack.c.b16 %v6028, %v6026
    %v6123 = vpack.c.b16 %v6031, %v6029
    %v6124 = vpack.c.b16 %v6032, %v6030
    %v6125 = vpack.c.b16 %v6035, %v6033
    %v6126 = vpack.c.b16 %v6036, %v6034
    %v6127 = vpack.c.b16 %v6039, %v6037
    %v6128 = vpack.c.b16 %v6040, %v6038
    %v6129 = vpack.c.b16 %v6043, %v6041
    %v6130 = vpack.c.b16 %v6044, %v6042
    %v6131 = vpack.c.b16 %v6047, %v6045
    %v6132 = vpack.c.b16 %v6048, %v6046
    %v6133 = vpack.c.b16 %v6051, %v6049
    %v6134 = vpack.c.b16 %v6052, %v6050
    %v6135 = vpack.c.b16 %v6055, %v6053
    %v6136 = vpack.c.b16 %v6056, %v6054
    %v6137 = vpack.c.b16 %v6059, %v6057
    %v6138 = vpack.c.b16 %v6060, %v6058
    %v6139 = vpack.c.b16 %v6063, %v6061
    %v6140 = vpack.c.b16 %v6064, %v6062
    %v6141 = vpack.c.b16 %v6067, %v6065
    %v6142 = vpack.c.b16 %v6068, %v6066
    %v6143 = vpack.c.b16 %v6071, %v6069
    %v6144 = vpack.c.b16 %v6072, %v6070
    %v6145 = vpack.c.b16 %v6075, %v6073
    %v6146 = vpack.c.b16 %v6076, %v6074
    %v6147 = vpack.c.b16 %v6079, %v6077
    %v6148 = vpack.c.b16 %v6080, %v6078
    %v6149 = vpack.c.b16 %v6083, %v6081
    %v6150 = vpack.c.b16 %v6084, %v6082
    %v6151 = vpack.c.b16 %v6087, %v6085
    %v6152 = vpack.c.b16 %v6088, %v6086
    %6217 = vmatpush.bf16.msra.mxu0 %v6103
    %6218 = vmatpush.bf16.msra.mxu0 %v6101
    %6219 = vmatpush.bf16.msra.mxu0 %v6099
    %6220 = vmatpush.bf16.msra.mxu0 %v6097
    %6221 = vmatpush.bf16.msra.mxu0 %v6095
    %6222 = vmatpush.bf16.msra.mxu0 %v6093
    %6223 = vmatpush.bf16.msra.mxu0 %v6091
    %6224 = vmatpush.bf16.msra.mxu0 %v6089
    %6225 = vmatmul.bf16.gmra.mxu0 %v5822
    %v6226 = vpop.f32.mrf.mxu0
    %v6227 = vadd.f32 %v5893, %v6226
    %v6228 = vpop.f32.mrf.mxu0
    %6229 = vdwg.mxu0
    %6230 = vmatpush.bf16.msra.mxu0 %v6119
    %6231 = vmatpush.bf16.msra.mxu0 %v6117
    %6232 = vmatpush.bf16.msra.mxu0 %v6115
    %6233 = vmatpush.bf16.msra.mxu0 %v6113
    %6234 = vmatpush.bf16.msra.mxu0 %v6111
    %6235 = vmatpush.bf16.msra.mxu0 %v6109
    %6236 = vmatpush.bf16.msra.mxu0 %v6107
    %6237 = vmatpush.bf16.msra.mxu0 %v6105
    %6238 = vmatmul.bf16.gmra.mxu0 %v5823
    %v6239 = vpop.f32.mrf.mxu0
    %v6240 = vadd.f32 %v6227, %v6239
    %v6241 = vpop.f32.mrf.mxu0
    %6242 = vdwg.mxu0
    %6243 = vmatpush.bf16.msra.mxu0 %v6135
    %6244 = vmatpush.bf16.msra.mxu0 %v6133
    %6245 = vmatpush.bf16.msra.mxu0 %v6131
    %6246 = vmatpush.bf16.msra.mxu0 %v6129
    %6247 = vmatpush.bf16.msra.mxu0 %v6127
    %6248 = vmatpush.bf16.msra.mxu0 %v6125
    %6249 = vmatpush.bf16.msra.mxu0 %v6123
    %6250 = vmatpush.bf16.msra.mxu0 %v6121
    %6251 = vmatmul.bf16.gmra.mxu0 %v5824
    %v6252 = vpop.f32.mrf.mxu0
    %v6253 = vadd.f32 %v6240, %v6252
    %v6254 = vpop.f32.mrf.mxu0
    %6255 = vdwg.mxu0
    %6256 = vmatpush.bf16.msra.mxu0 %v6151
    %6257 = vmatpush.bf16.msra.mxu0 %v6149
    %6258 = vmatpush.bf16.msra.mxu0 %v6147
    %6259 = vmatpush.bf16.msra.mxu0 %v6145
    %6260 = vmatpush.bf16.msra.mxu0 %v6143
    %6261 = vmatpush.bf16.msra.mxu0 %v6141
    %6262 = vmatpush.bf16.msra.mxu0 %v6139
    %6263 = vmatpush.bf16.msra.mxu0 %v6137
    %6264 = vmatmul.bf16.gmra.mxu0 %v5825
    %v6265 = vpop.f32.mrf.mxu0
    %v6266 = vadd.f32 %v6253, %v6265
    %v6267 = vpop.f32.mrf.mxu0
    %6268 = vdwg.mxu0
    %6269 = vmatpush.bf16.msra.mxu0 %v6104
    %6270 = vmatpush.bf16.msra.mxu0 %v6102
    %6271 = vmatpush.bf16.msra.mxu0 %v6100
    %6272 = vmatpush.bf16.msra.mxu0 %v6098
    %6273 = vmatpush.bf16.msra.mxu0 %v6096
    %6274 = vmatpush.bf16.msra.mxu0 %v6094
    %6275 = vmatpush.bf16.msra.mxu0 %v6092
    %6276 = vmatpush.bf16.msra.mxu0 %v6090
    %6277 = vmatmul.bf16.gmra.mxu0 %v5822
    %v6278 = vpop.f32.mrf.mxu0
    %v6279 = vadd.f32 %v5894, %v6278
    %v6280 = vpop.f32.mrf.mxu0
    %6281 = vdwg.mxu0
    %6282 = vmatpush.bf16.msra.mxu0 %v6120
    %6283 = vmatpush.bf16.msra.mxu0 %v6118
    %6284 = vmatpush.bf16.msra.mxu0 %v6116
    %6285 = vmatpush.bf16.msra.mxu0 %v6114
    %6286 = vmatpush.bf16.msra.mxu0 %v6112
    %6287 = vmatpush.bf16.msra.mxu0 %v6110
    %6288 = vmatpush.bf16.msra.mxu0 %v6108
    %6289 = vmatpush.bf16.msra.mxu0 %v6106
    %6290 = vmatmul.bf16.gmra.mxu0 %v5823
    %v6291 = vpop.f32.mrf.mxu0
    %v6292 = vadd.f32 %v6279, %v6291
    %v6293 = vpop.f32.mrf.mxu0
    %6294 = vdwg.mxu0
    %6295 = vmatpush.bf16.msra.mxu0 %v6136
    %6296 = vmatpush.bf16.msra.mxu0 %v6134
    %6297 = vmatpush.bf16.msra.mxu0 %v6132
    %6298 = vmatpush.bf16.msra.mxu0 %v6130
    %6299 = vmatpush.bf16.msra.mxu0 %v6128
    %6300 = vmatpush.bf16.msra.mxu0 %v6126
    %6301 = vmatpush.bf16.msra.mxu0 %v6124
    %6302 = vmatpush.bf16.msra.mxu0 %v6122
    %6303 = vmatmul.bf16.gmra.mxu0 %v5824
    %v6304 = vpop.f32.mrf.mxu0
    %v6305 = vadd.f32 %v6292, %v6304
    %v6306 = vpop.f32.mrf.mxu0
    %6307 = vdwg.mxu0
    %6308 = vmatpush.bf16.msra.mxu0 %v6152
    %6309 = vmatpush.bf16.msra.mxu0 %v6150
    %6310 = vmatpush.bf16.msra.mxu0 %v6148
    %6311 = vmatpush.bf16.msra.mxu0 %v6146
    %6312 = vmatpush.bf16.msra.mxu0 %v6144
    %6313 = vmatpush.bf16.msra.mxu0 %v6142
    %6314 = vmatpush.bf16.msra.mxu0 %v6140
    %6315 = vmatpush.bf16.msra.mxu0 %v6138
    %6316 = vmatmul.bf16.gmra.mxu0 %v5825
    %v6317 = vpop.f32.mrf.mxu0
    %v6318 = vadd.f32 %v6305, %v6317
    %v6319 = vpop.f32.mrf.mxu0
    %6320 = vdwg.mxu0
    %v6321 = vxor.u32 %v6266, 2147483648
    %v6322 = vxor.u32 %v6318, 2147483648
    %v6323 = vmul.f32 %v6321, 1.442695
    %v6324 = vpow.pop %v6323
    %v6325 = vmul.f32 %v6322, 1.442695
    %v6326 = vpow.pop %v6325
    %v6327 = vadd.f32 %v6324, 1.0
    %v6328 = vadd.f32 %v6326, 1.0
    %v6329 = vrcp.pop %v6327
    %v6330 = vmul.f32 %v6327, %v6329
    %v6331 = vsub.f32 1.0, %v6330
    %v6332 = vmul.f32 %v6329, %v6331
    %v6333 = vadd.f32 %v6329, %v6332
    %vm6334 = vweird.f32 %v6327
    %vm6335 = vweird.f32 %v6329
    %vm6336 = vmor %vm6334, %vm6335
    %v6337 = vsel %vm6336, %v6329, %v6333
    %v6338 = vand.u32 2147483647, %v6327
    %vm6339 = vcmp.eq.f32.partialorder %v6338, 8.507059e+37
    %v6340 = vand.u32 %v6327, 2147483648
    %v6341 = vor.u32 1.1754944e-38, %v6340
    %v6342 = vsel %vm6339, %v6341, %v6337
    %v6343 = vmul.f32 1.0, %v6342
    %v6344 = vrcp.pop %v6328
    %v6345 = vmul.f32 %v6328, %v6344
    %v6346 = vsub.f32 1.0, %v6345
    %v6347 = vmul.f32 %v6344, %v6346
    %v6348 = vadd.f32 %v6344, %v6347
    %vm6349 = vweird.f32 %v6328
    %vm6350 = vweird.f32 %v6344
    %vm6351 = vmor %vm6349, %vm6350
    %v6352 = vsel %vm6351, %v6344, %v6348
    %v6353 = vand.u32 2147483647, %v6328
    %vm6354 = vcmp.eq.f32.partialorder %v6353, 8.507059e+37
    %v6355 = vand.u32 %v6328, 2147483648
    %v6356 = vor.u32 1.1754944e-38, %v6355
    %v6357 = vsel %vm6354, %v6356, %v6352
    %v6358 = vmul.f32 1.0, %v6357
    %v6359 = vpack.c.bf16 %v6343, %v6343
    %v6360 = vpack.c.bf16 %v6358, %v6358
    %v6361 = vld [vmem:[#allocation7] sm:$0xf]
    %v6362 = vld [vmem:[#allocation7 + $0x4] sm:$0xf]
    %v6363 = vld [vmem:[#allocation7 + $0x8] sm:$0xf]
    %v6364 = vld [vmem:[#allocation7 + $0xc] sm:$0xf]
    %v6365 = vld [vmem:[#allocation7 + $0x10] sm:$0xf]
    %v6366 = vld [vmem:[#allocation7 + $0x14] sm:$0xf]
    %v6367 = vld [vmem:[#allocation7 + $0x18] sm:$0xf]
    %v6368 = vld [vmem:[#allocation7 + $0x1c] sm:$0xf]
    %v6369 = vld [vmem:[#allocation7 + $0x20] sm:$0xf]
    %v6370 = vld [vmem:[#allocation7 + $0x24] sm:$0xf]
    %v6371 = vld [vmem:[#allocation7 + $0x28] sm:$0xf]
    %v6372 = vld [vmem:[#allocation7 + $0x2c] sm:$0xf]
    %v6373 = vld [vmem:[#allocation7 + $0x30] sm:$0xf]
    %v6374 = vld [vmem:[#allocation7 + $0x34] sm:$0xf]
    %v6375 = vld [vmem:[#allocation7 + $0x38] sm:$0xf]
    %v6376 = vld [vmem:[#allocation7 + $0x3c] sm:$0xf]
    %v6377 = vld [vmem:[#allocation7 + $0x40] sm:$0xf]
    %v6378 = vld [vmem:[#allocation7 + $0x44] sm:$0xf]
    %v6379 = vld [vmem:[#allocation7 + $0x48] sm:$0xf]
    %v6380 = vld [vmem:[#allocation7 + $0x4c] sm:$0xf]
    %v6381 = vld [vmem:[#allocation7 + $0x50] sm:$0xf]
    %v6382 = vld [vmem:[#allocation7 + $0x54] sm:$0xf]
    %v6383 = vld [vmem:[#allocation7 + $0x58] sm:$0xf]
    %v6384 = vld [vmem:[#allocation7 + $0x5c] sm:$0xf]
    %v6385 = vld [vmem:[#allocation7 + $0x60] sm:$0xf]
    %v6386 = vld [vmem:[#allocation7 + $0x64] sm:$0xf]
    %v6387 = vld [vmem:[#allocation7 + $0x68] sm:$0xf]
    %v6388 = vld [vmem:[#allocation7 + $0x6c] sm:$0xf]
    %v6389 = vld [vmem:[#allocation7 + $0x70] sm:$0xf]
    %v6390 = vld [vmem:[#allocation7 + $0x74] sm:$0xf]
    %v6391 = vld [vmem:[#allocation7 + $0x78] sm:$0xf]
    %v6392 = vld [vmem:[#allocation7 + $0x7c] sm:$0xf]
    %v6393 = vld [vmem:[#allocation15 + $0x3] ss:$0 sm:$0xff]
    %v6426 = vunpack.c.l.b16 %v6361
    %v6427 = vunpack.c.l.b16 %v6362
    %v6428 = vunpack.c.l.b16 %v6363
    %v6429 = vunpack.c.l.b16 %v6364
    %v6430 = vunpack.c.l.b16 %v6365
    %v6431 = vunpack.c.l.b16 %v6366
    %v6432 = vunpack.c.l.b16 %v6367
    %v6433 = vunpack.c.l.b16 %v6368
    %v6434 = vunpack.c.l.b16 %v6369
    %v6435 = vunpack.c.l.b16 %v6370
    %v6436 = vunpack.c.l.b16 %v6371
    %v6437 = vunpack.c.l.b16 %v6372
    %v6438 = vunpack.c.l.b16 %v6373
    %v6439 = vunpack.c.l.b16 %v6374
    %v6440 = vunpack.c.l.b16 %v6375
    %v6441 = vunpack.c.l.b16 %v6376
    %v6442 = vunpack.c.l.b16 %v6377
    %v6443 = vunpack.c.l.b16 %v6378
    %v6444 = vunpack.c.l.b16 %v6379
    %v6445 = vunpack.c.l.b16 %v6380
    %v6446 = vunpack.c.l.b16 %v6381
    %v6447 = vunpack.c.l.b16 %v6382
    %v6448 = vunpack.c.l.b16 %v6383
    %v6449 = vunpack.c.l.b16 %v6384
    %v6450 = vunpack.c.l.b16 %v6385
    %v6451 = vunpack.c.l.b16 %v6386
    %v6452 = vunpack.c.l.b16 %v6387
    %v6453 = vunpack.c.l.b16 %v6388
    %v6454 = vunpack.c.l.b16 %v6389
    %v6455 = vunpack.c.l.b16 %v6390
    %v6456 = vunpack.c.l.b16 %v6391
    %v6457 = vunpack.c.l.b16 %v6392
    %v6458 = vpack.c.b16 %v6427, %v6426
    %v6459 = vpack.c.b16 %v6429, %v6428
    %v6460 = vpack.c.b16 %v6431, %v6430
    %v6461 = vpack.c.b16 %v6433, %v6432
    %v6462 = vpack.c.b16 %v6435, %v6434
    %v6463 = vpack.c.b16 %v6437, %v6436
    %v6464 = vpack.c.b16 %v6439, %v6438
    %v6465 = vpack.c.b16 %v6441, %v6440
    %v6466 = vpack.c.b16 %v6443, %v6442
    %v6467 = vpack.c.b16 %v6445, %v6444
    %v6468 = vpack.c.b16 %v6447, %v6446
    %v6469 = vpack.c.b16 %v6449, %v6448
    %v6470 = vpack.c.b16 %v6451, %v6450
    %v6471 = vpack.c.b16 %v6453, %v6452
    %v6472 = vpack.c.b16 %v6455, %v6454
    %v6473 = vpack.c.b16 %v6457, %v6456
    %6490 = vmatpush.bf16.msra.mxu0 %v6465
    %6491 = vmatpush.bf16.msra.mxu0 %v6464
    %6492 = vmatpush.bf16.msra.mxu0 %v6463
    %6493 = vmatpush.bf16.msra.mxu0 %v6462
    %6494 = vmatpush.bf16.msra.mxu0 %v6461
    %6495 = vmatpush.bf16.msra.mxu0 %v6460
    %6496 = vmatpush.bf16.msra.mxu0 %v6459
    %6497 = vmatpush.bf16.msra.mxu0 %v6458
    %6498 = vmatmul.bf16.gmra.mxu0 %v6359
    %v6499 = vpop.f32.mrf.mxu0
    %v6500 = vadd.f32 %v6393, %v6499
    %v6501 = vpop.f32.mrf.mxu0
    %6502 = vdwg.mxu0
    %6503 = vmatpush.bf16.msra.mxu0 %v6473
    %6504 = vmatpush.bf16.msra.mxu0 %v6472
    %6505 = vmatpush.bf16.msra.mxu0 %v6471
    %6506 = vmatpush.bf16.msra.mxu0 %v6470
    %6507 = vmatpush.bf16.msra.mxu0 %v6469
    %6508 = vmatpush.bf16.msra.mxu0 %v6468
    %6509 = vmatpush.bf16.msra.mxu0 %v6467
    %6510 = vmatpush.bf16.msra.mxu0 %v6466
    %6511 = vmatmul.bf16.gmra.mxu0 %v6360
    %v6512 = vpop.f32.mrf.mxu0
    %v6513 = vadd.f32 %v6500, %v6512
    %v6514 = vpop.f32.mrf.mxu0
    %6515 = vdwg.mxu0
    %v6516 = vpack.c.bf16 %v6513, %v6513
    %v6517 = vld [vmem:[#allocation9] sm:$0xff]
    %v6518 = vld [vmem:[#allocation9 + $0x8] sm:$0xff]
    %v6519 = vld [vmem:[#allocation9 + $0x10] sm:$0xff]
    %v6520 = vld [vmem:[#allocation9 + $0x18] sm:$0xff]
    %v6521 = vld [vmem:[#allocation9 + $0x20] sm:$0xff]
    %v6522 = vld [vmem:[#allocation9 + $0x28] sm:$0xff]
    %v6523 = vld [vmem:[#allocation9 + $0x30] sm:$0xff]
    %v6524 = vld [vmem:[#allocation9 + $0x38] sm:$0xff]
    %v6525 = vld [vmem:[#allocation9 + $0x40] sm:$0xff]
    %v6526 = vld [vmem:[#allocation9 + $0x48] sm:$0xff]
    %v6527 = vld [vmem:[#allocation9 + $0x50] sm:$0xff]
    %v6528 = vld [vmem:[#allocation9 + $0x58] sm:$0xff]
    %v6529 = vld [vmem:[#allocation9 + $0x60] sm:$0xff]
    %v6530 = vld [vmem:[#allocation9 + $0x68] sm:$0xff]
    %v6531 = vld [vmem:[#allocation9 + $0x70] sm:$0xff]
    %v6532 = vld [vmem:[#allocation9 + $0x78] sm:$0xff]
    %s6533 = scalar_lea.vmem [#allocation15], 4
    %v6534 = vld [vmem:[%s6533] ss:$8 sm:$0x3]
    %v6536 = vperm.slane %v6534, 0
    %v6537 = vperm.slane %v6534, 1
    %v6556 = vunpack.c.l.b16 %v6517
    %v6557 = vunpack.c.h.b16 %v6517
    %v6558 = vunpack.c.l.b16 %v6518
    %v6559 = vunpack.c.h.b16 %v6518
    %v6560 = vunpack.c.l.b16 %v6519
    %v6561 = vunpack.c.h.b16 %v6519
    %v6562 = vunpack.c.l.b16 %v6520
    %v6563 = vunpack.c.h.b16 %v6520
    %v6564 = vunpack.c.l.b16 %v6521
    %v6565 = vunpack.c.h.b16 %v6521
    %v6566 = vunpack.c.l.b16 %v6522
    %v6567 = vunpack.c.h.b16 %v6522
    %v6568 = vunpack.c.l.b16 %v6523
    %v6569 = vunpack.c.h.b16 %v6523
    %v6570 = vunpack.c.l.b16 %v6524
    %v6571 = vunpack.c.h.b16 %v6524
    %v6572 = vunpack.c.l.b16 %v6525
    %v6573 = vunpack.c.h.b16 %v6525
    %v6574 = vunpack.c.l.b16 %v6526
    %v6575 = vunpack.c.h.b16 %v6526
    %v6576 = vunpack.c.l.b16 %v6527
    %v6577 = vunpack.c.h.b16 %v6527
    %v6578 = vunpack.c.l.b16 %v6528
    %v6579 = vunpack.c.h.b16 %v6528
    %v6580 = vunpack.c.l.b16 %v6529
    %v6581 = vunpack.c.h.b16 %v6529
    %v6582 = vunpack.c.l.b16 %v6530
    %v6583 = vunpack.c.h.b16 %v6530
    %v6584 = vunpack.c.l.b16 %v6531
    %v6585 = vunpack.c.h.b16 %v6531
    %v6586 = vunpack.c.l.b16 %v6532
    %v6587 = vunpack.c.h.b16 %v6532
    %v6588 = vpack.c.b16 %v6558, %v6556
    %v6589 = vpack.c.b16 %v6559, %v6557
    %v6590 = vpack.c.b16 %v6562, %v6560
    %v6591 = vpack.c.b16 %v6563, %v6561
    %v6592 = vpack.c.b16 %v6566, %v6564
    %v6593 = vpack.c.b16 %v6567, %v6565
    %v6594 = vpack.c.b16 %v6570, %v6568
    %v6595 = vpack.c.b16 %v6571, %v6569
    %v6596 = vpack.c.b16 %v6574, %v6572
    %v6597 = vpack.c.b16 %v6575, %v6573
    %v6598 = vpack.c.b16 %v6578, %v6576
    %v6599 = vpack.c.b16 %v6579, %v6577
    %v6600 = vpack.c.b16 %v6582, %v6580
    %v6601 = vpack.c.b16 %v6583, %v6581
    %v6602 = vpack.c.b16 %v6586, %v6584
    %v6603 = vpack.c.b16 %v6587, %v6585
    %6620 = vmatpush.bf16.msra.mxu0 %v6602
    %6621 = vmatpush.bf16.msra.mxu0 %v6600
    %6622 = vmatpush.bf16.msra.mxu0 %v6598
    %6623 = vmatpush.bf16.msra.mxu0 %v6596
    %6624 = vmatpush.bf16.msra.mxu0 %v6594
    %6625 = vmatpush.bf16.msra.mxu0 %v6592
    %6626 = vmatpush.bf16.msra.mxu0 %v6590
    %6627 = vmatpush.bf16.msra.mxu0 %v6588
    %6628 = vmatmul.bf16.gmra.mxu0 %v6516
    %v6629 = vpop.f32.mrf.mxu0
    %v6630 = vadd.f32 %v6536, %v6629
    %v6631 = vpop.f32.mrf.mxu0
    %6632 = vdwg.mxu0
    %6633 = vmatpush.bf16.msra.mxu0 %v6603
    %6634 = vmatpush.bf16.msra.mxu0 %v6601
    %6635 = vmatpush.bf16.msra.mxu0 %v6599
    %6636 = vmatpush.bf16.msra.mxu0 %v6597
    %6637 = vmatpush.bf16.msra.mxu0 %v6595
    %6638 = vmatpush.bf16.msra.mxu0 %v6593
    %6639 = vmatpush.bf16.msra.mxu0 %v6591
    %6640 = vmatpush.bf16.msra.mxu0 %v6589
    %6641 = vmatmul.bf16.gmra.mxu0 %v6516
    %v6642 = vpop.f32.mrf.mxu0
    %v6643 = vadd.f32 %v6537, %v6642
    %v6644 = vpop.f32.mrf.mxu0
    %6645 = vdwg.mxu0
    %v6646 = vxor.u32 %v6630, 2147483648
    %v6647 = vxor.u32 %v6643, 2147483648
    %v6648 = vmul.f32 %v6646, 1.442695
    %v6649 = vpow.pop %v6648
    %v6650 = vmul.f32 %v6647, 1.442695
    %v6651 = vpow.pop %v6650
    %v6652 = vadd.f32 %v6649, 1.0
    %v6653 = vadd.f32 %v6651, 1.0
    %v6654 = vrcp.pop %v6652
    %v6655 = vmul.f32 %v6652, %v6654
    %v6656 = vsub.f32 1.0, %v6655
    %v6657 = vmul.f32 %v6654, %v6656
    %v6658 = vadd.f32 %v6654, %v6657
    %vm6659 = vweird.f32 %v6652
    %vm6660 = vweird.f32 %v6654
    %vm6661 = vmor %vm6659, %vm6660
    %v6662 = vsel %vm6661, %v6654, %v6658
    %v6663 = vand.u32 2147483647, %v6652
    %vm6664 = vcmp.eq.f32.partialorder %v6663, 8.507059e+37
    %v6665 = vand.u32 %v6652, 2147483648
    %v6666 = vor.u32 1.1754944e-38, %v6665
    %v6667 = vsel %vm6664, %v6666, %v6662
    %v6668 = vmul.f32 1.0, %v6667
    %v6669 = vrcp.pop %v6653
    %v6670 = vmul.f32 %v6653, %v6669
    %v6671 = vsub.f32 1.0, %v6670
    %v6672 = vmul.f32 %v6669, %v6671
    %v6673 = vadd.f32 %v6669, %v6672
    %vm6674 = vweird.f32 %v6653
    %vm6675 = vweird.f32 %v6669
    %vm6676 = vmor %vm6674, %vm6675
    %v6677 = vsel %vm6676, %v6669, %v6673
    %v6678 = vand.u32 2147483647, %v6653
    %vm6679 = vcmp.eq.f32.partialorder %v6678, 8.507059e+37
    %v6680 = vand.u32 %v6653, 2147483648
    %v6681 = vor.u32 1.1754944e-38, %v6680
    %v6682 = vsel %vm6679, %v6681, %v6677
    %v6683 = vmul.f32 1.0, %v6682
    %v6684 = vpack.c.bf16 %v6668, %v6668
    %v6685 = vpack.c.bf16 %v6683, %v6683
    %v6686 = vld [vmem:[#allocation10] sm:$0xff]
    %v6687 = vld [vmem:[#allocation10 + $0x8] sm:$0xff]
    %v6688 = vld [vmem:[#allocation10 + $0x10] sm:$0xff]
    %v6689 = vld [vmem:[#allocation10 + $0x18] sm:$0xff]
    %v6690 = vld [vmem:[#allocation10 + $0x20] sm:$0xff]
    %v6691 = vld [vmem:[#allocation10 + $0x28] sm:$0xff]
    %v6692 = vld [vmem:[#allocation10 + $0x30] sm:$0xff]
    %v6693 = vld [vmem:[#allocation10 + $0x38] sm:$0xff]
    %v6694 = vld [vmem:[#allocation10 + $0x40] sm:$0xff]
    %v6695 = vld [vmem:[#allocation10 + $0x48] sm:$0xff]
    %v6696 = vld [vmem:[#allocation10 + $0x50] sm:$0xff]
    %v6697 = vld [vmem:[#allocation10 + $0x58] sm:$0xff]
    %v6698 = vld [vmem:[#allocation10 + $0x60] sm:$0xff]
    %v6699 = vld [vmem:[#allocation10 + $0x68] sm:$0xff]
    %v6700 = vld [vmem:[#allocation10 + $0x70] sm:$0xff]
    %v6701 = vld [vmem:[#allocation10 + $0x78] sm:$0xff]
    %v6702 = vld [vmem:[#allocation10 + $0x80] sm:$0xff]
    %v6703 = vld [vmem:[#allocation10 + $0x88] sm:$0xff]
    %v6704 = vld [vmem:[#allocation10 + $0x90] sm:$0xff]
    %v6705 = vld [vmem:[#allocation10 + $0x98] sm:$0xff]
    %v6706 = vld [vmem:[#allocation10 + $0xa0] sm:$0xff]
    %v6707 = vld [vmem:[#allocation10 + $0xa8] sm:$0xff]
    %v6708 = vld [vmem:[#allocation10 + $0xb0] sm:$0xff]
    %v6709 = vld [vmem:[#allocation10 + $0xb8] sm:$0xff]
    %v6710 = vld [vmem:[#allocation10 + $0xc0] sm:$0xff]
    %v6711 = vld [vmem:[#allocation10 + $0xc8] sm:$0xff]
    %v6712 = vld [vmem:[#allocation10 + $0xd0] sm:$0xff]
    %v6713 = vld [vmem:[#allocation10 + $0xd8] sm:$0xff]
    %v6714 = vld [vmem:[#allocation10 + $0xe0] sm:$0xff]
    %v6715 = vld [vmem:[#allocation10 + $0xe8] sm:$0xff]
    %v6716 = vld [vmem:[#allocation10 + $0xf0] sm:$0xff]
    %v6717 = vld [vmem:[#allocation10 + $0xf8] sm:$0xff]
    %v6718 = vld [vmem:[#allocation10 + $0x100] sm:$0xff]
    %v6719 = vld [vmem:[#allocation10 + $0x108] sm:$0xff]
    %v6720 = vld [vmem:[#allocation10 + $0x110] sm:$0xff]
    %v6721 = vld [vmem:[#allocation10 + $0x118] sm:$0xff]
    %v6722 = vld [vmem:[#allocation10 + $0x120] sm:$0xff]
    %v6723 = vld [vmem:[#allocation10 + $0x128] sm:$0xff]
    %v6724 = vld [vmem:[#allocation10 + $0x130] sm:$0xff]
    %v6725 = vld [vmem:[#allocation10 + $0x138] sm:$0xff]
    %v6726 = vld [vmem:[#allocation10 + $0x140] sm:$0xff]
    %v6727 = vld [vmem:[#allocation10 + $0x148] sm:$0xff]
    %v6728 = vld [vmem:[#allocation10 + $0x150] sm:$0xff]
    %v6729 = vld [vmem:[#allocation10 + $0x158] sm:$0xff]
    %v6730 = vld [vmem:[#allocation10 + $0x160] sm:$0xff]
    %v6731 = vld [vmem:[#allocation10 + $0x168] sm:$0xff]
    %v6732 = vld [vmem:[#allocation10 + $0x170] sm:$0xff]
    %v6733 = vld [vmem:[#allocation10 + $0x178] sm:$0xff]
    %v6734 = vld [vmem:[#allocation10 + $0x180] sm:$0xff]
    %v6735 = vld [vmem:[#allocation10 + $0x188] sm:$0xff]
    %v6736 = vld [vmem:[#allocation10 + $0x190] sm:$0xff]
    %v6737 = vld [vmem:[#allocation10 + $0x198] sm:$0xff]
    %v6738 = vld [vmem:[#allocation10 + $0x1a0] sm:$0xff]
    %v6739 = vld [vmem:[#allocation10 + $0x1a8] sm:$0xff]
    %v6740 = vld [vmem:[#allocation10 + $0x1b0] sm:$0xff]
    %v6741 = vld [vmem:[#allocation10 + $0x1b8] sm:$0xff]
    %v6742 = vld [vmem:[#allocation10 + $0x1c0] sm:$0xff]
    %v6743 = vld [vmem:[#allocation10 + $0x1c8] sm:$0xff]
    %v6744 = vld [vmem:[#allocation10 + $0x1d0] sm:$0xff]
    %v6745 = vld [vmem:[#allocation10 + $0x1d8] sm:$0xff]
    %v6746 = vld [vmem:[#allocation10 + $0x1e0] sm:$0xff]
    %v6747 = vld [vmem:[#allocation10 + $0x1e8] sm:$0xff]
    %v6748 = vld [vmem:[#allocation10 + $0x1f0] sm:$0xff]
    %v6749 = vld [vmem:[#allocation10 + $0x1f8] sm:$0xff]
    %s6750 = scalar_lea.vmem [#allocation15], 5
    %v6751 = vld [vmem:[%s6750] ss:$8 sm:$0xf]
    %v6753 = vperm.slane %v6751, 0
    %v6754 = vperm.slane %v6751, 1
    %v6755 = vperm.slane %v6751, 2
    %v6756 = vperm.slane %v6751, 3
    %v6825 = vunpack.c.l.b16 %v6686
    %v6826 = vunpack.c.h.b16 %v6686
    %v6827 = vunpack.c.l.b16 %v6687
    %v6828 = vunpack.c.h.b16 %v6687
    %v6829 = vunpack.c.l.b16 %v6688
    %v6830 = vunpack.c.h.b16 %v6688
    %v6831 = vunpack.c.l.b16 %v6689
    %v6832 = vunpack.c.h.b16 %v6689
    %v6833 = vunpack.c.l.b16 %v6690
    %v6834 = vunpack.c.h.b16 %v6690
    %v6835 = vunpack.c.l.b16 %v6691
    %v6836 = vunpack.c.h.b16 %v6691
    %v6837 = vunpack.c.l.b16 %v6692
    %v6838 = vunpack.c.h.b16 %v6692
    %v6839 = vunpack.c.l.b16 %v6693
    %v6840 = vunpack.c.h.b16 %v6693
    %v6841 = vunpack.c.l.b16 %v6694
    %v6842 = vunpack.c.h.b16 %v6694
    %v6843 = vunpack.c.l.b16 %v6695
    %v6844 = vunpack.c.h.b16 %v6695
    %v6845 = vunpack.c.l.b16 %v6696
    %v6846 = vunpack.c.h.b16 %v6696
    %v6847 = vunpack.c.l.b16 %v6697
    %v6848 = vunpack.c.h.b16 %v6697
    %v6849 = vunpack.c.l.b16 %v6698
    %v6850 = vunpack.c.h.b16 %v6698
    %v6851 = vunpack.c.l.b16 %v6699
    %v6852 = vunpack.c.h.b16 %v6699
    %v6853 = vunpack.c.l.b16 %v6700
    %v6854 = vunpack.c.h.b16 %v6700
    %v6855 = vunpack.c.l.b16 %v6701
    %v6856 = vunpack.c.h.b16 %v6701
    %v6857 = vunpack.c.l.b16 %v6702
    %v6858 = vunpack.c.h.b16 %v6702
    %v6859 = vunpack.c.l.b16 %v6703
    %v6860 = vunpack.c.h.b16 %v6703
    %v6861 = vunpack.c.l.b16 %v6704
    %v6862 = vunpack.c.h.b16 %v6704
    %v6863 = vunpack.c.l.b16 %v6705
    %v6864 = vunpack.c.h.b16 %v6705
    %v6865 = vunpack.c.l.b16 %v6706
    %v6866 = vunpack.c.h.b16 %v6706
    %v6867 = vunpack.c.l.b16 %v6707
    %v6868 = vunpack.c.h.b16 %v6707
    %v6869 = vunpack.c.l.b16 %v6708
    %v6870 = vunpack.c.h.b16 %v6708
    %v6871 = vunpack.c.l.b16 %v6709
    %v6872 = vunpack.c.h.b16 %v6709
    %v6873 = vunpack.c.l.b16 %v6710
    %v6874 = vunpack.c.h.b16 %v6710
    %v6875 = vunpack.c.l.b16 %v6711
    %v6876 = vunpack.c.h.b16 %v6711
    %v6877 = vunpack.c.l.b16 %v6712
    %v6878 = vunpack.c.h.b16 %v6712
    %v6879 = vunpack.c.l.b16 %v6713
    %v6880 = vunpack.c.h.b16 %v6713
    %v6881 = vunpack.c.l.b16 %v6714
    %v6882 = vunpack.c.h.b16 %v6714
    %v6883 = vunpack.c.l.b16 %v6715
    %v6884 = vunpack.c.h.b16 %v6715
    %v6885 = vunpack.c.l.b16 %v6716
    %v6886 = vunpack.c.h.b16 %v6716
    %v6887 = vunpack.c.l.b16 %v6717
    %v6888 = vunpack.c.h.b16 %v6717
    %v6889 = vunpack.c.l.b16 %v6718
    %v6890 = vunpack.c.h.b16 %v6718
    %v6891 = vunpack.c.l.b16 %v6719
    %v6892 = vunpack.c.h.b16 %v6719
    %v6893 = vunpack.c.l.b16 %v6720
    %v6894 = vunpack.c.h.b16 %v6720
    %v6895 = vunpack.c.l.b16 %v6721
    %v6896 = vunpack.c.h.b16 %v6721
    %v6897 = vunpack.c.l.b16 %v6722
    %v6898 = vunpack.c.h.b16 %v6722
    %v6899 = vunpack.c.l.b16 %v6723
    %v6900 = vunpack.c.h.b16 %v6723
    %v6901 = vunpack.c.l.b16 %v6724
    %v6902 = vunpack.c.h.b16 %v6724
    %v6903 = vunpack.c.l.b16 %v6725
    %v6904 = vunpack.c.h.b16 %v6725
    %v6905 = vunpack.c.l.b16 %v6726
    %v6906 = vunpack.c.h.b16 %v6726
    %v6907 = vunpack.c.l.b16 %v6727
    %v6908 = vunpack.c.h.b16 %v6727
    %v6909 = vunpack.c.l.b16 %v6728
    %v6910 = vunpack.c.h.b16 %v6728
    %v6911 = vunpack.c.l.b16 %v6729
    %v6912 = vunpack.c.h.b16 %v6729
    %v6913 = vunpack.c.l.b16 %v6730
    %v6914 = vunpack.c.h.b16 %v6730
    %v6915 = vunpack.c.l.b16 %v6731
    %v6916 = vunpack.c.h.b16 %v6731
    %v6917 = vunpack.c.l.b16 %v6732
    %v6918 = vunpack.c.h.b16 %v6732
    %v6919 = vunpack.c.l.b16 %v6733
    %v6920 = vunpack.c.h.b16 %v6733
    %v6921 = vunpack.c.l.b16 %v6734
    %v6922 = vunpack.c.h.b16 %v6734
    %v6923 = vunpack.c.l.b16 %v6735
    %v6924 = vunpack.c.h.b16 %v6735
    %v6925 = vunpack.c.l.b16 %v6736
    %v6926 = vunpack.c.h.b16 %v6736
    %v6927 = vunpack.c.l.b16 %v6737
    %v6928 = vunpack.c.h.b16 %v6737
    %v6929 = vunpack.c.l.b16 %v6738
    %v6930 = vunpack.c.h.b16 %v6738
    %v6931 = vunpack.c.l.b16 %v6739
    %v6932 = vunpack.c.h.b16 %v6739
    %v6933 = vunpack.c.l.b16 %v6740
    %v6934 = vunpack.c.h.b16 %v6740
    %v6935 = vunpack.c.l.b16 %v6741
    %v6936 = vunpack.c.h.b16 %v6741
    %v6937 = vunpack.c.l.b16 %v6742
    %v6938 = vunpack.c.h.b16 %v6742
    %v6939 = vunpack.c.l.b16 %v6743
    %v6940 = vunpack.c.h.b16 %v6743
    %v6941 = vunpack.c.l.b16 %v6744
    %v6942 = vunpack.c.h.b16 %v6744
    %v6943 = vunpack.c.l.b16 %v6745
    %v6944 = vunpack.c.h.b16 %v6745
    %v6945 = vunpack.c.l.b16 %v6746
    %v6946 = vunpack.c.h.b16 %v6746
    %v6947 = vunpack.c.l.b16 %v6747
    %v6948 = vunpack.c.h.b16 %v6747
    %v6949 = vunpack.c.l.b16 %v6748
    %v6950 = vunpack.c.h.b16 %v6748
    %v6951 = vunpack.c.l.b16 %v6749
    %v6952 = vunpack.c.h.b16 %v6749
    %v6953 = vpack.c.b16 %v6829, %v6825
    %v6954 = vpack.c.b16 %v6830, %v6826
    %v6955 = vpack.c.b16 %v6831, %v6827
    %v6956 = vpack.c.b16 %v6832, %v6828
    %v6957 = vpack.c.b16 %v6837, %v6833
    %v6958 = vpack.c.b16 %v6838, %v6834
    %v6959 = vpack.c.b16 %v6839, %v6835
    %v6960 = vpack.c.b16 %v6840, %v6836
    %v6961 = vpack.c.b16 %v6845, %v6841
    %v6962 = vpack.c.b16 %v6846, %v6842
    %v6963 = vpack.c.b16 %v6847, %v6843
    %v6964 = vpack.c.b16 %v6848, %v6844
    %v6965 = vpack.c.b16 %v6853, %v6849
    %v6966 = vpack.c.b16 %v6854, %v6850
    %v6967 = vpack.c.b16 %v6855, %v6851
    %v6968 = vpack.c.b16 %v6856, %v6852
    %v6969 = vpack.c.b16 %v6861, %v6857
    %v6970 = vpack.c.b16 %v6862, %v6858
    %v6971 = vpack.c.b16 %v6863, %v6859
    %v6972 = vpack.c.b16 %v6864, %v6860
    %v6973 = vpack.c.b16 %v6869, %v6865
    %v6974 = vpack.c.b16 %v6870, %v6866
    %v6975 = vpack.c.b16 %v6871, %v6867
    %v6976 = vpack.c.b16 %v6872, %v6868
    %v6977 = vpack.c.b16 %v6877, %v6873
    %v6978 = vpack.c.b16 %v6878, %v6874
    %v6979 = vpack.c.b16 %v6879, %v6875
    %v6980 = vpack.c.b16 %v6880, %v6876
    %v6981 = vpack.c.b16 %v6885, %v6881
    %v6982 = vpack.c.b16 %v6886, %v6882
    %v6983 = vpack.c.b16 %v6887, %v6883
    %v6984 = vpack.c.b16 %v6888, %v6884
    %v6985 = vpack.c.b16 %v6893, %v6889
    %v6986 = vpack.c.b16 %v6894, %v6890
    %v6987 = vpack.c.b16 %v6895, %v6891
    %v6988 = vpack.c.b16 %v6896, %v6892
    %v6989 = vpack.c.b16 %v6901, %v6897
    %v6990 = vpack.c.b16 %v6902, %v6898
    %v6991 = vpack.c.b16 %v6903, %v6899
    %v6992 = vpack.c.b16 %v6904, %v6900
    %v6993 = vpack.c.b16 %v6909, %v6905
    %v6994 = vpack.c.b16 %v6910, %v6906
    %v6995 = vpack.c.b16 %v6911, %v6907
    %v6996 = vpack.c.b16 %v6912, %v6908
    %v6997 = vpack.c.b16 %v6917, %v6913
    %v6998 = vpack.c.b16 %v6918, %v6914
    %v6999 = vpack.c.b16 %v6919, %v6915
    %v7000 = vpack.c.b16 %v6920, %v6916
    %v7001 = vpack.c.b16 %v6925, %v6921
    %v7002 = vpack.c.b16 %v6926, %v6922
    %v7003 = vpack.c.b16 %v6927, %v6923
    %v7004 = vpack.c.b16 %v6928, %v6924
    %v7005 = vpack.c.b16 %v6933, %v6929
    %v7006 = vpack.c.b16 %v6934, %v6930
    %v7007 = vpack.c.b16 %v6935, %v6931
    %v7008 = vpack.c.b16 %v6936, %v6932
    %v7009 = vpack.c.b16 %v6941, %v6937
    %v7010 = vpack.c.b16 %v6942, %v6938
    %v7011 = vpack.c.b16 %v6943, %v6939
    %v7012 = vpack.c.b16 %v6944, %v6940
    %v7013 = vpack.c.b16 %v6949, %v6945
    %v7014 = vpack.c.b16 %v6950, %v6946
    %v7015 = vpack.c.b16 %v6951, %v6947
    %v7016 = vpack.c.b16 %v6952, %v6948
    %7081 = vmatpush.bf16.msra.mxu0 %v6981
    %7082 = vmatpush.bf16.msra.mxu0 %v6977
    %7083 = vmatpush.bf16.msra.mxu0 %v6973
    %7084 = vmatpush.bf16.msra.mxu0 %v6969
    %7085 = vmatpush.bf16.msra.mxu0 %v6965
    %7086 = vmatpush.bf16.msra.mxu0 %v6961
    %7087 = vmatpush.bf16.msra.mxu0 %v6957
    %7088 = vmatpush.bf16.msra.mxu0 %v6953
    %7089 = vmatmul.bf16.gmra.mxu0 %v6684
    %v7090 = vpop.f32.mrf.mxu0
    %v7091 = vadd.f32 %v6753, %v7090
    %v7092 = vpop.f32.mrf.mxu0
    %7093 = vdwg.mxu0
    %7094 = vmatpush.bf16.msra.mxu0 %v7013
    %7095 = vmatpush.bf16.msra.mxu0 %v7009
    %7096 = vmatpush.bf16.msra.mxu0 %v7005
    %7097 = vmatpush.bf16.msra.mxu0 %v7001
    %7098 = vmatpush.bf16.msra.mxu0 %v6997
    %7099 = vmatpush.bf16.msra.mxu0 %v6993
    %7100 = vmatpush.bf16.msra.mxu0 %v6989
    %7101 = vmatpush.bf16.msra.mxu0 %v6985
    %7102 = vmatmul.bf16.gmra.mxu0 %v6685
    %v7103 = vpop.f32.mrf.mxu0
    %v7104 = vadd.f32 %v7091, %v7103
    %v7105 = vpop.f32.mrf.mxu0
    %7106 = vdwg.mxu0
    %7107 = vmatpush.bf16.msra.mxu0 %v6982
    %7108 = vmatpush.bf16.msra.mxu0 %v6978
    %7109 = vmatpush.bf16.msra.mxu0 %v6974
    %7110 = vmatpush.bf16.msra.mxu0 %v6970
    %7111 = vmatpush.bf16.msra.mxu0 %v6966
    %7112 = vmatpush.bf16.msra.mxu0 %v6962
    %7113 = vmatpush.bf16.msra.mxu0 %v6958
    %7114 = vmatpush.bf16.msra.mxu0 %v6954
    %7115 = vmatmul.bf16.gmra.mxu0 %v6684
    %v7116 = vpop.f32.mrf.mxu0
    %v7117 = vadd.f32 %v6754, %v7116
    %v7118 = vpop.f32.mrf.mxu0
    %7119 = vdwg.mxu0
    %7120 = vmatpush.bf16.msra.mxu0 %v7014
    %7121 = vmatpush.bf16.msra.mxu0 %v7010
    %7122 = vmatpush.bf16.msra.mxu0 %v7006
    %7123 = vmatpush.bf16.msra.mxu0 %v7002
    %7124 = vmatpush.bf16.msra.mxu0 %v6998
    %7125 = vmatpush.bf16.msra.mxu0 %v6994
    %7126 = vmatpush.bf16.msra.mxu0 %v6990
    %7127 = vmatpush.bf16.msra.mxu0 %v6986
    %7128 = vmatmul.bf16.gmra.mxu0 %v6685
    %v7129 = vpop.f32.mrf.mxu0
    %v7130 = vadd.f32 %v7117, %v7129
    %v7131 = vpop.f32.mrf.mxu0
    %7132 = vdwg.mxu0
    %7133 = vmatpush.bf16.msra.mxu0 %v6983
    %7134 = vmatpush.bf16.msra.mxu0 %v6979
    %7135 = vmatpush.bf16.msra.mxu0 %v6975
    %7136 = vmatpush.bf16.msra.mxu0 %v6971
    %7137 = vmatpush.bf16.msra.mxu0 %v6967
    %7138 = vmatpush.bf16.msra.mxu0 %v6963
    %7139 = vmatpush.bf16.msra.mxu0 %v6959
    %7140 = vmatpush.bf16.msra.mxu0 %v6955
    %7141 = vmatmul.bf16.gmra.mxu0 %v6684
    %v7142 = vpop.f32.mrf.mxu0
    %v7143 = vadd.f32 %v6755, %v7142
    %v7144 = vpop.f32.mrf.mxu0
    %7145 = vdwg.mxu0
    %7146 = vmatpush.bf16.msra.mxu0 %v7015
    %7147 = vmatpush.bf16.msra.mxu0 %v7011
    %7148 = vmatpush.bf16.msra.mxu0 %v7007
    %7149 = vmatpush.bf16.msra.mxu0 %v7003
    %7150 = vmatpush.bf16.msra.mxu0 %v6999
    %7151 = vmatpush.bf16.msra.mxu0 %v6995
    %7152 = vmatpush.bf16.msra.mxu0 %v6991
    %7153 = vmatpush.bf16.msra.mxu0 %v6987
    %7154 = vmatmul.bf16.gmra.mxu0 %v6685
    %v7155 = vpop.f32.mrf.mxu0
    %v7156 = vadd.f32 %v7143, %v7155
    %v7157 = vpop.f32.mrf.mxu0
    %7158 = vdwg.mxu0
    %7159 = vmatpush.bf16.msra.mxu0 %v6984
    %7160 = vmatpush.bf16.msra.mxu0 %v6980
    %7161 = vmatpush.bf16.msra.mxu0 %v6976
    %7162 = vmatpush.bf16.msra.mxu0 %v6972
    %7163 = vmatpush.bf16.msra.mxu0 %v6968
    %7164 = vmatpush.bf16.msra.mxu0 %v6964
    %7165 = vmatpush.bf16.msra.mxu0 %v6960
    %7166 = vmatpush.bf16.msra.mxu0 %v6956
    %7167 = vmatmul.bf16.gmra.mxu0 %v6684
    %v7168 = vpop.f32.mrf.mxu0
    %v7169 = vadd.f32 %v6756, %v7168
    %v7170 = vpop.f32.mrf.mxu0
    %7171 = vdwg.mxu0
    %7172 = vmatpush.bf16.msra.mxu0 %v7016
    %7173 = vmatpush.bf16.msra.mxu0 %v7012
    %7174 = vmatpush.bf16.msra.mxu0 %v7008
    %7175 = vmatpush.bf16.msra.mxu0 %v7004
    %7176 = vmatpush.bf16.msra.mxu0 %v7000
    %7177 = vmatpush.bf16.msra.mxu0 %v6996
    %7178 = vmatpush.bf16.msra.mxu0 %v6992
    %7179 = vmatpush.bf16.msra.mxu0 %v6988
    %7180 = vmatmul.bf16.gmra.mxu0 %v6685
    %v7181 = vpop.f32.mrf.mxu0
    %v7182 = vadd.f32 %v7169, %v7181
    %v7183 = vpop.f32.mrf.mxu0
    %7184 = vdwg.mxu0
    %v7185 = vxor.u32 %v7104, 2147483648
    %v7186 = vxor.u32 %v7130, 2147483648
    %v7187 = vxor.u32 %v7156, 2147483648
    %v7188 = vxor.u32 %v7182, 2147483648
    %v7189 = vmul.f32 %v7185, 1.442695
    %v7190 = vpow.pop %v7189
    %v7191 = vmul.f32 %v7186, 1.442695
    %v7192 = vpow.pop %v7191
    %v7193 = vmul.f32 %v7187, 1.442695
    %v7194 = vpow.pop %v7193
    %v7195 = vmul.f32 %v7188, 1.442695
    %v7196 = vpow.pop %v7195
    %v7197 = vadd.f32 %v7190, 1.0
    %v7198 = vadd.f32 %v7192, 1.0
    %v7199 = vadd.f32 %v7194, 1.0
    %v7200 = vadd.f32 %v7196, 1.0
    %v7201 = vrcp.pop %v7197
    %v7202 = vmul.f32 %v7197, %v7201
    %v7203 = vsub.f32 1.0, %v7202
    %v7204 = vmul.f32 %v7201, %v7203
    %v7205 = vadd.f32 %v7201, %v7204
    %vm7206 = vweird.f32 %v7197
    %vm7207 = vweird.f32 %v7201
    %vm7208 = vmor %vm7206, %vm7207
    %v7209 = vsel %vm7208, %v7201, %v7205
    %v7210 = vand.u32 2147483647, %v7197
    %vm7211 = vcmp.eq.f32.partialorder %v7210, 8.507059e+37
    %v7212 = vand.u32 %v7197, 2147483648
    %v7213 = vor.u32 1.1754944e-38, %v7212
    %v7214 = vsel %vm7211, %v7213, %v7209
    %v7215 = vmul.f32 1.0, %v7214
    %v7216 = vrcp.pop %v7198
    %v7217 = vmul.f32 %v7198, %v7216
    %v7218 = vsub.f32 1.0, %v7217
    %v7219 = vmul.f32 %v7216, %v7218
    %v7220 = vadd.f32 %v7216, %v7219
    %vm7221 = vweird.f32 %v7198
    %vm7222 = vweird.f32 %v7216
    %vm7223 = vmor %vm7221, %vm7222
    %v7224 = vsel %vm7223, %v7216, %v7220
    %v7225 = vand.u32 2147483647, %v7198
    %vm7226 = vcmp.eq.f32.partialorder %v7225, 8.507059e+37
    %v7227 = vand.u32 %v7198, 2147483648
    %v7228 = vor.u32 1.1754944e-38, %v7227
    %v7229 = vsel %vm7226, %v7228, %v7224
    %v7230 = vmul.f32 1.0, %v7229
    %v7231 = vrcp.pop %v7199
    %v7232 = vmul.f32 %v7199, %v7231
    %v7233 = vsub.f32 1.0, %v7232
    %v7234 = vmul.f32 %v7231, %v7233
    %v7235 = vadd.f32 %v7231, %v7234
    %vm7236 = vweird.f32 %v7199
    %vm7237 = vweird.f32 %v7231
    %vm7238 = vmor %vm7236, %vm7237
    %v7239 = vsel %vm7238, %v7231, %v7235
    %v7240 = vand.u32 2147483647, %v7199
    %vm7241 = vcmp.eq.f32.partialorder %v7240, 8.507059e+37
    %v7242 = vand.u32 %v7199, 2147483648
    %v7243 = vor.u32 1.1754944e-38, %v7242
    %v7244 = vsel %vm7241, %v7243, %v7239
    %v7245 = vmul.f32 1.0, %v7244
    %v7246 = vrcp.pop %v7200
    %v7247 = vmul.f32 %v7200, %v7246
    %v7248 = vsub.f32 1.0, %v7247
    %v7249 = vmul.f32 %v7246, %v7248
    %v7250 = vadd.f32 %v7246, %v7249
    %vm7251 = vweird.f32 %v7200
    %vm7252 = vweird.f32 %v7246
    %vm7253 = vmor %vm7251, %vm7252
    %v7254 = vsel %vm7253, %v7246, %v7250
    %v7255 = vand.u32 2147483647, %v7200
    %vm7256 = vcmp.eq.f32.partialorder %v7255, 8.507059e+37
    %v7257 = vand.u32 %v7200, 2147483648
    %v7258 = vor.u32 1.1754944e-38, %v7257
    %v7259 = vsel %vm7256, %v7258, %v7254
    %v7260 = vmul.f32 1.0, %v7259
    %v7261 = vpack.c.bf16 %v7215, %v7215
    %v7262 = vpack.c.bf16 %v7230, %v7230
    %v7263 = vpack.c.bf16 %v7245, %v7245
    %v7264 = vpack.c.bf16 %v7260, %v7260
    %v7265 = vld [vmem:[#allocation12] sm:$0xff]
    %v7266 = vld [vmem:[#allocation12 + $0x8] sm:$0xff]
    %v7267 = vld [vmem:[#allocation12 + $0x10] sm:$0xff]
    %v7268 = vld [vmem:[#allocation12 + $0x18] sm:$0xff]
    %v7269 = vld [vmem:[#allocation12 + $0x20] sm:$0xff]
    %v7270 = vld [vmem:[#allocation12 + $0x28] sm:$0xff]
    %v7271 = vld [vmem:[#allocation12 + $0x30] sm:$0xff]
    %v7272 = vld [vmem:[#allocation12 + $0x38] sm:$0xff]
    %v7273 = vld [vmem:[#allocation12 + $0x40] sm:$0xff]
    %v7274 = vld [vmem:[#allocation12 + $0x48] sm:$0xff]
    %v7275 = vld [vmem:[#allocation12 + $0x50] sm:$0xff]
    %v7276 = vld [vmem:[#allocation12 + $0x58] sm:$0xff]
    %v7277 = vld [vmem:[#allocation12 + $0x60] sm:$0xff]
    %v7278 = vld [vmem:[#allocation12 + $0x68] sm:$0xff]
    %v7279 = vld [vmem:[#allocation12 + $0x70] sm:$0xff]
    %v7280 = vld [vmem:[#allocation12 + $0x78] sm:$0xff]
    %v7281 = vld [vmem:[#allocation12 + $0x80] sm:$0xff]
    %v7282 = vld [vmem:[#allocation12 + $0x88] sm:$0xff]
    %v7283 = vld [vmem:[#allocation12 + $0x90] sm:$0xff]
    %v7284 = vld [vmem:[#allocation12 + $0x98] sm:$0xff]
    %v7285 = vld [vmem:[#allocation12 + $0xa0] sm:$0xff]
    %v7286 = vld [vmem:[#allocation12 + $0xa8] sm:$0xff]
    %v7287 = vld [vmem:[#allocation12 + $0xb0] sm:$0xff]
    %v7288 = vld [vmem:[#allocation12 + $0xb8] sm:$0xff]
    %v7289 = vld [vmem:[#allocation12 + $0xc0] sm:$0xff]
    %v7290 = vld [vmem:[#allocation12 + $0xc8] sm:$0xff]
    %v7291 = vld [vmem:[#allocation12 + $0xd0] sm:$0xff]
    %v7292 = vld [vmem:[#allocation12 + $0xd8] sm:$0xff]
    %v7293 = vld [vmem:[#allocation12 + $0xe0] sm:$0xff]
    %v7294 = vld [vmem:[#allocation12 + $0xe8] sm:$0xff]
    %v7295 = vld [vmem:[#allocation12 + $0xf0] sm:$0xff]
    %v7296 = vld [vmem:[#allocation12 + $0xf8] sm:$0xff]
    %v7297 = vld [vmem:[#allocation12 + $0x100] sm:$0xff]
    %v7298 = vld [vmem:[#allocation12 + $0x108] sm:$0xff]
    %v7299 = vld [vmem:[#allocation12 + $0x110] sm:$0xff]
    %v7300 = vld [vmem:[#allocation12 + $0x118] sm:$0xff]
    %v7301 = vld [vmem:[#allocation12 + $0x120] sm:$0xff]
    %v7302 = vld [vmem:[#allocation12 + $0x128] sm:$0xff]
    %v7303 = vld [vmem:[#allocation12 + $0x130] sm:$0xff]
    %v7304 = vld [vmem:[#allocation12 + $0x138] sm:$0xff]
    %v7305 = vld [vmem:[#allocation12 + $0x140] sm:$0xff]
    %v7306 = vld [vmem:[#allocation12 + $0x148] sm:$0xff]
    %v7307 = vld [vmem:[#allocation12 + $0x150] sm:$0xff]
    %v7308 = vld [vmem:[#allocation12 + $0x158] sm:$0xff]
    %v7309 = vld [vmem:[#allocation12 + $0x160] sm:$0xff]
    %v7310 = vld [vmem:[#allocation12 + $0x168] sm:$0xff]
    %v7311 = vld [vmem:[#allocation12 + $0x170] sm:$0xff]
    %v7312 = vld [vmem:[#allocation12 + $0x178] sm:$0xff]
    %v7313 = vld [vmem:[#allocation12 + $0x180] sm:$0xff]
    %v7314 = vld [vmem:[#allocation12 + $0x188] sm:$0xff]
    %v7315 = vld [vmem:[#allocation12 + $0x190] sm:$0xff]
    %v7316 = vld [vmem:[#allocation12 + $0x198] sm:$0xff]
    %v7317 = vld [vmem:[#allocation12 + $0x1a0] sm:$0xff]
    %v7318 = vld [vmem:[#allocation12 + $0x1a8] sm:$0xff]
    %v7319 = vld [vmem:[#allocation12 + $0x1b0] sm:$0xff]
    %v7320 = vld [vmem:[#allocation12 + $0x1b8] sm:$0xff]
    %v7321 = vld [vmem:[#allocation12 + $0x1c0] sm:$0xff]
    %v7322 = vld [vmem:[#allocation12 + $0x1c8] sm:$0xff]
    %v7323 = vld [vmem:[#allocation12 + $0x1d0] sm:$0xff]
    %v7324 = vld [vmem:[#allocation12 + $0x1d8] sm:$0xff]
    %v7325 = vld [vmem:[#allocation12 + $0x1e0] sm:$0xff]
    %v7326 = vld [vmem:[#allocation12 + $0x1e8] sm:$0xff]
    %v7327 = vld [vmem:[#allocation12 + $0x1f0] sm:$0xff]
    %v7328 = vld [vmem:[#allocation12 + $0x1f8] sm:$0xff]
    %v7329 = vld [vmem:[#allocation12 + $0x200] sm:$0xff]
    %v7330 = vld [vmem:[#allocation12 + $0x208] sm:$0xff]
    %v7331 = vld [vmem:[#allocation12 + $0x210] sm:$0xff]
    %v7332 = vld [vmem:[#allocation12 + $0x218] sm:$0xff]
    %v7333 = vld [vmem:[#allocation12 + $0x220] sm:$0xff]
    %v7334 = vld [vmem:[#allocation12 + $0x228] sm:$0xff]
    %v7335 = vld [vmem:[#allocation12 + $0x230] sm:$0xff]
    %v7336 = vld [vmem:[#allocation12 + $0x238] sm:$0xff]
    %v7337 = vld [vmem:[#allocation12 + $0x240] sm:$0xff]
    %v7338 = vld [vmem:[#allocation12 + $0x248] sm:$0xff]
    %v7339 = vld [vmem:[#allocation12 + $0x250] sm:$0xff]
    %v7340 = vld [vmem:[#allocation12 + $0x258] sm:$0xff]
    %v7341 = vld [vmem:[#allocation12 + $0x260] sm:$0xff]
    %v7342 = vld [vmem:[#allocation12 + $0x268] sm:$0xff]
    %v7343 = vld [vmem:[#allocation12 + $0x270] sm:$0xff]
    %v7344 = vld [vmem:[#allocation12 + $0x278] sm:$0xff]
    %v7345 = vld [vmem:[#allocation12 + $0x280] sm:$0xff]
    %v7346 = vld [vmem:[#allocation12 + $0x288] sm:$0xff]
    %v7347 = vld [vmem:[#allocation12 + $0x290] sm:$0xff]
    %v7348 = vld [vmem:[#allocation12 + $0x298] sm:$0xff]
    %v7349 = vld [vmem:[#allocation12 + $0x2a0] sm:$0xff]
    %v7350 = vld [vmem:[#allocation12 + $0x2a8] sm:$0xff]
    %v7351 = vld [vmem:[#allocation12 + $0x2b0] sm:$0xff]
    %v7352 = vld [vmem:[#allocation12 + $0x2b8] sm:$0xff]
    %v7353 = vld [vmem:[#allocation12 + $0x2c0] sm:$0xff]
    %v7354 = vld [vmem:[#allocation12 + $0x2c8] sm:$0xff]
    %v7355 = vld [vmem:[#allocation12 + $0x2d0] sm:$0xff]
    %v7356 = vld [vmem:[#allocation12 + $0x2d8] sm:$0xff]
    %v7357 = vld [vmem:[#allocation12 + $0x2e0] sm:$0xff]
    %v7358 = vld [vmem:[#allocation12 + $0x2e8] sm:$0xff]
    %v7359 = vld [vmem:[#allocation12 + $0x2f0] sm:$0xff]
    %v7360 = vld [vmem:[#allocation12 + $0x2f8] sm:$0xff]
    %v7361 = vld [vmem:[#allocation12 + $0x300] sm:$0xff]
    %v7362 = vld [vmem:[#allocation12 + $0x308] sm:$0xff]
    %v7363 = vld [vmem:[#allocation12 + $0x310] sm:$0xff]
    %v7364 = vld [vmem:[#allocation12 + $0x318] sm:$0xff]
    %v7365 = vld [vmem:[#allocation12 + $0x320] sm:$0xff]
    %v7366 = vld [vmem:[#allocation12 + $0x328] sm:$0xff]
    %v7367 = vld [vmem:[#allocation12 + $0x330] sm:$0xff]
    %v7368 = vld [vmem:[#allocation12 + $0x338] sm:$0xff]
    %v7369 = vld [vmem:[#allocation12 + $0x340] sm:$0xff]
    %v7370 = vld [vmem:[#allocation12 + $0x348] sm:$0xff]
    %v7371 = vld [vmem:[#allocation12 + $0x350] sm:$0xff]
    %v7372 = vld [vmem:[#allocation12 + $0x358] sm:$0xff]
    %v7373 = vld [vmem:[#allocation12 + $0x360] sm:$0xff]
    %v7374 = vld [vmem:[#allocation12 + $0x368] sm:$0xff]
    %v7375 = vld [vmem:[#allocation12 + $0x370] sm:$0xff]
    %v7376 = vld [vmem:[#allocation12 + $0x378] sm:$0xff]
    %v7377 = vld [vmem:[#allocation12 + $0x380] sm:$0xff]
    %v7378 = vld [vmem:[#allocation12 + $0x388] sm:$0xff]
    %v7379 = vld [vmem:[#allocation12 + $0x390] sm:$0xff]
    %v7380 = vld [vmem:[#allocation12 + $0x398] sm:$0xff]
    %v7381 = vld [vmem:[#allocation12 + $0x3a0] sm:$0xff]
    %v7382 = vld [vmem:[#allocation12 + $0x3a8] sm:$0xff]
    %v7383 = vld [vmem:[#allocation12 + $0x3b0] sm:$0xff]
    %v7384 = vld [vmem:[#allocation12 + $0x3b8] sm:$0xff]
    %v7385 = vld [vmem:[#allocation12 + $0x3c0] sm:$0xff]
    %v7386 = vld [vmem:[#allocation12 + $0x3c8] sm:$0xff]
    %v7387 = vld [vmem:[#allocation12 + $0x3d0] sm:$0xff]
    %v7388 = vld [vmem:[#allocation12 + $0x3d8] sm:$0xff]
    %v7389 = vld [vmem:[#allocation12 + $0x3e0] sm:$0xff]
    %v7390 = vld [vmem:[#allocation12 + $0x3e8] sm:$0xff]
    %v7391 = vld [vmem:[#allocation12 + $0x3f0] sm:$0xff]
    %v7392 = vld [vmem:[#allocation12 + $0x3f8] sm:$0xff]
    %v7393 = vld [vmem:[#allocation12 + $0x400] sm:$0xff]
    %v7394 = vld [vmem:[#allocation12 + $0x408] sm:$0xff]
    %v7395 = vld [vmem:[#allocation12 + $0x410] sm:$0xff]
    %v7396 = vld [vmem:[#allocation12 + $0x418] sm:$0xff]
    %v7397 = vld [vmem:[#allocation12 + $0x420] sm:$0xff]
    %v7398 = vld [vmem:[#allocation12 + $0x428] sm:$0xff]
    %v7399 = vld [vmem:[#allocation12 + $0x430] sm:$0xff]
    %v7400 = vld [vmem:[#allocation12 + $0x438] sm:$0xff]
    %v7401 = vld [vmem:[#allocation12 + $0x440] sm:$0xff]
    %v7402 = vld [vmem:[#allocation12 + $0x448] sm:$0xff]
    %v7403 = vld [vmem:[#allocation12 + $0x450] sm:$0xff]
    %v7404 = vld [vmem:[#allocation12 + $0x458] sm:$0xff]
    %v7405 = vld [vmem:[#allocation12 + $0x460] sm:$0xff]
    %v7406 = vld [vmem:[#allocation12 + $0x468] sm:$0xff]
    %v7407 = vld [vmem:[#allocation12 + $0x470] sm:$0xff]
    %v7408 = vld [vmem:[#allocation12 + $0x478] sm:$0xff]
    %v7409 = vld [vmem:[#allocation12 + $0x480] sm:$0xff]
    %v7410 = vld [vmem:[#allocation12 + $0x488] sm:$0xff]
    %v7411 = vld [vmem:[#allocation12 + $0x490] sm:$0xff]
    %v7412 = vld [vmem:[#allocation12 + $0x498] sm:$0xff]
    %v7413 = vld [vmem:[#allocation12 + $0x4a0] sm:$0xff]
    %v7414 = vld [vmem:[#allocation12 + $0x4a8] sm:$0xff]
    %v7415 = vld [vmem:[#allocation12 + $0x4b0] sm:$0xff]
    %v7416 = vld [vmem:[#allocation12 + $0x4b8] sm:$0xff]
    %v7417 = vld [vmem:[#allocation12 + $0x4c0] sm:$0xff]
    %v7418 = vld [vmem:[#allocation12 + $0x4c8] sm:$0xff]
    %v7419 = vld [vmem:[#allocation12 + $0x4d0] sm:$0xff]
    %v7420 = vld [vmem:[#allocation12 + $0x4d8] sm:$0xff]
    %v7421 = vld [vmem:[#allocation12 + $0x4e0] sm:$0xff]
    %v7422 = vld [vmem:[#allocation12 + $0x4e8] sm:$0xff]
    %v7423 = vld [vmem:[#allocation12 + $0x4f0] sm:$0xff]
    %v7424 = vld [vmem:[#allocation12 + $0x4f8] sm:$0xff]
    %v7425 = vld [vmem:[#allocation12 + $0x500] sm:$0xff]
    %v7426 = vld [vmem:[#allocation12 + $0x508] sm:$0xff]
    %v7427 = vld [vmem:[#allocation12 + $0x510] sm:$0xff]
    %v7428 = vld [vmem:[#allocation12 + $0x518] sm:$0xff]
    %v7429 = vld [vmem:[#allocation12 + $0x520] sm:$0xff]
    %v7430 = vld [vmem:[#allocation12 + $0x528] sm:$0xff]
    %v7431 = vld [vmem:[#allocation12 + $0x530] sm:$0xff]
    %v7432 = vld [vmem:[#allocation12 + $0x538] sm:$0xff]
    %v7433 = vld [vmem:[#allocation12 + $0x540] sm:$0xff]
    %v7434 = vld [vmem:[#allocation12 + $0x548] sm:$0xff]
    %v7435 = vld [vmem:[#allocation12 + $0x550] sm:$0xff]
    %v7436 = vld [vmem:[#allocation12 + $0x558] sm:$0xff]
    %v7437 = vld [vmem:[#allocation12 + $0x560] sm:$0xff]
    %v7438 = vld [vmem:[#allocation12 + $0x568] sm:$0xff]
    %v7439 = vld [vmem:[#allocation12 + $0x570] sm:$0xff]
    %v7440 = vld [vmem:[#allocation12 + $0x578] sm:$0xff]
    %v7441 = vld [vmem:[#allocation12 + $0x580] sm:$0xff]
    %v7442 = vld [vmem:[#allocation12 + $0x588] sm:$0xff]
    %v7443 = vld [vmem:[#allocation12 + $0x590] sm:$0xff]
    %v7444 = vld [vmem:[#allocation12 + $0x598] sm:$0xff]
    %v7445 = vld [vmem:[#allocation12 + $0x5a0] sm:$0xff]
    %v7446 = vld [vmem:[#allocation12 + $0x5a8] sm:$0xff]
    %v7447 = vld [vmem:[#allocation12 + $0x5b0] sm:$0xff]
    %v7448 = vld [vmem:[#allocation12 + $0x5b8] sm:$0xff]
    %v7449 = vld [vmem:[#allocation12 + $0x5c0] sm:$0xff]
    %v7450 = vld [vmem:[#allocation12 + $0x5c8] sm:$0xff]
    %v7451 = vld [vmem:[#allocation12 + $0x5d0] sm:$0xff]
    %v7452 = vld [vmem:[#allocation12 + $0x5d8] sm:$0xff]
    %v7453 = vld [vmem:[#allocation12 + $0x5e0] sm:$0xff]
    %v7454 = vld [vmem:[#allocation12 + $0x5e8] sm:$0xff]
    %v7455 = vld [vmem:[#allocation12 + $0x5f0] sm:$0xff]
    %v7456 = vld [vmem:[#allocation12 + $0x5f8] sm:$0xff]
    %v7457 = vld [vmem:[#allocation12 + $0x600] sm:$0xff]
    %v7458 = vld [vmem:[#allocation12 + $0x608] sm:$0xff]
    %v7459 = vld [vmem:[#allocation12 + $0x610] sm:$0xff]
    %v7460 = vld [vmem:[#allocation12 + $0x618] sm:$0xff]
    %v7461 = vld [vmem:[#allocation12 + $0x620] sm:$0xff]
    %v7462 = vld [vmem:[#allocation12 + $0x628] sm:$0xff]
    %v7463 = vld [vmem:[#allocation12 + $0x630] sm:$0xff]
    %v7464 = vld [vmem:[#allocation12 + $0x638] sm:$0xff]
    %v7465 = vld [vmem:[#allocation12 + $0x640] sm:$0xff]
    %v7466 = vld [vmem:[#allocation12 + $0x648] sm:$0xff]
    %v7467 = vld [vmem:[#allocation12 + $0x650] sm:$0xff]
    %v7468 = vld [vmem:[#allocation12 + $0x658] sm:$0xff]
    %v7469 = vld [vmem:[#allocation12 + $0x660] sm:$0xff]
    %v7470 = vld [vmem:[#allocation12 + $0x668] sm:$0xff]
    %v7471 = vld [vmem:[#allocation12 + $0x670] sm:$0xff]
    %v7472 = vld [vmem:[#allocation12 + $0x678] sm:$0xff]
    %v7473 = vld [vmem:[#allocation12 + $0x680] sm:$0xff]
    %v7474 = vld [vmem:[#allocation12 + $0x688] sm:$0xff]
    %v7475 = vld [vmem:[#allocation12 + $0x690] sm:$0xff]
    %v7476 = vld [vmem:[#allocation12 + $0x698] sm:$0xff]
    %v7477 = vld [vmem:[#allocation12 + $0x6a0] sm:$0xff]
    %v7478 = vld [vmem:[#allocation12 + $0x6a8] sm:$0xff]
    %v7479 = vld [vmem:[#allocation12 + $0x6b0] sm:$0xff]
    %v7480 = vld [vmem:[#allocation12 + $0x6b8] sm:$0xff]
    %v7481 = vld [vmem:[#allocation12 + $0x6c0] sm:$0xff]
    %v7482 = vld [vmem:[#allocation12 + $0x6c8] sm:$0xff]
    %v7483 = vld [vmem:[#allocation12 + $0x6d0] sm:$0xff]
    %v7484 = vld [vmem:[#allocation12 + $0x6d8] sm:$0xff]
    %v7485 = vld [vmem:[#allocation12 + $0x6e0] sm:$0xff]
    %v7486 = vld [vmem:[#allocation12 + $0x6e8] sm:$0xff]
    %v7487 = vld [vmem:[#allocation12 + $0x6f0] sm:$0xff]
    %v7488 = vld [vmem:[#allocation12 + $0x6f8] sm:$0xff]
    %v7489 = vld [vmem:[#allocation12 + $0x700] sm:$0xff]
    %v7490 = vld [vmem:[#allocation12 + $0x708] sm:$0xff]
    %v7491 = vld [vmem:[#allocation12 + $0x710] sm:$0xff]
    %v7492 = vld [vmem:[#allocation12 + $0x718] sm:$0xff]
    %v7493 = vld [vmem:[#allocation12 + $0x720] sm:$0xff]
    %v7494 = vld [vmem:[#allocation12 + $0x728] sm:$0xff]
    %v7495 = vld [vmem:[#allocation12 + $0x730] sm:$0xff]
    %v7496 = vld [vmem:[#allocation12 + $0x738] sm:$0xff]
    %v7497 = vld [vmem:[#allocation12 + $0x740] sm:$0xff]
    %v7498 = vld [vmem:[#allocation12 + $0x748] sm:$0xff]
    %v7499 = vld [vmem:[#allocation12 + $0x750] sm:$0xff]
    %v7500 = vld [vmem:[#allocation12 + $0x758] sm:$0xff]
    %v7501 = vld [vmem:[#allocation12 + $0x760] sm:$0xff]
    %v7502 = vld [vmem:[#allocation12 + $0x768] sm:$0xff]
    %v7503 = vld [vmem:[#allocation12 + $0x770] sm:$0xff]
    %v7504 = vld [vmem:[#allocation12 + $0x778] sm:$0xff]
    %v7505 = vld [vmem:[#allocation12 + $0x780] sm:$0xff]
    %v7506 = vld [vmem:[#allocation12 + $0x788] sm:$0xff]
    %v7507 = vld [vmem:[#allocation12 + $0x790] sm:$0xff]
    %v7508 = vld [vmem:[#allocation12 + $0x798] sm:$0xff]
    %v7509 = vld [vmem:[#allocation12 + $0x7a0] sm:$0xff]
    %v7510 = vld [vmem:[#allocation12 + $0x7a8] sm:$0xff]
    %v7511 = vld [vmem:[#allocation12 + $0x7b0] sm:$0xff]
    %v7512 = vld [vmem:[#allocation12 + $0x7b8] sm:$0xff]
    %v7513 = vld [vmem:[#allocation12 + $0x7c0] sm:$0xff]
    %v7514 = vld [vmem:[#allocation12 + $0x7c8] sm:$0xff]
    %v7515 = vld [vmem:[#allocation12 + $0x7d0] sm:$0xff]
    %v7516 = vld [vmem:[#allocation12 + $0x7d8] sm:$0xff]
    %v7517 = vld [vmem:[#allocation12 + $0x7e0] sm:$0xff]
    %v7518 = vld [vmem:[#allocation12 + $0x7e8] sm:$0xff]
    %v7519 = vld [vmem:[#allocation12 + $0x7f0] sm:$0xff]
    %v7520 = vld [vmem:[#allocation12 + $0x7f8] sm:$0xff]
    %s7521 = scalar_lea.vmem [#allocation15], 6
    %v7522 = vld [vmem:[%s7521] ss:$8 sm:$0xf]
    %v7523 = vld [vmem:[%s7521] ss:$8 sm:$0xf0]
    %v7524 = vor.u32 %v7522, %v7523
    %v7526 = vperm.slane %v7524, 0
    %v7527 = vperm.slane %v7524, 1
    %v7528 = vperm.slane %v7524, 2
    %v7529 = vperm.slane %v7524, 3
    %v7530 = vperm.slane %v7524, 4
    %v7531 = vperm.slane %v7524, 5
    %v7532 = vperm.slane %v7524, 6
    %v7533 = vperm.slane %v7524, 7
    %v7798 = vunpack.c.l.b16 %v7265
    %v7799 = vunpack.c.h.b16 %v7265
    %v7800 = vunpack.c.l.b16 %v7266
    %v7801 = vunpack.c.h.b16 %v7266
    %v7802 = vunpack.c.l.b16 %v7267
    %v7803 = vunpack.c.h.b16 %v7267
    %v7804 = vunpack.c.l.b16 %v7268
    %v7805 = vunpack.c.h.b16 %v7268
    %v7806 = vunpack.c.l.b16 %v7269
    %v7807 = vunpack.c.h.b16 %v7269
    %v7808 = vunpack.c.l.b16 %v7270
    %v7809 = vunpack.c.h.b16 %v7270
    %v7810 = vunpack.c.l.b16 %v7271
    %v7811 = vunpack.c.h.b16 %v7271
    %v7812 = vunpack.c.l.b16 %v7272
    %v7813 = vunpack.c.h.b16 %v7272
    %v7814 = vunpack.c.l.b16 %v7273
    %v7815 = vunpack.c.h.b16 %v7273
    %v7816 = vunpack.c.l.b16 %v7274
    %v7817 = vunpack.c.h.b16 %v7274
    %v7818 = vunpack.c.l.b16 %v7275
    %v7819 = vunpack.c.h.b16 %v7275
    %v7820 = vunpack.c.l.b16 %v7276
    %v7821 = vunpack.c.h.b16 %v7276
    %v7822 = vunpack.c.l.b16 %v7277
    %v7823 = vunpack.c.h.b16 %v7277
    %v7824 = vunpack.c.l.b16 %v7278
    %v7825 = vunpack.c.h.b16 %v7278
    %v7826 = vunpack.c.l.b16 %v7279
    %v7827 = vunpack.c.h.b16 %v7279
    %v7828 = vunpack.c.l.b16 %v7280
    %v7829 = vunpack.c.h.b16 %v7280
    %v7830 = vunpack.c.l.b16 %v7281
    %v7831 = vunpack.c.h.b16 %v7281
    %v7832 = vunpack.c.l.b16 %v7282
    %v7833 = vunpack.c.h.b16 %v7282
    %v7834 = vunpack.c.l.b16 %v7283
    %v7835 = vunpack.c.h.b16 %v7283
    %v7836 = vunpack.c.l.b16 %v7284
    %v7837 = vunpack.c.h.b16 %v7284
    %v7838 = vunpack.c.l.b16 %v7285
    %v7839 = vunpack.c.h.b16 %v7285
    %v7840 = vunpack.c.l.b16 %v7286
    %v7841 = vunpack.c.h.b16 %v7286
    %v7842 = vunpack.c.l.b16 %v7287
    %v7843 = vunpack.c.h.b16 %v7287
    %v7844 = vunpack.c.l.b16 %v7288
    %v7845 = vunpack.c.h.b16 %v7288
    %v7846 = vunpack.c.l.b16 %v7289
    %v7847 = vunpack.c.h.b16 %v7289
    %v7848 = vunpack.c.l.b16 %v7290
    %v7849 = vunpack.c.h.b16 %v7290
    %v7850 = vunpack.c.l.b16 %v7291
    %v7851 = vunpack.c.h.b16 %v7291
    %v7852 = vunpack.c.l.b16 %v7292
    %v7853 = vunpack.c.h.b16 %v7292
    %v7854 = vunpack.c.l.b16 %v7293
    %v7855 = vunpack.c.h.b16 %v7293
    %v7856 = vunpack.c.l.b16 %v7294
    %v7857 = vunpack.c.h.b16 %v7294
    %v7858 = vunpack.c.l.b16 %v7295
    %v7859 = vunpack.c.h.b16 %v7295
    %v7860 = vunpack.c.l.b16 %v7296
    %v7861 = vunpack.c.h.b16 %v7296
    %v7862 = vunpack.c.l.b16 %v7297
    %v7863 = vunpack.c.h.b16 %v7297
    %v7864 = vunpack.c.l.b16 %v7298
    %v7865 = vunpack.c.h.b16 %v7298
    %v7866 = vunpack.c.l.b16 %v7299
    %v7867 = vunpack.c.h.b16 %v7299
    %v7868 = vunpack.c.l.b16 %v7300
    %v7869 = vunpack.c.h.b16 %v7300
    %v7870 = vunpack.c.l.b16 %v7301
    %v7871 = vunpack.c.h.b16 %v7301
    %v7872 = vunpack.c.l.b16 %v7302
    %v7873 = vunpack.c.h.b16 %v7302
    %v7874 = vunpack.c.l.b16 %v7303
    %v7875 = vunpack.c.h.b16 %v7303
    %v7876 = vunpack.c.l.b16 %v7304
    %v7877 = vunpack.c.h.b16 %v7304
    %v7878 = vunpack.c.l.b16 %v7305
    %v7879 = vunpack.c.h.b16 %v7305
    %v7880 = vunpack.c.l.b16 %v7306
    %v7881 = vunpack.c.h.b16 %v7306
    %v7882 = vunpack.c.l.b16 %v7307
    %v7883 = vunpack.c.h.b16 %v7307
    %v7884 = vunpack.c.l.b16 %v7308
    %v7885 = vunpack.c.h.b16 %v7308
    %v7886 = vunpack.c.l.b16 %v7309
    %v7887 = vunpack.c.h.b16 %v7309
    %v7888 = vunpack.c.l.b16 %v7310
    %v7889 = vunpack.c.h.b16 %v7310
    %v7890 = vunpack.c.l.b16 %v7311
    %v7891 = vunpack.c.h.b16 %v7311
    %v7892 = vunpack.c.l.b16 %v7312
    %v7893 = vunpack.c.h.b16 %v7312
    %v7894 = vunpack.c.l.b16 %v7313
    %v7895 = vunpack.c.h.b16 %v7313
    %v7896 = vunpack.c.l.b16 %v7314
    %v7897 = vunpack.c.h.b16 %v7314
    %v7898 = vunpack.c.l.b16 %v7315
    %v7899 = vunpack.c.h.b16 %v7315
    %v7900 = vunpack.c.l.b16 %v7316
    %v7901 = vunpack.c.h.b16 %v7316
    %v7902 = vunpack.c.l.b16 %v7317
    %v7903 = vunpack.c.h.b16 %v7317
    %v7904 = vunpack.c.l.b16 %v7318
    %v7905 = vunpack.c.h.b16 %v7318
    %v7906 = vunpack.c.l.b16 %v7319
    %v7907 = vunpack.c.h.b16 %v7319
    %v7908 = vunpack.c.l.b16 %v7320
    %v7909 = vunpack.c.h.b16 %v7320
    %v7910 = vunpack.c.l.b16 %v7321
    %v7911 = vunpack.c.h.b16 %v7321
    %v7912 = vunpack.c.l.b16 %v7322
    %v7913 = vunpack.c.h.b16 %v7322
    %v7914 = vunpack.c.l.b16 %v7323
    %v7915 = vunpack.c.h.b16 %v7323
    %v7916 = vunpack.c.l.b16 %v7324
    %v7917 = vunpack.c.h.b16 %v7324
    %v7918 = vunpack.c.l.b16 %v7325
    %v7919 = vunpack.c.h.b16 %v7325
    %v7920 = vunpack.c.l.b16 %v7326
    %v7921 = vunpack.c.h.b16 %v7326
    %v7922 = vunpack.c.l.b16 %v7327
    %v7923 = vunpack.c.h.b16 %v7327
    %v7924 = vunpack.c.l.b16 %v7328
    %v7925 = vunpack.c.h.b16 %v7328
    %v7926 = vunpack.c.l.b16 %v7329
    %v7927 = vunpack.c.h.b16 %v7329
    %v7928 = vunpack.c.l.b16 %v7330
    %v7929 = vunpack.c.h.b16 %v7330
    %v7930 = vunpack.c.l.b16 %v7331
    %v7931 = vunpack.c.h.b16 %v7331
    %v7932 = vunpack.c.l.b16 %v7332
    %v7933 = vunpack.c.h.b16 %v7332
    %v7934 = vunpack.c.l.b16 %v7333
    %v7935 = vunpack.c.h.b16 %v7333
    %v7936 = vunpack.c.l.b16 %v7334
    %v7937 = vunpack.c.h.b16 %v7334
    %v7938 = vunpack.c.l.b16 %v7335
    %v7939 = vunpack.c.h.b16 %v7335
    %v7940 = vunpack.c.l.b16 %v7336
    %v7941 = vunpack.c.h.b16 %v7336
    %v7942 = vunpack.c.l.b16 %v7337
    %v7943 = vunpack.c.h.b16 %v7337
    %v7944 = vunpack.c.l.b16 %v7338
    %v7945 = vunpack.c.h.b16 %v7338
    %v7946 = vunpack.c.l.b16 %v7339
    %v7947 = vunpack.c.h.b16 %v7339
    %v7948 = vunpack.c.l.b16 %v7340
    %v7949 = vunpack.c.h.b16 %v7340
    %v7950 = vunpack.c.l.b16 %v7341
    %v7951 = vunpack.c.h.b16 %v7341
    %v7952 = vunpack.c.l.b16 %v7342
    %v7953 = vunpack.c.h.b16 %v7342
    %v7954 = vunpack.c.l.b16 %v7343
    %v7955 = vunpack.c.h.b16 %v7343
    %v7956 = vunpack.c.l.b16 %v7344
    %v7957 = vunpack.c.h.b16 %v7344
    %v7958 = vunpack.c.l.b16 %v7345
    %v7959 = vunpack.c.h.b16 %v7345
    %v7960 = vunpack.c.l.b16 %v7346
    %v7961 = vunpack.c.h.b16 %v7346
    %v7962 = vunpack.c.l.b16 %v7347
    %v7963 = vunpack.c.h.b16 %v7347
    %v7964 = vunpack.c.l.b16 %v7348
    %v7965 = vunpack.c.h.b16 %v7348
    %v7966 = vunpack.c.l.b16 %v7349
    %v7967 = vunpack.c.h.b16 %v7349
    %v7968 = vunpack.c.l.b16 %v7350
    %v7969 = vunpack.c.h.b16 %v7350
    %v7970 = vunpack.c.l.b16 %v7351
    %v7971 = vunpack.c.h.b16 %v7351
    %v7972 = vunpack.c.l.b16 %v7352
    %v7973 = vunpack.c.h.b16 %v7352
    %v7974 = vunpack.c.l.b16 %v7353
    %v7975 = vunpack.c.h.b16 %v7353
    %v7976 = vunpack.c.l.b16 %v7354
    %v7977 = vunpack.c.h.b16 %v7354
    %v7978 = vunpack.c.l.b16 %v7355
    %v7979 = vunpack.c.h.b16 %v7355
    %v7980 = vunpack.c.l.b16 %v7356
    %v7981 = vunpack.c.h.b16 %v7356
    %v7982 = vunpack.c.l.b16 %v7357
    %v7983 = vunpack.c.h.b16 %v7357
    %v7984 = vunpack.c.l.b16 %v7358
    %v7985 = vunpack.c.h.b16 %v7358
    %v7986 = vunpack.c.l.b16 %v7359
    %v7987 = vunpack.c.h.b16 %v7359
    %v7988 = vunpack.c.l.b16 %v7360
    %v7989 = vunpack.c.h.b16 %v7360
    %v7990 = vunpack.c.l.b16 %v7361
    %v7991 = vunpack.c.h.b16 %v7361
    %v7992 = vunpack.c.l.b16 %v7362
    %v7993 = vunpack.c.h.b16 %v7362
    %v7994 = vunpack.c.l.b16 %v7363
    %v7995 = vunpack.c.h.b16 %v7363
    %v7996 = vunpack.c.l.b16 %v7364
    %v7997 = vunpack.c.h.b16 %v7364
    %v7998 = vunpack.c.l.b16 %v7365
    %v7999 = vunpack.c.h.b16 %v7365
    %v8000 = vunpack.c.l.b16 %v7366
    %v8001 = vunpack.c.h.b16 %v7366
    %v8002 = vunpack.c.l.b16 %v7367
    %v8003 = vunpack.c.h.b16 %v7367
    %v8004 = vunpack.c.l.b16 %v7368
    %v8005 = vunpack.c.h.b16 %v7368
    %v8006 = vunpack.c.l.b16 %v7369
    %v8007 = vunpack.c.h.b16 %v7369
    %v8008 = vunpack.c.l.b16 %v7370
    %v8009 = vunpack.c.h.b16 %v7370
    %v8010 = vunpack.c.l.b16 %v7371
    %v8011 = vunpack.c.h.b16 %v7371
    %v8012 = vunpack.c.l.b16 %v7372
    %v8013 = vunpack.c.h.b16 %v7372
    %v8014 = vunpack.c.l.b16 %v7373
    %v8015 = vunpack.c.h.b16 %v7373
    %v8016 = vunpack.c.l.b16 %v7374
    %v8017 = vunpack.c.h.b16 %v7374
    %v8018 = vunpack.c.l.b16 %v7375
    %v8019 = vunpack.c.h.b16 %v7375
    %v8020 = vunpack.c.l.b16 %v7376
    %v8021 = vunpack.c.h.b16 %v7376
    %v8022 = vunpack.c.l.b16 %v7377
    %v8023 = vunpack.c.h.b16 %v7377
    %v8024 = vunpack.c.l.b16 %v7378
    %v8025 = vunpack.c.h.b16 %v7378
    %v8026 = vunpack.c.l.b16 %v7379
    %v8027 = vunpack.c.h.b16 %v7379
    %v8028 = vunpack.c.l.b16 %v7380
    %v8029 = vunpack.c.h.b16 %v7380
    %v8030 = vunpack.c.l.b16 %v7381
    %v8031 = vunpack.c.h.b16 %v7381
    %v8032 = vunpack.c.l.b16 %v7382
    %v8033 = vunpack.c.h.b16 %v7382
    %v8034 = vunpack.c.l.b16 %v7383
    %v8035 = vunpack.c.h.b16 %v7383
    %v8036 = vunpack.c.l.b16 %v7384
    %v8037 = vunpack.c.h.b16 %v7384
    %v8038 = vunpack.c.l.b16 %v7385
    %v8039 = vunpack.c.h.b16 %v7385
    %v8040 = vunpack.c.l.b16 %v7386
    %v8041 = vunpack.c.h.b16 %v7386
    %v8042 = vunpack.c.l.b16 %v7387
    %v8043 = vunpack.c.h.b16 %v7387
    %v8044 = vunpack.c.l.b16 %v7388
    %v8045 = vunpack.c.h.b16 %v7388
    %v8046 = vunpack.c.l.b16 %v7389
    %v8047 = vunpack.c.h.b16 %v7389
    %v8048 = vunpack.c.l.b16 %v7390
    %v8049 = vunpack.c.h.b16 %v7390
    %v8050 = vunpack.c.l.b16 %v7391
    %v8051 = vunpack.c.h.b16 %v7391
    %v8052 = vunpack.c.l.b16 %v7392
    %v8053 = vunpack.c.h.b16 %v7392
    %v8054 = vunpack.c.l.b16 %v7393
    %v8055 = vunpack.c.h.b16 %v7393
    %v8056 = vunpack.c.l.b16 %v7394
    %v8057 = vunpack.c.h.b16 %v7394
    %v8058 = vunpack.c.l.b16 %v7395
    %v8059 = vunpack.c.h.b16 %v7395
    %v8060 = vunpack.c.l.b16 %v7396
    %v8061 = vunpack.c.h.b16 %v7396
    %v8062 = vunpack.c.l.b16 %v7397
    %v8063 = vunpack.c.h.b16 %v7397
    %v8064 = vunpack.c.l.b16 %v7398
    %v8065 = vunpack.c.h.b16 %v7398
    %v8066 = vunpack.c.l.b16 %v7399
    %v8067 = vunpack.c.h.b16 %v7399
    %v8068 = vunpack.c.l.b16 %v7400
    %v8069 = vunpack.c.h.b16 %v7400
    %v8070 = vunpack.c.l.b16 %v7401
    %v8071 = vunpack.c.h.b16 %v7401
    %v8072 = vunpack.c.l.b16 %v7402
    %v8073 = vunpack.c.h.b16 %v7402
    %v8074 = vunpack.c.l.b16 %v7403
    %v8075 = vunpack.c.h.b16 %v7403
    %v8076 = vunpack.c.l.b16 %v7404
    %v8077 = vunpack.c.h.b16 %v7404
    %v8078 = vunpack.c.l.b16 %v7405
    %v8079 = vunpack.c.h.b16 %v7405
    %v8080 = vunpack.c.l.b16 %v7406
    %v8081 = vunpack.c.h.b16 %v7406
    %v8082 = vunpack.c.l.b16 %v7407
    %v8083 = vunpack.c.h.b16 %v7407
    %v8084 = vunpack.c.l.b16 %v7408
    %v8085 = vunpack.c.h.b16 %v7408
    %v8086 = vunpack.c.l.b16 %v7409
    %v8087 = vunpack.c.h.b16 %v7409
    %v8088 = vunpack.c.l.b16 %v7410
    %v8089 = vunpack.c.h.b16 %v7410
    %v8090 = vunpack.c.l.b16 %v7411
    %v8091 = vunpack.c.h.b16 %v7411
    %v8092 = vunpack.c.l.b16 %v7412
    %v8093 = vunpack.c.h.b16 %v7412
    %v8094 = vunpack.c.l.b16 %v7413
    %v8095 = vunpack.c.h.b16 %v7413
    %v8096 = vunpack.c.l.b16 %v7414
    %v8097 = vunpack.c.h.b16 %v7414
    %v8098 = vunpack.c.l.b16 %v7415
    %v8099 = vunpack.c.h.b16 %v7415
    %v8100 = vunpack.c.l.b16 %v7416
    %v8101 = vunpack.c.h.b16 %v7416
    %v8102 = vunpack.c.l.b16 %v7417
    %v8103 = vunpack.c.h.b16 %v7417
    %v8104 = vunpack.c.l.b16 %v7418
    %v8105 = vunpack.c.h.b16 %v7418
    %v8106 = vunpack.c.l.b16 %v7419
    %v8107 = vunpack.c.h.b16 %v7419
    %v8108 = vunpack.c.l.b16 %v7420
    %v8109 = vunpack.c.h.b16 %v7420
    %v8110 = vunpack.c.l.b16 %v7421
    %v8111 = vunpack.c.h.b16 %v7421
    %v8112 = vunpack.c.l.b16 %v7422
    %v8113 = vunpack.c.h.b16 %v7422
    %v8114 = vunpack.c.l.b16 %v7423
    %v8115 = vunpack.c.h.b16 %v7423
    %v8116 = vunpack.c.l.b16 %v7424
    %v8117 = vunpack.c.h.b16 %v7424
    %v8118 = vunpack.c.l.b16 %v7425
    %v8119 = vunpack.c.h.b16 %v7425
    %v8120 = vunpack.c.l.b16 %v7426
    %v8121 = vunpack.c.h.b16 %v7426
    %v8122 = vunpack.c.l.b16 %v7427
    %v8123 = vunpack.c.h.b16 %v7427
    %v8124 = vunpack.c.l.b16 %v7428
    %v8125 = vunpack.c.h.b16 %v7428
    %v8126 = vunpack.c.l.b16 %v7429
    %v8127 = vunpack.c.h.b16 %v7429
    %v8128 = vunpack.c.l.b16 %v7430
    %v8129 = vunpack.c.h.b16 %v7430
    %v8130 = vunpack.c.l.b16 %v7431
    %v8131 = vunpack.c.h.b16 %v7431
    %v8132 = vunpack.c.l.b16 %v7432
    %v8133 = vunpack.c.h.b16 %v7432
    %v8134 = vunpack.c.l.b16 %v7433
    %v8135 = vunpack.c.h.b16 %v7433
    %v8136 = vunpack.c.l.b16 %v7434
    %v8137 = vunpack.c.h.b16 %v7434
    %v8138 = vunpack.c.l.b16 %v7435
    %v8139 = vunpack.c.h.b16 %v7435
    %v8140 = vunpack.c.l.b16 %v7436
    %v8141 = vunpack.c.h.b16 %v7436
    %v8142 = vunpack.c.l.b16 %v7437
    %v8143 = vunpack.c.h.b16 %v7437
    %v8144 = vunpack.c.l.b16 %v7438
    %v8145 = vunpack.c.h.b16 %v7438
    %v8146 = vunpack.c.l.b16 %v7439
    %v8147 = vunpack.c.h.b16 %v7439
    %v8148 = vunpack.c.l.b16 %v7440
    %v8149 = vunpack.c.h.b16 %v7440
    %v8150 = vunpack.c.l.b16 %v7441
    %v8151 = vunpack.c.h.b16 %v7441
    %v8152 = vunpack.c.l.b16 %v7442
    %v8153 = vunpack.c.h.b16 %v7442
    %v8154 = vunpack.c.l.b16 %v7443
    %v8155 = vunpack.c.h.b16 %v7443
    %v8156 = vunpack.c.l.b16 %v7444
    %v8157 = vunpack.c.h.b16 %v7444
    %v8158 = vunpack.c.l.b16 %v7445
    %v8159 = vunpack.c.h.b16 %v7445
    %v8160 = vunpack.c.l.b16 %v7446
    %v8161 = vunpack.c.h.b16 %v7446
    %v8162 = vunpack.c.l.b16 %v7447
    %v8163 = vunpack.c.h.b16 %v7447
    %v8164 = vunpack.c.l.b16 %v7448
    %v8165 = vunpack.c.h.b16 %v7448
    %v8166 = vunpack.c.l.b16 %v7449
    %v8167 = vunpack.c.h.b16 %v7449
    %v8168 = vunpack.c.l.b16 %v7450
    %v8169 = vunpack.c.h.b16 %v7450
    %v8170 = vunpack.c.l.b16 %v7451
    %v8171 = vunpack.c.h.b16 %v7451
    %v8172 = vunpack.c.l.b16 %v7452
    %v8173 = vunpack.c.h.b16 %v7452
    %v8174 = vunpack.c.l.b16 %v7453
    %v8175 = vunpack.c.h.b16 %v7453
    %v8176 = vunpack.c.l.b16 %v7454
    %v8177 = vunpack.c.h.b16 %v7454
    %v8178 = vunpack.c.l.b16 %v7455
    %v8179 = vunpack.c.h.b16 %v7455
    %v8180 = vunpack.c.l.b16 %v7456
    %v8181 = vunpack.c.h.b16 %v7456
    %v8182 = vunpack.c.l.b16 %v7457
    %v8183 = vunpack.c.h.b16 %v7457
    %v8184 = vunpack.c.l.b16 %v7458
    %v8185 = vunpack.c.h.b16 %v7458
    %v8186 = vunpack.c.l.b16 %v7459
    %v8187 = vunpack.c.h.b16 %v7459
    %v8188 = vunpack.c.l.b16 %v7460
    %v8189 = vunpack.c.h.b16 %v7460
    %v8190 = vunpack.c.l.b16 %v7461
    %v8191 = vunpack.c.h.b16 %v7461
    %v8192 = vunpack.c.l.b16 %v7462
    %v8193 = vunpack.c.h.b16 %v7462
    %v8194 = vunpack.c.l.b16 %v7463
    %v8195 = vunpack.c.h.b16 %v7463
    %v8196 = vunpack.c.l.b16 %v7464
    %v8197 = vunpack.c.h.b16 %v7464
    %v8198 = vunpack.c.l.b16 %v7465
    %v8199 = vunpack.c.h.b16 %v7465
    %v8200 = vunpack.c.l.b16 %v7466
    %v8201 = vunpack.c.h.b16 %v7466
    %v8202 = vunpack.c.l.b16 %v7467
    %v8203 = vunpack.c.h.b16 %v7467
    %v8204 = vunpack.c.l.b16 %v7468
    %v8205 = vunpack.c.h.b16 %v7468
    %v8206 = vunpack.c.l.b16 %v7469
    %v8207 = vunpack.c.h.b16 %v7469
    %v8208 = vunpack.c.l.b16 %v7470
    %v8209 = vunpack.c.h.b16 %v7470
    %v8210 = vunpack.c.l.b16 %v7471
    %v8211 = vunpack.c.h.b16 %v7471
    %v8212 = vunpack.c.l.b16 %v7472
    %v8213 = vunpack.c.h.b16 %v7472
    %v8214 = vunpack.c.l.b16 %v7473
    %v8215 = vunpack.c.h.b16 %v7473
    %v8216 = vunpack.c.l.b16 %v7474
    %v8217 = vunpack.c.h.b16 %v7474
    %v8218 = vunpack.c.l.b16 %v7475
    %v8219 = vunpack.c.h.b16 %v7475
    %v8220 = vunpack.c.l.b16 %v7476
    %v8221 = vunpack.c.h.b16 %v7476
    %v8222 = vunpack.c.l.b16 %v7477
    %v8223 = vunpack.c.h.b16 %v7477
    %v8224 = vunpack.c.l.b16 %v7478
    %v8225 = vunpack.c.h.b16 %v7478
    %v8226 = vunpack.c.l.b16 %v7479
    %v8227 = vunpack.c.h.b16 %v7479
    %v8228 = vunpack.c.l.b16 %v7480
    %v8229 = vunpack.c.h.b16 %v7480
    %v8230 = vunpack.c.l.b16 %v7481
    %v8231 = vunpack.c.h.b16 %v7481
    %v8232 = vunpack.c.l.b16 %v7482
    %v8233 = vunpack.c.h.b16 %v7482
    %v8234 = vunpack.c.l.b16 %v7483
    %v8235 = vunpack.c.h.b16 %v7483
    %v8236 = vunpack.c.l.b16 %v7484
    %v8237 = vunpack.c.h.b16 %v7484
    %v8238 = vunpack.c.l.b16 %v7485
    %v8239 = vunpack.c.h.b16 %v7485
    %v8240 = vunpack.c.l.b16 %v7486
    %v8241 = vunpack.c.h.b16 %v7486
    %v8242 = vunpack.c.l.b16 %v7487
    %v8243 = vunpack.c.h.b16 %v7487
    %v8244 = vunpack.c.l.b16 %v7488
    %v8245 = vunpack.c.h.b16 %v7488
    %v8246 = vunpack.c.l.b16 %v7489
    %v8247 = vunpack.c.h.b16 %v7489
    %v8248 = vunpack.c.l.b16 %v7490
    %v8249 = vunpack.c.h.b16 %v7490
    %v8250 = vunpack.c.l.b16 %v7491
    %v8251 = vunpack.c.h.b16 %v7491
    %v8252 = vunpack.c.l.b16 %v7492
    %v8253 = vunpack.c.h.b16 %v7492
    %v8254 = vunpack.c.l.b16 %v7493
    %v8255 = vunpack.c.h.b16 %v7493
    %v8256 = vunpack.c.l.b16 %v7494
    %v8257 = vunpack.c.h.b16 %v7494
    %v8258 = vunpack.c.l.b16 %v7495
    %v8259 = vunpack.c.h.b16 %v7495
    %v8260 = vunpack.c.l.b16 %v7496
    %v8261 = vunpack.c.h.b16 %v7496
    %v8262 = vunpack.c.l.b16 %v7497
    %v8263 = vunpack.c.h.b16 %v7497
    %v8264 = vunpack.c.l.b16 %v7498
    %v8265 = vunpack.c.h.b16 %v7498
    %v8266 = vunpack.c.l.b16 %v7499
    %v8267 = vunpack.c.h.b16 %v7499
    %v8268 = vunpack.c.l.b16 %v7500
    %v8269 = vunpack.c.h.b16 %v7500
    %v8270 = vunpack.c.l.b16 %v7501
    %v8271 = vunpack.c.h.b16 %v7501
    %v8272 = vunpack.c.l.b16 %v7502
    %v8273 = vunpack.c.h.b16 %v7502
    %v8274 = vunpack.c.l.b16 %v7503
    %v8275 = vunpack.c.h.b16 %v7503
    %v8276 = vunpack.c.l.b16 %v7504
    %v8277 = vunpack.c.h.b16 %v7504
    %v8278 = vunpack.c.l.b16 %v7505
    %v8279 = vunpack.c.h.b16 %v7505
    %v8280 = vunpack.c.l.b16 %v7506
    %v8281 = vunpack.c.h.b16 %v7506
    %v8282 = vunpack.c.l.b16 %v7507
    %v8283 = vunpack.c.h.b16 %v7507
    %v8284 = vunpack.c.l.b16 %v7508
    %v8285 = vunpack.c.h.b16 %v7508
    %v8286 = vunpack.c.l.b16 %v7509
    %v8287 = vunpack.c.h.b16 %v7509
    %v8288 = vunpack.c.l.b16 %v7510
    %v8289 = vunpack.c.h.b16 %v7510
    %v8290 = vunpack.c.l.b16 %v7511
    %v8291 = vunpack.c.h.b16 %v7511
    %v8292 = vunpack.c.l.b16 %v7512
    %v8293 = vunpack.c.h.b16 %v7512
    %v8294 = vunpack.c.l.b16 %v7513
    %v8295 = vunpack.c.h.b16 %v7513
    %v8296 = vunpack.c.l.b16 %v7514
    %v8297 = vunpack.c.h.b16 %v7514
    %v8298 = vunpack.c.l.b16 %v7515
    %v8299 = vunpack.c.h.b16 %v7515
    %v8300 = vunpack.c.l.b16 %v7516
    %v8301 = vunpack.c.h.b16 %v7516
    %v8302 = vunpack.c.l.b16 %v7517
    %v8303 = vunpack.c.h.b16 %v7517
    %v8304 = vunpack.c.l.b16 %v7518
    %v8305 = vunpack.c.h.b16 %v7518
    %v8306 = vunpack.c.l.b16 %v7519
    %v8307 = vunpack.c.h.b16 %v7519
    %v8308 = vunpack.c.l.b16 %v7520
    %v8309 = vunpack.c.h.b16 %v7520
    %v8310 = vpack.c.b16 %v7806, %v7798
    %v8311 = vpack.c.b16 %v7807, %v7799
    %v8312 = vpack.c.b16 %v7808, %v7800
    %v8313 = vpack.c.b16 %v7809, %v7801
    %v8314 = vpack.c.b16 %v7810, %v7802
    %v8315 = vpack.c.b16 %v7811, %v7803
    %v8316 = vpack.c.b16 %v7812, %v7804
    %v8317 = vpack.c.b16 %v7813, %v7805
    %v8318 = vpack.c.b16 %v7822, %v7814
    %v8319 = vpack.c.b16 %v7823, %v7815
    %v8320 = vpack.c.b16 %v7824, %v7816
    %v8321 = vpack.c.b16 %v7825, %v7817
    %v8322 = vpack.c.b16 %v7826, %v7818
    %v8323 = vpack.c.b16 %v7827, %v7819
    %v8324 = vpack.c.b16 %v7828, %v7820
    %v8325 = vpack.c.b16 %v7829, %v7821
    %v8326 = vpack.c.b16 %v7838, %v7830
    %v8327 = vpack.c.b16 %v7839, %v7831
    %v8328 = vpack.c.b16 %v7840, %v7832
    %v8329 = vpack.c.b16 %v7841, %v7833
    %v8330 = vpack.c.b16 %v7842, %v7834
    %v8331 = vpack.c.b16 %v7843, %v7835
    %v8332 = vpack.c.b16 %v7844, %v7836
    %v8333 = vpack.c.b16 %v7845, %v7837
    %v8334 = vpack.c.b16 %v7854, %v7846
    %v8335 = vpack.c.b16 %v7855, %v7847
    %v8336 = vpack.c.b16 %v7856, %v7848
    %v8337 = vpack.c.b16 %v7857, %v7849
    %v8338 = vpack.c.b16 %v7858, %v7850
    %v8339 = vpack.c.b16 %v7859, %v7851
    %v8340 = vpack.c.b16 %v7860, %v7852
    %v8341 = vpack.c.b16 %v7861, %v7853
    %v8342 = vpack.c.b16 %v7870, %v7862
    %v8343 = vpack.c.b16 %v7871, %v7863
    %v8344 = vpack.c.b16 %v7872, %v7864
    %v8345 = vpack.c.b16 %v7873, %v7865
    %v8346 = vpack.c.b16 %v7874, %v7866
    %v8347 = vpack.c.b16 %v7875, %v7867
    %v8348 = vpack.c.b16 %v7876, %v7868
    %v8349 = vpack.c.b16 %v7877, %v7869
    %v8350 = vpack.c.b16 %v7886, %v7878
    %v8351 = vpack.c.b16 %v7887, %v7879
    %v8352 = vpack.c.b16 %v7888, %v7880
    %v8353 = vpack.c.b16 %v7889, %v7881
    %v8354 = vpack.c.b16 %v7890, %v7882
    %v8355 = vpack.c.b16 %v7891, %v7883
    %v8356 = vpack.c.b16 %v7892, %v7884
    %v8357 = vpack.c.b16 %v7893, %v7885
    %v8358 = vpack.c.b16 %v7902, %v7894
    %v8359 = vpack.c.b16 %v7903, %v7895
    %v8360 = vpack.c.b16 %v7904, %v7896
    %v8361 = vpack.c.b16 %v7905, %v7897
    %v8362 = vpack.c.b16 %v7906, %v7898
    %v8363 = vpack.c.b16 %v7907, %v7899
    %v8364 = vpack.c.b16 %v7908, %v7900
    %v8365 = vpack.c.b16 %v7909, %v7901
    %v8366 = vpack.c.b16 %v7918, %v7910
    %v8367 = vpack.c.b16 %v7919, %v7911
    %v8368 = vpack.c.b16 %v7920, %v7912
    %v8369 = vpack.c.b16 %v7921, %v7913
    %v8370 = vpack.c.b16 %v7922, %v7914
    %v8371 = vpack.c.b16 %v7923, %v7915
    %v8372 = vpack.c.b16 %v7924, %v7916
    %v8373 = vpack.c.b16 %v7925, %v7917
    %v8374 = vpack.c.b16 %v7934, %v7926
    %v8375 = vpack.c.b16 %v7935, %v7927
    %v8376 = vpack.c.b16 %v7936, %v7928
    %v8377 = vpack.c.b16 %v7937, %v7929
    %v8378 = vpack.c.b16 %v7938, %v7930
    %v8379 = vpack.c.b16 %v7939, %v7931
    %v8380 = vpack.c.b16 %v7940, %v7932
    %v8381 = vpack.c.b16 %v7941, %v7933
    %v8382 = vpack.c.b16 %v7950, %v7942
    %v8383 = vpack.c.b16 %v7951, %v7943
    %v8384 = vpack.c.b16 %v7952, %v7944
    %v8385 = vpack.c.b16 %v7953, %v7945
    %v8386 = vpack.c.b16 %v7954, %v7946
    %v8387 = vpack.c.b16 %v7955, %v7947
    %v8388 = vpack.c.b16 %v7956, %v7948
    %v8389 = vpack.c.b16 %v7957, %v7949
    %v8390 = vpack.c.b16 %v7966, %v7958
    %v8391 = vpack.c.b16 %v7967, %v7959
    %v8392 = vpack.c.b16 %v7968, %v7960
    %v8393 = vpack.c.b16 %v7969, %v7961
    %v8394 = vpack.c.b16 %v7970, %v7962
    %v8395 = vpack.c.b16 %v7971, %v7963
    %v8396 = vpack.c.b16 %v7972, %v7964
    %v8397 = vpack.c.b16 %v7973, %v7965
    %v8398 = vpack.c.b16 %v7982, %v7974
    %v8399 = vpack.c.b16 %v7983, %v7975
    %v8400 = vpack.c.b16 %v7984, %v7976
    %v8401 = vpack.c.b16 %v7985, %v7977
    %v8402 = vpack.c.b16 %v7986, %v7978
    %v8403 = vpack.c.b16 %v7987, %v7979
    %v8404 = vpack.c.b16 %v7988, %v7980
    %v8405 = vpack.c.b16 %v7989, %v7981
    %v8406 = vpack.c.b16 %v7998, %v7990
    %v8407 = vpack.c.b16 %v7999, %v7991
    %v8408 = vpack.c.b16 %v8000, %v7992
    %v8409 = vpack.c.b16 %v8001, %v7993
    %v8410 = vpack.c.b16 %v8002, %v7994
    %v8411 = vpack.c.b16 %v8003, %v7995
    %v8412 = vpack.c.b16 %v8004, %v7996
    %v8413 = vpack.c.b16 %v8005, %v7997
    %v8414 = vpack.c.b16 %v8014, %v8006
    %v8415 = vpack.c.b16 %v8015, %v8007
    %v8416 = vpack.c.b16 %v8016, %v8008
    %v8417 = vpack.c.b16 %v8017, %v8009
    %v8418 = vpack.c.b16 %v8018, %v8010
    %v8419 = vpack.c.b16 %v8019, %v8011
    %v8420 = vpack.c.b16 %v8020, %v8012
    %v8421 = vpack.c.b16 %v8021, %v8013
    %v8422 = vpack.c.b16 %v8030, %v8022
    %v8423 = vpack.c.b16 %v8031, %v8023
    %v8424 = vpack.c.b16 %v8032, %v8024
    %v8425 = vpack.c.b16 %v8033, %v8025
    %v8426 = vpack.c.b16 %v8034, %v8026
    %v8427 = vpack.c.b16 %v8035, %v8027
    %v8428 = vpack.c.b16 %v8036, %v8028
    %v8429 = vpack.c.b16 %v8037, %v8029
    %v8430 = vpack.c.b16 %v8046, %v8038
    %v8431 = vpack.c.b16 %v8047, %v8039
    %v8432 = vpack.c.b16 %v8048, %v8040
    %v8433 = vpack.c.b16 %v8049, %v8041
    %v8434 = vpack.c.b16 %v8050, %v8042
    %v8435 = vpack.c.b16 %v8051, %v8043
    %v8436 = vpack.c.b16 %v8052, %v8044
    %v8437 = vpack.c.b16 %v8053, %v8045
    %v8438 = vpack.c.b16 %v8062, %v8054
    %v8439 = vpack.c.b16 %v8063, %v8055
    %v8440 = vpack.c.b16 %v8064, %v8056
    %v8441 = vpack.c.b16 %v8065, %v8057
    %v8442 = vpack.c.b16 %v8066, %v8058
    %v8443 = vpack.c.b16 %v8067, %v8059
    %v8444 = vpack.c.b16 %v8068, %v8060
    %v8445 = vpack.c.b16 %v8069, %v8061
    %v8446 = vpack.c.b16 %v8078, %v8070
    %v8447 = vpack.c.b16 %v8079, %v8071
    %v8448 = vpack.c.b16 %v8080, %v8072
    %v8449 = vpack.c.b16 %v8081, %v8073
    %v8450 = vpack.c.b16 %v8082, %v8074
    %v8451 = vpack.c.b16 %v8083, %v8075
    %v8452 = vpack.c.b16 %v8084, %v8076
    %v8453 = vpack.c.b16 %v8085, %v8077
    %v8454 = vpack.c.b16 %v8094, %v8086
    %v8455 = vpack.c.b16 %v8095, %v8087
    %v8456 = vpack.c.b16 %v8096, %v8088
    %v8457 = vpack.c.b16 %v8097, %v8089
    %v8458 = vpack.c.b16 %v8098, %v8090
    %v8459 = vpack.c.b16 %v8099, %v8091
    %v8460 = vpack.c.b16 %v8100, %v8092
    %v8461 = vpack.c.b16 %v8101, %v8093
    %v8462 = vpack.c.b16 %v8110, %v8102
    %v8463 = vpack.c.b16 %v8111, %v8103
    %v8464 = vpack.c.b16 %v8112, %v8104
    %v8465 = vpack.c.b16 %v8113, %v8105
    %v8466 = vpack.c.b16 %v8114, %v8106
    %v8467 = vpack.c.b16 %v8115, %v8107
    %v8468 = vpack.c.b16 %v8116, %v8108
    %v8469 = vpack.c.b16 %v8117, %v8109
    %v8470 = vpack.c.b16 %v8126, %v8118
    %v8471 = vpack.c.b16 %v8127, %v8119
    %v8472 = vpack.c.b16 %v8128, %v8120
    %v8473 = vpack.c.b16 %v8129, %v8121
    %v8474 = vpack.c.b16 %v8130, %v8122
    %v8475 = vpack.c.b16 %v8131, %v8123
    %v8476 = vpack.c.b16 %v8132, %v8124
    %v8477 = vpack.c.b16 %v8133, %v8125
    %v8478 = vpack.c.b16 %v8142, %v8134
    %v8479 = vpack.c.b16 %v8143, %v8135
    %v8480 = vpack.c.b16 %v8144, %v8136
    %v8481 = vpack.c.b16 %v8145, %v8137
    %v8482 = vpack.c.b16 %v8146, %v8138
    %v8483 = vpack.c.b16 %v8147, %v8139
    %v8484 = vpack.c.b16 %v8148, %v8140
    %v8485 = vpack.c.b16 %v8149, %v8141
    %v8486 = vpack.c.b16 %v8158, %v8150
    %v8487 = vpack.c.b16 %v8159, %v8151
    %v8488 = vpack.c.b16 %v8160, %v8152
    %v8489 = vpack.c.b16 %v8161, %v8153
    %v8490 = vpack.c.b16 %v8162, %v8154
    %v8491 = vpack.c.b16 %v8163, %v8155
    %v8492 = vpack.c.b16 %v8164, %v8156
    %v8493 = vpack.c.b16 %v8165, %v8157
    %v8494 = vpack.c.b16 %v8174, %v8166
    %v8495 = vpack.c.b16 %v8175, %v8167
    %v8496 = vpack.c.b16 %v8176, %v8168
    %v8497 = vpack.c.b16 %v8177, %v8169
    %v8498 = vpack.c.b16 %v8178, %v8170
    %v8499 = vpack.c.b16 %v8179, %v8171
    %v8500 = vpack.c.b16 %v8180, %v8172
    %v8501 = vpack.c.b16 %v8181, %v8173
    %v8502 = vpack.c.b16 %v8190, %v8182
    %v8503 = vpack.c.b16 %v8191, %v8183
    %v8504 = vpack.c.b16 %v8192, %v8184
    %v8505 = vpack.c.b16 %v8193, %v8185
    %v8506 = vpack.c.b16 %v8194, %v8186
    %v8507 = vpack.c.b16 %v8195, %v8187
    %v8508 = vpack.c.b16 %v8196, %v8188
    %v8509 = vpack.c.b16 %v8197, %v8189
    %v8510 = vpack.c.b16 %v8206, %v8198
    %v8511 = vpack.c.b16 %v8207, %v8199
    %v8512 = vpack.c.b16 %v8208, %v8200
    %v8513 = vpack.c.b16 %v8209, %v8201
    %v8514 = vpack.c.b16 %v8210, %v8202
    %v8515 = vpack.c.b16 %v8211, %v8203
    %v8516 = vpack.c.b16 %v8212, %v8204
    %v8517 = vpack.c.b16 %v8213, %v8205
    %v8518 = vpack.c.b16 %v8222, %v8214
    %v8519 = vpack.c.b16 %v8223, %v8215
    %v8520 = vpack.c.b16 %v8224, %v8216
    %v8521 = vpack.c.b16 %v8225, %v8217
    %v8522 = vpack.c.b16 %v8226, %v8218
    %v8523 = vpack.c.b16 %v8227, %v8219
    %v8524 = vpack.c.b16 %v8228, %v8220
    %v8525 = vpack.c.b16 %v8229, %v8221
    %v8526 = vpack.c.b16 %v8238, %v8230
    %v8527 = vpack.c.b16 %v8239, %v8231
    %v8528 = vpack.c.b16 %v8240, %v8232
    %v8529 = vpack.c.b16 %v8241, %v8233
    %v8530 = vpack.c.b16 %v8242, %v8234
    %v8531 = vpack.c.b16 %v8243, %v8235
    %v8532 = vpack.c.b16 %v8244, %v8236
    %v8533 = vpack.c.b16 %v8245, %v8237
    %v8534 = vpack.c.b16 %v8254, %v8246
    %v8535 = vpack.c.b16 %v8255, %v8247
    %v8536 = vpack.c.b16 %v8256, %v8248
    %v8537 = vpack.c.b16 %v8257, %v8249
    %v8538 = vpack.c.b16 %v8258, %v8250
    %v8539 = vpack.c.b16 %v8259, %v8251
    %v8540 = vpack.c.b16 %v8260, %v8252
    %v8541 = vpack.c.b16 %v8261, %v8253
    %v8542 = vpack.c.b16 %v8270, %v8262
    %v8543 = vpack.c.b16 %v8271, %v8263
    %v8544 = vpack.c.b16 %v8272, %v8264
    %v8545 = vpack.c.b16 %v8273, %v8265
    %v8546 = vpack.c.b16 %v8274, %v8266
    %v8547 = vpack.c.b16 %v8275, %v8267
    %v8548 = vpack.c.b16 %v8276, %v8268
    %v8549 = vpack.c.b16 %v8277, %v8269
    %v8550 = vpack.c.b16 %v8286, %v8278
    %v8551 = vpack.c.b16 %v8287, %v8279
    %v8552 = vpack.c.b16 %v8288, %v8280
    %v8553 = vpack.c.b16 %v8289, %v8281
    %v8554 = vpack.c.b16 %v8290, %v8282
    %v8555 = vpack.c.b16 %v8291, %v8283
    %v8556 = vpack.c.b16 %v8292, %v8284
    %v8557 = vpack.c.b16 %v8293, %v8285
    %v8558 = vpack.c.b16 %v8302, %v8294
    %v8559 = vpack.c.b16 %v8303, %v8295
    %v8560 = vpack.c.b16 %v8304, %v8296
    %v8561 = vpack.c.b16 %v8305, %v8297
    %v8562 = vpack.c.b16 %v8306, %v8298
    %v8563 = vpack.c.b16 %v8307, %v8299
    %v8564 = vpack.c.b16 %v8308, %v8300
    %v8565 = vpack.c.b16 %v8309, %v8301
    %8822 = vmatpush.bf16.msra.mxu0 %v8366
    %8823 = vmatpush.bf16.msra.mxu0 %v8358
    %8824 = vmatpush.bf16.msra.mxu0 %v8350
    %8825 = vmatpush.bf16.msra.mxu0 %v8342
    %8826 = vmatpush.bf16.msra.mxu0 %v8334
    %8827 = vmatpush.bf16.msra.mxu0 %v8326
    %8828 = vmatpush.bf16.msra.mxu0 %v8318
    %8829 = vmatpush.bf16.msra.mxu0 %v8310
    %8830 = vmatmul.bf16.gmra.mxu0 %v7261
    %v8831 = vpop.f32.mrf.mxu0
    %v8832 = vadd.f32 %v7526, %v8831
    %v8833 = vpop.f32.mrf.mxu0
    %8834 = vdwg.mxu0
    %8835 = vmatpush.bf16.msra.mxu0 %v8430
    %8836 = vmatpush.bf16.msra.mxu0 %v8422
    %8837 = vmatpush.bf16.msra.mxu0 %v8414
    %8838 = vmatpush.bf16.msra.mxu0 %v8406
    %8839 = vmatpush.bf16.msra.mxu0 %v8398
    %8840 = vmatpush.bf16.msra.mxu0 %v8390
    %8841 = vmatpush.bf16.msra.mxu0 %v8382
    %8842 = vmatpush.bf16.msra.mxu0 %v8374
    %8843 = vmatmul.bf16.gmra.mxu0 %v7262
    %v8844 = vpop.f32.mrf.mxu0
    %v8845 = vadd.f32 %v8832, %v8844
    %v8846 = vpop.f32.mrf.mxu0
    %8847 = vdwg.mxu0
    %8848 = vmatpush.bf16.msra.mxu0 %v8494
    %8849 = vmatpush.bf16.msra.mxu0 %v8486
    %8850 = vmatpush.bf16.msra.mxu0 %v8478
    %8851 = vmatpush.bf16.msra.mxu0 %v8470
    %8852 = vmatpush.bf16.msra.mxu0 %v8462
    %8853 = vmatpush.bf16.msra.mxu0 %v8454
    %8854 = vmatpush.bf16.msra.mxu0 %v8446
    %8855 = vmatpush.bf16.msra.mxu0 %v8438
    %8856 = vmatmul.bf16.gmra.mxu0 %v7263
    %v8857 = vpop.f32.mrf.mxu0
    %v8858 = vadd.f32 %v8845, %v8857
    %v8859 = vpop.f32.mrf.mxu0
    %8860 = vdwg.mxu0
    %8861 = vmatpush.bf16.msra.mxu0 %v8558
    %8862 = vmatpush.bf16.msra.mxu0 %v8550
    %8863 = vmatpush.bf16.msra.mxu0 %v8542
    %8864 = vmatpush.bf16.msra.mxu0 %v8534
    %8865 = vmatpush.bf16.msra.mxu0 %v8526
    %8866 = vmatpush.bf16.msra.mxu0 %v8518
    %8867 = vmatpush.bf16.msra.mxu0 %v8510
    %8868 = vmatpush.bf16.msra.mxu0 %v8502
    %8869 = vmatmul.bf16.gmra.mxu0 %v7264
    %v8870 = vpop.f32.mrf.mxu0
    %v8871 = vadd.f32 %v8858, %v8870
    %v8872 = vpop.f32.mrf.mxu0
    %8873 = vdwg.mxu0
    %8874 = vmatpush.bf16.msra.mxu0 %v8367
    %8875 = vmatpush.bf16.msra.mxu0 %v8359
    %8876 = vmatpush.bf16.msra.mxu0 %v8351
    %8877 = vmatpush.bf16.msra.mxu0 %v8343
    %8878 = vmatpush.bf16.msra.mxu0 %v8335
    %8879 = vmatpush.bf16.msra.mxu0 %v8327
    %8880 = vmatpush.bf16.msra.mxu0 %v8319
    %8881 = vmatpush.bf16.msra.mxu0 %v8311
    %8882 = vmatmul.bf16.gmra.mxu0 %v7261
    %v8883 = vpop.f32.mrf.mxu0
    %v8884 = vadd.f32 %v7527, %v8883
    %v8885 = vpop.f32.mrf.mxu0
    %8886 = vdwg.mxu0
    %8887 = vmatpush.bf16.msra.mxu0 %v8431
    %8888 = vmatpush.bf16.msra.mxu0 %v8423
    %8889 = vmatpush.bf16.msra.mxu0 %v8415
    %8890 = vmatpush.bf16.msra.mxu0 %v8407
    %8891 = vmatpush.bf16.msra.mxu0 %v8399
    %8892 = vmatpush.bf16.msra.mxu0 %v8391
    %8893 = vmatpush.bf16.msra.mxu0 %v8383
    %8894 = vmatpush.bf16.msra.mxu0 %v8375
    %8895 = vmatmul.bf16.gmra.mxu0 %v7262
    %v8896 = vpop.f32.mrf.mxu0
    %v8897 = vadd.f32 %v8884, %v8896
    %v8898 = vpop.f32.mrf.mxu0
    %8899 = vdwg.mxu0
    %8900 = vmatpush.bf16.msra.mxu0 %v8495
    %8901 = vmatpush.bf16.msra.mxu0 %v8487
    %8902 = vmatpush.bf16.msra.mxu0 %v8479
    %8903 = vmatpush.bf16.msra.mxu0 %v8471
    %8904 = vmatpush.bf16.msra.mxu0 %v8463
    %8905 = vmatpush.bf16.msra.mxu0 %v8455
    %8906 = vmatpush.bf16.msra.mxu0 %v8447
    %8907 = vmatpush.bf16.msra.mxu0 %v8439
    %8908 = vmatmul.bf16.gmra.mxu0 %v7263
    %v8909 = vpop.f32.mrf.mxu0
    %v8910 = vadd.f32 %v8897, %v8909
    %v8911 = vpop.f32.mrf.mxu0
    %8912 = vdwg.mxu0
    %8913 = vmatpush.bf16.msra.mxu0 %v8559
    %8914 = vmatpush.bf16.msra.mxu0 %v8551
    %8915 = vmatpush.bf16.msra.mxu0 %v8543
    %8916 = vmatpush.bf16.msra.mxu0 %v8535
    %8917 = vmatpush.bf16.msra.mxu0 %v8527
    %8918 = vmatpush.bf16.msra.mxu0 %v8519
    %8919 = vmatpush.bf16.msra.mxu0 %v8511
    %8920 = vmatpush.bf16.msra.mxu0 %v8503
    %8921 = vmatmul.bf16.gmra.mxu0 %v7264
    %v8922 = vpop.f32.mrf.mxu0
    %v8923 = vadd.f32 %v8910, %v8922
    %v8924 = vpop.f32.mrf.mxu0
    %8925 = vdwg.mxu0
    %8926 = vmatpush.bf16.msra.mxu0 %v8368
    %8927 = vmatpush.bf16.msra.mxu0 %v8360
    %8928 = vmatpush.bf16.msra.mxu0 %v8352
    %8929 = vmatpush.bf16.msra.mxu0 %v8344
    %8930 = vmatpush.bf16.msra.mxu0 %v8336
    %8931 = vmatpush.bf16.msra.mxu0 %v8328
    %8932 = vmatpush.bf16.msra.mxu0 %v8320
    %8933 = vmatpush.bf16.msra.mxu0 %v8312
    %8934 = vmatmul.bf16.gmra.mxu0 %v7261
    %v8935 = vpop.f32.mrf.mxu0
    %v8936 = vadd.f32 %v7528, %v8935
    %v8937 = vpop.f32.mrf.mxu0
    %8938 = vdwg.mxu0
    %8939 = vmatpush.bf16.msra.mxu0 %v8432
    %8940 = vmatpush.bf16.msra.mxu0 %v8424
    %8941 = vmatpush.bf16.msra.mxu0 %v8416
    %8942 = vmatpush.bf16.msra.mxu0 %v8408
    %8943 = vmatpush.bf16.msra.mxu0 %v8400
    %8944 = vmatpush.bf16.msra.mxu0 %v8392
    %8945 = vmatpush.bf16.msra.mxu0 %v8384
    %8946 = vmatpush.bf16.msra.mxu0 %v8376
    %8947 = vmatmul.bf16.gmra.mxu0 %v7262
    %v8948 = vpop.f32.mrf.mxu0
    %v8949 = vadd.f32 %v8936, %v8948
    %v8950 = vpop.f32.mrf.mxu0
    %8951 = vdwg.mxu0
    %8952 = vmatpush.bf16.msra.mxu0 %v8496
    %8953 = vmatpush.bf16.msra.mxu0 %v8488
    %8954 = vmatpush.bf16.msra.mxu0 %v8480
    %8955 = vmatpush.bf16.msra.mxu0 %v8472
    %8956 = vmatpush.bf16.msra.mxu0 %v8464
    %8957 = vmatpush.bf16.msra.mxu0 %v8456
    %8958 = vmatpush.bf16.msra.mxu0 %v8448
    %8959 = vmatpush.bf16.msra.mxu0 %v8440
    %8960 = vmatmul.bf16.gmra.mxu0 %v7263
    %v8961 = vpop.f32.mrf.mxu0
    %v8962 = vadd.f32 %v8949, %v8961
    %v8963 = vpop.f32.mrf.mxu0
    %8964 = vdwg.mxu0
    %8965 = vmatpush.bf16.msra.mxu0 %v8560
    %8966 = vmatpush.bf16.msra.mxu0 %v8552
    %8967 = vmatpush.bf16.msra.mxu0 %v8544
    %8968 = vmatpush.bf16.msra.mxu0 %v8536
    %8969 = vmatpush.bf16.msra.mxu0 %v8528
    %8970 = vmatpush.bf16.msra.mxu0 %v8520
    %8971 = vmatpush.bf16.msra.mxu0 %v8512
    %8972 = vmatpush.bf16.msra.mxu0 %v8504
    %8973 = vmatmul.bf16.gmra.mxu0 %v7264
    %v8974 = vpop.f32.mrf.mxu0
    %v8975 = vadd.f32 %v8962, %v8974
    %v8976 = vpop.f32.mrf.mxu0
    %8977 = vdwg.mxu0
    %8978 = vmatpush.bf16.msra.mxu0 %v8369
    %8979 = vmatpush.bf16.msra.mxu0 %v8361
    %8980 = vmatpush.bf16.msra.mxu0 %v8353
    %8981 = vmatpush.bf16.msra.mxu0 %v8345
    %8982 = vmatpush.bf16.msra.mxu0 %v8337
    %8983 = vmatpush.bf16.msra.mxu0 %v8329
    %8984 = vmatpush.bf16.msra.mxu0 %v8321
    %8985 = vmatpush.bf16.msra.mxu0 %v8313
    %8986 = vmatmul.bf16.gmra.mxu0 %v7261
    %v8987 = vpop.f32.mrf.mxu0
    %v8988 = vadd.f32 %v7529, %v8987
    %v8989 = vpop.f32.mrf.mxu0
    %8990 = vdwg.mxu0
    %8991 = vmatpush.bf16.msra.mxu0 %v8433
    %8992 = vmatpush.bf16.msra.mxu0 %v8425
    %8993 = vmatpush.bf16.msra.mxu0 %v8417
    %8994 = vmatpush.bf16.msra.mxu0 %v8409
    %8995 = vmatpush.bf16.msra.mxu0 %v8401
    %8996 = vmatpush.bf16.msra.mxu0 %v8393
    %8997 = vmatpush.bf16.msra.mxu0 %v8385
    %8998 = vmatpush.bf16.msra.mxu0 %v8377
    %8999 = vmatmul.bf16.gmra.mxu0 %v7262
    %v9000 = vpop.f32.mrf.mxu0
    %v9001 = vadd.f32 %v8988, %v9000
    %v9002 = vpop.f32.mrf.mxu0
    %9003 = vdwg.mxu0
    %9004 = vmatpush.bf16.msra.mxu0 %v8497
    %9005 = vmatpush.bf16.msra.mxu0 %v8489
    %9006 = vmatpush.bf16.msra.mxu0 %v8481
    %9007 = vmatpush.bf16.msra.mxu0 %v8473
    %9008 = vmatpush.bf16.msra.mxu0 %v8465
    %9009 = vmatpush.bf16.msra.mxu0 %v8457
    %9010 = vmatpush.bf16.msra.mxu0 %v8449
    %9011 = vmatpush.bf16.msra.mxu0 %v8441
    %9012 = vmatmul.bf16.gmra.mxu0 %v7263
    %v9013 = vpop.f32.mrf.mxu0
    %v9014 = vadd.f32 %v9001, %v9013
    %v9015 = vpop.f32.mrf.mxu0
    %9016 = vdwg.mxu0
    %9017 = vmatpush.bf16.msra.mxu0 %v8561
    %9018 = vmatpush.bf16.msra.mxu0 %v8553
    %9019 = vmatpush.bf16.msra.mxu0 %v8545
    %9020 = vmatpush.bf16.msra.mxu0 %v8537
    %9021 = vmatpush.bf16.msra.mxu0 %v8529
    %9022 = vmatpush.bf16.msra.mxu0 %v8521
    %9023 = vmatpush.bf16.msra.mxu0 %v8513
    %9024 = vmatpush.bf16.msra.mxu0 %v8505
    %9025 = vmatmul.bf16.gmra.mxu0 %v7264
    %v9026 = vpop.f32.mrf.mxu0
    %v9027 = vadd.f32 %v9014, %v9026
    %v9028 = vpop.f32.mrf.mxu0
    %9029 = vdwg.mxu0
    %9030 = vmatpush.bf16.msra.mxu0 %v8370
    %9031 = vmatpush.bf16.msra.mxu0 %v8362
    %9032 = vmatpush.bf16.msra.mxu0 %v8354
    %9033 = vmatpush.bf16.msra.mxu0 %v8346
    %9034 = vmatpush.bf16.msra.mxu0 %v8338
    %9035 = vmatpush.bf16.msra.mxu0 %v8330
    %9036 = vmatpush.bf16.msra.mxu0 %v8322
    %9037 = vmatpush.bf16.msra.mxu0 %v8314
    %9038 = vmatmul.bf16.gmra.mxu0 %v7261
    %v9039 = vpop.f32.mrf.mxu0
    %v9040 = vadd.f32 %v7530, %v9039
    %v9041 = vpop.f32.mrf.mxu0
    %9042 = vdwg.mxu0
    %9043 = vmatpush.bf16.msra.mxu0 %v8434
    %9044 = vmatpush.bf16.msra.mxu0 %v8426
    %9045 = vmatpush.bf16.msra.mxu0 %v8418
    %9046 = vmatpush.bf16.msra.mxu0 %v8410
    %9047 = vmatpush.bf16.msra.mxu0 %v8402
    %9048 = vmatpush.bf16.msra.mxu0 %v8394
    %9049 = vmatpush.bf16.msra.mxu0 %v8386
    %9050 = vmatpush.bf16.msra.mxu0 %v8378
    %9051 = vmatmul.bf16.gmra.mxu0 %v7262
    %v9052 = vpop.f32.mrf.mxu0
    %v9053 = vadd.f32 %v9040, %v9052
    %v9054 = vpop.f32.mrf.mxu0
    %9055 = vdwg.mxu0
    %9056 = vmatpush.bf16.msra.mxu0 %v8498
    %9057 = vmatpush.bf16.msra.mxu0 %v8490
    %9058 = vmatpush.bf16.msra.mxu0 %v8482
    %9059 = vmatpush.bf16.msra.mxu0 %v8474
    %9060 = vmatpush.bf16.msra.mxu0 %v8466
    %9061 = vmatpush.bf16.msra.mxu0 %v8458
    %9062 = vmatpush.bf16.msra.mxu0 %v8450
    %9063 = vmatpush.bf16.msra.mxu0 %v8442
    %9064 = vmatmul.bf16.gmra.mxu0 %v7263
    %v9065 = vpop.f32.mrf.mxu0
    %v9066 = vadd.f32 %v9053, %v9065
    %v9067 = vpop.f32.mrf.mxu0
    %9068 = vdwg.mxu0
    %9069 = vmatpush.bf16.msra.mxu0 %v8562
    %9070 = vmatpush.bf16.msra.mxu0 %v8554
    %9071 = vmatpush.bf16.msra.mxu0 %v8546
    %9072 = vmatpush.bf16.msra.mxu0 %v8538
    %9073 = vmatpush.bf16.msra.mxu0 %v8530
    %9074 = vmatpush.bf16.msra.mxu0 %v8522
    %9075 = vmatpush.bf16.msra.mxu0 %v8514
    %9076 = vmatpush.bf16.msra.mxu0 %v8506
    %9077 = vmatmul.bf16.gmra.mxu0 %v7264
    %v9078 = vpop.f32.mrf.mxu0
    %v9079 = vadd.f32 %v9066, %v9078
    %v9080 = vpop.f32.mrf.mxu0
    %9081 = vdwg.mxu0
    %9082 = vmatpush.bf16.msra.mxu0 %v8371
    %9083 = vmatpush.bf16.msra.mxu0 %v8363
    %9084 = vmatpush.bf16.msra.mxu0 %v8355
    %9085 = vmatpush.bf16.msra.mxu0 %v8347
    %9086 = vmatpush.bf16.msra.mxu0 %v8339
    %9087 = vmatpush.bf16.msra.mxu0 %v8331
    %9088 = vmatpush.bf16.msra.mxu0 %v8323
    %9089 = vmatpush.bf16.msra.mxu0 %v8315
    %9090 = vmatmul.bf16.gmra.mxu0 %v7261
    %v9091 = vpop.f32.mrf.mxu0
    %v9092 = vadd.f32 %v7531, %v9091
    %v9093 = vpop.f32.mrf.mxu0
    %9094 = vdwg.mxu0
    %9095 = vmatpush.bf16.msra.mxu0 %v8435
    %9096 = vmatpush.bf16.msra.mxu0 %v8427
    %9097 = vmatpush.bf16.msra.mxu0 %v8419
    %9098 = vmatpush.bf16.msra.mxu0 %v8411
    %9099 = vmatpush.bf16.msra.mxu0 %v8403
    %9100 = vmatpush.bf16.msra.mxu0 %v8395
    %9101 = vmatpush.bf16.msra.mxu0 %v8387
    %9102 = vmatpush.bf16.msra.mxu0 %v8379
    %9103 = vmatmul.bf16.gmra.mxu0 %v7262
    %v9104 = vpop.f32.mrf.mxu0
    %v9105 = vadd.f32 %v9092, %v9104
    %v9106 = vpop.f32.mrf.mxu0
    %9107 = vdwg.mxu0
    %9108 = vmatpush.bf16.msra.mxu0 %v8499
    %9109 = vmatpush.bf16.msra.mxu0 %v8491
    %9110 = vmatpush.bf16.msra.mxu0 %v8483
    %9111 = vmatpush.bf16.msra.mxu0 %v8475
    %9112 = vmatpush.bf16.msra.mxu0 %v8467
    %9113 = vmatpush.bf16.msra.mxu0 %v8459
    %9114 = vmatpush.bf16.msra.mxu0 %v8451
    %9115 = vmatpush.bf16.msra.mxu0 %v8443
    %9116 = vmatmul.bf16.gmra.mxu0 %v7263
    %v9117 = vpop.f32.mrf.mxu0
    %v9118 = vadd.f32 %v9105, %v9117
    %v9119 = vpop.f32.mrf.mxu0
    %9120 = vdwg.mxu0
    %9121 = vmatpush.bf16.msra.mxu0 %v8563
    %9122 = vmatpush.bf16.msra.mxu0 %v8555
    %9123 = vmatpush.bf16.msra.mxu0 %v8547
    %9124 = vmatpush.bf16.msra.mxu0 %v8539
    %9125 = vmatpush.bf16.msra.mxu0 %v8531
    %9126 = vmatpush.bf16.msra.mxu0 %v8523
    %9127 = vmatpush.bf16.msra.mxu0 %v8515
    %9128 = vmatpush.bf16.msra.mxu0 %v8507
    %9129 = vmatmul.bf16.gmra.mxu0 %v7264
    %v9130 = vpop.f32.mrf.mxu0
    %v9131 = vadd.f32 %v9118, %v9130
    %v9132 = vpop.f32.mrf.mxu0
    %9133 = vdwg.mxu0
    %9134 = vmatpush.bf16.msra.mxu0 %v8372
    %9135 = vmatpush.bf16.msra.mxu0 %v8364
    %9136 = vmatpush.bf16.msra.mxu0 %v8356
    %9137 = vmatpush.bf16.msra.mxu0 %v8348
    %9138 = vmatpush.bf16.msra.mxu0 %v8340
    %9139 = vmatpush.bf16.msra.mxu0 %v8332
    %9140 = vmatpush.bf16.msra.mxu0 %v8324
    %9141 = vmatpush.bf16.msra.mxu0 %v8316
    %9142 = vmatmul.bf16.gmra.mxu0 %v7261
    %v9143 = vpop.f32.mrf.mxu0
    %v9144 = vadd.f32 %v7532, %v9143
    %v9145 = vpop.f32.mrf.mxu0
    %9146 = vdwg.mxu0
    %9147 = vmatpush.bf16.msra.mxu0 %v8436
    %9148 = vmatpush.bf16.msra.mxu0 %v8428
    %9149 = vmatpush.bf16.msra.mxu0 %v8420
    %9150 = vmatpush.bf16.msra.mxu0 %v8412
    %9151 = vmatpush.bf16.msra.mxu0 %v8404
    %9152 = vmatpush.bf16.msra.mxu0 %v8396
    %9153 = vmatpush.bf16.msra.mxu0 %v8388
    %9154 = vmatpush.bf16.msra.mxu0 %v8380
    %9155 = vmatmul.bf16.gmra.mxu0 %v7262
    %v9156 = vpop.f32.mrf.mxu0
    %v9157 = vadd.f32 %v9144, %v9156
    %v9158 = vpop.f32.mrf.mxu0
    %9159 = vdwg.mxu0
    %9160 = vmatpush.bf16.msra.mxu0 %v8500
    %9161 = vmatpush.bf16.msra.mxu0 %v8492
    %9162 = vmatpush.bf16.msra.mxu0 %v8484
    %9163 = vmatpush.bf16.msra.mxu0 %v8476
    %9164 = vmatpush.bf16.msra.mxu0 %v8468
    %9165 = vmatpush.bf16.msra.mxu0 %v8460
    %9166 = vmatpush.bf16.msra.mxu0 %v8452
    %9167 = vmatpush.bf16.msra.mxu0 %v8444
    %9168 = vmatmul.bf16.gmra.mxu0 %v7263
    %v9169 = vpop.f32.mrf.mxu0
    %v9170 = vadd.f32 %v9157, %v9169
    %v9171 = vpop.f32.mrf.mxu0
    %9172 = vdwg.mxu0
    %9173 = vmatpush.bf16.msra.mxu0 %v8564
    %9174 = vmatpush.bf16.msra.mxu0 %v8556
    %9175 = vmatpush.bf16.msra.mxu0 %v8548
    %9176 = vmatpush.bf16.msra.mxu0 %v8540
    %9177 = vmatpush.bf16.msra.mxu0 %v8532
    %9178 = vmatpush.bf16.msra.mxu0 %v8524
    %9179 = vmatpush.bf16.msra.mxu0 %v8516
    %9180 = vmatpush.bf16.msra.mxu0 %v8508
    %9181 = vmatmul.bf16.gmra.mxu0 %v7264
    %v9182 = vpop.f32.mrf.mxu0
    %v9183 = vadd.f32 %v9170, %v9182
    %v9184 = vpop.f32.mrf.mxu0
    %9185 = vdwg.mxu0
    %9186 = vmatpush.bf16.msra.mxu0 %v8373
    %9187 = vmatpush.bf16.msra.mxu0 %v8365
    %9188 = vmatpush.bf16.msra.mxu0 %v8357
    %9189 = vmatpush.bf16.msra.mxu0 %v8349
    %9190 = vmatpush.bf16.msra.mxu0 %v8341
    %9191 = vmatpush.bf16.msra.mxu0 %v8333
    %9192 = vmatpush.bf16.msra.mxu0 %v8325
    %9193 = vmatpush.bf16.msra.mxu0 %v8317
    %9194 = vmatmul.bf16.gmra.mxu0 %v7261
    %v9195 = vpop.f32.mrf.mxu0
    %v9196 = vadd.f32 %v7533, %v9195
    %v9197 = vpop.f32.mrf.mxu0
    %9198 = vdwg.mxu0
    %9199 = vmatpush.bf16.msra.mxu0 %v8437
    %9200 = vmatpush.bf16.msra.mxu0 %v8429
    %9201 = vmatpush.bf16.msra.mxu0 %v8421
    %9202 = vmatpush.bf16.msra.mxu0 %v8413
    %9203 = vmatpush.bf16.msra.mxu0 %v8405
    %9204 = vmatpush.bf16.msra.mxu0 %v8397
    %9205 = vmatpush.bf16.msra.mxu0 %v8389
    %9206 = vmatpush.bf16.msra.mxu0 %v8381
    %9207 = vmatmul.bf16.gmra.mxu0 %v7262
    %v9208 = vpop.f32.mrf.mxu0
    %v9209 = vadd.f32 %v9196, %v9208
    %v9210 = vpop.f32.mrf.mxu0
    %9211 = vdwg.mxu0
    %9212 = vmatpush.bf16.msra.mxu0 %v8501
    %9213 = vmatpush.bf16.msra.mxu0 %v8493
    %9214 = vmatpush.bf16.msra.mxu0 %v8485
    %9215 = vmatpush.bf16.msra.mxu0 %v8477
    %9216 = vmatpush.bf16.msra.mxu0 %v8469
    %9217 = vmatpush.bf16.msra.mxu0 %v8461
    %9218 = vmatpush.bf16.msra.mxu0 %v8453
    %9219 = vmatpush.bf16.msra.mxu0 %v8445
    %9220 = vmatmul.bf16.gmra.mxu0 %v7263
    %v9221 = vpop.f32.mrf.mxu0
    %v9222 = vadd.f32 %v9209, %v9221
    %v9223 = vpop.f32.mrf.mxu0
    %9224 = vdwg.mxu0
    %9225 = vmatpush.bf16.msra.mxu0 %v8565
    %9226 = vmatpush.bf16.msra.mxu0 %v8557
    %9227 = vmatpush.bf16.msra.mxu0 %v8549
    %9228 = vmatpush.bf16.msra.mxu0 %v8541
    %9229 = vmatpush.bf16.msra.mxu0 %v8533
    %9230 = vmatpush.bf16.msra.mxu0 %v8525
    %9231 = vmatpush.bf16.msra.mxu0 %v8517
    %9232 = vmatpush.bf16.msra.mxu0 %v8509
    %9233 = vmatmul.bf16.gmra.mxu0 %v7264
    %v9234 = vpop.f32.mrf.mxu0
    %v9235 = vadd.f32 %v9222, %v9234
    %v9236 = vpop.f32.mrf.mxu0
    %9237 = vdwg.mxu0
    %v9238 = vxor.u32 %v8871, 2147483648
    %v9239 = vxor.u32 %v8923, 2147483648
    %v9240 = vxor.u32 %v8975, 2147483648
    %v9241 = vxor.u32 %v9027, 2147483648
    %v9242 = vxor.u32 %v9079, 2147483648
    %v9243 = vxor.u32 %v9131, 2147483648
    %v9244 = vxor.u32 %v9183, 2147483648
    %v9245 = vxor.u32 %v9235, 2147483648
    %v9246 = vmul.f32 %v9238, 1.442695
    %v9247 = vpow.pop %v9246
    %v9248 = vmul.f32 %v9239, 1.442695
    %v9249 = vpow.pop %v9248
    %v9250 = vmul.f32 %v9240, 1.442695
    %v9251 = vpow.pop %v9250
    %v9252 = vmul.f32 %v9241, 1.442695
    %v9253 = vpow.pop %v9252
    %v9254 = vmul.f32 %v9242, 1.442695
    %v9255 = vpow.pop %v9254
    %v9256 = vmul.f32 %v9243, 1.442695
    %v9257 = vpow.pop %v9256
    %v9258 = vmul.f32 %v9244, 1.442695
    %v9259 = vpow.pop %v9258
    %v9260 = vmul.f32 %v9245, 1.442695
    %v9261 = vpow.pop %v9260
    %v9262 = vadd.f32 %v9247, 1.0
    %v9263 = vadd.f32 %v9249, 1.0
    %v9264 = vadd.f32 %v9251, 1.0
    %v9265 = vadd.f32 %v9253, 1.0
    %v9266 = vadd.f32 %v9255, 1.0
    %v9267 = vadd.f32 %v9257, 1.0
    %v9268 = vadd.f32 %v9259, 1.0
    %v9269 = vadd.f32 %v9261, 1.0
    %v9270 = vrcp.pop %v9262
    %v9271 = vmul.f32 %v9262, %v9270
    %v9272 = vsub.f32 1.0, %v9271
    %v9273 = vmul.f32 %v9270, %v9272
    %v9274 = vadd.f32 %v9270, %v9273
    %vm9275 = vweird.f32 %v9262
    %vm9276 = vweird.f32 %v9270
    %vm9277 = vmor %vm9275, %vm9276
    %v9278 = vsel %vm9277, %v9270, %v9274
    %v9279 = vand.u32 2147483647, %v9262
    %vm9280 = vcmp.eq.f32.partialorder %v9279, 8.507059e+37
    %v9281 = vand.u32 %v9262, 2147483648
    %v9282 = vor.u32 1.1754944e-38, %v9281
    %v9283 = vsel %vm9280, %v9282, %v9278
    %v9284 = vmul.f32 1.0, %v9283
    %v9285 = vrcp.pop %v9263
    %v9286 = vmul.f32 %v9263, %v9285
    %v9287 = vsub.f32 1.0, %v9286
    %v9288 = vmul.f32 %v9285, %v9287
    %v9289 = vadd.f32 %v9285, %v9288
    %vm9290 = vweird.f32 %v9263
    %vm9291 = vweird.f32 %v9285
    %vm9292 = vmor %vm9290, %vm9291
    %v9293 = vsel %vm9292, %v9285, %v9289
    %v9294 = vand.u32 2147483647, %v9263
    %vm9295 = vcmp.eq.f32.partialorder %v9294, 8.507059e+37
    %v9296 = vand.u32 %v9263, 2147483648
    %v9297 = vor.u32 1.1754944e-38, %v9296
    %v9298 = vsel %vm9295, %v9297, %v9293
    %v9299 = vmul.f32 1.0, %v9298
    %v9300 = vrcp.pop %v9264
    %v9301 = vmul.f32 %v9264, %v9300
    %v9302 = vsub.f32 1.0, %v9301
    %v9303 = vmul.f32 %v9300, %v9302
    %v9304 = vadd.f32 %v9300, %v9303
    %vm9305 = vweird.f32 %v9264
    %vm9306 = vweird.f32 %v9300
    %vm9307 = vmor %vm9305, %vm9306
    %v9308 = vsel %vm9307, %v9300, %v9304
    %v9309 = vand.u32 2147483647, %v9264
    %vm9310 = vcmp.eq.f32.partialorder %v9309, 8.507059e+37
    %v9311 = vand.u32 %v9264, 2147483648
    %v9312 = vor.u32 1.1754944e-38, %v9311
    %v9313 = vsel %vm9310, %v9312, %v9308
    %v9314 = vmul.f32 1.0, %v9313
    %v9315 = vrcp.pop %v9265
    %v9316 = vmul.f32 %v9265, %v9315
    %v9317 = vsub.f32 1.0, %v9316
    %v9318 = vmul.f32 %v9315, %v9317
    %v9319 = vadd.f32 %v9315, %v9318
    %vm9320 = vweird.f32 %v9265
    %vm9321 = vweird.f32 %v9315
    %vm9322 = vmor %vm9320, %vm9321
    %v9323 = vsel %vm9322, %v9315, %v9319
    %v9324 = vand.u32 2147483647, %v9265
    %vm9325 = vcmp.eq.f32.partialorder %v9324, 8.507059e+37
    %v9326 = vand.u32 %v9265, 2147483648
    %v9327 = vor.u32 1.1754944e-38, %v9326
    %v9328 = vsel %vm9325, %v9327, %v9323
    %v9329 = vmul.f32 1.0, %v9328
    %v9330 = vrcp.pop %v9266
    %v9331 = vmul.f32 %v9266, %v9330
    %v9332 = vsub.f32 1.0, %v9331
    %v9333 = vmul.f32 %v9330, %v9332
    %v9334 = vadd.f32 %v9330, %v9333
    %vm9335 = vweird.f32 %v9266
    %vm9336 = vweird.f32 %v9330
    %vm9337 = vmor %vm9335, %vm9336
    %v9338 = vsel %vm9337, %v9330, %v9334
    %v9339 = vand.u32 2147483647, %v9266
    %vm9340 = vcmp.eq.f32.partialorder %v9339, 8.507059e+37
    %v9341 = vand.u32 %v9266, 2147483648
    %v9342 = vor.u32 1.1754944e-38, %v9341
    %v9343 = vsel %vm9340, %v9342, %v9338
    %v9344 = vmul.f32 1.0, %v9343
    %v9345 = vrcp.pop %v9267
    %v9346 = vmul.f32 %v9267, %v9345
    %v9347 = vsub.f32 1.0, %v9346
    %v9348 = vmul.f32 %v9345, %v9347
    %v9349 = vadd.f32 %v9345, %v9348
    %vm9350 = vweird.f32 %v9267
    %vm9351 = vweird.f32 %v9345
    %vm9352 = vmor %vm9350, %vm9351
    %v9353 = vsel %vm9352, %v9345, %v9349
    %v9354 = vand.u32 2147483647, %v9267
    %vm9355 = vcmp.eq.f32.partialorder %v9354, 8.507059e+37
    %v9356 = vand.u32 %v9267, 2147483648
    %v9357 = vor.u32 1.1754944e-38, %v9356
    %v9358 = vsel %vm9355, %v9357, %v9353
    %v9359 = vmul.f32 1.0, %v9358
    %v9360 = vrcp.pop %v9268
    %v9361 = vmul.f32 %v9268, %v9360
    %v9362 = vsub.f32 1.0, %v9361
    %v9363 = vmul.f32 %v9360, %v9362
    %v9364 = vadd.f32 %v9360, %v9363
    %vm9365 = vweird.f32 %v9268
    %vm9366 = vweird.f32 %v9360
    %vm9367 = vmor %vm9365, %vm9366
    %v9368 = vsel %vm9367, %v9360, %v9364
    %v9369 = vand.u32 2147483647, %v9268
    %vm9370 = vcmp.eq.f32.partialorder %v9369, 8.507059e+37
    %v9371 = vand.u32 %v9268, 2147483648
    %v9372 = vor.u32 1.1754944e-38, %v9371
    %v9373 = vsel %vm9370, %v9372, %v9368
    %v9374 = vmul.f32 1.0, %v9373
    %v9375 = vrcp.pop %v9269
    %v9376 = vmul.f32 %v9269, %v9375
    %v9377 = vsub.f32 1.0, %v9376
    %v9378 = vmul.f32 %v9375, %v9377
    %v9379 = vadd.f32 %v9375, %v9378
    %vm9380 = vweird.f32 %v9269
    %vm9381 = vweird.f32 %v9375
    %vm9382 = vmor %vm9380, %vm9381
    %v9383 = vsel %vm9382, %v9375, %v9379
    %v9384 = vand.u32 2147483647, %v9269
    %vm9385 = vcmp.eq.f32.partialorder %v9384, 8.507059e+37
    %v9386 = vand.u32 %v9269, 2147483648
    %v9387 = vor.u32 1.1754944e-38, %v9386
    %v9388 = vsel %vm9385, %v9387, %v9383
    %v9389 = vmul.f32 1.0, %v9388
    %v9390 = vpack.c.bf16 %v9284, %v9284
    %v9391 = vpack.c.bf16 %v9299, %v9299
    %v9392 = vpack.c.bf16 %v9314, %v9314
    %v9393 = vpack.c.bf16 %v9329, %v9329
    %v9394 = vpack.c.bf16 %v9344, %v9344
    %v9395 = vpack.c.bf16 %v9359, %v9359
    %v9396 = vpack.c.bf16 %v9374, %v9374
    %v9397 = vpack.c.bf16 %v9389, %v9389
    %v9398 = vld [vmem:[#allocation13] sm:$0xff]
    %v9399 = vld [vmem:[#allocation13 + $0x8] sm:$0xff]
    %v9400 = vld [vmem:[#allocation13 + $0x10] sm:$0xff]
    %v9401 = vld [vmem:[#allocation13 + $0x18] sm:$0xf]
    %v9402 = vld [vmem:[#allocation13 + $0x1c] sm:$0xff]
    %v9403 = vld [vmem:[#allocation13 + $0x24] sm:$0xff]
    %v9404 = vld [vmem:[#allocation13 + $0x2c] sm:$0xff]
    %v9405 = vld [vmem:[#allocation13 + $0x34] sm:$0xf]
    %v9406 = vld [vmem:[#allocation13 + $0x38] sm:$0xff]
    %v9407 = vld [vmem:[#allocation13 + $0x40] sm:$0xff]
    %v9408 = vld [vmem:[#allocation13 + $0x48] sm:$0xff]
    %v9409 = vld [vmem:[#allocation13 + $0x50] sm:$0xf]
    %v9410 = vld [vmem:[#allocation13 + $0x54] sm:$0xff]
    %v9411 = vld [vmem:[#allocation13 + $0x5c] sm:$0xff]
    %v9412 = vld [vmem:[#allocation13 + $0x64] sm:$0xff]
    %v9413 = vld [vmem:[#allocation13 + $0x6c] sm:$0xf]
    %v9414 = vld [vmem:[#allocation13 + $0x70] sm:$0xff]
    %v9415 = vld [vmem:[#allocation13 + $0x78] sm:$0xff]
    %v9416 = vld [vmem:[#allocation13 + $0x80] sm:$0xff]
    %v9417 = vld [vmem:[#allocation13 + $0x88] sm:$0xf]
    %v9418 = vld [vmem:[#allocation13 + $0x8c] sm:$0xff]
    %v9419 = vld [vmem:[#allocation13 + $0x94] sm:$0xff]
    %v9420 = vld [vmem:[#allocation13 + $0x9c] sm:$0xff]
    %v9421 = vld [vmem:[#allocation13 + $0xa4] sm:$0xf]
    %v9422 = vld [vmem:[#allocation13 + $0xa8] sm:$0xff]
    %v9423 = vld [vmem:[#allocation13 + $0xb0] sm:$0xff]
    %v9424 = vld [vmem:[#allocation13 + $0xb8] sm:$0xff]
    %v9425 = vld [vmem:[#allocation13 + $0xc0] sm:$0xf]
    %v9426 = vld [vmem:[#allocation13 + $0xc4] sm:$0xff]
    %v9427 = vld [vmem:[#allocation13 + $0xcc] sm:$0xff]
    %v9428 = vld [vmem:[#allocation13 + $0xd4] sm:$0xff]
    %v9429 = vld [vmem:[#allocation13 + $0xdc] sm:$0xf]
    %v9430 = vld [vmem:[#allocation13 + $0xe0] sm:$0xff]
    %v9431 = vld [vmem:[#allocation13 + $0xe8] sm:$0xff]
    %v9432 = vld [vmem:[#allocation13 + $0xf0] sm:$0xff]
    %v9433 = vld [vmem:[#allocation13 + $0xf8] sm:$0xf]
    %v9434 = vld [vmem:[#allocation13 + $0xfc] sm:$0xff]
    %v9435 = vld [vmem:[#allocation13 + $0x104] sm:$0xff]
    %v9436 = vld [vmem:[#allocation13 + $0x10c] sm:$0xff]
    %v9437 = vld [vmem:[#allocation13 + $0x114] sm:$0xf]
    %v9438 = vld [vmem:[#allocation13 + $0x118] sm:$0xff]
    %v9439 = vld [vmem:[#allocation13 + $0x120] sm:$0xff]
    %v9440 = vld [vmem:[#allocation13 + $0x128] sm:$0xff]
    %v9441 = vld [vmem:[#allocation13 + $0x130] sm:$0xf]
    %v9442 = vld [vmem:[#allocation13 + $0x134] sm:$0xff]
    %v9443 = vld [vmem:[#allocation13 + $0x13c] sm:$0xff]
    %v9444 = vld [vmem:[#allocation13 + $0x144] sm:$0xff]
    %v9445 = vld [vmem:[#allocation13 + $0x14c] sm:$0xf]
    %v9446 = vld [vmem:[#allocation13 + $0x150] sm:$0xff]
    %v9447 = vld [vmem:[#allocation13 + $0x158] sm:$0xff]
    %v9448 = vld [vmem:[#allocation13 + $0x160] sm:$0xff]
    %v9449 = vld [vmem:[#allocation13 + $0x168] sm:$0xf]
    %v9450 = vld [vmem:[#allocation13 + $0x16c] sm:$0xff]
    %v9451 = vld [vmem:[#allocation13 + $0x174] sm:$0xff]
    %v9452 = vld [vmem:[#allocation13 + $0x17c] sm:$0xff]
    %v9453 = vld [vmem:[#allocation13 + $0x184] sm:$0xf]
    %v9454 = vld [vmem:[#allocation13 + $0x188] sm:$0xff]
    %v9455 = vld [vmem:[#allocation13 + $0x190] sm:$0xff]
    %v9456 = vld [vmem:[#allocation13 + $0x198] sm:$0xff]
    %v9457 = vld [vmem:[#allocation13 + $0x1a0] sm:$0xf]
    %v9458 = vld [vmem:[#allocation13 + $0x1a4] sm:$0xff]
    %v9459 = vld [vmem:[#allocation13 + $0x1ac] sm:$0xff]
    %v9460 = vld [vmem:[#allocation13 + $0x1b4] sm:$0xff]
    %v9461 = vld [vmem:[#allocation13 + $0x1bc] sm:$0xf]
    %v9462 = vld [vmem:[#allocation13 + $0x1c0] sm:$0xff]
    %v9463 = vld [vmem:[#allocation13 + $0x1c8] sm:$0xff]
    %v9464 = vld [vmem:[#allocation13 + $0x1d0] sm:$0xff]
    %v9465 = vld [vmem:[#allocation13 + $0x1d8] sm:$0xf]
    %v9466 = vld [vmem:[#allocation13 + $0x1dc] sm:$0xff]
    %v9467 = vld [vmem:[#allocation13 + $0x1e4] sm:$0xff]
    %v9468 = vld [vmem:[#allocation13 + $0x1ec] sm:$0xff]
    %v9469 = vld [vmem:[#allocation13 + $0x1f4] sm:$0xf]
    %v9470 = vld [vmem:[#allocation13 + $0x1f8] sm:$0xff]
    %v9471 = vld [vmem:[#allocation13 + $0x200] sm:$0xff]
    %v9472 = vld [vmem:[#allocation13 + $0x208] sm:$0xff]
    %v9473 = vld [vmem:[#allocation13 + $0x210] sm:$0xf]
    %v9474 = vld [vmem:[#allocation13 + $0x214] sm:$0xff]
    %v9475 = vld [vmem:[#allocation13 + $0x21c] sm:$0xff]
    %v9476 = vld [vmem:[#allocation13 + $0x224] sm:$0xff]
    %v9477 = vld [vmem:[#allocation13 + $0x22c] sm:$0xf]
    %v9478 = vld [vmem:[#allocation13 + $0x230] sm:$0xff]
    %v9479 = vld [vmem:[#allocation13 + $0x238] sm:$0xff]
    %v9480 = vld [vmem:[#allocation13 + $0x240] sm:$0xff]
    %v9481 = vld [vmem:[#allocation13 + $0x248] sm:$0xf]
    %v9482 = vld [vmem:[#allocation13 + $0x24c] sm:$0xff]
    %v9483 = vld [vmem:[#allocation13 + $0x254] sm:$0xff]
    %v9484 = vld [vmem:[#allocation13 + $0x25c] sm:$0xff]
    %v9485 = vld [vmem:[#allocation13 + $0x264] sm:$0xf]
    %v9486 = vld [vmem:[#allocation13 + $0x268] sm:$0xff]
    %v9487 = vld [vmem:[#allocation13 + $0x270] sm:$0xff]
    %v9488 = vld [vmem:[#allocation13 + $0x278] sm:$0xff]
    %v9489 = vld [vmem:[#allocation13 + $0x280] sm:$0xf]
    %v9490 = vld [vmem:[#allocation13 + $0x284] sm:$0xff]
    %v9491 = vld [vmem:[#allocation13 + $0x28c] sm:$0xff]
    %v9492 = vld [vmem:[#allocation13 + $0x294] sm:$0xff]
    %v9493 = vld [vmem:[#allocation13 + $0x29c] sm:$0xf]
    %v9494 = vld [vmem:[#allocation13 + $0x2a0] sm:$0xff]
    %v9495 = vld [vmem:[#allocation13 + $0x2a8] sm:$0xff]
    %v9496 = vld [vmem:[#allocation13 + $0x2b0] sm:$0xff]
    %v9497 = vld [vmem:[#allocation13 + $0x2b8] sm:$0xf]
    %v9498 = vld [vmem:[#allocation13 + $0x2bc] sm:$0xff]
    %v9499 = vld [vmem:[#allocation13 + $0x2c4] sm:$0xff]
    %v9500 = vld [vmem:[#allocation13 + $0x2cc] sm:$0xff]
    %v9501 = vld [vmem:[#allocation13 + $0x2d4] sm:$0xf]
    %v9502 = vld [vmem:[#allocation13 + $0x2d8] sm:$0xff]
    %v9503 = vld [vmem:[#allocation13 + $0x2e0] sm:$0xff]
    %v9504 = vld [vmem:[#allocation13 + $0x2e8] sm:$0xff]
    %v9505 = vld [vmem:[#allocation13 + $0x2f0] sm:$0xf]
    %v9506 = vld [vmem:[#allocation13 + $0x2f4] sm:$0xff]
    %v9507 = vld [vmem:[#allocation13 + $0x2fc] sm:$0xff]
    %v9508 = vld [vmem:[#allocation13 + $0x304] sm:$0xff]
    %v9509 = vld [vmem:[#allocation13 + $0x30c] sm:$0xf]
    %v9510 = vld [vmem:[#allocation13 + $0x310] sm:$0xff]
    %v9511 = vld [vmem:[#allocation13 + $0x318] sm:$0xff]
    %v9512 = vld [vmem:[#allocation13 + $0x320] sm:$0xff]
    %v9513 = vld [vmem:[#allocation13 + $0x328] sm:$0xf]
    %v9514 = vld [vmem:[#allocation13 + $0x32c] sm:$0xff]
    %v9515 = vld [vmem:[#allocation13 + $0x334] sm:$0xff]
    %v9516 = vld [vmem:[#allocation13 + $0x33c] sm:$0xff]
    %v9517 = vld [vmem:[#allocation13 + $0x344] sm:$0xf]
    %v9518 = vld [vmem:[#allocation13 + $0x348] sm:$0xff]
    %v9519 = vld [vmem:[#allocation13 + $0x350] sm:$0xff]
    %v9520 = vld [vmem:[#allocation13 + $0x358] sm:$0xff]
    %v9521 = vld [vmem:[#allocation13 + $0x360] sm:$0xf]
    %v9522 = vld [vmem:[#allocation13 + $0x364] sm:$0xff]
    %v9523 = vld [vmem:[#allocation13 + $0x36c] sm:$0xff]
    %v9524 = vld [vmem:[#allocation13 + $0x374] sm:$0xff]
    %v9525 = vld [vmem:[#allocation13 + $0x37c] sm:$0xf]
    %v9526 = vld [vmem:[#allocation13 + $0x380] sm:$0xff]
    %v9527 = vld [vmem:[#allocation13 + $0x388] sm:$0xff]
    %v9528 = vld [vmem:[#allocation13 + $0x390] sm:$0xff]
    %v9529 = vld [vmem:[#allocation13 + $0x398] sm:$0xf]
    %v9530 = vld [vmem:[#allocation13 + $0x39c] sm:$0xff]
    %v9531 = vld [vmem:[#allocation13 + $0x3a4] sm:$0xff]
    %v9532 = vld [vmem:[#allocation13 + $0x3ac] sm:$0xff]
    %v9533 = vld [vmem:[#allocation13 + $0x3b4] sm:$0xf]
    %v9534 = vld [vmem:[#allocation13 + $0x3b8] sm:$0xff]
    %v9535 = vld [vmem:[#allocation13 + $0x3c0] sm:$0xff]
    %v9536 = vld [vmem:[#allocation13 + $0x3c8] sm:$0xff]
    %v9537 = vld [vmem:[#allocation13 + $0x3d0] sm:$0xf]
    %v9538 = vld [vmem:[#allocation13 + $0x3d4] sm:$0xff]
    %v9539 = vld [vmem:[#allocation13 + $0x3dc] sm:$0xff]
    %v9540 = vld [vmem:[#allocation13 + $0x3e4] sm:$0xff]
    %v9541 = vld [vmem:[#allocation13 + $0x3ec] sm:$0xf]
    %v9542 = vld [vmem:[#allocation13 + $0x3f0] sm:$0xff]
    %v9543 = vld [vmem:[#allocation13 + $0x3f8] sm:$0xff]
    %v9544 = vld [vmem:[#allocation13 + $0x400] sm:$0xff]
    %v9545 = vld [vmem:[#allocation13 + $0x408] sm:$0xf]
    %v9546 = vld [vmem:[#allocation13 + $0x40c] sm:$0xff]
    %v9547 = vld [vmem:[#allocation13 + $0x414] sm:$0xff]
    %v9548 = vld [vmem:[#allocation13 + $0x41c] sm:$0xff]
    %v9549 = vld [vmem:[#allocation13 + $0x424] sm:$0xf]
    %v9550 = vld [vmem:[#allocation13 + $0x428] sm:$0xff]
    %v9551 = vld [vmem:[#allocation13 + $0x430] sm:$0xff]
    %v9552 = vld [vmem:[#allocation13 + $0x438] sm:$0xff]
    %v9553 = vld [vmem:[#allocation13 + $0x440] sm:$0xf]
    %v9554 = vld [vmem:[#allocation13 + $0x444] sm:$0xff]
    %v9555 = vld [vmem:[#allocation13 + $0x44c] sm:$0xff]
    %v9556 = vld [vmem:[#allocation13 + $0x454] sm:$0xff]
    %v9557 = vld [vmem:[#allocation13 + $0x45c] sm:$0xf]
    %v9558 = vld [vmem:[#allocation13 + $0x460] sm:$0xff]
    %v9559 = vld [vmem:[#allocation13 + $0x468] sm:$0xff]
    %v9560 = vld [vmem:[#allocation13 + $0x470] sm:$0xff]
    %v9561 = vld [vmem:[#allocation13 + $0x478] sm:$0xf]
    %v9562 = vld [vmem:[#allocation13 + $0x47c] sm:$0xff]
    %v9563 = vld [vmem:[#allocation13 + $0x484] sm:$0xff]
    %v9564 = vld [vmem:[#allocation13 + $0x48c] sm:$0xff]
    %v9565 = vld [vmem:[#allocation13 + $0x494] sm:$0xf]
    %v9566 = vld [vmem:[#allocation13 + $0x498] sm:$0xff]
    %v9567 = vld [vmem:[#allocation13 + $0x4a0] sm:$0xff]
    %v9568 = vld [vmem:[#allocation13 + $0x4a8] sm:$0xff]
    %v9569 = vld [vmem:[#allocation13 + $0x4b0] sm:$0xf]
    %v9570 = vld [vmem:[#allocation13 + $0x4b4] sm:$0xff]
    %v9571 = vld [vmem:[#allocation13 + $0x4bc] sm:$0xff]
    %v9572 = vld [vmem:[#allocation13 + $0x4c4] sm:$0xff]
    %v9573 = vld [vmem:[#allocation13 + $0x4cc] sm:$0xf]
    %v9574 = vld [vmem:[#allocation13 + $0x4d0] sm:$0xff]
    %v9575 = vld [vmem:[#allocation13 + $0x4d8] sm:$0xff]
    %v9576 = vld [vmem:[#allocation13 + $0x4e0] sm:$0xff]
    %v9577 = vld [vmem:[#allocation13 + $0x4e8] sm:$0xf]
    %v9578 = vld [vmem:[#allocation13 + $0x4ec] sm:$0xff]
    %v9579 = vld [vmem:[#allocation13 + $0x4f4] sm:$0xff]
    %v9580 = vld [vmem:[#allocation13 + $0x4fc] sm:$0xff]
    %v9581 = vld [vmem:[#allocation13 + $0x504] sm:$0xf]
    %v9582 = vld [vmem:[#allocation13 + $0x508] sm:$0xff]
    %v9583 = vld [vmem:[#allocation13 + $0x510] sm:$0xff]
    %v9584 = vld [vmem:[#allocation13 + $0x518] sm:$0xff]
    %v9585 = vld [vmem:[#allocation13 + $0x520] sm:$0xf]
    %v9586 = vld [vmem:[#allocation13 + $0x524] sm:$0xff]
    %v9587 = vld [vmem:[#allocation13 + $0x52c] sm:$0xff]
    %v9588 = vld [vmem:[#allocation13 + $0x534] sm:$0xff]
    %v9589 = vld [vmem:[#allocation13 + $0x53c] sm:$0xf]
    %v9590 = vld [vmem:[#allocation13 + $0x540] sm:$0xff]
    %v9591 = vld [vmem:[#allocation13 + $0x548] sm:$0xff]
    %v9592 = vld [vmem:[#allocation13 + $0x550] sm:$0xff]
    %v9593 = vld [vmem:[#allocation13 + $0x558] sm:$0xf]
    %v9594 = vld [vmem:[#allocation13 + $0x55c] sm:$0xff]
    %v9595 = vld [vmem:[#allocation13 + $0x564] sm:$0xff]
    %v9596 = vld [vmem:[#allocation13 + $0x56c] sm:$0xff]
    %v9597 = vld [vmem:[#allocation13 + $0x574] sm:$0xf]
    %v9598 = vld [vmem:[#allocation13 + $0x578] sm:$0xff]
    %v9599 = vld [vmem:[#allocation13 + $0x580] sm:$0xff]
    %v9600 = vld [vmem:[#allocation13 + $0x588] sm:$0xff]
    %v9601 = vld [vmem:[#allocation13 + $0x590] sm:$0xf]
    %v9602 = vld [vmem:[#allocation13 + $0x594] sm:$0xff]
    %v9603 = vld [vmem:[#allocation13 + $0x59c] sm:$0xff]
    %v9604 = vld [vmem:[#allocation13 + $0x5a4] sm:$0xff]
    %v9605 = vld [vmem:[#allocation13 + $0x5ac] sm:$0xf]
    %v9606 = vld [vmem:[#allocation13 + $0x5b0] sm:$0xff]
    %v9607 = vld [vmem:[#allocation13 + $0x5b8] sm:$0xff]
    %v9608 = vld [vmem:[#allocation13 + $0x5c0] sm:$0xff]
    %v9609 = vld [vmem:[#allocation13 + $0x5c8] sm:$0xf]
    %v9610 = vld [vmem:[#allocation13 + $0x5cc] sm:$0xff]
    %v9611 = vld [vmem:[#allocation13 + $0x5d4] sm:$0xff]
    %v9612 = vld [vmem:[#allocation13 + $0x5dc] sm:$0xff]
    %v9613 = vld [vmem:[#allocation13 + $0x5e4] sm:$0xf]
    %v9614 = vld [vmem:[#allocation13 + $0x5e8] sm:$0xff]
    %v9615 = vld [vmem:[#allocation13 + $0x5f0] sm:$0xff]
    %v9616 = vld [vmem:[#allocation13 + $0x5f8] sm:$0xff]
    %v9617 = vld [vmem:[#allocation13 + $0x600] sm:$0xf]
    %v9618 = vld [vmem:[#allocation13 + $0x604] sm:$0xff]
    %v9619 = vld [vmem:[#allocation13 + $0x60c] sm:$0xff]
    %v9620 = vld [vmem:[#allocation13 + $0x614] sm:$0xff]
    %v9621 = vld [vmem:[#allocation13 + $0x61c] sm:$0xf]
    %v9622 = vld [vmem:[#allocation13 + $0x620] sm:$0xff]
    %v9623 = vld [vmem:[#allocation13 + $0x628] sm:$0xff]
    %v9624 = vld [vmem:[#allocation13 + $0x630] sm:$0xff]
    %v9625 = vld [vmem:[#allocation13 + $0x638] sm:$0xf]
    %v9626 = vld [vmem:[#allocation13 + $0x63c] sm:$0xff]
    %v9627 = vld [vmem:[#allocation13 + $0x644] sm:$0xff]
    %v9628 = vld [vmem:[#allocation13 + $0x64c] sm:$0xff]
    %v9629 = vld [vmem:[#allocation13 + $0x654] sm:$0xf]
    %v9630 = vld [vmem:[#allocation13 + $0x658] sm:$0xff]
    %v9631 = vld [vmem:[#allocation13 + $0x660] sm:$0xff]
    %v9632 = vld [vmem:[#allocation13 + $0x668] sm:$0xff]
    %v9633 = vld [vmem:[#allocation13 + $0x670] sm:$0xf]
    %v9634 = vld [vmem:[#allocation13 + $0x674] sm:$0xff]
    %v9635 = vld [vmem:[#allocation13 + $0x67c] sm:$0xff]
    %v9636 = vld [vmem:[#allocation13 + $0x684] sm:$0xff]
    %v9637 = vld [vmem:[#allocation13 + $0x68c] sm:$0xf]
    %v9638 = vld [vmem:[#allocation13 + $0x690] sm:$0xff]
    %v9639 = vld [vmem:[#allocation13 + $0x698] sm:$0xff]
    %v9640 = vld [vmem:[#allocation13 + $0x6a0] sm:$0xff]
    %v9641 = vld [vmem:[#allocation13 + $0x6a8] sm:$0xf]
    %v9642 = vld [vmem:[#allocation13 + $0x6ac] sm:$0xff]
    %v9643 = vld [vmem:[#allocation13 + $0x6b4] sm:$0xff]
    %v9644 = vld [vmem:[#allocation13 + $0x6bc] sm:$0xff]
    %v9645 = vld [vmem:[#allocation13 + $0x6c4] sm:$0xf]
    %v9646 = vld [vmem:[#allocation13 + $0x6c8] sm:$0xff]
    %v9647 = vld [vmem:[#allocation13 + $0x6d0] sm:$0xff]
    %v9648 = vld [vmem:[#allocation13 + $0x6d8] sm:$0xff]
    %v9649 = vld [vmem:[#allocation13 + $0x6e0] sm:$0xf]
    %v9650 = vld [vmem:[#allocation13 + $0x6e4] sm:$0xff]
    %v9651 = vld [vmem:[#allocation13 + $0x6ec] sm:$0xff]
    %v9652 = vld [vmem:[#allocation13 + $0x6f4] sm:$0xff]
    %v9653 = vld [vmem:[#allocation13 + $0x6fc] sm:$0xf]
    %v9654 = vld [vmem:[#allocation13 + $0x700] sm:$0xff]
    %v9655 = vld [vmem:[#allocation13 + $0x708] sm:$0xff]
    %v9656 = vld [vmem:[#allocation13 + $0x710] sm:$0xff]
    %v9657 = vld [vmem:[#allocation13 + $0x718] sm:$0xf]
    %v9658 = vld [vmem:[#allocation13 + $0x71c] sm:$0xff]
    %v9659 = vld [vmem:[#allocation13 + $0x724] sm:$0xff]
    %v9660 = vld [vmem:[#allocation13 + $0x72c] sm:$0xff]
    %v9661 = vld [vmem:[#allocation13 + $0x734] sm:$0xf]
    %v9662 = vld [vmem:[#allocation13 + $0x738] sm:$0xff]
    %v9663 = vld [vmem:[#allocation13 + $0x740] sm:$0xff]
    %v9664 = vld [vmem:[#allocation13 + $0x748] sm:$0xff]
    %v9665 = vld [vmem:[#allocation13 + $0x750] sm:$0xf]
    %v9666 = vld [vmem:[#allocation13 + $0x754] sm:$0xff]
    %v9667 = vld [vmem:[#allocation13 + $0x75c] sm:$0xff]
    %v9668 = vld [vmem:[#allocation13 + $0x764] sm:$0xff]
    %v9669 = vld [vmem:[#allocation13 + $0x76c] sm:$0xf]
    %v9670 = vld [vmem:[#allocation13 + $0x770] sm:$0xff]
    %v9671 = vld [vmem:[#allocation13 + $0x778] sm:$0xff]
    %v9672 = vld [vmem:[#allocation13 + $0x780] sm:$0xff]
    %v9673 = vld [vmem:[#allocation13 + $0x788] sm:$0xf]
    %v9674 = vld [vmem:[#allocation13 + $0x78c] sm:$0xff]
    %v9675 = vld [vmem:[#allocation13 + $0x794] sm:$0xff]
    %v9676 = vld [vmem:[#allocation13 + $0x79c] sm:$0xff]
    %v9677 = vld [vmem:[#allocation13 + $0x7a4] sm:$0xf]
    %v9678 = vld [vmem:[#allocation13 + $0x7a8] sm:$0xff]
    %v9679 = vld [vmem:[#allocation13 + $0x7b0] sm:$0xff]
    %v9680 = vld [vmem:[#allocation13 + $0x7b8] sm:$0xff]
    %v9681 = vld [vmem:[#allocation13 + $0x7c0] sm:$0xf]
    %v9682 = vld [vmem:[#allocation13 + $0x7c4] sm:$0xff]
    %v9683 = vld [vmem:[#allocation13 + $0x7cc] sm:$0xff]
    %v9684 = vld [vmem:[#allocation13 + $0x7d4] sm:$0xff]
    %v9685 = vld [vmem:[#allocation13 + $0x7dc] sm:$0xf]
    %v9686 = vld [vmem:[#allocation13 + $0x7e0] sm:$0xff]
    %v9687 = vld [vmem:[#allocation13 + $0x7e8] sm:$0xff]
    %v9688 = vld [vmem:[#allocation13 + $0x7f0] sm:$0xff]
    %v9689 = vld [vmem:[#allocation13 + $0x7f8] sm:$0xf]
    %v9690 = vld [vmem:[#allocation13 + $0x7fc] sm:$0xff]
    %v9691 = vld [vmem:[#allocation13 + $0x804] sm:$0xff]
    %v9692 = vld [vmem:[#allocation13 + $0x80c] sm:$0xff]
    %v9693 = vld [vmem:[#allocation13 + $0x814] sm:$0xf]
    %v9694 = vld [vmem:[#allocation13 + $0x818] sm:$0xff]
    %v9695 = vld [vmem:[#allocation13 + $0x820] sm:$0xff]
    %v9696 = vld [vmem:[#allocation13 + $0x828] sm:$0xff]
    %v9697 = vld [vmem:[#allocation13 + $0x830] sm:$0xf]
    %v9698 = vld [vmem:[#allocation13 + $0x834] sm:$0xff]
    %v9699 = vld [vmem:[#allocation13 + $0x83c] sm:$0xff]
    %v9700 = vld [vmem:[#allocation13 + $0x844] sm:$0xff]
    %v9701 = vld [vmem:[#allocation13 + $0x84c] sm:$0xf]
    %v9702 = vld [vmem:[#allocation13 + $0x850] sm:$0xff]
    %v9703 = vld [vmem:[#allocation13 + $0x858] sm:$0xff]
    %v9704 = vld [vmem:[#allocation13 + $0x860] sm:$0xff]
    %v9705 = vld [vmem:[#allocation13 + $0x868] sm:$0xf]
    %v9706 = vld [vmem:[#allocation13 + $0x86c] sm:$0xff]
    %v9707 = vld [vmem:[#allocation13 + $0x874] sm:$0xff]
    %v9708 = vld [vmem:[#allocation13 + $0x87c] sm:$0xff]
    %v9709 = vld [vmem:[#allocation13 + $0x884] sm:$0xf]
    %v9710 = vld [vmem:[#allocation13 + $0x888] sm:$0xff]
    %v9711 = vld [vmem:[#allocation13 + $0x890] sm:$0xff]
    %v9712 = vld [vmem:[#allocation13 + $0x898] sm:$0xff]
    %v9713 = vld [vmem:[#allocation13 + $0x8a0] sm:$0xf]
    %v9714 = vld [vmem:[#allocation13 + $0x8a4] sm:$0xff]
    %v9715 = vld [vmem:[#allocation13 + $0x8ac] sm:$0xff]
    %v9716 = vld [vmem:[#allocation13 + $0x8b4] sm:$0xff]
    %v9717 = vld [vmem:[#allocation13 + $0x8bc] sm:$0xf]
    %v9718 = vld [vmem:[#allocation13 + $0x8c0] sm:$0xff]
    %v9719 = vld [vmem:[#allocation13 + $0x8c8] sm:$0xff]
    %v9720 = vld [vmem:[#allocation13 + $0x8d0] sm:$0xff]
    %v9721 = vld [vmem:[#allocation13 + $0x8d8] sm:$0xf]
    %v9722 = vld [vmem:[#allocation13 + $0x8dc] sm:$0xff]
    %v9723 = vld [vmem:[#allocation13 + $0x8e4] sm:$0xff]
    %v9724 = vld [vmem:[#allocation13 + $0x8ec] sm:$0xff]
    %v9725 = vld [vmem:[#allocation13 + $0x8f4] sm:$0xf]
    %v9726 = vld [vmem:[#allocation13 + $0x8f8] sm:$0xff]
    %v9727 = vld [vmem:[#allocation13 + $0x900] sm:$0xff]
    %v9728 = vld [vmem:[#allocation13 + $0x908] sm:$0xff]
    %v9729 = vld [vmem:[#allocation13 + $0x910] sm:$0xf]
    %v9730 = vld [vmem:[#allocation13 + $0x914] sm:$0xff]
    %v9731 = vld [vmem:[#allocation13 + $0x91c] sm:$0xff]
    %v9732 = vld [vmem:[#allocation13 + $0x924] sm:$0xff]
    %v9733 = vld [vmem:[#allocation13 + $0x92c] sm:$0xf]
    %v9734 = vld [vmem:[#allocation13 + $0x930] sm:$0xff]
    %v9735 = vld [vmem:[#allocation13 + $0x938] sm:$0xff]
    %v9736 = vld [vmem:[#allocation13 + $0x940] sm:$0xff]
    %v9737 = vld [vmem:[#allocation13 + $0x948] sm:$0xf]
    %v9738 = vld [vmem:[#allocation13 + $0x94c] sm:$0xff]
    %v9739 = vld [vmem:[#allocation13 + $0x954] sm:$0xff]
    %v9740 = vld [vmem:[#allocation13 + $0x95c] sm:$0xff]
    %v9741 = vld [vmem:[#allocation13 + $0x964] sm:$0xf]
    %v9742 = vld [vmem:[#allocation13 + $0x968] sm:$0xff]
    %v9743 = vld [vmem:[#allocation13 + $0x970] sm:$0xff]
    %v9744 = vld [vmem:[#allocation13 + $0x978] sm:$0xff]
    %v9745 = vld [vmem:[#allocation13 + $0x980] sm:$0xf]
    %v9746 = vld [vmem:[#allocation13 + $0x984] sm:$0xff]
    %v9747 = vld [vmem:[#allocation13 + $0x98c] sm:$0xff]
    %v9748 = vld [vmem:[#allocation13 + $0x994] sm:$0xff]
    %v9749 = vld [vmem:[#allocation13 + $0x99c] sm:$0xf]
    %v9750 = vld [vmem:[#allocation13 + $0x9a0] sm:$0xff]
    %v9751 = vld [vmem:[#allocation13 + $0x9a8] sm:$0xff]
    %v9752 = vld [vmem:[#allocation13 + $0x9b0] sm:$0xff]
    %v9753 = vld [vmem:[#allocation13 + $0x9b8] sm:$0xf]
    %v9754 = vld [vmem:[#allocation13 + $0x9bc] sm:$0xff]
    %v9755 = vld [vmem:[#allocation13 + $0x9c4] sm:$0xff]
    %v9756 = vld [vmem:[#allocation13 + $0x9cc] sm:$0xff]
    %v9757 = vld [vmem:[#allocation13 + $0x9d4] sm:$0xf]
    %v9758 = vld [vmem:[#allocation13 + $0x9d8] sm:$0xff]
    %v9759 = vld [vmem:[#allocation13 + $0x9e0] sm:$0xff]
    %v9760 = vld [vmem:[#allocation13 + $0x9e8] sm:$0xff]
    %v9761 = vld [vmem:[#allocation13 + $0x9f0] sm:$0xf]
    %v9762 = vld [vmem:[#allocation13 + $0x9f4] sm:$0xff]
    %v9763 = vld [vmem:[#allocation13 + $0x9fc] sm:$0xff]
    %v9764 = vld [vmem:[#allocation13 + $0xa04] sm:$0xff]
    %v9765 = vld [vmem:[#allocation13 + $0xa0c] sm:$0xf]
    %v9766 = vld [vmem:[#allocation13 + $0xa10] sm:$0xff]
    %v9767 = vld [vmem:[#allocation13 + $0xa18] sm:$0xff]
    %v9768 = vld [vmem:[#allocation13 + $0xa20] sm:$0xff]
    %v9769 = vld [vmem:[#allocation13 + $0xa28] sm:$0xf]
    %v9770 = vld [vmem:[#allocation13 + $0xa2c] sm:$0xff]
    %v9771 = vld [vmem:[#allocation13 + $0xa34] sm:$0xff]
    %v9772 = vld [vmem:[#allocation13 + $0xa3c] sm:$0xff]
    %v9773 = vld [vmem:[#allocation13 + $0xa44] sm:$0xf]
    %v9774 = vld [vmem:[#allocation13 + $0xa48] sm:$0xff]
    %v9775 = vld [vmem:[#allocation13 + $0xa50] sm:$0xff]
    %v9776 = vld [vmem:[#allocation13 + $0xa58] sm:$0xff]
    %v9777 = vld [vmem:[#allocation13 + $0xa60] sm:$0xf]
    %v9778 = vld [vmem:[#allocation13 + $0xa64] sm:$0xff]
    %v9779 = vld [vmem:[#allocation13 + $0xa6c] sm:$0xff]
    %v9780 = vld [vmem:[#allocation13 + $0xa74] sm:$0xff]
    %v9781 = vld [vmem:[#allocation13 + $0xa7c] sm:$0xf]
    %v9782 = vld [vmem:[#allocation13 + $0xa80] sm:$0xff]
    %v9783 = vld [vmem:[#allocation13 + $0xa88] sm:$0xff]
    %v9784 = vld [vmem:[#allocation13 + $0xa90] sm:$0xff]
    %v9785 = vld [vmem:[#allocation13 + $0xa98] sm:$0xf]
    %v9786 = vld [vmem:[#allocation13 + $0xa9c] sm:$0xff]
    %v9787 = vld [vmem:[#allocation13 + $0xaa4] sm:$0xff]
    %v9788 = vld [vmem:[#allocation13 + $0xaac] sm:$0xff]
    %v9789 = vld [vmem:[#allocation13 + $0xab4] sm:$0xf]
    %v9790 = vld [vmem:[#allocation13 + $0xab8] sm:$0xff]
    %v9791 = vld [vmem:[#allocation13 + $0xac0] sm:$0xff]
    %v9792 = vld [vmem:[#allocation13 + $0xac8] sm:$0xff]
    %v9793 = vld [vmem:[#allocation13 + $0xad0] sm:$0xf]
    %v9794 = vld [vmem:[#allocation13 + $0xad4] sm:$0xff]
    %v9795 = vld [vmem:[#allocation13 + $0xadc] sm:$0xff]
    %v9796 = vld [vmem:[#allocation13 + $0xae4] sm:$0xff]
    %v9797 = vld [vmem:[#allocation13 + $0xaec] sm:$0xf]
    %v9798 = vld [vmem:[#allocation13 + $0xaf0] sm:$0xff]
    %v9799 = vld [vmem:[#allocation13 + $0xaf8] sm:$0xff]
    %v9800 = vld [vmem:[#allocation13 + $0xb00] sm:$0xff]
    %v9801 = vld [vmem:[#allocation13 + $0xb08] sm:$0xf]
    %v9802 = vld [vmem:[#allocation13 + $0xb0c] sm:$0xff]
    %v9803 = vld [vmem:[#allocation13 + $0xb14] sm:$0xff]
    %v9804 = vld [vmem:[#allocation13 + $0xb1c] sm:$0xff]
    %v9805 = vld [vmem:[#allocation13 + $0xb24] sm:$0xf]
    %v9806 = vld [vmem:[#allocation13 + $0xb28] sm:$0xff]
    %v9807 = vld [vmem:[#allocation13 + $0xb30] sm:$0xff]
    %v9808 = vld [vmem:[#allocation13 + $0xb38] sm:$0xff]
    %v9809 = vld [vmem:[#allocation13 + $0xb40] sm:$0xf]
    %v9810 = vld [vmem:[#allocation13 + $0xb44] sm:$0xff]
    %v9811 = vld [vmem:[#allocation13 + $0xb4c] sm:$0xff]
    %v9812 = vld [vmem:[#allocation13 + $0xb54] sm:$0xff]
    %v9813 = vld [vmem:[#allocation13 + $0xb5c] sm:$0xf]
    %v9814 = vld [vmem:[#allocation13 + $0xb60] sm:$0xff]
    %v9815 = vld [vmem:[#allocation13 + $0xb68] sm:$0xff]
    %v9816 = vld [vmem:[#allocation13 + $0xb70] sm:$0xff]
    %v9817 = vld [vmem:[#allocation13 + $0xb78] sm:$0xf]
    %v9818 = vld [vmem:[#allocation13 + $0xb7c] sm:$0xff]
    %v9819 = vld [vmem:[#allocation13 + $0xb84] sm:$0xff]
    %v9820 = vld [vmem:[#allocation13 + $0xb8c] sm:$0xff]
    %v9821 = vld [vmem:[#allocation13 + $0xb94] sm:$0xf]
    %v9822 = vld [vmem:[#allocation13 + $0xb98] sm:$0xff]
    %v9823 = vld [vmem:[#allocation13 + $0xba0] sm:$0xff]
    %v9824 = vld [vmem:[#allocation13 + $0xba8] sm:$0xff]
    %v9825 = vld [vmem:[#allocation13 + $0xbb0] sm:$0xf]
    %v9826 = vld [vmem:[#allocation13 + $0xbb4] sm:$0xff]
    %v9827 = vld [vmem:[#allocation13 + $0xbbc] sm:$0xff]
    %v9828 = vld [vmem:[#allocation13 + $0xbc4] sm:$0xff]
    %v9829 = vld [vmem:[#allocation13 + $0xbcc] sm:$0xf]
    %v9830 = vld [vmem:[#allocation13 + $0xbd0] sm:$0xff]
    %v9831 = vld [vmem:[#allocation13 + $0xbd8] sm:$0xff]
    %v9832 = vld [vmem:[#allocation13 + $0xbe0] sm:$0xff]
    %v9833 = vld [vmem:[#allocation13 + $0xbe8] sm:$0xf]
    %v9834 = vld [vmem:[#allocation13 + $0xbec] sm:$0xff]
    %v9835 = vld [vmem:[#allocation13 + $0xbf4] sm:$0xff]
    %v9836 = vld [vmem:[#allocation13 + $0xbfc] sm:$0xff]
    %v9837 = vld [vmem:[#allocation13 + $0xc04] sm:$0xf]
    %v9838 = vld [vmem:[#allocation13 + $0xc08] sm:$0xff]
    %v9839 = vld [vmem:[#allocation13 + $0xc10] sm:$0xff]
    %v9840 = vld [vmem:[#allocation13 + $0xc18] sm:$0xff]
    %v9841 = vld [vmem:[#allocation13 + $0xc20] sm:$0xf]
    %v9842 = vld [vmem:[#allocation13 + $0xc24] sm:$0xff]
    %v9843 = vld [vmem:[#allocation13 + $0xc2c] sm:$0xff]
    %v9844 = vld [vmem:[#allocation13 + $0xc34] sm:$0xff]
    %v9845 = vld [vmem:[#allocation13 + $0xc3c] sm:$0xf]
    %v9846 = vld [vmem:[#allocation13 + $0xc40] sm:$0xff]
    %v9847 = vld [vmem:[#allocation13 + $0xc48] sm:$0xff]
    %v9848 = vld [vmem:[#allocation13 + $0xc50] sm:$0xff]
    %v9849 = vld [vmem:[#allocation13 + $0xc58] sm:$0xf]
    %v9850 = vld [vmem:[#allocation13 + $0xc5c] sm:$0xff]
    %v9851 = vld [vmem:[#allocation13 + $0xc64] sm:$0xff]
    %v9852 = vld [vmem:[#allocation13 + $0xc6c] sm:$0xff]
    %v9853 = vld [vmem:[#allocation13 + $0xc74] sm:$0xf]
    %v9854 = vld [vmem:[#allocation13 + $0xc78] sm:$0xff]
    %v9855 = vld [vmem:[#allocation13 + $0xc80] sm:$0xff]
    %v9856 = vld [vmem:[#allocation13 + $0xc88] sm:$0xff]
    %v9857 = vld [vmem:[#allocation13 + $0xc90] sm:$0xf]
    %v9858 = vld [vmem:[#allocation13 + $0xc94] sm:$0xff]
    %v9859 = vld [vmem:[#allocation13 + $0xc9c] sm:$0xff]
    %v9860 = vld [vmem:[#allocation13 + $0xca4] sm:$0xff]
    %v9861 = vld [vmem:[#allocation13 + $0xcac] sm:$0xf]
    %v9862 = vld [vmem:[#allocation13 + $0xcb0] sm:$0xff]
    %v9863 = vld [vmem:[#allocation13 + $0xcb8] sm:$0xff]
    %v9864 = vld [vmem:[#allocation13 + $0xcc0] sm:$0xff]
    %v9865 = vld [vmem:[#allocation13 + $0xcc8] sm:$0xf]
    %v9866 = vld [vmem:[#allocation13 + $0xccc] sm:$0xff]
    %v9867 = vld [vmem:[#allocation13 + $0xcd4] sm:$0xff]
    %v9868 = vld [vmem:[#allocation13 + $0xcdc] sm:$0xff]
    %v9869 = vld [vmem:[#allocation13 + $0xce4] sm:$0xf]
    %v9870 = vld [vmem:[#allocation13 + $0xce8] sm:$0xff]
    %v9871 = vld [vmem:[#allocation13 + $0xcf0] sm:$0xff]
    %v9872 = vld [vmem:[#allocation13 + $0xcf8] sm:$0xff]
    %v9873 = vld [vmem:[#allocation13 + $0xd00] sm:$0xf]
    %v9874 = vld [vmem:[#allocation13 + $0xd04] sm:$0xff]
    %v9875 = vld [vmem:[#allocation13 + $0xd0c] sm:$0xff]
    %v9876 = vld [vmem:[#allocation13 + $0xd14] sm:$0xff]
    %v9877 = vld [vmem:[#allocation13 + $0xd1c] sm:$0xf]
    %v9878 = vld [vmem:[#allocation13 + $0xd20] sm:$0xff]
    %v9879 = vld [vmem:[#allocation13 + $0xd28] sm:$0xff]
    %v9880 = vld [vmem:[#allocation13 + $0xd30] sm:$0xff]
    %v9881 = vld [vmem:[#allocation13 + $0xd38] sm:$0xf]
    %v9882 = vld [vmem:[#allocation13 + $0xd3c] sm:$0xff]
    %v9883 = vld [vmem:[#allocation13 + $0xd44] sm:$0xff]
    %v9884 = vld [vmem:[#allocation13 + $0xd4c] sm:$0xff]
    %v9885 = vld [vmem:[#allocation13 + $0xd54] sm:$0xf]
    %v9886 = vld [vmem:[#allocation13 + $0xd58] sm:$0xff]
    %v9887 = vld [vmem:[#allocation13 + $0xd60] sm:$0xff]
    %v9888 = vld [vmem:[#allocation13 + $0xd68] sm:$0xff]
    %v9889 = vld [vmem:[#allocation13 + $0xd70] sm:$0xf]
    %v9890 = vld [vmem:[#allocation13 + $0xd74] sm:$0xff]
    %v9891 = vld [vmem:[#allocation13 + $0xd7c] sm:$0xff]
    %v9892 = vld [vmem:[#allocation13 + $0xd84] sm:$0xff]
    %v9893 = vld [vmem:[#allocation13 + $0xd8c] sm:$0xf]
    %v9894 = vld [vmem:[#allocation13 + $0xd90] sm:$0xff]
    %v9895 = vld [vmem:[#allocation13 + $0xd98] sm:$0xff]
    %v9896 = vld [vmem:[#allocation13 + $0xda0] sm:$0xff]
    %v9897 = vld [vmem:[#allocation13 + $0xda8] sm:$0xf]
    %v9898 = vld [vmem:[#allocation13 + $0xdac] sm:$0xff]
    %v9899 = vld [vmem:[#allocation13 + $0xdb4] sm:$0xff]
    %v9900 = vld [vmem:[#allocation13 + $0xdbc] sm:$0xff]
    %v9901 = vld [vmem:[#allocation13 + $0xdc4] sm:$0xf]
    %v9902 = vld [vmem:[#allocation13 + $0xdc8] sm:$0xff]
    %v9903 = vld [vmem:[#allocation13 + $0xdd0] sm:$0xff]
    %v9904 = vld [vmem:[#allocation13 + $0xdd8] sm:$0xff]
    %v9905 = vld [vmem:[#allocation13 + $0xde0] sm:$0xf]
    %v9906 = vld [vmem:[#allocation13 + $0xde4] sm:$0xff]
    %v9907 = vld [vmem:[#allocation13 + $0xdec] sm:$0xff]
    %v9908 = vld [vmem:[#allocation13 + $0xdf4] sm:$0xff]
    %v9909 = vld [vmem:[#allocation13 + $0xdfc] sm:$0xf]
    %s9910 = scalar_lea.vmem [#allocation15], 7
    %v9911 = vld [vmem:[%s9910] ss:$8 sm:$0xf]
    %v9912 = vld [vmem:[%s9910] ss:$8 sm:$0xf0]
    %v9913 = vor.u32 %v9911, %v9912
    %v9915 = vperm.slane %v9913, 0
    %v9916 = vperm.slane %v9913, 1
    %v9917 = vperm.slane %v9913, 2
    %v9918 = vperm.slane %v9913, 3
    %v9919 = vperm.slane %v9913, 4
    %v9920 = vperm.slane %v9913, 5
    %v9921 = vperm.slane %v9913, 6
    %v10441 = vunpack.c.l.b16 %v9398
    %v10442 = vunpack.c.h.b16 %v9398
    %v10443 = vunpack.c.l.b16 %v9399
    %v10444 = vunpack.c.h.b16 %v9399
    %v10445 = vunpack.c.l.b16 %v9400
    %v10446 = vunpack.c.h.b16 %v9400
    %v10447 = vunpack.c.l.b16 %v9401
    %v10448 = vunpack.c.l.b16 %v9402
    %v10449 = vunpack.c.h.b16 %v9402
    %v10450 = vunpack.c.l.b16 %v9403
    %v10451 = vunpack.c.h.b16 %v9403
    %v10452 = vunpack.c.l.b16 %v9404
    %v10453 = vunpack.c.h.b16 %v9404
    %v10454 = vunpack.c.l.b16 %v9405
    %v10455 = vunpack.c.l.b16 %v9406
    %v10456 = vunpack.c.h.b16 %v9406
    %v10457 = vunpack.c.l.b16 %v9407
    %v10458 = vunpack.c.h.b16 %v9407
    %v10459 = vunpack.c.l.b16 %v9408
    %v10460 = vunpack.c.h.b16 %v9408
    %v10461 = vunpack.c.l.b16 %v9409
    %v10462 = vunpack.c.l.b16 %v9410
    %v10463 = vunpack.c.h.b16 %v9410
    %v10464 = vunpack.c.l.b16 %v9411
    %v10465 = vunpack.c.h.b16 %v9411
    %v10466 = vunpack.c.l.b16 %v9412
    %v10467 = vunpack.c.h.b16 %v9412
    %v10468 = vunpack.c.l.b16 %v9413
    %v10469 = vunpack.c.l.b16 %v9414
    %v10470 = vunpack.c.h.b16 %v9414
    %v10471 = vunpack.c.l.b16 %v9415
    %v10472 = vunpack.c.h.b16 %v9415
    %v10473 = vunpack.c.l.b16 %v9416
    %v10474 = vunpack.c.h.b16 %v9416
    %v10475 = vunpack.c.l.b16 %v9417
    %v10476 = vunpack.c.l.b16 %v9418
    %v10477 = vunpack.c.h.b16 %v9418
    %v10478 = vunpack.c.l.b16 %v9419
    %v10479 = vunpack.c.h.b16 %v9419
    %v10480 = vunpack.c.l.b16 %v9420
    %v10481 = vunpack.c.h.b16 %v9420
    %v10482 = vunpack.c.l.b16 %v9421
    %v10483 = vunpack.c.l.b16 %v9422
    %v10484 = vunpack.c.h.b16 %v9422
    %v10485 = vunpack.c.l.b16 %v9423
    %v10486 = vunpack.c.h.b16 %v9423
    %v10487 = vunpack.c.l.b16 %v9424
    %v10488 = vunpack.c.h.b16 %v9424
    %v10489 = vunpack.c.l.b16 %v9425
    %v10490 = vunpack.c.l.b16 %v9426
    %v10491 = vunpack.c.h.b16 %v9426
    %v10492 = vunpack.c.l.b16 %v9427
    %v10493 = vunpack.c.h.b16 %v9427
    %v10494 = vunpack.c.l.b16 %v9428
    %v10495 = vunpack.c.h.b16 %v9428
    %v10496 = vunpack.c.l.b16 %v9429
    %v10497 = vunpack.c.l.b16 %v9430
    %v10498 = vunpack.c.h.b16 %v9430
    %v10499 = vunpack.c.l.b16 %v9431
    %v10500 = vunpack.c.h.b16 %v9431
    %v10501 = vunpack.c.l.b16 %v9432
    %v10502 = vunpack.c.h.b16 %v9432
    %v10503 = vunpack.c.l.b16 %v9433
    %v10504 = vunpack.c.l.b16 %v9434
    %v10505 = vunpack.c.h.b16 %v9434
    %v10506 = vunpack.c.l.b16 %v9435
    %v10507 = vunpack.c.h.b16 %v9435
    %v10508 = vunpack.c.l.b16 %v9436
    %v10509 = vunpack.c.h.b16 %v9436
    %v10510 = vunpack.c.l.b16 %v9437
    %v10511 = vunpack.c.l.b16 %v9438
    %v10512 = vunpack.c.h.b16 %v9438
    %v10513 = vunpack.c.l.b16 %v9439
    %v10514 = vunpack.c.h.b16 %v9439
    %v10515 = vunpack.c.l.b16 %v9440
    %v10516 = vunpack.c.h.b16 %v9440
    %v10517 = vunpack.c.l.b16 %v9441
    %v10518 = vunpack.c.l.b16 %v9442
    %v10519 = vunpack.c.h.b16 %v9442
    %v10520 = vunpack.c.l.b16 %v9443
    %v10521 = vunpack.c.h.b16 %v9443
    %v10522 = vunpack.c.l.b16 %v9444
    %v10523 = vunpack.c.h.b16 %v9444
    %v10524 = vunpack.c.l.b16 %v9445
    %v10525 = vunpack.c.l.b16 %v9446
    %v10526 = vunpack.c.h.b16 %v9446
    %v10527 = vunpack.c.l.b16 %v9447
    %v10528 = vunpack.c.h.b16 %v9447
    %v10529 = vunpack.c.l.b16 %v9448
    %v10530 = vunpack.c.h.b16 %v9448
    %v10531 = vunpack.c.l.b16 %v9449
    %v10532 = vunpack.c.l.b16 %v9450
    %v10533 = vunpack.c.h.b16 %v9450
    %v10534 = vunpack.c.l.b16 %v9451
    %v10535 = vunpack.c.h.b16 %v9451
    %v10536 = vunpack.c.l.b16 %v9452
    %v10537 = vunpack.c.h.b16 %v9452
    %v10538 = vunpack.c.l.b16 %v9453
    %v10539 = vunpack.c.l.b16 %v9454
    %v10540 = vunpack.c.h.b16 %v9454
    %v10541 = vunpack.c.l.b16 %v9455
    %v10542 = vunpack.c.h.b16 %v9455
    %v10543 = vunpack.c.l.b16 %v9456
    %v10544 = vunpack.c.h.b16 %v9456
    %v10545 = vunpack.c.l.b16 %v9457
    %v10546 = vunpack.c.l.b16 %v9458
    %v10547 = vunpack.c.h.b16 %v9458
    %v10548 = vunpack.c.l.b16 %v9459
    %v10549 = vunpack.c.h.b16 %v9459
    %v10550 = vunpack.c.l.b16 %v9460
    %v10551 = vunpack.c.h.b16 %v9460
    %v10552 = vunpack.c.l.b16 %v9461
    %v10553 = vunpack.c.l.b16 %v9462
    %v10554 = vunpack.c.h.b16 %v9462
    %v10555 = vunpack.c.l.b16 %v9463
    %v10556 = vunpack.c.h.b16 %v9463
    %v10557 = vunpack.c.l.b16 %v9464
    %v10558 = vunpack.c.h.b16 %v9464
    %v10559 = vunpack.c.l.b16 %v9465
    %v10560 = vunpack.c.l.b16 %v9466
    %v10561 = vunpack.c.h.b16 %v9466
    %v10562 = vunpack.c.l.b16 %v9467
    %v10563 = vunpack.c.h.b16 %v9467
    %v10564 = vunpack.c.l.b16 %v9468
    %v10565 = vunpack.c.h.b16 %v9468
    %v10566 = vunpack.c.l.b16 %v9469
    %v10567 = vunpack.c.l.b16 %v9470
    %v10568 = vunpack.c.h.b16 %v9470
    %v10569 = vunpack.c.l.b16 %v9471
    %v10570 = vunpack.c.h.b16 %v9471
    %v10571 = vunpack.c.l.b16 %v9472
    %v10572 = vunpack.c.h.b16 %v9472
    %v10573 = vunpack.c.l.b16 %v9473
    %v10574 = vunpack.c.l.b16 %v9474
    %v10575 = vunpack.c.h.b16 %v9474
    %v10576 = vunpack.c.l.b16 %v9475
    %v10577 = vunpack.c.h.b16 %v9475
    %v10578 = vunpack.c.l.b16 %v9476
    %v10579 = vunpack.c.h.b16 %v9476
    %v10580 = vunpack.c.l.b16 %v9477
    %v10581 = vunpack.c.l.b16 %v9478
    %v10582 = vunpack.c.h.b16 %v9478
    %v10583 = vunpack.c.l.b16 %v9479
    %v10584 = vunpack.c.h.b16 %v9479
    %v10585 = vunpack.c.l.b16 %v9480
    %v10586 = vunpack.c.h.b16 %v9480
    %v10587 = vunpack.c.l.b16 %v9481
    %v10588 = vunpack.c.l.b16 %v9482
    %v10589 = vunpack.c.h.b16 %v9482
    %v10590 = vunpack.c.l.b16 %v9483
    %v10591 = vunpack.c.h.b16 %v9483
    %v10592 = vunpack.c.l.b16 %v9484
    %v10593 = vunpack.c.h.b16 %v9484
    %v10594 = vunpack.c.l.b16 %v9485
    %v10595 = vunpack.c.l.b16 %v9486
    %v10596 = vunpack.c.h.b16 %v9486
    %v10597 = vunpack.c.l.b16 %v9487
    %v10598 = vunpack.c.h.b16 %v9487
    %v10599 = vunpack.c.l.b16 %v9488
    %v10600 = vunpack.c.h.b16 %v9488
    %v10601 = vunpack.c.l.b16 %v9489
    %v10602 = vunpack.c.l.b16 %v9490
    %v10603 = vunpack.c.h.b16 %v9490
    %v10604 = vunpack.c.l.b16 %v9491
    %v10605 = vunpack.c.h.b16 %v9491
    %v10606 = vunpack.c.l.b16 %v9492
    %v10607 = vunpack.c.h.b16 %v9492
    %v10608 = vunpack.c.l.b16 %v9493
    %v10609 = vunpack.c.l.b16 %v9494
    %v10610 = vunpack.c.h.b16 %v9494
    %v10611 = vunpack.c.l.b16 %v9495
    %v10612 = vunpack.c.h.b16 %v9495
    %v10613 = vunpack.c.l.b16 %v9496
    %v10614 = vunpack.c.h.b16 %v9496
    %v10615 = vunpack.c.l.b16 %v9497
    %v10616 = vunpack.c.l.b16 %v9498
    %v10617 = vunpack.c.h.b16 %v9498
    %v10618 = vunpack.c.l.b16 %v9499
    %v10619 = vunpack.c.h.b16 %v9499
    %v10620 = vunpack.c.l.b16 %v9500
    %v10621 = vunpack.c.h.b16 %v9500
    %v10622 = vunpack.c.l.b16 %v9501
    %v10623 = vunpack.c.l.b16 %v9502
    %v10624 = vunpack.c.h.b16 %v9502
    %v10625 = vunpack.c.l.b16 %v9503
    %v10626 = vunpack.c.h.b16 %v9503
    %v10627 = vunpack.c.l.b16 %v9504
    %v10628 = vunpack.c.h.b16 %v9504
    %v10629 = vunpack.c.l.b16 %v9505
    %v10630 = vunpack.c.l.b16 %v9506
    %v10631 = vunpack.c.h.b16 %v9506
    %v10632 = vunpack.c.l.b16 %v9507
    %v10633 = vunpack.c.h.b16 %v9507
    %v10634 = vunpack.c.l.b16 %v9508
    %v10635 = vunpack.c.h.b16 %v9508
    %v10636 = vunpack.c.l.b16 %v9509
    %v10637 = vunpack.c.l.b16 %v9510
    %v10638 = vunpack.c.h.b16 %v9510
    %v10639 = vunpack.c.l.b16 %v9511
    %v10640 = vunpack.c.h.b16 %v9511
    %v10641 = vunpack.c.l.b16 %v9512
    %v10642 = vunpack.c.h.b16 %v9512
    %v10643 = vunpack.c.l.b16 %v9513
    %v10644 = vunpack.c.l.b16 %v9514
    %v10645 = vunpack.c.h.b16 %v9514
    %v10646 = vunpack.c.l.b16 %v9515
    %v10647 = vunpack.c.h.b16 %v9515
    %v10648 = vunpack.c.l.b16 %v9516
    %v10649 = vunpack.c.h.b16 %v9516
    %v10650 = vunpack.c.l.b16 %v9517
    %v10651 = vunpack.c.l.b16 %v9518
    %v10652 = vunpack.c.h.b16 %v9518
    %v10653 = vunpack.c.l.b16 %v9519
    %v10654 = vunpack.c.h.b16 %v9519
    %v10655 = vunpack.c.l.b16 %v9520
    %v10656 = vunpack.c.h.b16 %v9520
    %v10657 = vunpack.c.l.b16 %v9521
    %v10658 = vunpack.c.l.b16 %v9522
    %v10659 = vunpack.c.h.b16 %v9522
    %v10660 = vunpack.c.l.b16 %v9523
    %v10661 = vunpack.c.h.b16 %v9523
    %v10662 = vunpack.c.l.b16 %v9524
    %v10663 = vunpack.c.h.b16 %v9524
    %v10664 = vunpack.c.l.b16 %v9525
    %v10665 = vunpack.c.l.b16 %v9526
    %v10666 = vunpack.c.h.b16 %v9526
    %v10667 = vunpack.c.l.b16 %v9527
    %v10668 = vunpack.c.h.b16 %v9527
    %v10669 = vunpack.c.l.b16 %v9528
    %v10670 = vunpack.c.h.b16 %v9528
    %v10671 = vunpack.c.l.b16 %v9529
    %v10672 = vunpack.c.l.b16 %v9530
    %v10673 = vunpack.c.h.b16 %v9530
    %v10674 = vunpack.c.l.b16 %v9531
    %v10675 = vunpack.c.h.b16 %v9531
    %v10676 = vunpack.c.l.b16 %v9532
    %v10677 = vunpack.c.h.b16 %v9532
    %v10678 = vunpack.c.l.b16 %v9533
    %v10679 = vunpack.c.l.b16 %v9534
    %v10680 = vunpack.c.h.b16 %v9534
    %v10681 = vunpack.c.l.b16 %v9535
    %v10682 = vunpack.c.h.b16 %v9535
    %v10683 = vunpack.c.l.b16 %v9536
    %v10684 = vunpack.c.h.b16 %v9536
    %v10685 = vunpack.c.l.b16 %v9537
    %v10686 = vunpack.c.l.b16 %v9538
    %v10687 = vunpack.c.h.b16 %v9538
    %v10688 = vunpack.c.l.b16 %v9539
    %v10689 = vunpack.c.h.b16 %v9539
    %v10690 = vunpack.c.l.b16 %v9540
    %v10691 = vunpack.c.h.b16 %v9540
    %v10692 = vunpack.c.l.b16 %v9541
    %v10693 = vunpack.c.l.b16 %v9542
    %v10694 = vunpack.c.h.b16 %v9542
    %v10695 = vunpack.c.l.b16 %v9543
    %v10696 = vunpack.c.h.b16 %v9543
    %v10697 = vunpack.c.l.b16 %v9544
    %v10698 = vunpack.c.h.b16 %v9544
    %v10699 = vunpack.c.l.b16 %v9545
    %v10700 = vunpack.c.l.b16 %v9546
    %v10701 = vunpack.c.h.b16 %v9546
    %v10702 = vunpack.c.l.b16 %v9547
    %v10703 = vunpack.c.h.b16 %v9547
    %v10704 = vunpack.c.l.b16 %v9548
    %v10705 = vunpack.c.h.b16 %v9548
    %v10706 = vunpack.c.l.b16 %v9549
    %v10707 = vunpack.c.l.b16 %v9550
    %v10708 = vunpack.c.h.b16 %v9550
    %v10709 = vunpack.c.l.b16 %v9551
    %v10710 = vunpack.c.h.b16 %v9551
    %v10711 = vunpack.c.l.b16 %v9552
    %v10712 = vunpack.c.h.b16 %v9552
    %v10713 = vunpack.c.l.b16 %v9553
    %v10714 = vunpack.c.l.b16 %v9554
    %v10715 = vunpack.c.h.b16 %v9554
    %v10716 = vunpack.c.l.b16 %v9555
    %v10717 = vunpack.c.h.b16 %v9555
    %v10718 = vunpack.c.l.b16 %v9556
    %v10719 = vunpack.c.h.b16 %v9556
    %v10720 = vunpack.c.l.b16 %v9557
    %v10721 = vunpack.c.l.b16 %v9558
    %v10722 = vunpack.c.h.b16 %v9558
    %v10723 = vunpack.c.l.b16 %v9559
    %v10724 = vunpack.c.h.b16 %v9559
    %v10725 = vunpack.c.l.b16 %v9560
    %v10726 = vunpack.c.h.b16 %v9560
    %v10727 = vunpack.c.l.b16 %v9561
    %v10728 = vunpack.c.l.b16 %v9562
    %v10729 = vunpack.c.h.b16 %v9562
    %v10730 = vunpack.c.l.b16 %v9563
    %v10731 = vunpack.c.h.b16 %v9563
    %v10732 = vunpack.c.l.b16 %v9564
    %v10733 = vunpack.c.h.b16 %v9564
    %v10734 = vunpack.c.l.b16 %v9565
    %v10735 = vunpack.c.l.b16 %v9566
    %v10736 = vunpack.c.h.b16 %v9566
    %v10737 = vunpack.c.l.b16 %v9567
    %v10738 = vunpack.c.h.b16 %v9567
    %v10739 = vunpack.c.l.b16 %v9568
    %v10740 = vunpack.c.h.b16 %v9568
    %v10741 = vunpack.c.l.b16 %v9569
    %v10742 = vunpack.c.l.b16 %v9570
    %v10743 = vunpack.c.h.b16 %v9570
    %v10744 = vunpack.c.l.b16 %v9571
    %v10745 = vunpack.c.h.b16 %v9571
    %v10746 = vunpack.c.l.b16 %v9572
    %v10747 = vunpack.c.h.b16 %v9572
    %v10748 = vunpack.c.l.b16 %v9573
    %v10749 = vunpack.c.l.b16 %v9574
    %v10750 = vunpack.c.h.b16 %v9574
    %v10751 = vunpack.c.l.b16 %v9575
    %v10752 = vunpack.c.h.b16 %v9575
    %v10753 = vunpack.c.l.b16 %v9576
    %v10754 = vunpack.c.h.b16 %v9576
    %v10755 = vunpack.c.l.b16 %v9577
    %v10756 = vunpack.c.l.b16 %v9578
    %v10757 = vunpack.c.h.b16 %v9578
    %v10758 = vunpack.c.l.b16 %v9579
    %v10759 = vunpack.c.h.b16 %v9579
    %v10760 = vunpack.c.l.b16 %v9580
    %v10761 = vunpack.c.h.b16 %v9580
    %v10762 = vunpack.c.l.b16 %v9581
    %v10763 = vunpack.c.l.b16 %v9582
    %v10764 = vunpack.c.h.b16 %v9582
    %v10765 = vunpack.c.l.b16 %v9583
    %v10766 = vunpack.c.h.b16 %v9583
    %v10767 = vunpack.c.l.b16 %v9584
    %v10768 = vunpack.c.h.b16 %v9584
    %v10769 = vunpack.c.l.b16 %v9585
    %v10770 = vunpack.c.l.b16 %v9586
    %v10771 = vunpack.c.h.b16 %v9586
    %v10772 = vunpack.c.l.b16 %v9587
    %v10773 = vunpack.c.h.b16 %v9587
    %v10774 = vunpack.c.l.b16 %v9588
    %v10775 = vunpack.c.h.b16 %v9588
    %v10776 = vunpack.c.l.b16 %v9589
    %v10777 = vunpack.c.l.b16 %v9590
    %v10778 = vunpack.c.h.b16 %v9590
    %v10779 = vunpack.c.l.b16 %v9591
    %v10780 = vunpack.c.h.b16 %v9591
    %v10781 = vunpack.c.l.b16 %v9592
    %v10782 = vunpack.c.h.b16 %v9592
    %v10783 = vunpack.c.l.b16 %v9593
    %v10784 = vunpack.c.l.b16 %v9594
    %v10785 = vunpack.c.h.b16 %v9594
    %v10786 = vunpack.c.l.b16 %v9595
    %v10787 = vunpack.c.h.b16 %v9595
    %v10788 = vunpack.c.l.b16 %v9596
    %v10789 = vunpack.c.h.b16 %v9596
    %v10790 = vunpack.c.l.b16 %v9597
    %v10791 = vunpack.c.l.b16 %v9598
    %v10792 = vunpack.c.h.b16 %v9598
    %v10793 = vunpack.c.l.b16 %v9599
    %v10794 = vunpack.c.h.b16 %v9599
    %v10795 = vunpack.c.l.b16 %v9600
    %v10796 = vunpack.c.h.b16 %v9600
    %v10797 = vunpack.c.l.b16 %v9601
    %v10798 = vunpack.c.l.b16 %v9602
    %v10799 = vunpack.c.h.b16 %v9602
    %v10800 = vunpack.c.l.b16 %v9603
    %v10801 = vunpack.c.h.b16 %v9603
    %v10802 = vunpack.c.l.b16 %v9604
    %v10803 = vunpack.c.h.b16 %v9604
    %v10804 = vunpack.c.l.b16 %v9605
    %v10805 = vunpack.c.l.b16 %v9606
    %v10806 = vunpack.c.h.b16 %v9606
    %v10807 = vunpack.c.l.b16 %v9607
    %v10808 = vunpack.c.h.b16 %v9607
    %v10809 = vunpack.c.l.b16 %v9608
    %v10810 = vunpack.c.h.b16 %v9608
    %v10811 = vunpack.c.l.b16 %v9609
    %v10812 = vunpack.c.l.b16 %v9610
    %v10813 = vunpack.c.h.b16 %v9610
    %v10814 = vunpack.c.l.b16 %v9611
    %v10815 = vunpack.c.h.b16 %v9611
    %v10816 = vunpack.c.l.b16 %v9612
    %v10817 = vunpack.c.h.b16 %v9612
    %v10818 = vunpack.c.l.b16 %v9613
    %v10819 = vunpack.c.l.b16 %v9614
    %v10820 = vunpack.c.h.b16 %v9614
    %v10821 = vunpack.c.l.b16 %v9615
    %v10822 = vunpack.c.h.b16 %v9615
    %v10823 = vunpack.c.l.b16 %v9616
    %v10824 = vunpack.c.h.b16 %v9616
    %v10825 = vunpack.c.l.b16 %v9617
    %v10826 = vunpack.c.l.b16 %v9618
    %v10827 = vunpack.c.h.b16 %v9618
    %v10828 = vunpack.c.l.b16 %v9619
    %v10829 = vunpack.c.h.b16 %v9619
    %v10830 = vunpack.c.l.b16 %v9620
    %v10831 = vunpack.c.h.b16 %v9620
    %v10832 = vunpack.c.l.b16 %v9621
    %v10833 = vunpack.c.l.b16 %v9622
    %v10834 = vunpack.c.h.b16 %v9622
    %v10835 = vunpack.c.l.b16 %v9623
    %v10836 = vunpack.c.h.b16 %v9623
    %v10837 = vunpack.c.l.b16 %v9624
    %v10838 = vunpack.c.h.b16 %v9624
    %v10839 = vunpack.c.l.b16 %v9625
    %v10840 = vunpack.c.l.b16 %v9626
    %v10841 = vunpack.c.h.b16 %v9626
    %v10842 = vunpack.c.l.b16 %v9627
    %v10843 = vunpack.c.h.b16 %v9627
    %v10844 = vunpack.c.l.b16 %v9628
    %v10845 = vunpack.c.h.b16 %v9628
    %v10846 = vunpack.c.l.b16 %v9629
    %v10847 = vunpack.c.l.b16 %v9630
    %v10848 = vunpack.c.h.b16 %v9630
    %v10849 = vunpack.c.l.b16 %v9631
    %v10850 = vunpack.c.h.b16 %v9631
    %v10851 = vunpack.c.l.b16 %v9632
    %v10852 = vunpack.c.h.b16 %v9632
    %v10853 = vunpack.c.l.b16 %v9633
    %v10854 = vunpack.c.l.b16 %v9634
    %v10855 = vunpack.c.h.b16 %v9634
    %v10856 = vunpack.c.l.b16 %v9635
    %v10857 = vunpack.c.h.b16 %v9635
    %v10858 = vunpack.c.l.b16 %v9636
    %v10859 = vunpack.c.h.b16 %v9636
    %v10860 = vunpack.c.l.b16 %v9637
    %v10861 = vunpack.c.l.b16 %v9638
    %v10862 = vunpack.c.h.b16 %v9638
    %v10863 = vunpack.c.l.b16 %v9639
    %v10864 = vunpack.c.h.b16 %v9639
    %v10865 = vunpack.c.l.b16 %v9640
    %v10866 = vunpack.c.h.b16 %v9640
    %v10867 = vunpack.c.l.b16 %v9641
    %v10868 = vunpack.c.l.b16 %v9642
    %v10869 = vunpack.c.h.b16 %v9642
    %v10870 = vunpack.c.l.b16 %v9643
    %v10871 = vunpack.c.h.b16 %v9643
    %v10872 = vunpack.c.l.b16 %v9644
    %v10873 = vunpack.c.h.b16 %v9644
    %v10874 = vunpack.c.l.b16 %v9645
    %v10875 = vunpack.c.l.b16 %v9646
    %v10876 = vunpack.c.h.b16 %v9646
    %v10877 = vunpack.c.l.b16 %v9647
    %v10878 = vunpack.c.h.b16 %v9647
    %v10879 = vunpack.c.l.b16 %v9648
    %v10880 = vunpack.c.h.b16 %v9648
    %v10881 = vunpack.c.l.b16 %v9649
    %v10882 = vunpack.c.l.b16 %v9650
    %v10883 = vunpack.c.h.b16 %v9650
    %v10884 = vunpack.c.l.b16 %v9651
    %v10885 = vunpack.c.h.b16 %v9651
    %v10886 = vunpack.c.l.b16 %v9652
    %v10887 = vunpack.c.h.b16 %v9652
    %v10888 = vunpack.c.l.b16 %v9653
    %v10889 = vunpack.c.l.b16 %v9654
    %v10890 = vunpack.c.h.b16 %v9654
    %v10891 = vunpack.c.l.b16 %v9655
    %v10892 = vunpack.c.h.b16 %v9655
    %v10893 = vunpack.c.l.b16 %v9656
    %v10894 = vunpack.c.h.b16 %v9656
    %v10895 = vunpack.c.l.b16 %v9657
    %v10896 = vunpack.c.l.b16 %v9658
    %v10897 = vunpack.c.h.b16 %v9658
    %v10898 = vunpack.c.l.b16 %v9659
    %v10899 = vunpack.c.h.b16 %v9659
    %v10900 = vunpack.c.l.b16 %v9660
    %v10901 = vunpack.c.h.b16 %v9660
    %v10902 = vunpack.c.l.b16 %v9661
    %v10903 = vunpack.c.l.b16 %v9662
    %v10904 = vunpack.c.h.b16 %v9662
    %v10905 = vunpack.c.l.b16 %v9663
    %v10906 = vunpack.c.h.b16 %v9663
    %v10907 = vunpack.c.l.b16 %v9664
    %v10908 = vunpack.c.h.b16 %v9664
    %v10909 = vunpack.c.l.b16 %v9665
    %v10910 = vunpack.c.l.b16 %v9666
    %v10911 = vunpack.c.h.b16 %v9666
    %v10912 = vunpack.c.l.b16 %v9667
    %v10913 = vunpack.c.h.b16 %v9667
    %v10914 = vunpack.c.l.b16 %v9668
    %v10915 = vunpack.c.h.b16 %v9668
    %v10916 = vunpack.c.l.b16 %v9669
    %v10917 = vunpack.c.l.b16 %v9670
    %v10918 = vunpack.c.h.b16 %v9670
    %v10919 = vunpack.c.l.b16 %v9671
    %v10920 = vunpack.c.h.b16 %v9671
    %v10921 = vunpack.c.l.b16 %v9672
    %v10922 = vunpack.c.h.b16 %v9672
    %v10923 = vunpack.c.l.b16 %v9673
    %v10924 = vunpack.c.l.b16 %v9674
    %v10925 = vunpack.c.h.b16 %v9674
    %v10926 = vunpack.c.l.b16 %v9675
    %v10927 = vunpack.c.h.b16 %v9675
    %v10928 = vunpack.c.l.b16 %v9676
    %v10929 = vunpack.c.h.b16 %v9676
    %v10930 = vunpack.c.l.b16 %v9677
    %v10931 = vunpack.c.l.b16 %v9678
    %v10932 = vunpack.c.h.b16 %v9678
    %v10933 = vunpack.c.l.b16 %v9679
    %v10934 = vunpack.c.h.b16 %v9679
    %v10935 = vunpack.c.l.b16 %v9680
    %v10936 = vunpack.c.h.b16 %v9680
    %v10937 = vunpack.c.l.b16 %v9681
    %v10938 = vunpack.c.l.b16 %v9682
    %v10939 = vunpack.c.h.b16 %v9682
    %v10940 = vunpack.c.l.b16 %v9683
    %v10941 = vunpack.c.h.b16 %v9683
    %v10942 = vunpack.c.l.b16 %v9684
    %v10943 = vunpack.c.h.b16 %v9684
    %v10944 = vunpack.c.l.b16 %v9685
    %v10945 = vunpack.c.l.b16 %v9686
    %v10946 = vunpack.c.h.b16 %v9686
    %v10947 = vunpack.c.l.b16 %v9687
    %v10948 = vunpack.c.h.b16 %v9687
    %v10949 = vunpack.c.l.b16 %v9688
    %v10950 = vunpack.c.h.b16 %v9688
    %v10951 = vunpack.c.l.b16 %v9689
    %v10952 = vunpack.c.l.b16 %v9690
    %v10953 = vunpack.c.h.b16 %v9690
    %v10954 = vunpack.c.l.b16 %v9691
    %v10955 = vunpack.c.h.b16 %v9691
    %v10956 = vunpack.c.l.b16 %v9692
    %v10957 = vunpack.c.h.b16 %v9692
    %v10958 = vunpack.c.l.b16 %v9693
    %v10959 = vunpack.c.l.b16 %v9694
    %v10960 = vunpack.c.h.b16 %v9694
    %v10961 = vunpack.c.l.b16 %v9695
    %v10962 = vunpack.c.h.b16 %v9695
    %v10963 = vunpack.c.l.b16 %v9696
    %v10964 = vunpack.c.h.b16 %v9696
    %v10965 = vunpack.c.l.b16 %v9697
    %v10966 = vunpack.c.l.b16 %v9698
    %v10967 = vunpack.c.h.b16 %v9698
    %v10968 = vunpack.c.l.b16 %v9699
    %v10969 = vunpack.c.h.b16 %v9699
    %v10970 = vunpack.c.l.b16 %v9700
    %v10971 = vunpack.c.h.b16 %v9700
    %v10972 = vunpack.c.l.b16 %v9701
    %v10973 = vunpack.c.l.b16 %v9702
    %v10974 = vunpack.c.h.b16 %v9702
    %v10975 = vunpack.c.l.b16 %v9703
    %v10976 = vunpack.c.h.b16 %v9703
    %v10977 = vunpack.c.l.b16 %v9704
    %v10978 = vunpack.c.h.b16 %v9704
    %v10979 = vunpack.c.l.b16 %v9705
    %v10980 = vunpack.c.l.b16 %v9706
    %v10981 = vunpack.c.h.b16 %v9706
    %v10982 = vunpack.c.l.b16 %v9707
    %v10983 = vunpack.c.h.b16 %v9707
    %v10984 = vunpack.c.l.b16 %v9708
    %v10985 = vunpack.c.h.b16 %v9708
    %v10986 = vunpack.c.l.b16 %v9709
    %v10987 = vunpack.c.l.b16 %v9710
    %v10988 = vunpack.c.h.b16 %v9710
    %v10989 = vunpack.c.l.b16 %v9711
    %v10990 = vunpack.c.h.b16 %v9711
    %v10991 = vunpack.c.l.b16 %v9712
    %v10992 = vunpack.c.h.b16 %v9712
    %v10993 = vunpack.c.l.b16 %v9713
    %v10994 = vunpack.c.l.b16 %v9714
    %v10995 = vunpack.c.h.b16 %v9714
    %v10996 = vunpack.c.l.b16 %v9715
    %v10997 = vunpack.c.h.b16 %v9715
    %v10998 = vunpack.c.l.b16 %v9716
    %v10999 = vunpack.c.h.b16 %v9716
    %v11000 = vunpack.c.l.b16 %v9717
    %v11001 = vunpack.c.l.b16 %v9718
    %v11002 = vunpack.c.h.b16 %v9718
    %v11003 = vunpack.c.l.b16 %v9719
    %v11004 = vunpack.c.h.b16 %v9719
    %v11005 = vunpack.c.l.b16 %v9720
    %v11006 = vunpack.c.h.b16 %v9720
    %v11007 = vunpack.c.l.b16 %v9721
    %v11008 = vunpack.c.l.b16 %v9722
    %v11009 = vunpack.c.h.b16 %v9722
    %v11010 = vunpack.c.l.b16 %v9723
    %v11011 = vunpack.c.h.b16 %v9723
    %v11012 = vunpack.c.l.b16 %v9724
    %v11013 = vunpack.c.h.b16 %v9724
    %v11014 = vunpack.c.l.b16 %v9725
    %v11015 = vunpack.c.l.b16 %v9726
    %v11016 = vunpack.c.h.b16 %v9726
    %v11017 = vunpack.c.l.b16 %v9727
    %v11018 = vunpack.c.h.b16 %v9727
    %v11019 = vunpack.c.l.b16 %v9728
    %v11020 = vunpack.c.h.b16 %v9728
    %v11021 = vunpack.c.l.b16 %v9729
    %v11022 = vunpack.c.l.b16 %v9730
    %v11023 = vunpack.c.h.b16 %v9730
    %v11024 = vunpack.c.l.b16 %v9731
    %v11025 = vunpack.c.h.b16 %v9731
    %v11026 = vunpack.c.l.b16 %v9732
    %v11027 = vunpack.c.h.b16 %v9732
    %v11028 = vunpack.c.l.b16 %v9733
    %v11029 = vunpack.c.l.b16 %v9734
    %v11030 = vunpack.c.h.b16 %v9734
    %v11031 = vunpack.c.l.b16 %v9735
    %v11032 = vunpack.c.h.b16 %v9735
    %v11033 = vunpack.c.l.b16 %v9736
    %v11034 = vunpack.c.h.b16 %v9736
    %v11035 = vunpack.c.l.b16 %v9737
    %v11036 = vunpack.c.l.b16 %v9738
    %v11037 = vunpack.c.h.b16 %v9738
    %v11038 = vunpack.c.l.b16 %v9739
    %v11039 = vunpack.c.h.b16 %v9739
    %v11040 = vunpack.c.l.b16 %v9740
    %v11041 = vunpack.c.h.b16 %v9740
    %v11042 = vunpack.c.l.b16 %v9741
    %v11043 = vunpack.c.l.b16 %v9742
    %v11044 = vunpack.c.h.b16 %v9742
    %v11045 = vunpack.c.l.b16 %v9743
    %v11046 = vunpack.c.h.b16 %v9743
    %v11047 = vunpack.c.l.b16 %v9744
    %v11048 = vunpack.c.h.b16 %v9744
    %v11049 = vunpack.c.l.b16 %v9745
    %v11050 = vunpack.c.l.b16 %v9746
    %v11051 = vunpack.c.h.b16 %v9746
    %v11052 = vunpack.c.l.b16 %v9747
    %v11053 = vunpack.c.h.b16 %v9747
    %v11054 = vunpack.c.l.b16 %v9748
    %v11055 = vunpack.c.h.b16 %v9748
    %v11056 = vunpack.c.l.b16 %v9749
    %v11057 = vunpack.c.l.b16 %v9750
    %v11058 = vunpack.c.h.b16 %v9750
    %v11059 = vunpack.c.l.b16 %v9751
    %v11060 = vunpack.c.h.b16 %v9751
    %v11061 = vunpack.c.l.b16 %v9752
    %v11062 = vunpack.c.h.b16 %v9752
    %v11063 = vunpack.c.l.b16 %v9753
    %v11064 = vunpack.c.l.b16 %v9754
    %v11065 = vunpack.c.h.b16 %v9754
    %v11066 = vunpack.c.l.b16 %v9755
    %v11067 = vunpack.c.h.b16 %v9755
    %v11068 = vunpack.c.l.b16 %v9756
    %v11069 = vunpack.c.h.b16 %v9756
    %v11070 = vunpack.c.l.b16 %v9757
    %v11071 = vunpack.c.l.b16 %v9758
    %v11072 = vunpack.c.h.b16 %v9758
    %v11073 = vunpack.c.l.b16 %v9759
    %v11074 = vunpack.c.h.b16 %v9759
    %v11075 = vunpack.c.l.b16 %v9760
    %v11076 = vunpack.c.h.b16 %v9760
    %v11077 = vunpack.c.l.b16 %v9761
    %v11078 = vunpack.c.l.b16 %v9762
    %v11079 = vunpack.c.h.b16 %v9762
    %v11080 = vunpack.c.l.b16 %v9763
    %v11081 = vunpack.c.h.b16 %v9763
    %v11082 = vunpack.c.l.b16 %v9764
    %v11083 = vunpack.c.h.b16 %v9764
    %v11084 = vunpack.c.l.b16 %v9765
    %v11085 = vunpack.c.l.b16 %v9766
    %v11086 = vunpack.c.h.b16 %v9766
    %v11087 = vunpack.c.l.b16 %v9767
    %v11088 = vunpack.c.h.b16 %v9767
    %v11089 = vunpack.c.l.b16 %v9768
    %v11090 = vunpack.c.h.b16 %v9768
    %v11091 = vunpack.c.l.b16 %v9769
    %v11092 = vunpack.c.l.b16 %v9770
    %v11093 = vunpack.c.h.b16 %v9770
    %v11094 = vunpack.c.l.b16 %v9771
    %v11095 = vunpack.c.h.b16 %v9771
    %v11096 = vunpack.c.l.b16 %v9772
    %v11097 = vunpack.c.h.b16 %v9772
    %v11098 = vunpack.c.l.b16 %v9773
    %v11099 = vunpack.c.l.b16 %v9774
    %v11100 = vunpack.c.h.b16 %v9774
    %v11101 = vunpack.c.l.b16 %v9775
    %v11102 = vunpack.c.h.b16 %v9775
    %v11103 = vunpack.c.l.b16 %v9776
    %v11104 = vunpack.c.h.b16 %v9776
    %v11105 = vunpack.c.l.b16 %v9777
    %v11106 = vunpack.c.l.b16 %v9778
    %v11107 = vunpack.c.h.b16 %v9778
    %v11108 = vunpack.c.l.b16 %v9779
    %v11109 = vunpack.c.h.b16 %v9779
    %v11110 = vunpack.c.l.b16 %v9780
    %v11111 = vunpack.c.h.b16 %v9780
    %v11112 = vunpack.c.l.b16 %v9781
    %v11113 = vunpack.c.l.b16 %v9782
    %v11114 = vunpack.c.h.b16 %v9782
    %v11115 = vunpack.c.l.b16 %v9783
    %v11116 = vunpack.c.h.b16 %v9783
    %v11117 = vunpack.c.l.b16 %v9784
    %v11118 = vunpack.c.h.b16 %v9784
    %v11119 = vunpack.c.l.b16 %v9785
    %v11120 = vunpack.c.l.b16 %v9786
    %v11121 = vunpack.c.h.b16 %v9786
    %v11122 = vunpack.c.l.b16 %v9787
    %v11123 = vunpack.c.h.b16 %v9787
    %v11124 = vunpack.c.l.b16 %v9788
    %v11125 = vunpack.c.h.b16 %v9788
    %v11126 = vunpack.c.l.b16 %v9789
    %v11127 = vunpack.c.l.b16 %v9790
    %v11128 = vunpack.c.h.b16 %v9790
    %v11129 = vunpack.c.l.b16 %v9791
    %v11130 = vunpack.c.h.b16 %v9791
    %v11131 = vunpack.c.l.b16 %v9792
    %v11132 = vunpack.c.h.b16 %v9792
    %v11133 = vunpack.c.l.b16 %v9793
    %v11134 = vunpack.c.l.b16 %v9794
    %v11135 = vunpack.c.h.b16 %v9794
    %v11136 = vunpack.c.l.b16 %v9795
    %v11137 = vunpack.c.h.b16 %v9795
    %v11138 = vunpack.c.l.b16 %v9796
    %v11139 = vunpack.c.h.b16 %v9796
    %v11140 = vunpack.c.l.b16 %v9797
    %v11141 = vunpack.c.l.b16 %v9798
    %v11142 = vunpack.c.h.b16 %v9798
    %v11143 = vunpack.c.l.b16 %v9799
    %v11144 = vunpack.c.h.b16 %v9799
    %v11145 = vunpack.c.l.b16 %v9800
    %v11146 = vunpack.c.h.b16 %v9800
    %v11147 = vunpack.c.l.b16 %v9801
    %v11148 = vunpack.c.l.b16 %v9802
    %v11149 = vunpack.c.h.b16 %v9802
    %v11150 = vunpack.c.l.b16 %v9803
    %v11151 = vunpack.c.h.b16 %v9803
    %v11152 = vunpack.c.l.b16 %v9804
    %v11153 = vunpack.c.h.b16 %v9804
    %v11154 = vunpack.c.l.b16 %v9805
    %v11155 = vunpack.c.l.b16 %v9806
    %v11156 = vunpack.c.h.b16 %v9806
    %v11157 = vunpack.c.l.b16 %v9807
    %v11158 = vunpack.c.h.b16 %v9807
    %v11159 = vunpack.c.l.b16 %v9808
    %v11160 = vunpack.c.h.b16 %v9808
    %v11161 = vunpack.c.l.b16 %v9809
    %v11162 = vunpack.c.l.b16 %v9810
    %v11163 = vunpack.c.h.b16 %v9810
    %v11164 = vunpack.c.l.b16 %v9811
    %v11165 = vunpack.c.h.b16 %v9811
    %v11166 = vunpack.c.l.b16 %v9812
    %v11167 = vunpack.c.h.b16 %v9812
    %v11168 = vunpack.c.l.b16 %v9813
    %v11169 = vunpack.c.l.b16 %v9814
    %v11170 = vunpack.c.h.b16 %v9814
    %v11171 = vunpack.c.l.b16 %v9815
    %v11172 = vunpack.c.h.b16 %v9815
    %v11173 = vunpack.c.l.b16 %v9816
    %v11174 = vunpack.c.h.b16 %v9816
    %v11175 = vunpack.c.l.b16 %v9817
    %v11176 = vunpack.c.l.b16 %v9818
    %v11177 = vunpack.c.h.b16 %v9818
    %v11178 = vunpack.c.l.b16 %v9819
    %v11179 = vunpack.c.h.b16 %v9819
    %v11180 = vunpack.c.l.b16 %v9820
    %v11181 = vunpack.c.h.b16 %v9820
    %v11182 = vunpack.c.l.b16 %v9821
    %v11183 = vunpack.c.l.b16 %v9822
    %v11184 = vunpack.c.h.b16 %v9822
    %v11185 = vunpack.c.l.b16 %v9823
    %v11186 = vunpack.c.h.b16 %v9823
    %v11187 = vunpack.c.l.b16 %v9824
    %v11188 = vunpack.c.h.b16 %v9824
    %v11189 = vunpack.c.l.b16 %v9825
    %v11190 = vunpack.c.l.b16 %v9826
    %v11191 = vunpack.c.h.b16 %v9826
    %v11192 = vunpack.c.l.b16 %v9827
    %v11193 = vunpack.c.h.b16 %v9827
    %v11194 = vunpack.c.l.b16 %v9828
    %v11195 = vunpack.c.h.b16 %v9828
    %v11196 = vunpack.c.l.b16 %v9829
    %v11197 = vunpack.c.l.b16 %v9830
    %v11198 = vunpack.c.h.b16 %v9830
    %v11199 = vunpack.c.l.b16 %v9831
    %v11200 = vunpack.c.h.b16 %v9831
    %v11201 = vunpack.c.l.b16 %v9832
    %v11202 = vunpack.c.h.b16 %v9832
    %v11203 = vunpack.c.l.b16 %v9833
    %v11204 = vunpack.c.l.b16 %v9834
    %v11205 = vunpack.c.h.b16 %v9834
    %v11206 = vunpack.c.l.b16 %v9835
    %v11207 = vunpack.c.h.b16 %v9835
    %v11208 = vunpack.c.l.b16 %v9836
    %v11209 = vunpack.c.h.b16 %v9836
    %v11210 = vunpack.c.l.b16 %v9837
    %v11211 = vunpack.c.l.b16 %v9838
    %v11212 = vunpack.c.h.b16 %v9838
    %v11213 = vunpack.c.l.b16 %v9839
    %v11214 = vunpack.c.h.b16 %v9839
    %v11215 = vunpack.c.l.b16 %v9840
    %v11216 = vunpack.c.h.b16 %v9840
    %v11217 = vunpack.c.l.b16 %v9841
    %v11218 = vunpack.c.l.b16 %v9842
    %v11219 = vunpack.c.h.b16 %v9842
    %v11220 = vunpack.c.l.b16 %v9843
    %v11221 = vunpack.c.h.b16 %v9843
    %v11222 = vunpack.c.l.b16 %v9844
    %v11223 = vunpack.c.h.b16 %v9844
    %v11224 = vunpack.c.l.b16 %v9845
    %v11225 = vunpack.c.l.b16 %v9846
    %v11226 = vunpack.c.h.b16 %v9846
    %v11227 = vunpack.c.l.b16 %v9847
    %v11228 = vunpack.c.h.b16 %v9847
    %v11229 = vunpack.c.l.b16 %v9848
    %v11230 = vunpack.c.h.b16 %v9848
    %v11231 = vunpack.c.l.b16 %v9849
    %v11232 = vunpack.c.l.b16 %v9850
    %v11233 = vunpack.c.h.b16 %v9850
    %v11234 = vunpack.c.l.b16 %v9851
    %v11235 = vunpack.c.h.b16 %v9851
    %v11236 = vunpack.c.l.b16 %v9852
    %v11237 = vunpack.c.h.b16 %v9852
    %v11238 = vunpack.c.l.b16 %v9853
    %v11239 = vunpack.c.l.b16 %v9854
    %v11240 = vunpack.c.h.b16 %v9854
    %v11241 = vunpack.c.l.b16 %v9855
    %v11242 = vunpack.c.h.b16 %v9855
    %v11243 = vunpack.c.l.b16 %v9856
    %v11244 = vunpack.c.h.b16 %v9856
    %v11245 = vunpack.c.l.b16 %v9857
    %v11246 = vunpack.c.l.b16 %v9858
    %v11247 = vunpack.c.h.b16 %v9858
    %v11248 = vunpack.c.l.b16 %v9859
    %v11249 = vunpack.c.h.b16 %v9859
    %v11250 = vunpack.c.l.b16 %v9860
    %v11251 = vunpack.c.h.b16 %v9860
    %v11252 = vunpack.c.l.b16 %v9861
    %v11253 = vunpack.c.l.b16 %v9862
    %v11254 = vunpack.c.h.b16 %v9862
    %v11255 = vunpack.c.l.b16 %v9863
    %v11256 = vunpack.c.h.b16 %v9863
    %v11257 = vunpack.c.l.b16 %v9864
    %v11258 = vunpack.c.h.b16 %v9864
    %v11259 = vunpack.c.l.b16 %v9865
    %v11260 = vunpack.c.l.b16 %v9866
    %v11261 = vunpack.c.h.b16 %v9866
    %v11262 = vunpack.c.l.b16 %v9867
    %v11263 = vunpack.c.h.b16 %v9867
    %v11264 = vunpack.c.l.b16 %v9868
    %v11265 = vunpack.c.h.b16 %v9868
    %v11266 = vunpack.c.l.b16 %v9869
    %v11267 = vunpack.c.l.b16 %v9870
    %v11268 = vunpack.c.h.b16 %v9870
    %v11269 = vunpack.c.l.b16 %v9871
    %v11270 = vunpack.c.h.b16 %v9871
    %v11271 = vunpack.c.l.b16 %v9872
    %v11272 = vunpack.c.h.b16 %v9872
    %v11273 = vunpack.c.l.b16 %v9873
    %v11274 = vunpack.c.l.b16 %v9874
    %v11275 = vunpack.c.h.b16 %v9874
    %v11276 = vunpack.c.l.b16 %v9875
    %v11277 = vunpack.c.h.b16 %v9875
    %v11278 = vunpack.c.l.b16 %v9876
    %v11279 = vunpack.c.h.b16 %v9876
    %v11280 = vunpack.c.l.b16 %v9877
    %v11281 = vunpack.c.l.b16 %v9878
    %v11282 = vunpack.c.h.b16 %v9878
    %v11283 = vunpack.c.l.b16 %v9879
    %v11284 = vunpack.c.h.b16 %v9879
    %v11285 = vunpack.c.l.b16 %v9880
    %v11286 = vunpack.c.h.b16 %v9880
    %v11287 = vunpack.c.l.b16 %v9881
    %v11288 = vunpack.c.l.b16 %v9882
    %v11289 = vunpack.c.h.b16 %v9882
    %v11290 = vunpack.c.l.b16 %v9883
    %v11291 = vunpack.c.h.b16 %v9883
    %v11292 = vunpack.c.l.b16 %v9884
    %v11293 = vunpack.c.h.b16 %v9884
    %v11294 = vunpack.c.l.b16 %v9885
    %v11295 = vunpack.c.l.b16 %v9886
    %v11296 = vunpack.c.h.b16 %v9886
    %v11297 = vunpack.c.l.b16 %v9887
    %v11298 = vunpack.c.h.b16 %v9887
    %v11299 = vunpack.c.l.b16 %v9888
    %v11300 = vunpack.c.h.b16 %v9888
    %v11301 = vunpack.c.l.b16 %v9889
    %v11302 = vunpack.c.l.b16 %v9890
    %v11303 = vunpack.c.h.b16 %v9890
    %v11304 = vunpack.c.l.b16 %v9891
    %v11305 = vunpack.c.h.b16 %v9891
    %v11306 = vunpack.c.l.b16 %v9892
    %v11307 = vunpack.c.h.b16 %v9892
    %v11308 = vunpack.c.l.b16 %v9893
    %v11309 = vunpack.c.l.b16 %v9894
    %v11310 = vunpack.c.h.b16 %v9894
    %v11311 = vunpack.c.l.b16 %v9895
    %v11312 = vunpack.c.h.b16 %v9895
    %v11313 = vunpack.c.l.b16 %v9896
    %v11314 = vunpack.c.h.b16 %v9896
    %v11315 = vunpack.c.l.b16 %v9897
    %v11316 = vunpack.c.l.b16 %v9898
    %v11317 = vunpack.c.h.b16 %v9898
    %v11318 = vunpack.c.l.b16 %v9899
    %v11319 = vunpack.c.h.b16 %v9899
    %v11320 = vunpack.c.l.b16 %v9900
    %v11321 = vunpack.c.h.b16 %v9900
    %v11322 = vunpack.c.l.b16 %v9901
    %v11323 = vunpack.c.l.b16 %v9902
    %v11324 = vunpack.c.h.b16 %v9902
    %v11325 = vunpack.c.l.b16 %v9903
    %v11326 = vunpack.c.h.b16 %v9903
    %v11327 = vunpack.c.l.b16 %v9904
    %v11328 = vunpack.c.h.b16 %v9904
    %v11329 = vunpack.c.l.b16 %v9905
    %v11330 = vunpack.c.l.b16 %v9906
    %v11331 = vunpack.c.h.b16 %v9906
    %v11332 = vunpack.c.l.b16 %v9907
    %v11333 = vunpack.c.h.b16 %v9907
    %v11334 = vunpack.c.l.b16 %v9908
    %v11335 = vunpack.c.h.b16 %v9908
    %v11336 = vunpack.c.l.b16 %v9909
    %v11337 = vpack.c.b16 %v10448, %v10441
    %v11338 = vpack.c.b16 %v10449, %v10442
    %v11339 = vpack.c.b16 %v10450, %v10443
    %v11340 = vpack.c.b16 %v10451, %v10444
    %v11341 = vpack.c.b16 %v10452, %v10445
    %v11342 = vpack.c.b16 %v10453, %v10446
    %v11343 = vpack.c.b16 %v10454, %v10447
    %v11344 = vpack.c.b16 %v10462, %v10455
    %v11345 = vpack.c.b16 %v10463, %v10456
    %v11346 = vpack.c.b16 %v10464, %v10457
    %v11347 = vpack.c.b16 %v10465, %v10458
    %v11348 = vpack.c.b16 %v10466, %v10459
    %v11349 = vpack.c.b16 %v10467, %v10460
    %v11350 = vpack.c.b16 %v10468, %v10461
    %v11351 = vpack.c.b16 %v10476, %v10469
    %v11352 = vpack.c.b16 %v10477, %v10470
    %v11353 = vpack.c.b16 %v10478, %v10471
    %v11354 = vpack.c.b16 %v10479, %v10472
    %v11355 = vpack.c.b16 %v10480, %v10473
    %v11356 = vpack.c.b16 %v10481, %v10474
    %v11357 = vpack.c.b16 %v10482, %v10475
    %v11358 = vpack.c.b16 %v10490, %v10483
    %v11359 = vpack.c.b16 %v10491, %v10484
    %v11360 = vpack.c.b16 %v10492, %v10485
    %v11361 = vpack.c.b16 %v10493, %v10486
    %v11362 = vpack.c.b16 %v10494, %v10487
    %v11363 = vpack.c.b16 %v10495, %v10488
    %v11364 = vpack.c.b16 %v10496, %v10489
    %v11365 = vpack.c.b16 %v10504, %v10497
    %v11366 = vpack.c.b16 %v10505, %v10498
    %v11367 = vpack.c.b16 %v10506, %v10499
    %v11368 = vpack.c.b16 %v10507, %v10500
    %v11369 = vpack.c.b16 %v10508, %v10501
    %v11370 = vpack.c.b16 %v10509, %v10502
    %v11371 = vpack.c.b16 %v10510, %v10503
    %v11372 = vpack.c.b16 %v10518, %v10511
    %v11373 = vpack.c.b16 %v10519, %v10512
    %v11374 = vpack.c.b16 %v10520, %v10513
    %v11375 = vpack.c.b16 %v10521, %v10514
    %v11376 = vpack.c.b16 %v10522, %v10515
    %v11377 = vpack.c.b16 %v10523, %v10516
    %v11378 = vpack.c.b16 %v10524, %v10517
    %v11379 = vpack.c.b16 %v10532, %v10525
    %v11380 = vpack.c.b16 %v10533, %v10526
    %v11381 = vpack.c.b16 %v10534, %v10527
    %v11382 = vpack.c.b16 %v10535, %v10528
    %v11383 = vpack.c.b16 %v10536, %v10529
    %v11384 = vpack.c.b16 %v10537, %v10530
    %v11385 = vpack.c.b16 %v10538, %v10531
    %v11386 = vpack.c.b16 %v10546, %v10539
    %v11387 = vpack.c.b16 %v10547, %v10540
    %v11388 = vpack.c.b16 %v10548, %v10541
    %v11389 = vpack.c.b16 %v10549, %v10542
    %v11390 = vpack.c.b16 %v10550, %v10543
    %v11391 = vpack.c.b16 %v10551, %v10544
    %v11392 = vpack.c.b16 %v10552, %v10545
    %v11393 = vpack.c.b16 %v10560, %v10553
    %v11394 = vpack.c.b16 %v10561, %v10554
    %v11395 = vpack.c.b16 %v10562, %v10555
    %v11396 = vpack.c.b16 %v10563, %v10556
    %v11397 = vpack.c.b16 %v10564, %v10557
    %v11398 = vpack.c.b16 %v10565, %v10558
    %v11399 = vpack.c.b16 %v10566, %v10559
    %v11400 = vpack.c.b16 %v10574, %v10567
    %v11401 = vpack.c.b16 %v10575, %v10568
    %v11402 = vpack.c.b16 %v10576, %v10569
    %v11403 = vpack.c.b16 %v10577, %v10570
    %v11404 = vpack.c.b16 %v10578, %v10571
    %v11405 = vpack.c.b16 %v10579, %v10572
    %v11406 = vpack.c.b16 %v10580, %v10573
    %v11407 = vpack.c.b16 %v10588, %v10581
    %v11408 = vpack.c.b16 %v10589, %v10582
    %v11409 = vpack.c.b16 %v10590, %v10583
    %v11410 = vpack.c.b16 %v10591, %v10584
    %v11411 = vpack.c.b16 %v10592, %v10585
    %v11412 = vpack.c.b16 %v10593, %v10586
    %v11413 = vpack.c.b16 %v10594, %v10587
    %v11414 = vpack.c.b16 %v10602, %v10595
    %v11415 = vpack.c.b16 %v10603, %v10596
    %v11416 = vpack.c.b16 %v10604, %v10597
    %v11417 = vpack.c.b16 %v10605, %v10598
    %v11418 = vpack.c.b16 %v10606, %v10599
    %v11419 = vpack.c.b16 %v10607, %v10600
    %v11420 = vpack.c.b16 %v10608, %v10601
    %v11421 = vpack.c.b16 %v10616, %v10609
    %v11422 = vpack.c.b16 %v10617, %v10610
    %v11423 = vpack.c.b16 %v10618, %v10611
    %v11424 = vpack.c.b16 %v10619, %v10612
    %v11425 = vpack.c.b16 %v10620, %v10613
    %v11426 = vpack.c.b16 %v10621, %v10614
    %v11427 = vpack.c.b16 %v10622, %v10615
    %v11428 = vpack.c.b16 %v10630, %v10623
    %v11429 = vpack.c.b16 %v10631, %v10624
    %v11430 = vpack.c.b16 %v10632, %v10625
    %v11431 = vpack.c.b16 %v10633, %v10626
    %v11432 = vpack.c.b16 %v10634, %v10627
    %v11433 = vpack.c.b16 %v10635, %v10628
    %v11434 = vpack.c.b16 %v10636, %v10629
    %v11435 = vpack.c.b16 %v10644, %v10637
    %v11436 = vpack.c.b16 %v10645, %v10638
    %v11437 = vpack.c.b16 %v10646, %v10639
    %v11438 = vpack.c.b16 %v10647, %v10640
    %v11439 = vpack.c.b16 %v10648, %v10641
    %v11440 = vpack.c.b16 %v10649, %v10642
    %v11441 = vpack.c.b16 %v10650, %v10643
    %v11442 = vpack.c.b16 %v10658, %v10651
    %v11443 = vpack.c.b16 %v10659, %v10652
    %v11444 = vpack.c.b16 %v10660, %v10653
    %v11445 = vpack.c.b16 %v10661, %v10654
    %v11446 = vpack.c.b16 %v10662, %v10655
    %v11447 = vpack.c.b16 %v10663, %v10656
    %v11448 = vpack.c.b16 %v10664, %v10657
    %v11449 = vpack.c.b16 %v10672, %v10665
    %v11450 = vpack.c.b16 %v10673, %v10666
    %v11451 = vpack.c.b16 %v10674, %v10667
    %v11452 = vpack.c.b16 %v10675, %v10668
    %v11453 = vpack.c.b16 %v10676, %v10669
    %v11454 = vpack.c.b16 %v10677, %v10670
    %v11455 = vpack.c.b16 %v10678, %v10671
    %v11456 = vpack.c.b16 %v10686, %v10679
    %v11457 = vpack.c.b16 %v10687, %v10680
    %v11458 = vpack.c.b16 %v10688, %v10681
    %v11459 = vpack.c.b16 %v10689, %v10682
    %v11460 = vpack.c.b16 %v10690, %v10683
    %v11461 = vpack.c.b16 %v10691, %v10684
    %v11462 = vpack.c.b16 %v10692, %v10685
    %v11463 = vpack.c.b16 %v10700, %v10693
    %v11464 = vpack.c.b16 %v10701, %v10694
    %v11465 = vpack.c.b16 %v10702, %v10695
    %v11466 = vpack.c.b16 %v10703, %v10696
    %v11467 = vpack.c.b16 %v10704, %v10697
    %v11468 = vpack.c.b16 %v10705, %v10698
    %v11469 = vpack.c.b16 %v10706, %v10699
    %v11470 = vpack.c.b16 %v10714, %v10707
    %v11471 = vpack.c.b16 %v10715, %v10708
    %v11472 = vpack.c.b16 %v10716, %v10709
    %v11473 = vpack.c.b16 %v10717, %v10710
    %v11474 = vpack.c.b16 %v10718, %v10711
    %v11475 = vpack.c.b16 %v10719, %v10712
    %v11476 = vpack.c.b16 %v10720, %v10713
    %v11477 = vpack.c.b16 %v10728, %v10721
    %v11478 = vpack.c.b16 %v10729, %v10722
    %v11479 = vpack.c.b16 %v10730, %v10723
    %v11480 = vpack.c.b16 %v10731, %v10724
    %v11481 = vpack.c.b16 %v10732, %v10725
    %v11482 = vpack.c.b16 %v10733, %v10726
    %v11483 = vpack.c.b16 %v10734, %v10727
    %v11484 = vpack.c.b16 %v10742, %v10735
    %v11485 = vpack.c.b16 %v10743, %v10736
    %v11486 = vpack.c.b16 %v10744, %v10737
    %v11487 = vpack.c.b16 %v10745, %v10738
    %v11488 = vpack.c.b16 %v10746, %v10739
    %v11489 = vpack.c.b16 %v10747, %v10740
    %v11490 = vpack.c.b16 %v10748, %v10741
    %v11491 = vpack.c.b16 %v10756, %v10749
    %v11492 = vpack.c.b16 %v10757, %v10750
    %v11493 = vpack.c.b16 %v10758, %v10751
    %v11494 = vpack.c.b16 %v10759, %v10752
    %v11495 = vpack.c.b16 %v10760, %v10753
    %v11496 = vpack.c.b16 %v10761, %v10754
    %v11497 = vpack.c.b16 %v10762, %v10755
    %v11498 = vpack.c.b16 %v10770, %v10763
    %v11499 = vpack.c.b16 %v10771, %v10764
    %v11500 = vpack.c.b16 %v10772, %v10765
    %v11501 = vpack.c.b16 %v10773, %v10766
    %v11502 = vpack.c.b16 %v10774, %v10767
    %v11503 = vpack.c.b16 %v10775, %v10768
    %v11504 = vpack.c.b16 %v10776, %v10769
    %v11505 = vpack.c.b16 %v10784, %v10777
    %v11506 = vpack.c.b16 %v10785, %v10778
    %v11507 = vpack.c.b16 %v10786, %v10779
    %v11508 = vpack.c.b16 %v10787, %v10780
    %v11509 = vpack.c.b16 %v10788, %v10781
    %v11510 = vpack.c.b16 %v10789, %v10782
    %v11511 = vpack.c.b16 %v10790, %v10783
    %v11512 = vpack.c.b16 %v10798, %v10791
    %v11513 = vpack.c.b16 %v10799, %v10792
    %v11514 = vpack.c.b16 %v10800, %v10793
    %v11515 = vpack.c.b16 %v10801, %v10794
    %v11516 = vpack.c.b16 %v10802, %v10795
    %v11517 = vpack.c.b16 %v10803, %v10796
    %v11518 = vpack.c.b16 %v10804, %v10797
    %v11519 = vpack.c.b16 %v10812, %v10805
    %v11520 = vpack.c.b16 %v10813, %v10806
    %v11521 = vpack.c.b16 %v10814, %v10807
    %v11522 = vpack.c.b16 %v10815, %v10808
    %v11523 = vpack.c.b16 %v10816, %v10809
    %v11524 = vpack.c.b16 %v10817, %v10810
    %v11525 = vpack.c.b16 %v10818, %v10811
    %v11526 = vpack.c.b16 %v10826, %v10819
    %v11527 = vpack.c.b16 %v10827, %v10820
    %v11528 = vpack.c.b16 %v10828, %v10821
    %v11529 = vpack.c.b16 %v10829, %v10822
    %v11530 = vpack.c.b16 %v10830, %v10823
    %v11531 = vpack.c.b16 %v10831, %v10824
    %v11532 = vpack.c.b16 %v10832, %v10825
    %v11533 = vpack.c.b16 %v10840, %v10833
    %v11534 = vpack.c.b16 %v10841, %v10834
    %v11535 = vpack.c.b16 %v10842, %v10835
    %v11536 = vpack.c.b16 %v10843, %v10836
    %v11537 = vpack.c.b16 %v10844, %v10837
    %v11538 = vpack.c.b16 %v10845, %v10838
    %v11539 = vpack.c.b16 %v10846, %v10839
    %v11540 = vpack.c.b16 %v10854, %v10847
    %v11541 = vpack.c.b16 %v10855, %v10848
    %v11542 = vpack.c.b16 %v10856, %v10849
    %v11543 = vpack.c.b16 %v10857, %v10850
    %v11544 = vpack.c.b16 %v10858, %v10851
    %v11545 = vpack.c.b16 %v10859, %v10852
    %v11546 = vpack.c.b16 %v10860, %v10853
    %v11547 = vpack.c.b16 %v10868, %v10861
    %v11548 = vpack.c.b16 %v10869, %v10862
    %v11549 = vpack.c.b16 %v10870, %v10863
    %v11550 = vpack.c.b16 %v10871, %v10864
    %v11551 = vpack.c.b16 %v10872, %v10865
    %v11552 = vpack.c.b16 %v10873, %v10866
    %v11553 = vpack.c.b16 %v10874, %v10867
    %v11554 = vpack.c.b16 %v10882, %v10875
    %v11555 = vpack.c.b16 %v10883, %v10876
    %v11556 = vpack.c.b16 %v10884, %v10877
    %v11557 = vpack.c.b16 %v10885, %v10878
    %v11558 = vpack.c.b16 %v10886, %v10879
    %v11559 = vpack.c.b16 %v10887, %v10880
    %v11560 = vpack.c.b16 %v10888, %v10881
    %v11561 = vpack.c.b16 %v10896, %v10889
    %v11562 = vpack.c.b16 %v10897, %v10890
    %v11563 = vpack.c.b16 %v10898, %v10891
    %v11564 = vpack.c.b16 %v10899, %v10892
    %v11565 = vpack.c.b16 %v10900, %v10893
    %v11566 = vpack.c.b16 %v10901, %v10894
    %v11567 = vpack.c.b16 %v10902, %v10895
    %v11568 = vpack.c.b16 %v10910, %v10903
    %v11569 = vpack.c.b16 %v10911, %v10904
    %v11570 = vpack.c.b16 %v10912, %v10905
    %v11571 = vpack.c.b16 %v10913, %v10906
    %v11572 = vpack.c.b16 %v10914, %v10907
    %v11573 = vpack.c.b16 %v10915, %v10908
    %v11574 = vpack.c.b16 %v10916, %v10909
    %v11575 = vpack.c.b16 %v10924, %v10917
    %v11576 = vpack.c.b16 %v10925, %v10918
    %v11577 = vpack.c.b16 %v10926, %v10919
    %v11578 = vpack.c.b16 %v10927, %v10920
    %v11579 = vpack.c.b16 %v10928, %v10921
    %v11580 = vpack.c.b16 %v10929, %v10922
    %v11581 = vpack.c.b16 %v10930, %v10923
    %v11582 = vpack.c.b16 %v10938, %v10931
    %v11583 = vpack.c.b16 %v10939, %v10932
    %v11584 = vpack.c.b16 %v10940, %v10933
    %v11585 = vpack.c.b16 %v10941, %v10934
    %v11586 = vpack.c.b16 %v10942, %v10935
    %v11587 = vpack.c.b16 %v10943, %v10936
    %v11588 = vpack.c.b16 %v10944, %v10937
    %v11589 = vpack.c.b16 %v10952, %v10945
    %v11590 = vpack.c.b16 %v10953, %v10946
    %v11591 = vpack.c.b16 %v10954, %v10947
    %v11592 = vpack.c.b16 %v10955, %v10948
    %v11593 = vpack.c.b16 %v10956, %v10949
    %v11594 = vpack.c.b16 %v10957, %v10950
    %v11595 = vpack.c.b16 %v10958, %v10951
    %v11596 = vpack.c.b16 %v10966, %v10959
    %v11597 = vpack.c.b16 %v10967, %v10960
    %v11598 = vpack.c.b16 %v10968, %v10961
    %v11599 = vpack.c.b16 %v10969, %v10962
    %v11600 = vpack.c.b16 %v10970, %v10963
    %v11601 = vpack.c.b16 %v10971, %v10964
    %v11602 = vpack.c.b16 %v10972, %v10965
    %v11603 = vpack.c.b16 %v10980, %v10973
    %v11604 = vpack.c.b16 %v10981, %v10974
    %v11605 = vpack.c.b16 %v10982, %v10975
    %v11606 = vpack.c.b16 %v10983, %v10976
    %v11607 = vpack.c.b16 %v10984, %v10977
    %v11608 = vpack.c.b16 %v10985, %v10978
    %v11609 = vpack.c.b16 %v10986, %v10979
    %v11610 = vpack.c.b16 %v10994, %v10987
    %v11611 = vpack.c.b16 %v10995, %v10988
    %v11612 = vpack.c.b16 %v10996, %v10989
    %v11613 = vpack.c.b16 %v10997, %v10990
    %v11614 = vpack.c.b16 %v10998, %v10991
    %v11615 = vpack.c.b16 %v10999, %v10992
    %v11616 = vpack.c.b16 %v11000, %v10993
    %v11617 = vpack.c.b16 %v11008, %v11001
    %v11618 = vpack.c.b16 %v11009, %v11002
    %v11619 = vpack.c.b16 %v11010, %v11003
    %v11620 = vpack.c.b16 %v11011, %v11004
    %v11621 = vpack.c.b16 %v11012, %v11005
    %v11622 = vpack.c.b16 %v11013, %v11006
    %v11623 = vpack.c.b16 %v11014, %v11007
    %v11624 = vpack.c.b16 %v11022, %v11015
    %v11625 = vpack.c.b16 %v11023, %v11016
    %v11626 = vpack.c.b16 %v11024, %v11017
    %v11627 = vpack.c.b16 %v11025, %v11018
    %v11628 = vpack.c.b16 %v11026, %v11019
    %v11629 = vpack.c.b16 %v11027, %v11020
    %v11630 = vpack.c.b16 %v11028, %v11021
    %v11631 = vpack.c.b16 %v11036, %v11029
    %v11632 = vpack.c.b16 %v11037, %v11030
    %v11633 = vpack.c.b16 %v11038, %v11031
    %v11634 = vpack.c.b16 %v11039, %v11032
    %v11635 = vpack.c.b16 %v11040, %v11033
    %v11636 = vpack.c.b16 %v11041, %v11034
    %v11637 = vpack.c.b16 %v11042, %v11035
    %v11638 = vpack.c.b16 %v11050, %v11043
    %v11639 = vpack.c.b16 %v11051, %v11044
    %v11640 = vpack.c.b16 %v11052, %v11045
    %v11641 = vpack.c.b16 %v11053, %v11046
    %v11642 = vpack.c.b16 %v11054, %v11047
    %v11643 = vpack.c.b16 %v11055, %v11048
    %v11644 = vpack.c.b16 %v11056, %v11049
    %v11645 = vpack.c.b16 %v11064, %v11057
    %v11646 = vpack.c.b16 %v11065, %v11058
    %v11647 = vpack.c.b16 %v11066, %v11059
    %v11648 = vpack.c.b16 %v11067, %v11060
    %v11649 = vpack.c.b16 %v11068, %v11061
    %v11650 = vpack.c.b16 %v11069, %v11062
    %v11651 = vpack.c.b16 %v11070, %v11063
    %v11652 = vpack.c.b16 %v11078, %v11071
    %v11653 = vpack.c.b16 %v11079, %v11072
    %v11654 = vpack.c.b16 %v11080, %v11073
    %v11655 = vpack.c.b16 %v11081, %v11074
    %v11656 = vpack.c.b16 %v11082, %v11075
    %v11657 = vpack.c.b16 %v11083, %v11076
    %v11658 = vpack.c.b16 %v11084, %v11077
    %v11659 = vpack.c.b16 %v11092, %v11085
    %v11660 = vpack.c.b16 %v11093, %v11086
    %v11661 = vpack.c.b16 %v11094, %v11087
    %v11662 = vpack.c.b16 %v11095, %v11088
    %v11663 = vpack.c.b16 %v11096, %v11089
    %v11664 = vpack.c.b16 %v11097, %v11090
    %v11665 = vpack.c.b16 %v11098, %v11091
    %v11666 = vpack.c.b16 %v11106, %v11099
    %v11667 = vpack.c.b16 %v11107, %v11100
    %v11668 = vpack.c.b16 %v11108, %v11101
    %v11669 = vpack.c.b16 %v11109, %v11102
    %v11670 = vpack.c.b16 %v11110, %v11103
    %v11671 = vpack.c.b16 %v11111, %v11104
    %v11672 = vpack.c.b16 %v11112, %v11105
    %v11673 = vpack.c.b16 %v11120, %v11113
    %v11674 = vpack.c.b16 %v11121, %v11114
    %v11675 = vpack.c.b16 %v11122, %v11115
    %v11676 = vpack.c.b16 %v11123, %v11116
    %v11677 = vpack.c.b16 %v11124, %v11117
    %v11678 = vpack.c.b16 %v11125, %v11118
    %v11679 = vpack.c.b16 %v11126, %v11119
    %v11680 = vpack.c.b16 %v11134, %v11127
    %v11681 = vpack.c.b16 %v11135, %v11128
    %v11682 = vpack.c.b16 %v11136, %v11129
    %v11683 = vpack.c.b16 %v11137, %v11130
    %v11684 = vpack.c.b16 %v11138, %v11131
    %v11685 = vpack.c.b16 %v11139, %v11132
    %v11686 = vpack.c.b16 %v11140, %v11133
    %v11687 = vpack.c.b16 %v11148, %v11141
    %v11688 = vpack.c.b16 %v11149, %v11142
    %v11689 = vpack.c.b16 %v11150, %v11143
    %v11690 = vpack.c.b16 %v11151, %v11144
    %v11691 = vpack.c.b16 %v11152, %v11145
    %v11692 = vpack.c.b16 %v11153, %v11146
    %v11693 = vpack.c.b16 %v11154, %v11147
    %v11694 = vpack.c.b16 %v11162, %v11155
    %v11695 = vpack.c.b16 %v11163, %v11156
    %v11696 = vpack.c.b16 %v11164, %v11157
    %v11697 = vpack.c.b16 %v11165, %v11158
    %v11698 = vpack.c.b16 %v11166, %v11159
    %v11699 = vpack.c.b16 %v11167, %v11160
    %v11700 = vpack.c.b16 %v11168, %v11161
    %v11701 = vpack.c.b16 %v11176, %v11169
    %v11702 = vpack.c.b16 %v11177, %v11170
    %v11703 = vpack.c.b16 %v11178, %v11171
    %v11704 = vpack.c.b16 %v11179, %v11172
    %v11705 = vpack.c.b16 %v11180, %v11173
    %v11706 = vpack.c.b16 %v11181, %v11174
    %v11707 = vpack.c.b16 %v11182, %v11175
    %v11708 = vpack.c.b16 %v11190, %v11183
    %v11709 = vpack.c.b16 %v11191, %v11184
    %v11710 = vpack.c.b16 %v11192, %v11185
    %v11711 = vpack.c.b16 %v11193, %v11186
    %v11712 = vpack.c.b16 %v11194, %v11187
    %v11713 = vpack.c.b16 %v11195, %v11188
    %v11714 = vpack.c.b16 %v11196, %v11189
    %v11715 = vpack.c.b16 %v11204, %v11197
    %v11716 = vpack.c.b16 %v11205, %v11198
    %v11717 = vpack.c.b16 %v11206, %v11199
    %v11718 = vpack.c.b16 %v11207, %v11200
    %v11719 = vpack.c.b16 %v11208, %v11201
    %v11720 = vpack.c.b16 %v11209, %v11202
    %v11721 = vpack.c.b16 %v11210, %v11203
    %v11722 = vpack.c.b16 %v11218, %v11211
    %v11723 = vpack.c.b16 %v11219, %v11212
    %v11724 = vpack.c.b16 %v11220, %v11213
    %v11725 = vpack.c.b16 %v11221, %v11214
    %v11726 = vpack.c.b16 %v11222, %v11215
    %v11727 = vpack.c.b16 %v11223, %v11216
    %v11728 = vpack.c.b16 %v11224, %v11217
    %v11729 = vpack.c.b16 %v11232, %v11225
    %v11730 = vpack.c.b16 %v11233, %v11226
    %v11731 = vpack.c.b16 %v11234, %v11227
    %v11732 = vpack.c.b16 %v11235, %v11228
    %v11733 = vpack.c.b16 %v11236, %v11229
    %v11734 = vpack.c.b16 %v11237, %v11230
    %v11735 = vpack.c.b16 %v11238, %v11231
    %v11736 = vpack.c.b16 %v11246, %v11239
    %v11737 = vpack.c.b16 %v11247, %v11240
    %v11738 = vpack.c.b16 %v11248, %v11241
    %v11739 = vpack.c.b16 %v11249, %v11242
    %v11740 = vpack.c.b16 %v11250, %v11243
    %v11741 = vpack.c.b16 %v11251, %v11244
    %v11742 = vpack.c.b16 %v11252, %v11245
    %v11743 = vpack.c.b16 %v11260, %v11253
    %v11744 = vpack.c.b16 %v11261, %v11254
    %v11745 = vpack.c.b16 %v11262, %v11255
    %v11746 = vpack.c.b16 %v11263, %v11256
    %v11747 = vpack.c.b16 %v11264, %v11257
    %v11748 = vpack.c.b16 %v11265, %v11258
    %v11749 = vpack.c.b16 %v11266, %v11259
    %v11750 = vpack.c.b16 %v11274, %v11267
    %v11751 = vpack.c.b16 %v11275, %v11268
    %v11752 = vpack.c.b16 %v11276, %v11269
    %v11753 = vpack.c.b16 %v11277, %v11270
    %v11754 = vpack.c.b16 %v11278, %v11271
    %v11755 = vpack.c.b16 %v11279, %v11272
    %v11756 = vpack.c.b16 %v11280, %v11273
    %v11757 = vpack.c.b16 %v11288, %v11281
    %v11758 = vpack.c.b16 %v11289, %v11282
    %v11759 = vpack.c.b16 %v11290, %v11283
    %v11760 = vpack.c.b16 %v11291, %v11284
    %v11761 = vpack.c.b16 %v11292, %v11285
    %v11762 = vpack.c.b16 %v11293, %v11286
    %v11763 = vpack.c.b16 %v11294, %v11287
    %v11764 = vpack.c.b16 %v11302, %v11295
    %v11765 = vpack.c.b16 %v11303, %v11296
    %v11766 = vpack.c.b16 %v11304, %v11297
    %v11767 = vpack.c.b16 %v11305, %v11298
    %v11768 = vpack.c.b16 %v11306, %v11299
    %v11769 = vpack.c.b16 %v11307, %v11300
    %v11770 = vpack.c.b16 %v11308, %v11301
    %v11771 = vpack.c.b16 %v11316, %v11309
    %v11772 = vpack.c.b16 %v11317, %v11310
    %v11773 = vpack.c.b16 %v11318, %v11311
    %v11774 = vpack.c.b16 %v11319, %v11312
    %v11775 = vpack.c.b16 %v11320, %v11313
    %v11776 = vpack.c.b16 %v11321, %v11314
    %v11777 = vpack.c.b16 %v11322, %v11315
    %v11778 = vpack.c.b16 %v11330, %v11323
    %v11779 = vpack.c.b16 %v11331, %v11324
    %v11780 = vpack.c.b16 %v11332, %v11325
    %v11781 = vpack.c.b16 %v11333, %v11326
    %v11782 = vpack.c.b16 %v11334, %v11327
    %v11783 = vpack.c.b16 %v11335, %v11328
    %v11784 = vpack.c.b16 %v11336, %v11329
    %12233 = vmatpush.bf16.msra.mxu0 %v11386
    %12234 = vmatpush.bf16.msra.mxu0 %v11379
    %12235 = vmatpush.bf16.msra.mxu0 %v11372
    %12236 = vmatpush.bf16.msra.mxu0 %v11365
    %12237 = vmatpush.bf16.msra.mxu0 %v11358
    %12238 = vmatpush.bf16.msra.mxu0 %v11351
    %12239 = vmatpush.bf16.msra.mxu0 %v11344
    %12240 = vmatpush.bf16.msra.mxu0 %v11337
    %12241 = vmatmul.bf16.gmra.mxu0 %v9390
    %v12242 = vpop.f32.mrf.mxu0
    %v12243 = vadd.f32 %v9915, %v12242
    %v12244 = vpop.f32.mrf.mxu0
    %12245 = vdwg.mxu0
    %12246 = vmatpush.bf16.msra.mxu0 %v11442
    %12247 = vmatpush.bf16.msra.mxu0 %v11435
    %12248 = vmatpush.bf16.msra.mxu0 %v11428
    %12249 = vmatpush.bf16.msra.mxu0 %v11421
    %12250 = vmatpush.bf16.msra.mxu0 %v11414
    %12251 = vmatpush.bf16.msra.mxu0 %v11407
    %12252 = vmatpush.bf16.msra.mxu0 %v11400
    %12253 = vmatpush.bf16.msra.mxu0 %v11393
    %12254 = vmatmul.bf16.gmra.mxu0 %v9391
    %v12255 = vpop.f32.mrf.mxu0
    %v12256 = vadd.f32 %v12243, %v12255
    %v12257 = vpop.f32.mrf.mxu0
    %12258 = vdwg.mxu0
    %12259 = vmatpush.bf16.msra.mxu0 %v11498
    %12260 = vmatpush.bf16.msra.mxu0 %v11491
    %12261 = vmatpush.bf16.msra.mxu0 %v11484
    %12262 = vmatpush.bf16.msra.mxu0 %v11477
    %12263 = vmatpush.bf16.msra.mxu0 %v11470
    %12264 = vmatpush.bf16.msra.mxu0 %v11463
    %12265 = vmatpush.bf16.msra.mxu0 %v11456
    %12266 = vmatpush.bf16.msra.mxu0 %v11449
    %12267 = vmatmul.bf16.gmra.mxu0 %v9392
    %v12268 = vpop.f32.mrf.mxu0
    %v12269 = vadd.f32 %v12256, %v12268
    %v12270 = vpop.f32.mrf.mxu0
    %12271 = vdwg.mxu0
    %12272 = vmatpush.bf16.msra.mxu0 %v11554
    %12273 = vmatpush.bf16.msra.mxu0 %v11547
    %12274 = vmatpush.bf16.msra.mxu0 %v11540
    %12275 = vmatpush.bf16.msra.mxu0 %v11533
    %12276 = vmatpush.bf16.msra.mxu0 %v11526
    %12277 = vmatpush.bf16.msra.mxu0 %v11519
    %12278 = vmatpush.bf16.msra.mxu0 %v11512
    %12279 = vmatpush.bf16.msra.mxu0 %v11505
    %12280 = vmatmul.bf16.gmra.mxu0 %v9393
    %v12281 = vpop.f32.mrf.mxu0
    %v12282 = vadd.f32 %v12269, %v12281
    %v12283 = vpop.f32.mrf.mxu0
    %12284 = vdwg.mxu0
    %12285 = vmatpush.bf16.msra.mxu0 %v11610
    %12286 = vmatpush.bf16.msra.mxu0 %v11603
    %12287 = vmatpush.bf16.msra.mxu0 %v11596
    %12288 = vmatpush.bf16.msra.mxu0 %v11589
    %12289 = vmatpush.bf16.msra.mxu0 %v11582
    %12290 = vmatpush.bf16.msra.mxu0 %v11575
    %12291 = vmatpush.bf16.msra.mxu0 %v11568
    %12292 = vmatpush.bf16.msra.mxu0 %v11561
    %12293 = vmatmul.bf16.gmra.mxu0 %v9394
    %v12294 = vpop.f32.mrf.mxu0
    %v12295 = vadd.f32 %v12282, %v12294
    %v12296 = vpop.f32.mrf.mxu0
    %12297 = vdwg.mxu0
    %12298 = vmatpush.bf16.msra.mxu0 %v11666
    %12299 = vmatpush.bf16.msra.mxu0 %v11659
    %12300 = vmatpush.bf16.msra.mxu0 %v11652
    %12301 = vmatpush.bf16.msra.mxu0 %v11645
    %12302 = vmatpush.bf16.msra.mxu0 %v11638
    %12303 = vmatpush.bf16.msra.mxu0 %v11631
    %12304 = vmatpush.bf16.msra.mxu0 %v11624
    %12305 = vmatpush.bf16.msra.mxu0 %v11617
    %12306 = vmatmul.bf16.gmra.mxu0 %v9395
    %v12307 = vpop.f32.mrf.mxu0
    %v12308 = vadd.f32 %v12295, %v12307
    %v12309 = vpop.f32.mrf.mxu0
    %12310 = vdwg.mxu0
    %12311 = vmatpush.bf16.msra.mxu0 %v11722
    %12312 = vmatpush.bf16.msra.mxu0 %v11715
    %12313 = vmatpush.bf16.msra.mxu0 %v11708
    %12314 = vmatpush.bf16.msra.mxu0 %v11701
    %12315 = vmatpush.bf16.msra.mxu0 %v11694
    %12316 = vmatpush.bf16.msra.mxu0 %v11687
    %12317 = vmatpush.bf16.msra.mxu0 %v11680
    %12318 = vmatpush.bf16.msra.mxu0 %v11673
    %12319 = vmatmul.bf16.gmra.mxu0 %v9396
    %v12320 = vpop.f32.mrf.mxu0
    %v12321 = vadd.f32 %v12308, %v12320
    %v12322 = vpop.f32.mrf.mxu0
    %12323 = vdwg.mxu0
    %12324 = vmatpush.bf16.msra.mxu0 %v11778
    %12325 = vmatpush.bf16.msra.mxu0 %v11771
    %12326 = vmatpush.bf16.msra.mxu0 %v11764
    %12327 = vmatpush.bf16.msra.mxu0 %v11757
    %12328 = vmatpush.bf16.msra.mxu0 %v11750
    %12329 = vmatpush.bf16.msra.mxu0 %v11743
    %12330 = vmatpush.bf16.msra.mxu0 %v11736
    %12331 = vmatpush.bf16.msra.mxu0 %v11729
    %12332 = vmatmul.bf16.gmra.mxu0 %v9397
    %v12333 = vpop.f32.mrf.mxu0
    %v12334 = vadd.f32 %v12321, %v12333
    %v12335 = vpop.f32.mrf.mxu0
    %12336 = vdwg.mxu0
    %12337 = vmatpush.bf16.msra.mxu0 %v11387
    %12338 = vmatpush.bf16.msra.mxu0 %v11380
    %12339 = vmatpush.bf16.msra.mxu0 %v11373
    %12340 = vmatpush.bf16.msra.mxu0 %v11366
    %12341 = vmatpush.bf16.msra.mxu0 %v11359
    %12342 = vmatpush.bf16.msra.mxu0 %v11352
    %12343 = vmatpush.bf16.msra.mxu0 %v11345
    %12344 = vmatpush.bf16.msra.mxu0 %v11338
    %12345 = vmatmul.bf16.gmra.mxu0 %v9390
    %v12346 = vpop.f32.mrf.mxu0
    %v12347 = vadd.f32 %v9916, %v12346
    %v12348 = vpop.f32.mrf.mxu0
    %12349 = vdwg.mxu0
    %12350 = vmatpush.bf16.msra.mxu0 %v11443
    %12351 = vmatpush.bf16.msra.mxu0 %v11436
    %12352 = vmatpush.bf16.msra.mxu0 %v11429
    %12353 = vmatpush.bf16.msra.mxu0 %v11422
    %12354 = vmatpush.bf16.msra.mxu0 %v11415
    %12355 = vmatpush.bf16.msra.mxu0 %v11408
    %12356 = vmatpush.bf16.msra.mxu0 %v11401
    %12357 = vmatpush.bf16.msra.mxu0 %v11394
    %12358 = vmatmul.bf16.gmra.mxu0 %v9391
    %v12359 = vpop.f32.mrf.mxu0
    %v12360 = vadd.f32 %v12347, %v12359
    %v12361 = vpop.f32.mrf.mxu0
    %12362 = vdwg.mxu0
    %12363 = vmatpush.bf16.msra.mxu0 %v11499
    %12364 = vmatpush.bf16.msra.mxu0 %v11492
    %12365 = vmatpush.bf16.msra.mxu0 %v11485
    %12366 = vmatpush.bf16.msra.mxu0 %v11478
    %12367 = vmatpush.bf16.msra.mxu0 %v11471
    %12368 = vmatpush.bf16.msra.mxu0 %v11464
    %12369 = vmatpush.bf16.msra.mxu0 %v11457
    %12370 = vmatpush.bf16.msra.mxu0 %v11450
    %12371 = vmatmul.bf16.gmra.mxu0 %v9392
    %v12372 = vpop.f32.mrf.mxu0
    %v12373 = vadd.f32 %v12360, %v12372
    %v12374 = vpop.f32.mrf.mxu0
    %12375 = vdwg.mxu0
    %12376 = vmatpush.bf16.msra.mxu0 %v11555
    %12377 = vmatpush.bf16.msra.mxu0 %v11548
    %12378 = vmatpush.bf16.msra.mxu0 %v11541
    %12379 = vmatpush.bf16.msra.mxu0 %v11534
    %12380 = vmatpush.bf16.msra.mxu0 %v11527
    %12381 = vmatpush.bf16.msra.mxu0 %v11520
    %12382 = vmatpush.bf16.msra.mxu0 %v11513
    %12383 = vmatpush.bf16.msra.mxu0 %v11506
    %12384 = vmatmul.bf16.gmra.mxu0 %v9393
    %v12385 = vpop.f32.mrf.mxu0
    %v12386 = vadd.f32 %v12373, %v12385
    %v12387 = vpop.f32.mrf.mxu0
    %12388 = vdwg.mxu0
    %12389 = vmatpush.bf16.msra.mxu0 %v11611
    %12390 = vmatpush.bf16.msra.mxu0 %v11604
    %12391 = vmatpush.bf16.msra.mxu0 %v11597
    %12392 = vmatpush.bf16.msra.mxu0 %v11590
    %12393 = vmatpush.bf16.msra.mxu0 %v11583
    %12394 = vmatpush.bf16.msra.mxu0 %v11576
    %12395 = vmatpush.bf16.msra.mxu0 %v11569
    %12396 = vmatpush.bf16.msra.mxu0 %v11562
    %12397 = vmatmul.bf16.gmra.mxu0 %v9394
    %v12398 = vpop.f32.mrf.mxu0
    %v12399 = vadd.f32 %v12386, %v12398
    %v12400 = vpop.f32.mrf.mxu0
    %12401 = vdwg.mxu0
    %12402 = vmatpush.bf16.msra.mxu0 %v11667
    %12403 = vmatpush.bf16.msra.mxu0 %v11660
    %12404 = vmatpush.bf16.msra.mxu0 %v11653
    %12405 = vmatpush.bf16.msra.mxu0 %v11646
    %12406 = vmatpush.bf16.msra.mxu0 %v11639
    %12407 = vmatpush.bf16.msra.mxu0 %v11632
    %12408 = vmatpush.bf16.msra.mxu0 %v11625
    %12409 = vmatpush.bf16.msra.mxu0 %v11618
    %12410 = vmatmul.bf16.gmra.mxu0 %v9395
    %v12411 = vpop.f32.mrf.mxu0
    %v12412 = vadd.f32 %v12399, %v12411
    %v12413 = vpop.f32.mrf.mxu0
    %12414 = vdwg.mxu0
    %12415 = vmatpush.bf16.msra.mxu0 %v11723
    %12416 = vmatpush.bf16.msra.mxu0 %v11716
    %12417 = vmatpush.bf16.msra.mxu0 %v11709
    %12418 = vmatpush.bf16.msra.mxu0 %v11702
    %12419 = vmatpush.bf16.msra.mxu0 %v11695
    %12420 = vmatpush.bf16.msra.mxu0 %v11688
    %12421 = vmatpush.bf16.msra.mxu0 %v11681
    %12422 = vmatpush.bf16.msra.mxu0 %v11674
    %12423 = vmatmul.bf16.gmra.mxu0 %v9396
    %v12424 = vpop.f32.mrf.mxu0
    %v12425 = vadd.f32 %v12412, %v12424
    %v12426 = vpop.f32.mrf.mxu0
    %12427 = vdwg.mxu0
    %12428 = vmatpush.bf16.msra.mxu0 %v11779
    %12429 = vmatpush.bf16.msra.mxu0 %v11772
    %12430 = vmatpush.bf16.msra.mxu0 %v11765
    %12431 = vmatpush.bf16.msra.mxu0 %v11758
    %12432 = vmatpush.bf16.msra.mxu0 %v11751
    %12433 = vmatpush.bf16.msra.mxu0 %v11744
    %12434 = vmatpush.bf16.msra.mxu0 %v11737
    %12435 = vmatpush.bf16.msra.mxu0 %v11730
    %12436 = vmatmul.bf16.gmra.mxu0 %v9397
    %v12437 = vpop.f32.mrf.mxu0
    %v12438 = vadd.f32 %v12425, %v12437
    %v12439 = vpop.f32.mrf.mxu0
    %12440 = vdwg.mxu0
    %12441 = vmatpush.bf16.msra.mxu0 %v11388
    %12442 = vmatpush.bf16.msra.mxu0 %v11381
    %12443 = vmatpush.bf16.msra.mxu0 %v11374
    %12444 = vmatpush.bf16.msra.mxu0 %v11367
    %12445 = vmatpush.bf16.msra.mxu0 %v11360
    %12446 = vmatpush.bf16.msra.mxu0 %v11353
    %12447 = vmatpush.bf16.msra.mxu0 %v11346
    %12448 = vmatpush.bf16.msra.mxu0 %v11339
    %12449 = vmatmul.bf16.gmra.mxu0 %v9390
    %v12450 = vpop.f32.mrf.mxu0
    %v12451 = vadd.f32 %v9917, %v12450
    %v12452 = vpop.f32.mrf.mxu0
    %12453 = vdwg.mxu0
    %12454 = vmatpush.bf16.msra.mxu0 %v11444
    %12455 = vmatpush.bf16.msra.mxu0 %v11437
    %12456 = vmatpush.bf16.msra.mxu0 %v11430
    %12457 = vmatpush.bf16.msra.mxu0 %v11423
    %12458 = vmatpush.bf16.msra.mxu0 %v11416
    %12459 = vmatpush.bf16.msra.mxu0 %v11409
    %12460 = vmatpush.bf16.msra.mxu0 %v11402
    %12461 = vmatpush.bf16.msra.mxu0 %v11395
    %12462 = vmatmul.bf16.gmra.mxu0 %v9391
    %v12463 = vpop.f32.mrf.mxu0
    %v12464 = vadd.f32 %v12451, %v12463
    %v12465 = vpop.f32.mrf.mxu0
    %12466 = vdwg.mxu0
    %12467 = vmatpush.bf16.msra.mxu0 %v11500
    %12468 = vmatpush.bf16.msra.mxu0 %v11493
    %12469 = vmatpush.bf16.msra.mxu0 %v11486
    %12470 = vmatpush.bf16.msra.mxu0 %v11479
    %12471 = vmatpush.bf16.msra.mxu0 %v11472
    %12472 = vmatpush.bf16.msra.mxu0 %v11465
    %12473 = vmatpush.bf16.msra.mxu0 %v11458
    %12474 = vmatpush.bf16.msra.mxu0 %v11451
    %12475 = vmatmul.bf16.gmra.mxu0 %v9392
    %v12476 = vpop.f32.mrf.mxu0
    %v12477 = vadd.f32 %v12464, %v12476
    %v12478 = vpop.f32.mrf.mxu0
    %12479 = vdwg.mxu0
    %12480 = vmatpush.bf16.msra.mxu0 %v11556
    %12481 = vmatpush.bf16.msra.mxu0 %v11549
    %12482 = vmatpush.bf16.msra.mxu0 %v11542
    %12483 = vmatpush.bf16.msra.mxu0 %v11535
    %12484 = vmatpush.bf16.msra.mxu0 %v11528
    %12485 = vmatpush.bf16.msra.mxu0 %v11521
    %12486 = vmatpush.bf16.msra.mxu0 %v11514
    %12487 = vmatpush.bf16.msra.mxu0 %v11507
    %12488 = vmatmul.bf16.gmra.mxu0 %v9393
    %v12489 = vpop.f32.mrf.mxu0
    %v12490 = vadd.f32 %v12477, %v12489
    %v12491 = vpop.f32.mrf.mxu0
    %12492 = vdwg.mxu0
    %12493 = vmatpush.bf16.msra.mxu0 %v11612
    %12494 = vmatpush.bf16.msra.mxu0 %v11605
    %12495 = vmatpush.bf16.msra.mxu0 %v11598
    %12496 = vmatpush.bf16.msra.mxu0 %v11591
    %12497 = vmatpush.bf16.msra.mxu0 %v11584
    %12498 = vmatpush.bf16.msra.mxu0 %v11577
    %12499 = vmatpush.bf16.msra.mxu0 %v11570
    %12500 = vmatpush.bf16.msra.mxu0 %v11563
    %12501 = vmatmul.bf16.gmra.mxu0 %v9394
    %v12502 = vpop.f32.mrf.mxu0
    %v12503 = vadd.f32 %v12490, %v12502
    %v12504 = vpop.f32.mrf.mxu0
    %12505 = vdwg.mxu0
    %12506 = vmatpush.bf16.msra.mxu0 %v11668
    %12507 = vmatpush.bf16.msra.mxu0 %v11661
    %12508 = vmatpush.bf16.msra.mxu0 %v11654
    %12509 = vmatpush.bf16.msra.mxu0 %v11647
    %12510 = vmatpush.bf16.msra.mxu0 %v11640
    %12511 = vmatpush.bf16.msra.mxu0 %v11633
    %12512 = vmatpush.bf16.msra.mxu0 %v11626
    %12513 = vmatpush.bf16.msra.mxu0 %v11619
    %12514 = vmatmul.bf16.gmra.mxu0 %v9395
    %v12515 = vpop.f32.mrf.mxu0
    %v12516 = vadd.f32 %v12503, %v12515
    %v12517 = vpop.f32.mrf.mxu0
    %12518 = vdwg.mxu0
    %12519 = vmatpush.bf16.msra.mxu0 %v11724
    %12520 = vmatpush.bf16.msra.mxu0 %v11717
    %12521 = vmatpush.bf16.msra.mxu0 %v11710
    %12522 = vmatpush.bf16.msra.mxu0 %v11703
    %12523 = vmatpush.bf16.msra.mxu0 %v11696
    %12524 = vmatpush.bf16.msra.mxu0 %v11689
    %12525 = vmatpush.bf16.msra.mxu0 %v11682
    %12526 = vmatpush.bf16.msra.mxu0 %v11675
    %12527 = vmatmul.bf16.gmra.mxu0 %v9396
    %v12528 = vpop.f32.mrf.mxu0
    %v12529 = vadd.f32 %v12516, %v12528
    %v12530 = vpop.f32.mrf.mxu0
    %12531 = vdwg.mxu0
    %12532 = vmatpush.bf16.msra.mxu0 %v11780
    %12533 = vmatpush.bf16.msra.mxu0 %v11773
    %12534 = vmatpush.bf16.msra.mxu0 %v11766
    %12535 = vmatpush.bf16.msra.mxu0 %v11759
    %12536 = vmatpush.bf16.msra.mxu0 %v11752
    %12537 = vmatpush.bf16.msra.mxu0 %v11745
    %12538 = vmatpush.bf16.msra.mxu0 %v11738
    %12539 = vmatpush.bf16.msra.mxu0 %v11731
    %12540 = vmatmul.bf16.gmra.mxu0 %v9397
    %v12541 = vpop.f32.mrf.mxu0
    %v12542 = vadd.f32 %v12529, %v12541
    %v12543 = vpop.f32.mrf.mxu0
    %12544 = vdwg.mxu0
    %12545 = vmatpush.bf16.msra.mxu0 %v11389
    %12546 = vmatpush.bf16.msra.mxu0 %v11382
    %12547 = vmatpush.bf16.msra.mxu0 %v11375
    %12548 = vmatpush.bf16.msra.mxu0 %v11368
    %12549 = vmatpush.bf16.msra.mxu0 %v11361
    %12550 = vmatpush.bf16.msra.mxu0 %v11354
    %12551 = vmatpush.bf16.msra.mxu0 %v11347
    %12552 = vmatpush.bf16.msra.mxu0 %v11340
    %12553 = vmatmul.bf16.gmra.mxu0 %v9390
    %v12554 = vpop.f32.mrf.mxu0
    %v12555 = vadd.f32 %v9918, %v12554
    %v12556 = vpop.f32.mrf.mxu0
    %12557 = vdwg.mxu0
    %12558 = vmatpush.bf16.msra.mxu0 %v11445
    %12559 = vmatpush.bf16.msra.mxu0 %v11438
    %12560 = vmatpush.bf16.msra.mxu0 %v11431
    %12561 = vmatpush.bf16.msra.mxu0 %v11424
    %12562 = vmatpush.bf16.msra.mxu0 %v11417
    %12563 = vmatpush.bf16.msra.mxu0 %v11410
    %12564 = vmatpush.bf16.msra.mxu0 %v11403
    %12565 = vmatpush.bf16.msra.mxu0 %v11396
    %12566 = vmatmul.bf16.gmra.mxu0 %v9391
    %v12567 = vpop.f32.mrf.mxu0
    %v12568 = vadd.f32 %v12555, %v12567
    %v12569 = vpop.f32.mrf.mxu0
    %12570 = vdwg.mxu0
    %12571 = vmatpush.bf16.msra.mxu0 %v11501
    %12572 = vmatpush.bf16.msra.mxu0 %v11494
    %12573 = vmatpush.bf16.msra.mxu0 %v11487
    %12574 = vmatpush.bf16.msra.mxu0 %v11480
    %12575 = vmatpush.bf16.msra.mxu0 %v11473
    %12576 = vmatpush.bf16.msra.mxu0 %v11466
    %12577 = vmatpush.bf16.msra.mxu0 %v11459
    %12578 = vmatpush.bf16.msra.mxu0 %v11452
    %12579 = vmatmul.bf16.gmra.mxu0 %v9392
    %v12580 = vpop.f32.mrf.mxu0
    %v12581 = vadd.f32 %v12568, %v12580
    %v12582 = vpop.f32.mrf.mxu0
    %12583 = vdwg.mxu0
    %12584 = vmatpush.bf16.msra.mxu0 %v11557
    %12585 = vmatpush.bf16.msra.mxu0 %v11550
    %12586 = vmatpush.bf16.msra.mxu0 %v11543
    %12587 = vmatpush.bf16.msra.mxu0 %v11536
    %12588 = vmatpush.bf16.msra.mxu0 %v11529
    %12589 = vmatpush.bf16.msra.mxu0 %v11522
    %12590 = vmatpush.bf16.msra.mxu0 %v11515
    %12591 = vmatpush.bf16.msra.mxu0 %v11508
    %12592 = vmatmul.bf16.gmra.mxu0 %v9393
    %v12593 = vpop.f32.mrf.mxu0
    %v12594 = vadd.f32 %v12581, %v12593
    %v12595 = vpop.f32.mrf.mxu0
    %12596 = vdwg.mxu0
    %12597 = vmatpush.bf16.msra.mxu0 %v11613
    %12598 = vmatpush.bf16.msra.mxu0 %v11606
    %12599 = vmatpush.bf16.msra.mxu0 %v11599
    %12600 = vmatpush.bf16.msra.mxu0 %v11592
    %12601 = vmatpush.bf16.msra.mxu0 %v11585
    %12602 = vmatpush.bf16.msra.mxu0 %v11578
    %12603 = vmatpush.bf16.msra.mxu0 %v11571
    %12604 = vmatpush.bf16.msra.mxu0 %v11564
    %12605 = vmatmul.bf16.gmra.mxu0 %v9394
    %v12606 = vpop.f32.mrf.mxu0
    %v12607 = vadd.f32 %v12594, %v12606
    %v12608 = vpop.f32.mrf.mxu0
    %12609 = vdwg.mxu0
    %12610 = vmatpush.bf16.msra.mxu0 %v11669
    %12611 = vmatpush.bf16.msra.mxu0 %v11662
    %12612 = vmatpush.bf16.msra.mxu0 %v11655
    %12613 = vmatpush.bf16.msra.mxu0 %v11648
    %12614 = vmatpush.bf16.msra.mxu0 %v11641
    %12615 = vmatpush.bf16.msra.mxu0 %v11634
    %12616 = vmatpush.bf16.msra.mxu0 %v11627
    %12617 = vmatpush.bf16.msra.mxu0 %v11620
    %12618 = vmatmul.bf16.gmra.mxu0 %v9395
    %v12619 = vpop.f32.mrf.mxu0
    %v12620 = vadd.f32 %v12607, %v12619
    %v12621 = vpop.f32.mrf.mxu0
    %12622 = vdwg.mxu0
    %12623 = vmatpush.bf16.msra.mxu0 %v11725
    %12624 = vmatpush.bf16.msra.mxu0 %v11718
    %12625 = vmatpush.bf16.msra.mxu0 %v11711
    %12626 = vmatpush.bf16.msra.mxu0 %v11704
    %12627 = vmatpush.bf16.msra.mxu0 %v11697
    %12628 = vmatpush.bf16.msra.mxu0 %v11690
    %12629 = vmatpush.bf16.msra.mxu0 %v11683
    %12630 = vmatpush.bf16.msra.mxu0 %v11676
    %12631 = vmatmul.bf16.gmra.mxu0 %v9396
    %v12632 = vpop.f32.mrf.mxu0
    %v12633 = vadd.f32 %v12620, %v12632
    %v12634 = vpop.f32.mrf.mxu0
    %12635 = vdwg.mxu0
    %12636 = vmatpush.bf16.msra.mxu0 %v11781
    %12637 = vmatpush.bf16.msra.mxu0 %v11774
    %12638 = vmatpush.bf16.msra.mxu0 %v11767
    %12639 = vmatpush.bf16.msra.mxu0 %v11760
    %12640 = vmatpush.bf16.msra.mxu0 %v11753
    %12641 = vmatpush.bf16.msra.mxu0 %v11746
    %12642 = vmatpush.bf16.msra.mxu0 %v11739
    %12643 = vmatpush.bf16.msra.mxu0 %v11732
    %12644 = vmatmul.bf16.gmra.mxu0 %v9397
    %v12645 = vpop.f32.mrf.mxu0
    %v12646 = vadd.f32 %v12633, %v12645
    %v12647 = vpop.f32.mrf.mxu0
    %12648 = vdwg.mxu0
    %12649 = vmatpush.bf16.msra.mxu0 %v11390
    %12650 = vmatpush.bf16.msra.mxu0 %v11383
    %12651 = vmatpush.bf16.msra.mxu0 %v11376
    %12652 = vmatpush.bf16.msra.mxu0 %v11369
    %12653 = vmatpush.bf16.msra.mxu0 %v11362
    %12654 = vmatpush.bf16.msra.mxu0 %v11355
    %12655 = vmatpush.bf16.msra.mxu0 %v11348
    %12656 = vmatpush.bf16.msra.mxu0 %v11341
    %12657 = vmatmul.bf16.gmra.mxu0 %v9390
    %v12658 = vpop.f32.mrf.mxu0
    %v12659 = vadd.f32 %v9919, %v12658
    %v12660 = vpop.f32.mrf.mxu0
    %12661 = vdwg.mxu0
    %12662 = vmatpush.bf16.msra.mxu0 %v11446
    %12663 = vmatpush.bf16.msra.mxu0 %v11439
    %12664 = vmatpush.bf16.msra.mxu0 %v11432
    %12665 = vmatpush.bf16.msra.mxu0 %v11425
    %12666 = vmatpush.bf16.msra.mxu0 %v11418
    %12667 = vmatpush.bf16.msra.mxu0 %v11411
    %12668 = vmatpush.bf16.msra.mxu0 %v11404
    %12669 = vmatpush.bf16.msra.mxu0 %v11397
    %12670 = vmatmul.bf16.gmra.mxu0 %v9391
    %v12671 = vpop.f32.mrf.mxu0
    %v12672 = vadd.f32 %v12659, %v12671
    %v12673 = vpop.f32.mrf.mxu0
    %12674 = vdwg.mxu0
    %12675 = vmatpush.bf16.msra.mxu0 %v11502
    %12676 = vmatpush.bf16.msra.mxu0 %v11495
    %12677 = vmatpush.bf16.msra.mxu0 %v11488
    %12678 = vmatpush.bf16.msra.mxu0 %v11481
    %12679 = vmatpush.bf16.msra.mxu0 %v11474
    %12680 = vmatpush.bf16.msra.mxu0 %v11467
    %12681 = vmatpush.bf16.msra.mxu0 %v11460
    %12682 = vmatpush.bf16.msra.mxu0 %v11453
    %12683 = vmatmul.bf16.gmra.mxu0 %v9392
    %v12684 = vpop.f32.mrf.mxu0
    %v12685 = vadd.f32 %v12672, %v12684
    %v12686 = vpop.f32.mrf.mxu0
    %12687 = vdwg.mxu0
    %12688 = vmatpush.bf16.msra.mxu0 %v11558
    %12689 = vmatpush.bf16.msra.mxu0 %v11551
    %12690 = vmatpush.bf16.msra.mxu0 %v11544
    %12691 = vmatpush.bf16.msra.mxu0 %v11537
    %12692 = vmatpush.bf16.msra.mxu0 %v11530
    %12693 = vmatpush.bf16.msra.mxu0 %v11523
    %12694 = vmatpush.bf16.msra.mxu0 %v11516
    %12695 = vmatpush.bf16.msra.mxu0 %v11509
    %12696 = vmatmul.bf16.gmra.mxu0 %v9393
    %v12697 = vpop.f32.mrf.mxu0
    %v12698 = vadd.f32 %v12685, %v12697
    %v12699 = vpop.f32.mrf.mxu0
    %12700 = vdwg.mxu0
    %12701 = vmatpush.bf16.msra.mxu0 %v11614
    %12702 = vmatpush.bf16.msra.mxu0 %v11607
    %12703 = vmatpush.bf16.msra.mxu0 %v11600
    %12704 = vmatpush.bf16.msra.mxu0 %v11593
    %12705 = vmatpush.bf16.msra.mxu0 %v11586
    %12706 = vmatpush.bf16.msra.mxu0 %v11579
    %12707 = vmatpush.bf16.msra.mxu0 %v11572
    %12708 = vmatpush.bf16.msra.mxu0 %v11565
    %12709 = vmatmul.bf16.gmra.mxu0 %v9394
    %v12710 = vpop.f32.mrf.mxu0
    %v12711 = vadd.f32 %v12698, %v12710
    %v12712 = vpop.f32.mrf.mxu0
    %12713 = vdwg.mxu0
    %12714 = vmatpush.bf16.msra.mxu0 %v11670
    %12715 = vmatpush.bf16.msra.mxu0 %v11663
    %12716 = vmatpush.bf16.msra.mxu0 %v11656
    %12717 = vmatpush.bf16.msra.mxu0 %v11649
    %12718 = vmatpush.bf16.msra.mxu0 %v11642
    %12719 = vmatpush.bf16.msra.mxu0 %v11635
    %12720 = vmatpush.bf16.msra.mxu0 %v11628
    %12721 = vmatpush.bf16.msra.mxu0 %v11621
    %12722 = vmatmul.bf16.gmra.mxu0 %v9395
    %v12723 = vpop.f32.mrf.mxu0
    %v12724 = vadd.f32 %v12711, %v12723
    %v12725 = vpop.f32.mrf.mxu0
    %12726 = vdwg.mxu0
    %12727 = vmatpush.bf16.msra.mxu0 %v11726
    %12728 = vmatpush.bf16.msra.mxu0 %v11719
    %12729 = vmatpush.bf16.msra.mxu0 %v11712
    %12730 = vmatpush.bf16.msra.mxu0 %v11705
    %12731 = vmatpush.bf16.msra.mxu0 %v11698
    %12732 = vmatpush.bf16.msra.mxu0 %v11691
    %12733 = vmatpush.bf16.msra.mxu0 %v11684
    %12734 = vmatpush.bf16.msra.mxu0 %v11677
    %12735 = vmatmul.bf16.gmra.mxu0 %v9396
    %v12736 = vpop.f32.mrf.mxu0
    %v12737 = vadd.f32 %v12724, %v12736
    %v12738 = vpop.f32.mrf.mxu0
    %12739 = vdwg.mxu0
    %12740 = vmatpush.bf16.msra.mxu0 %v11782
    %12741 = vmatpush.bf16.msra.mxu0 %v11775
    %12742 = vmatpush.bf16.msra.mxu0 %v11768
    %12743 = vmatpush.bf16.msra.mxu0 %v11761
    %12744 = vmatpush.bf16.msra.mxu0 %v11754
    %12745 = vmatpush.bf16.msra.mxu0 %v11747
    %12746 = vmatpush.bf16.msra.mxu0 %v11740
    %12747 = vmatpush.bf16.msra.mxu0 %v11733
    %12748 = vmatmul.bf16.gmra.mxu0 %v9397
    %v12749 = vpop.f32.mrf.mxu0
    %v12750 = vadd.f32 %v12737, %v12749
    %v12751 = vpop.f32.mrf.mxu0
    %12752 = vdwg.mxu0
    %12753 = vmatpush.bf16.msra.mxu0 %v11391
    %12754 = vmatpush.bf16.msra.mxu0 %v11384
    %12755 = vmatpush.bf16.msra.mxu0 %v11377
    %12756 = vmatpush.bf16.msra.mxu0 %v11370
    %12757 = vmatpush.bf16.msra.mxu0 %v11363
    %12758 = vmatpush.bf16.msra.mxu0 %v11356
    %12759 = vmatpush.bf16.msra.mxu0 %v11349
    %12760 = vmatpush.bf16.msra.mxu0 %v11342
    %12761 = vmatmul.bf16.gmra.mxu0 %v9390
    %v12762 = vpop.f32.mrf.mxu0
    %v12763 = vadd.f32 %v9920, %v12762
    %v12764 = vpop.f32.mrf.mxu0
    %12765 = vdwg.mxu0
    %12766 = vmatpush.bf16.msra.mxu0 %v11447
    %12767 = vmatpush.bf16.msra.mxu0 %v11440
    %12768 = vmatpush.bf16.msra.mxu0 %v11433
    %12769 = vmatpush.bf16.msra.mxu0 %v11426
    %12770 = vmatpush.bf16.msra.mxu0 %v11419
    %12771 = vmatpush.bf16.msra.mxu0 %v11412
    %12772 = vmatpush.bf16.msra.mxu0 %v11405
    %12773 = vmatpush.bf16.msra.mxu0 %v11398
    %12774 = vmatmul.bf16.gmra.mxu0 %v9391
    %v12775 = vpop.f32.mrf.mxu0
    %v12776 = vadd.f32 %v12763, %v12775
    %v12777 = vpop.f32.mrf.mxu0
    %12778 = vdwg.mxu0
    %12779 = vmatpush.bf16.msra.mxu0 %v11503
    %12780 = vmatpush.bf16.msra.mxu0 %v11496
    %12781 = vmatpush.bf16.msra.mxu0 %v11489
    %12782 = vmatpush.bf16.msra.mxu0 %v11482
    %12783 = vmatpush.bf16.msra.mxu0 %v11475
    %12784 = vmatpush.bf16.msra.mxu0 %v11468
    %12785 = vmatpush.bf16.msra.mxu0 %v11461
    %12786 = vmatpush.bf16.msra.mxu0 %v11454
    %12787 = vmatmul.bf16.gmra.mxu0 %v9392
    %v12788 = vpop.f32.mrf.mxu0
    %v12789 = vadd.f32 %v12776, %v12788
    %v12790 = vpop.f32.mrf.mxu0
    %12791 = vdwg.mxu0
    %12792 = vmatpush.bf16.msra.mxu0 %v11559
    %12793 = vmatpush.bf16.msra.mxu0 %v11552
    %12794 = vmatpush.bf16.msra.mxu0 %v11545
    %12795 = vmatpush.bf16.msra.mxu0 %v11538
    %12796 = vmatpush.bf16.msra.mxu0 %v11531
    %12797 = vmatpush.bf16.msra.mxu0 %v11524
    %12798 = vmatpush.bf16.msra.mxu0 %v11517
    %12799 = vmatpush.bf16.msra.mxu0 %v11510
    %12800 = vmatmul.bf16.gmra.mxu0 %v9393
    %v12801 = vpop.f32.mrf.mxu0
    %v12802 = vadd.f32 %v12789, %v12801
    %v12803 = vpop.f32.mrf.mxu0
    %12804 = vdwg.mxu0
    %12805 = vmatpush.bf16.msra.mxu0 %v11615
    %12806 = vmatpush.bf16.msra.mxu0 %v11608
    %12807 = vmatpush.bf16.msra.mxu0 %v11601
    %12808 = vmatpush.bf16.msra.mxu0 %v11594
    %12809 = vmatpush.bf16.msra.mxu0 %v11587
    %12810 = vmatpush.bf16.msra.mxu0 %v11580
    %12811 = vmatpush.bf16.msra.mxu0 %v11573
    %12812 = vmatpush.bf16.msra.mxu0 %v11566
    %12813 = vmatmul.bf16.gmra.mxu0 %v9394
    %v12814 = vpop.f32.mrf.mxu0
    %v12815 = vadd.f32 %v12802, %v12814
    %v12816 = vpop.f32.mrf.mxu0
    %12817 = vdwg.mxu0
    %12818 = vmatpush.bf16.msra.mxu0 %v11671
    %12819 = vmatpush.bf16.msra.mxu0 %v11664
    %12820 = vmatpush.bf16.msra.mxu0 %v11657
    %12821 = vmatpush.bf16.msra.mxu0 %v11650
    %12822 = vmatpush.bf16.msra.mxu0 %v11643
    %12823 = vmatpush.bf16.msra.mxu0 %v11636
    %12824 = vmatpush.bf16.msra.mxu0 %v11629
    %12825 = vmatpush.bf16.msra.mxu0 %v11622
    %12826 = vmatmul.bf16.gmra.mxu0 %v9395
    %v12827 = vpop.f32.mrf.mxu0
    %v12828 = vadd.f32 %v12815, %v12827
    %v12829 = vpop.f32.mrf.mxu0
    %12830 = vdwg.mxu0
    %12831 = vmatpush.bf16.msra.mxu0 %v11727
    %12832 = vmatpush.bf16.msra.mxu0 %v11720
    %12833 = vmatpush.bf16.msra.mxu0 %v11713
    %12834 = vmatpush.bf16.msra.mxu0 %v11706
    %12835 = vmatpush.bf16.msra.mxu0 %v11699
    %12836 = vmatpush.bf16.msra.mxu0 %v11692
    %12837 = vmatpush.bf16.msra.mxu0 %v11685
    %12838 = vmatpush.bf16.msra.mxu0 %v11678
    %12839 = vmatmul.bf16.gmra.mxu0 %v9396
    %v12840 = vpop.f32.mrf.mxu0
    %v12841 = vadd.f32 %v12828, %v12840
    %v12842 = vpop.f32.mrf.mxu0
    %12843 = vdwg.mxu0
    %12844 = vmatpush.bf16.msra.mxu0 %v11783
    %12845 = vmatpush.bf16.msra.mxu0 %v11776
    %12846 = vmatpush.bf16.msra.mxu0 %v11769
    %12847 = vmatpush.bf16.msra.mxu0 %v11762
    %12848 = vmatpush.bf16.msra.mxu0 %v11755
    %12849 = vmatpush.bf16.msra.mxu0 %v11748
    %12850 = vmatpush.bf16.msra.mxu0 %v11741
    %12851 = vmatpush.bf16.msra.mxu0 %v11734
    %12852 = vmatmul.bf16.gmra.mxu0 %v9397
    %v12853 = vpop.f32.mrf.mxu0
    %v12854 = vadd.f32 %v12841, %v12853
    %v12855 = vpop.f32.mrf.mxu0
    %12856 = vdwg.mxu0
    %12857 = vmatpush.bf16.msra.mxu0 %v11392
    %12858 = vmatpush.bf16.msra.mxu0 %v11385
    %12859 = vmatpush.bf16.msra.mxu0 %v11378
    %12860 = vmatpush.bf16.msra.mxu0 %v11371
    %12861 = vmatpush.bf16.msra.mxu0 %v11364
    %12862 = vmatpush.bf16.msra.mxu0 %v11357
    %12863 = vmatpush.bf16.msra.mxu0 %v11350
    %12864 = vmatpush.bf16.msra.mxu0 %v11343
    %12865 = vmatmul.bf16.gmra.mxu0 %v9390
    %v12866 = vpop.f32.mrf.mxu0
    %v12867 = vadd.f32 %v9921, %v12866
    %v12868 = vpop.f32.mrf.mxu0
    %12869 = vdwg.mxu0
    %12870 = vmatpush.bf16.msra.mxu0 %v11448
    %12871 = vmatpush.bf16.msra.mxu0 %v11441
    %12872 = vmatpush.bf16.msra.mxu0 %v11434
    %12873 = vmatpush.bf16.msra.mxu0 %v11427
    %12874 = vmatpush.bf16.msra.mxu0 %v11420
    %12875 = vmatpush.bf16.msra.mxu0 %v11413
    %12876 = vmatpush.bf16.msra.mxu0 %v11406
    %12877 = vmatpush.bf16.msra.mxu0 %v11399
    %12878 = vmatmul.bf16.gmra.mxu0 %v9391
    %v12879 = vpop.f32.mrf.mxu0
    %v12880 = vadd.f32 %v12867, %v12879
    %v12881 = vpop.f32.mrf.mxu0
    %12882 = vdwg.mxu0
    %12883 = vmatpush.bf16.msra.mxu0 %v11504
    %12884 = vmatpush.bf16.msra.mxu0 %v11497
    %12885 = vmatpush.bf16.msra.mxu0 %v11490
    %12886 = vmatpush.bf16.msra.mxu0 %v11483
    %12887 = vmatpush.bf16.msra.mxu0 %v11476
    %12888 = vmatpush.bf16.msra.mxu0 %v11469
    %12889 = vmatpush.bf16.msra.mxu0 %v11462
    %12890 = vmatpush.bf16.msra.mxu0 %v11455
    %12891 = vmatmul.bf16.gmra.mxu0 %v9392
    %v12892 = vpop.f32.mrf.mxu0
    %v12893 = vadd.f32 %v12880, %v12892
    %v12894 = vpop.f32.mrf.mxu0
    %12895 = vdwg.mxu0
    %12896 = vmatpush.bf16.msra.mxu0 %v11560
    %12897 = vmatpush.bf16.msra.mxu0 %v11553
    %12898 = vmatpush.bf16.msra.mxu0 %v11546
    %12899 = vmatpush.bf16.msra.mxu0 %v11539
    %12900 = vmatpush.bf16.msra.mxu0 %v11532
    %12901 = vmatpush.bf16.msra.mxu0 %v11525
    %12902 = vmatpush.bf16.msra.mxu0 %v11518
    %12903 = vmatpush.bf16.msra.mxu0 %v11511
    %12904 = vmatmul.bf16.gmra.mxu0 %v9393
    %v12905 = vpop.f32.mrf.mxu0
    %v12906 = vadd.f32 %v12893, %v12905
    %v12907 = vpop.f32.mrf.mxu0
    %12908 = vdwg.mxu0
    %12909 = vmatpush.bf16.msra.mxu0 %v11616
    %12910 = vmatpush.bf16.msra.mxu0 %v11609
    %12911 = vmatpush.bf16.msra.mxu0 %v11602
    %12912 = vmatpush.bf16.msra.mxu0 %v11595
    %12913 = vmatpush.bf16.msra.mxu0 %v11588
    %12914 = vmatpush.bf16.msra.mxu0 %v11581
    %12915 = vmatpush.bf16.msra.mxu0 %v11574
    %12916 = vmatpush.bf16.msra.mxu0 %v11567
    %12917 = vmatmul.bf16.gmra.mxu0 %v9394
    %v12918 = vpop.f32.mrf.mxu0
    %v12919 = vadd.f32 %v12906, %v12918
    %v12920 = vpop.f32.mrf.mxu0
    %12921 = vdwg.mxu0
    %12922 = vmatpush.bf16.msra.mxu0 %v11672
    %12923 = vmatpush.bf16.msra.mxu0 %v11665
    %12924 = vmatpush.bf16.msra.mxu0 %v11658
    %12925 = vmatpush.bf16.msra.mxu0 %v11651
    %12926 = vmatpush.bf16.msra.mxu0 %v11644
    %12927 = vmatpush.bf16.msra.mxu0 %v11637
    %12928 = vmatpush.bf16.msra.mxu0 %v11630
    %12929 = vmatpush.bf16.msra.mxu0 %v11623
    %12930 = vmatmul.bf16.gmra.mxu0 %v9395
    %v12931 = vpop.f32.mrf.mxu0
    %v12932 = vadd.f32 %v12919, %v12931
    %v12933 = vpop.f32.mrf.mxu0
    %12934 = vdwg.mxu0
    %12935 = vmatpush.bf16.msra.mxu0 %v11728
    %12936 = vmatpush.bf16.msra.mxu0 %v11721
    %12937 = vmatpush.bf16.msra.mxu0 %v11714
    %12938 = vmatpush.bf16.msra.mxu0 %v11707
    %12939 = vmatpush.bf16.msra.mxu0 %v11700
    %12940 = vmatpush.bf16.msra.mxu0 %v11693
    %12941 = vmatpush.bf16.msra.mxu0 %v11686
    %12942 = vmatpush.bf16.msra.mxu0 %v11679
    %12943 = vmatmul.bf16.gmra.mxu0 %v9396
    %v12944 = vpop.f32.mrf.mxu0
    %v12945 = vadd.f32 %v12932, %v12944
    %v12946 = vpop.f32.mrf.mxu0
    %12947 = vdwg.mxu0
    %12948 = vmatpush.bf16.msra.mxu0 %v11784
    %12949 = vmatpush.bf16.msra.mxu0 %v11777
    %12950 = vmatpush.bf16.msra.mxu0 %v11770
    %12951 = vmatpush.bf16.msra.mxu0 %v11763
    %12952 = vmatpush.bf16.msra.mxu0 %v11756
    %12953 = vmatpush.bf16.msra.mxu0 %v11749
    %12954 = vmatpush.bf16.msra.mxu0 %v11742
    %12955 = vmatpush.bf16.msra.mxu0 %v11735
    %12956 = vmatmul.bf16.gmra.mxu0 %v9397
    %v12957 = vpop.f32.mrf.mxu0
    %v12958 = vadd.f32 %v12945, %v12957
    %v12959 = vpop.f32.mrf.mxu0
    %12960 = vdwg.mxu0
    %v12961 = vxor.u32 %v12334, 2147483648
    %v12962 = vxor.u32 %v12438, 2147483648
    %v12963 = vxor.u32 %v12542, 2147483648
    %v12964 = vxor.u32 %v12646, 2147483648
    %v12965 = vxor.u32 %v12750, 2147483648
    %v12966 = vxor.u32 %v12854, 2147483648
    %v12967 = vxor.u32 %v12958, 2147483648
    %v12968 = vmul.f32 %v12961, 1.442695
    %v12969 = vpow.pop %v12968
    %v12970 = vmul.f32 %v12962, 1.442695
    %v12971 = vpow.pop %v12970
    %v12972 = vmul.f32 %v12963, 1.442695
    %v12973 = vpow.pop %v12972
    %v12974 = vmul.f32 %v12964, 1.442695
    %v12975 = vpow.pop %v12974
    %v12976 = vmul.f32 %v12965, 1.442695
    %v12977 = vpow.pop %v12976
    %v12978 = vmul.f32 %v12966, 1.442695
    %v12979 = vpow.pop %v12978
    %v12980 = vmul.f32 %v12967, 1.442695
    %v12981 = vpow.pop %v12980
    %v12982 = vadd.f32 %v12969, 1.0
    %v12983 = vadd.f32 %v12971, 1.0
    %v12984 = vadd.f32 %v12973, 1.0
    %v12985 = vadd.f32 %v12975, 1.0
    %v12986 = vadd.f32 %v12977, 1.0
    %v12987 = vadd.f32 %v12979, 1.0
    %v12988 = vadd.f32 %v12981, 1.0
    %v12989 = vrcp.pop %v12982
    %v12990 = vmul.f32 %v12982, %v12989
    %v12991 = vsub.f32 1.0, %v12990
    %v12992 = vmul.f32 %v12989, %v12991
    %v12993 = vadd.f32 %v12989, %v12992
    %vm12994 = vweird.f32 %v12982
    %vm12995 = vweird.f32 %v12989
    %vm12996 = vmor %vm12994, %vm12995
    %v12997 = vsel %vm12996, %v12989, %v12993
    %v12998 = vand.u32 2147483647, %v12982
    %vm12999 = vcmp.eq.f32.partialorder %v12998, 8.507059e+37
    %v13000 = vand.u32 %v12982, 2147483648
    %v13001 = vor.u32 1.1754944e-38, %v13000
    %v13002 = vsel %vm12999, %v13001, %v12997
    %v13003 = vmul.f32 1.0, %v13002
    %v13004 = vrcp.pop %v12983
    %v13005 = vmul.f32 %v12983, %v13004
    %v13006 = vsub.f32 1.0, %v13005
    %v13007 = vmul.f32 %v13004, %v13006
    %v13008 = vadd.f32 %v13004, %v13007
    %vm13009 = vweird.f32 %v12983
    %vm13010 = vweird.f32 %v13004
    %vm13011 = vmor %vm13009, %vm13010
    %v13012 = vsel %vm13011, %v13004, %v13008
    %v13013 = vand.u32 2147483647, %v12983
    %vm13014 = vcmp.eq.f32.partialorder %v13013, 8.507059e+37
    %v13015 = vand.u32 %v12983, 2147483648
    %v13016 = vor.u32 1.1754944e-38, %v13015
    %v13017 = vsel %vm13014, %v13016, %v13012
    %v13018 = vmul.f32 1.0, %v13017
    %v13019 = vrcp.pop %v12984
    %v13020 = vmul.f32 %v12984, %v13019
    %v13021 = vsub.f32 1.0, %v13020
    %v13022 = vmul.f32 %v13019, %v13021
    %v13023 = vadd.f32 %v13019, %v13022
    %vm13024 = vweird.f32 %v12984
    %vm13025 = vweird.f32 %v13019
    %vm13026 = vmor %vm13024, %vm13025
    %v13027 = vsel %vm13026, %v13019, %v13023
    %v13028 = vand.u32 2147483647, %v12984
    %vm13029 = vcmp.eq.f32.partialorder %v13028, 8.507059e+37
    %v13030 = vand.u32 %v12984, 2147483648
    %v13031 = vor.u32 1.1754944e-38, %v13030
    %v13032 = vsel %vm13029, %v13031, %v13027
    %v13033 = vmul.f32 1.0, %v13032
    %v13034 = vrcp.pop %v12985
    %v13035 = vmul.f32 %v12985, %v13034
    %v13036 = vsub.f32 1.0, %v13035
    %v13037 = vmul.f32 %v13034, %v13036
    %v13038 = vadd.f32 %v13034, %v13037
    %vm13039 = vweird.f32 %v12985
    %vm13040 = vweird.f32 %v13034
    %vm13041 = vmor %vm13039, %vm13040
    %v13042 = vsel %vm13041, %v13034, %v13038
    %v13043 = vand.u32 2147483647, %v12985
    %vm13044 = vcmp.eq.f32.partialorder %v13043, 8.507059e+37
    %v13045 = vand.u32 %v12985, 2147483648
    %v13046 = vor.u32 1.1754944e-38, %v13045
    %v13047 = vsel %vm13044, %v13046, %v13042
    %v13048 = vmul.f32 1.0, %v13047
    %v13049 = vrcp.pop %v12986
    %v13050 = vmul.f32 %v12986, %v13049
    %v13051 = vsub.f32 1.0, %v13050
    %v13052 = vmul.f32 %v13049, %v13051
    %v13053 = vadd.f32 %v13049, %v13052
    %vm13054 = vweird.f32 %v12986
    %vm13055 = vweird.f32 %v13049
    %vm13056 = vmor %vm13054, %vm13055
    %v13057 = vsel %vm13056, %v13049, %v13053
    %v13058 = vand.u32 2147483647, %v12986
    %vm13059 = vcmp.eq.f32.partialorder %v13058, 8.507059e+37
    %v13060 = vand.u32 %v12986, 2147483648
    %v13061 = vor.u32 1.1754944e-38, %v13060
    %v13062 = vsel %vm13059, %v13061, %v13057
    %v13063 = vmul.f32 1.0, %v13062
    %v13064 = vrcp.pop %v12987
    %v13065 = vmul.f32 %v12987, %v13064
    %v13066 = vsub.f32 1.0, %v13065
    %v13067 = vmul.f32 %v13064, %v13066
    %v13068 = vadd.f32 %v13064, %v13067
    %vm13069 = vweird.f32 %v12987
    %vm13070 = vweird.f32 %v13064
    %vm13071 = vmor %vm13069, %vm13070
    %v13072 = vsel %vm13071, %v13064, %v13068
    %v13073 = vand.u32 2147483647, %v12987
    %vm13074 = vcmp.eq.f32.partialorder %v13073, 8.507059e+37
    %v13075 = vand.u32 %v12987, 2147483648
    %v13076 = vor.u32 1.1754944e-38, %v13075
    %v13077 = vsel %vm13074, %v13076, %v13072
    %v13078 = vmul.f32 1.0, %v13077
    %v13079 = vrcp.pop %v12988
    %v13080 = vmul.f32 %v12988, %v13079
    %v13081 = vsub.f32 1.0, %v13080
    %v13082 = vmul.f32 %v13079, %v13081
    %v13083 = vadd.f32 %v13079, %v13082
    %vm13084 = vweird.f32 %v12988
    %vm13085 = vweird.f32 %v13079
    %vm13086 = vmor %vm13084, %vm13085
    %v13087 = vsel %vm13086, %v13079, %v13083
    %v13088 = vand.u32 2147483647, %v12988
    %vm13089 = vcmp.eq.f32.partialorder %v13088, 8.507059e+37
    %v13090 = vand.u32 %v12988, 2147483648
    %v13091 = vor.u32 1.1754944e-38, %v13090
    %v13092 = vsel %vm13089, %v13091, %v13087
    %v13093 = vmul.f32 1.0, %v13092
    %13094 = vst [vmem:[%s10] sm:$0xff] %v13003
    %13095 = vst [vmem:[%s10 + $0x8] sm:$0xff] %v13018
    %13096 = vst [vmem:[%s10 + $0x10] sm:$0xff] %v13033
    %13097 = vst [vmem:[%s10 + $0x18] sm:$0xff] %v13048
    %13098 = vst [vmem:[%s10 + $0x20] sm:$0xff] %v13063
    %13099 = vst [vmem:[%s10 + $0x28] sm:$0xff] %v13078
    %13100 = vst [vmem:[%s10 + $0x30] sm:$0xff] %v13093
    // Predicated region
    $region78: #{ae_forward.1} parent=1 // pred_check
      _
    $region79: #{ae_forward.1} parent=1 // pred_check_branch
      %13102 = sbr.rel (0) target = $region81
    $region80: #{ae_forward.1} parent=1 // pred_region
      _
    $region81: #{ae_forward.1} parent=1 // pred_fallthru
      _
    // Predicated region
    $region82: #{ae_forward.1} parent=1 // pred_check
      _
    $region83: #{ae_forward.1} parent=1 // pred_check_branch
      %13104 = sbr.rel (0) target = $region85
    $region84: #{ae_forward.1} parent=1 // pred_region
      _
    $region85: #{ae_forward.1} parent=1 // pred_fallthru
      _
    %13105 = vsyncpa [#allocation3], 1
    %13106 = vsyncpa [#allocation5], 1
    %13107 = vsyncpa [#allocation8], 1
    %13108 = vsyncpa [#allocation11], 1
    %13109 = vsyncpa [#allocation14], 1

</llo_original>
